<compile_context>
chip_gen: v7x
topology: tpu7x:2x2x1
jax: 0.10.0
libtpu: 0.0.40
codegen_flags: <defaults>
</compile_context>

<pallas_src>
import functools

import jax
import jax.numpy as jnp
from jax.experimental import pallas as pl
from jax.experimental.pallas import tpu as pltpu

EPS = 1e-5
COUT = 128          # conv output channels padded 64 -> 128 (lane-dense stores)
H_DIM = 64          # real (unpadded) channel count of the ConvNet encoder
_VMEM = pl.BlockSpec(memory_space=pltpu.MemorySpace.VMEM)


def _round_up(x, m):
    return -(-x // m) * m


# ----------------------------- Pallas kernels -----------------------------

def _conv_bn_relu_pool_kernel(p_ref, w_ref, g_ref, b_ref, o_ref, *,
                              mp_pad, inv_count, n_pad_rows):
    """Fused conv3x3(pad1) + BN(batch stats) + ReLU + 2x2 max-pool.

    p_ref : (4*Mp_pad, K_pad) bf16  im2col patches, pool-position major
    w_ref : (K_pad, 128)      bf16  conv weights (rows / out-cols zero-padded)
    g_ref : (1, 128)          f32   BN gamma (zero-padded)
    b_ref : (1, 128)          f32   BN beta  (zero-padded)
    o_ref : (Mp_pad, 128)     bf16 / f32   pooled output
    """
    # Single MXU matmul covering all 4 pooling positions: bf16 in, f32 acc.
    y = jnp.dot(p_ref[...], w_ref[...], preferred_element_type=jnp.float32)

    # Batch statistics over all N*H*W conv-output positions (the 4 pooling
    # positions together cover them all).  Padded patch rows produce exactly
    # zero conv outputs (no bias), so they add 0 to the sum; the two-pass
    # variance gets an exact correction of n_pad_rows * mean^2 for them.
    mean = jnp.sum(y, axis=0, keepdims=True) * inv_count           # (1, 128)
    d = y - mean
    ssd = jnp.sum(d * d, axis=0, keepdims=True)
    if n_pad_rows:
        ssd = ssd - n_pad_rows * (mean * mean)
    var = jnp.maximum(ssd * inv_count, 0.0)
    scale = g_ref[...] * jax.lax.rsqrt(var + EPS)                  # (1, 128)
    z = d * scale + b_ref[...]                                     # BN affine

    # 2x2 max over the 4 pool positions (8-aligned sublane slices) + ReLU
    # (monotone, so relu(max) == max(relu)).  Padded channels have
    # scale = beta = 0 and therefore stay exactly zero.
    z01 = jnp.maximum(z[0 * mp_pad:1 * mp_pad], z[1 * mp_pad:2 * mp_pad])
    z23 = jnp.maximum(z[2 * mp_pad:3 * mp_pad], z[3 * mp_pad:4 * mp_pad])
    o_ref[...] = jnp.maximum(jnp.maximum(z01, z23), 0.0).astype(o_ref.dtype)


def _proto_euclid_kernel(s_ref, q_ref, o_ref, *, inv_temp):
    """Fused prototype mean + euclidean_metric / temperature (no transpose).

    s_ref : (shot, way, D) support embeddings
    q_ref : (Q, D)         query embeddings
    o_ref : (Q, way)       logits
    """
    proto = jnp.mean(s_ref[...], axis=0)                              # (way, D)
    q = q_ref[...]                                                    # (Q, D)
    qp = jax.lax.dot_general(q, proto, (((1,), (1,)), ((), ())),
                             preferred_element_type=jnp.float32)      # (Q, way)
    qq = jnp.sum(q * q, axis=1, keepdims=True)                        # (Q, 1)
    pp = jnp.sum(proto * proto, axis=1)[None, :]                      # (1, way)
    o_ref[...] = (2.0 * qp - qq - pp) * inv_temp


# ------------------------------- glue -------------------------------------

def _im2col_pooled(x, mp_pad, k_pad):
    """(N,H,W,C) NHWC -> (4*Mp_pad, K_pad) bf16 im2col patches, grouped by
    2x2 pool position (pool-position major) and zero-padded so the row count
    is a multiple of 8 and the last dim is a multiple of 128 (lane-dense)."""
    x = x.astype(jnp.bfloat16)
    N, H, W, C = x.shape
    xp = jnp.pad(x, ((0, 0), (1, 1), (1, 1), (0, 0)))
    cols = [xp[:, kh:kh + H, kw:kw + W, :] for kh in range(3) for kw in range(3)]
    pat = jnp.stack(cols, axis=3)                       # (N, H, W, 9, C)
    pat = pat.reshape(N, H // 2, 2, W // 2, 2, 9 * C)
    pat = jnp.transpose(pat, (2, 4, 0, 1, 3, 5))        # (2, 2, N, H/2, W/2, 9C)
    mp = N * (H // 2) * (W // 2)
    pat = pat.reshape(4, mp, 9 * C)
    pat = jnp.pad(pat, ((0, 0), (0, mp_pad - mp), (0, k_pad - 9 * C)))
    return pat.reshape(4 * mp_pad, k_pad)


def _wmat_padded(w, k_pad):
    """PyTorch conv weight (O,I,3,3) -> (K_pad, COUT) bf16, rows ordered
    (kh, kw, cin) to match the patch layout, zero-padded rows / out cols."""
    O, I, _, _ = w.shape
    wt = jnp.transpose(w, (2, 3, 1, 0)).reshape(9 * I, O)
    wt = jnp.pad(wt, ((0, k_pad - 9 * I), (0, COUT - O)))
    return wt.astype(jnp.bfloat16)


def _pad_row(v):
    """(C,) -> (1, COUT) f32, zero-padded (pad 0 keeps padded channels at 0).
    NOTE: padding is re-applied from the unpadded param dict on every call;
    never pre-pad the params themselves or inner-loop updates could make
    channels 64..127 nonzero and change the euclidean metric."""
    return jnp.pad(v, (0, COUT - v.shape[0])).reshape(1, COUT).astype(jnp.float32)


def conv_block_pallas(x, w, gamma, beta, *, out_f32=False):
    """One ConvNet-MAML block: conv3x3(pad1) -> BN(batch stats) -> ReLU ->
    maxpool2, executed as a single fused Pallas kernel (one MXU matmul)."""
    N, H, W, Cin = x.shape
    assert H % 2 == 0 and W % 2 == 0
    Hp, Wp = H // 2, W // 2
    Mp = N * Hp * Wp
    Mp_pad = _round_up(Mp, 8)
    K_pad = _round_up(9 * Cin, 128)
    patches = _im2col_pooled(x, Mp_pad, K_pad)          # (4*Mp_pad, K_pad) bf16
    wmat = _wmat_padded(w, K_pad)                       # (K_pad, COUT)     bf16
    gam, bet = _pad_row(gamma), _pad_row(beta)
    out_dtype = jnp.float32 if out_f32 else jnp.bfloat16
    n_pad_rows = 4 * (Mp_pad - Mp)

    cost = pl.CostEstimate(
        flops=2 * 4 * Mp_pad * K_pad * COUT,
        transcendentals=COUT,                           # rsqrt on (1, COUT)
        bytes_accessed=(patches.size + wmat.size) * 2 + 2 * COUT * 4
        + Mp_pad * COUT * (4 if out_f32 else 2))
    out = pl.pallas_call(
        functools.partial(_conv_bn_relu_pool_kernel, mp_pad=Mp_pad,
                          inv_count=1.0 / (4 * Mp), n_pad_rows=n_pad_rows),
        out_shape=jax.ShapeDtypeStruct((Mp_pad, COUT), out_dtype),
        in_specs=[_VMEM] * 4,
        out_specs=_VMEM,
        # Ample for the largest block at these episode sizes; below every
        # generation's physical VMEM (v5e/v6e 128 MiB, v7x 64 MiB per TC).
        compiler_params=pltpu.CompilerParams(vmem_limit_bytes=32 * 1024 * 1024),
        cost_estimate=cost,
    )(patches, wmat, gam, bet)
    return out[:Mp].reshape(N, Hp, Wp, COUT)


def encoder_pallas(x_nchw, params):
    """ConvNet(last_layer=False) forward, embedding=True semantics.

    Returns (N, 128) f32 embeddings; channels 64..127 are identically zero,
    so all distances / dot products equal those of the 64-dim embedding."""
    x = jnp.transpose(x_nchw, (0, 2, 3, 1)).astype(jnp.float32)   # NCHW -> NHWC
    for l in range(4):
        last = l == 3
        x = conv_block_pallas(x, params[f"conv{l}.w"],
                              params[f"bn{l}.gamma"], params[f"bn{l}.beta"],
                              out_f32=last)
        if not last:
            # Drop the zero-padded channels before the next layer's im2col so
            # the contraction covers only the 64 real channels (bit-identical
            # result, half the patch bytes and MXU passes).
            x = x[..., :H_DIM]
    # TODO(synk): the NHWC flatten equals PyTorch's NCHW .view(N, -1) only
    # because the final spatial size is 1x1 (16->8->4->2->1); other input
    # resolutions would permute the embedding relative to the reference.
    return x.reshape(x.shape[0], -1)


# Pure-JAX twin of the encoder, numerically equivalent to the Pallas path (up
# to bf16 activations / matmul inputs), used only so jax.grad can drive the
# first-order MAML inner loop.
# TODO(synk): torch.autograd.grad (inner-loop backprop) has no clean Pallas
# equivalent; the backward pass runs in plain JAX via this twin encoder.
def _im2col(x):
    N, H, W, C = x.shape
    xp = jnp.pad(x, ((0, 0), (1, 1), (1, 1), (0, 0)))
    cols = [xp[:, kh:kh + H, kw:kw + W, :] for kh in range(3) for kw in range(3)]
    return jnp.stack(cols, axis=3).reshape(N * H * W, 9 * C)


def _wmat(w):
    O, I, _, _ = w.shape
    return jnp.transpose(w, (2, 3, 1, 0)).reshape(9 * I, O)


def _conv_block_ref(x, w, gamma, beta):
    N, H, W, _ = x.shape
    Cout = w.shape[0]
    # conv bias omitted: exactly cancelled by the BN mean subtraction.
    y = _im2col(x) @ _wmat(w)
    mean = jnp.mean(y, axis=0, keepdims=True)
    var = jnp.mean((y - mean) ** 2, axis=0, keepdims=True)
    y = (y - mean) * jax.lax.rsqrt(var + EPS) * gamma[None, :] + beta[None, :]
    y = jnp.maximum(y, 0.0).reshape(N, H, W, Cout)
    return jnp.maximum(jnp.maximum(y[:, 0::2, 0::2, :], y[:, 0::2, 1::2, :]),
                       jnp.maximum(y[:, 1::2, 0::2, :], y[:, 1::2, 1::2, :]))


def encoder_ref(x_nchw, params):
    x = jnp.transpose(x_nchw, (0, 2, 3, 1)).astype(jnp.float32)
    for l in range(4):
        x = _conv_block_ref(x, params[f"conv{l}.w"],
                            params[f"bn{l}.gamma"], params[f"bn{l}.beta"])
    return x.reshape(x.shape[0], -1)


def inner_train_step(params, support_nchw, *, way, shot, gd_lr, inner_iters):
    label = jnp.tile(jnp.arange(way), shot)          # torch.arange(way).repeat(shot)

    def loss_fn(p):
        emb = encoder_ref(support_nchw, p)
        proto = emb.reshape(shot, way, -1).mean(axis=0)
        ypred = 2.0 * emb @ proto.T - jnp.sum(proto ** 2, axis=1)[None, :]
        logz = jax.scipy.special.logsumexp(ypred, axis=1)
        correct = ypred[jnp.arange(ypred.shape[0]), label]
        return jnp.mean(logz - correct)              # F.cross_entropy (mean)

    for _ in range(inner_iters):                     # first-order updates
        grads = jax.grad(loss_fn)(params)
        params = {k: params[k] - gd_lr * grads[k] for k in params}
    return params


def protomaml_forward(params, data_shot, data_query, *, way, shot, gd_lr,
                      inner_iters, temperature):
    upd = inner_train_step(params, data_shot, way=way, shot=shot,
                           gd_lr=gd_lr, inner_iters=inner_iters)
    shot_emb = encoder_pallas(data_shot, upd)                    # (shot*way, 128)
    query_emb = encoder_pallas(data_query, upd)                  # (Q, 128)
    D = shot_emb.shape[1]
    logits = pl.pallas_call(
        functools.partial(_proto_euclid_kernel, inv_temp=1.0 / temperature),
        out_shape=jax.ShapeDtypeStruct((query_emb.shape[0], way), jnp.float32),
        in_specs=[_VMEM, _VMEM],
        out_specs=_VMEM,
    )(shot_emb.reshape(shot, way, D), query_emb)
    return logits


def init_params(key, hid=H_DIM, in_ch=3):
    """Deterministic synthetic init of ConvNet-MAML params (4 conv blocks)."""
    params = {}
    chans = [in_ch, hid, hid, hid]
    for l in range(4):
        key, k1 = jax.random.split(key)
        cin = chans[l]
        fan_in = cin * 9
        params[f"conv{l}.w"] = (jax.random.normal(k1, (hid, cin, 3, 3),
                                                  jnp.float32)
                                * (2.0 / fan_in) ** 0.5)
        # conv bias kept in the parameter set for fidelity with the PyTorch
        # module; its contribution (and gradient) is exactly cancelled by BN.
        params[f"conv{l}.b"] = jnp.zeros((hid,), jnp.float32)
        params[f"bn{l}.gamma"] = jnp.ones((hid,), jnp.float32)
        params[f"bn{l}.beta"] = jnp.zeros((hid,), jnp.float32)
    return params


if __name__ == "__main__":
    way, shot, query_shot = 3, 2, 2          # small few-shot episode
    key = jax.random.PRNGKey(0)
    key, kp, ks, kq = jax.random.split(key, 4)
    params = init_params(kp)                 # h_dim = 64 (16x16 -> 1x1 spatial)
    data_shot = jax.random.normal(ks, (shot * way, 3, 16, 16), jnp.float32)
    data_query = jax.random.normal(kq, (query_shot * way, 3, 16, 16), jnp.float32)

    fwd = jax.jit(functools.partial(protomaml_forward, way=way, shot=shot,
                                    gd_lr=0.01, inner_iters=2, temperature=1.0))
    logits = jax.block_until_ready(fwd(params, data_shot, data_query))
    assert logits.shape == (query_shot * way, way)
    assert bool(jnp.all(jnp.isfinite(logits)))
    print("KERNEL_OK")
</pallas_src>

<mosaic_0001>
module attributes {stable_mosaic.version = 11 : i64} {
  func.func @_conv_bn_relu_pool_kernel(%arg0: memref<1536x128xbf16, #tpu.memory_space<vmem>>, %arg1: memref<128x128xbf16, #tpu.memory_space<vmem>>, %arg2: memref<1x128xf32, #tpu.memory_space<vmem>>, %arg3: memref<1x128xf32, #tpu.memory_space<vmem>>, %arg4: memref<384x128xbf16, #tpu.memory_space<vmem>>) attributes {dimension_semantics = [], scalar_prefetch = 0 : i64, scratch_operands = 0 : i64, tpu.core_type = #tpu.core_type<tc>} {
    %c0 = arith.constant 0 : index
    %c0_0 = arith.constant 0 : index
    %0 = vector.load %arg0[%c0, %c0_0] : memref<1536x128xbf16, #tpu.memory_space<vmem>>, vector<1536x128xbf16>
    %c0_1 = arith.constant 0 : index
    %c0_2 = arith.constant 0 : index
    %1 = vector.load %arg1[%c0_1, %c0_2] : memref<128x128xbf16, #tpu.memory_space<vmem>>, vector<128x128xbf16>
    %cst = arith.constant dense<0.000000e+00> : vector<1536x128xf32>
    %2 = tpu.matmul %0, %1, %cst {dimension_numbers = #tpu.dot_dimension_numbers<[1], [0], [0], [1], [0, 0, 1, 1], [], []>} : vector<1536x128xbf16>, vector<128x128xbf16>, vector<1536x128xf32> -> vector<1536x128xf32>
    %cst_3 = arith.constant dense<0.000000e+00> : vector<128xf32>
    %3 = vector.multi_reduction <add>, %2, %cst_3 [0] : vector<1536x128xf32> to vector<128xf32>
    %4 = vector.shape_cast %3 : vector<128xf32> to vector<1x128xf32>
    %cst_4 = arith.constant 6.51041686E-4 : f32
    %5 = vector.broadcast %cst_4 : f32 to vector<1x128xf32>
    %6 = arith.mulf %4, %5 : vector<1x128xf32>
    %7 = vector.broadcast %6 : vector<1x128xf32> to vector<1536x128xf32>
    %8 = arith.subf %2, %7 : vector<1536x128xf32>
    %9 = arith.mulf %8, %8 : vector<1536x128xf32>
    %cst_5 = arith.constant dense<0.000000e+00> : vector<128xf32>
    %10 = vector.multi_reduction <add>, %9, %cst_5 [0] : vector<1536x128xf32> to vector<128xf32>
    %11 = vector.shape_cast %10 : vector<128xf32> to vector<1x128xf32>
    %cst_6 = arith.constant 6.51041686E-4 : f32
    %12 = vector.broadcast %cst_6 : f32 to vector<1x128xf32>
    %13 = arith.mulf %11, %12 : vector<1x128xf32>
    %cst_7 = arith.constant 0.000000e+00 : f32
    %14 = vector.broadcast %cst_7 : f32 to vector<1x128xf32>
    %15 = arith.maximumf %13, %14 : vector<1x128xf32>
    %c0_8 = arith.constant 0 : index
    %c0_9 = arith.constant 0 : index
    %16 = vector.load %arg2[%c0_8, %c0_9] : memref<1x128xf32, #tpu.memory_space<vmem>>, vector<1x128xf32>
    %cst_10 = arith.constant 9.99999974E-6 : f32
    %17 = vector.broadcast %cst_10 : f32 to vector<1x128xf32>
    %18 = arith.addf %15, %17 : vector<1x128xf32>
    %19 = math.rsqrt %18 : vector<1x128xf32>
    %20 = arith.mulf %16, %19 : vector<1x128xf32>
    %21 = vector.broadcast %20 : vector<1x128xf32> to vector<1536x128xf32>
    %22 = arith.mulf %8, %21 : vector<1536x128xf32>
    %c0_11 = arith.constant 0 : index
    %c0_12 = arith.constant 0 : index
    %23 = vector.load %arg3[%c0_11, %c0_12] : memref<1x128xf32, #tpu.memory_space<vmem>>, vector<1x128xf32>
    %24 = vector.broadcast %23 : vector<1x128xf32> to vector<1536x128xf32>
    %25 = arith.addf %22, %24 : vector<1536x128xf32>
    %26 = vector.extract_strided_slice %25 {offsets = [0, 0], sizes = [384, 128], strides = [1, 1]} : vector<1536x128xf32> to vector<384x128xf32>
    %27 = vector.extract_strided_slice %25 {offsets = [384, 0], sizes = [384, 128], strides = [1, 1]} : vector<1536x128xf32> to vector<384x128xf32>
    %28 = arith.maximumf %26, %27 : vector<384x128xf32>
    %29 = vector.extract_strided_slice %25 {offsets = [768, 0], sizes = [384, 128], strides = [1, 1]} : vector<1536x128xf32> to vector<384x128xf32>
    %30 = vector.extract_strided_slice %25 {offsets = [1152, 0], sizes = [384, 128], strides = [1, 1]} : vector<1536x128xf32> to vector<384x128xf32>
    %31 = arith.maximumf %29, %30 : vector<384x128xf32>
    %32 = arith.maximumf %28, %31 : vector<384x128xf32>
    %cst_13 = arith.constant 0.000000e+00 : f32
    %33 = vector.broadcast %cst_13 : f32 to vector<384x128xf32>
    %34 = arith.maximumf %32, %33 : vector<384x128xf32>
    %35 = arith.truncf %34 : vector<384x128xf32> to vector<384x128xbf16>
    %c0_14 = arith.constant 0 : index
    %c0_15 = arith.constant 0 : index
    %36 = vector.load %arg4[%c0_14, %c0_15] : memref<384x128xbf16, #tpu.memory_space<vmem>>, vector<384x128xbf16>
    tpu.vector_store %arg4[%c0_14, %c0_15], %35 {strides = array<i32>} : memref<384x128xbf16, #tpu.memory_space<vmem>>, vector<384x128xbf16>,
    return
  }
}

module attributes {stable_mosaic.version = 11 : i64} {
  func.func @_conv_bn_relu_pool_kernel(%arg0: memref<384x640xbf16, #tpu.memory_space<vmem>>, %arg1: memref<640x128xbf16, #tpu.memory_space<vmem>>, %arg2: memref<1x128xf32, #tpu.memory_space<vmem>>, %arg3: memref<1x128xf32, #tpu.memory_space<vmem>>, %arg4: memref<96x128xbf16, #tpu.memory_space<vmem>>) attributes {dimension_semantics = [], scalar_prefetch = 0 : i64, scratch_operands = 0 : i64, tpu.core_type = #tpu.core_type<tc>} {
    %c0 = arith.constant 0 : index
    %c0_0 = arith.constant 0 : index
    %0 = vector.load %arg0[%c0, %c0_0] : memref<384x640xbf16, #tpu.memory_space<vmem>>, vector<384x640xbf16>
    %c0_1 = arith.constant 0 : index
    %c0_2 = arith.constant 0 : index
    %1 = vector.load %arg1[%c0_1, %c0_2] : memref<640x128xbf16, #tpu.memory_space<vmem>>, vector<640x128xbf16>
    %cst = arith.constant dense<0.000000e+00> : vector<384x128xf32>
    %2 = tpu.matmul %0, %1, %cst {dimension_numbers = #tpu.dot_dimension_numbers<[1], [0], [0], [1], [0, 0, 1, 1], [], []>} : vector<384x640xbf16>, vector<640x128xbf16>, vector<384x128xf32> -> vector<384x128xf32>
    %cst_3 = arith.constant dense<0.000000e+00> : vector<128xf32>
    %3 = vector.multi_reduction <add>, %2, %cst_3 [0] : vector<384x128xf32> to vector<128xf32>
    %4 = vector.shape_cast %3 : vector<128xf32> to vector<1x128xf32>
    %cst_4 = arith.constant 0.00260416674 : f32
    %5 = vector.broadcast %cst_4 : f32 to vector<1x128xf32>
    %6 = arith.mulf %4, %5 : vector<1x128xf32>
    %7 = vector.broadcast %6 : vector<1x128xf32> to vector<384x128xf32>
    %8 = arith.subf %2, %7 : vector<384x128xf32>
    %9 = arith.mulf %8, %8 : vector<384x128xf32>
    %cst_5 = arith.constant dense<0.000000e+00> : vector<128xf32>
    %10 = vector.multi_reduction <add>, %9, %cst_5 [0] : vector<384x128xf32> to vector<128xf32>
    %11 = vector.shape_cast %10 : vector<128xf32> to vector<1x128xf32>
    %cst_6 = arith.constant 0.00260416674 : f32
    %12 = vector.broadcast %cst_6 : f32 to vector<1x128xf32>
    %13 = arith.mulf %11, %12 : vector<1x128xf32>
    %cst_7 = arith.constant 0.000000e+00 : f32
    %14 = vector.broadcast %cst_7 : f32 to vector<1x128xf32>
    %15 = arith.maximumf %13, %14 : vector<1x128xf32>
    %c0_8 = arith.constant 0 : index
    %c0_9 = arith.constant 0 : index
    %16 = vector.load %arg2[%c0_8, %c0_9] : memref<1x128xf32, #tpu.memory_space<vmem>>, vector<1x128xf32>
    %cst_10 = arith.constant 9.99999974E-6 : f32
    %17 = vector.broadcast %cst_10 : f32 to vector<1x128xf32>
    %18 = arith.addf %15, %17 : vector<1x128xf32>
    %19 = math.rsqrt %18 : vector<1x128xf32>
    %20 = arith.mulf %16, %19 : vector<1x128xf32>
    %21 = vector.broadcast %20 : vector<1x128xf32> to vector<384x128xf32>
    %22 = arith.mulf %8, %21 : vector<384x128xf32>
    %c0_11 = arith.constant 0 : index
    %c0_12 = arith.constant 0 : index
    %23 = vector.load %arg3[%c0_11, %c0_12] : memref<1x128xf32, #tpu.memory_space<vmem>>, vector<1x128xf32>
    %24 = vector.broadcast %23 : vector<1x128xf32> to vector<384x128xf32>
    %25 = arith.addf %22, %24 : vector<384x128xf32>
    %26 = vector.extract_strided_slice %25 {offsets = [0, 0], sizes = [96, 128], strides = [1, 1]} : vector<384x128xf32> to vector<96x128xf32>
    %27 = vector.extract_strided_slice %25 {offsets = [96, 0], sizes = [96, 128], strides = [1, 1]} : vector<384x128xf32> to vector<96x128xf32>
    %28 = arith.maximumf %26, %27 : vector<96x128xf32>
    %29 = vector.extract_strided_slice %25 {offsets = [192, 0], sizes = [96, 128], strides = [1, 1]} : vector<384x128xf32> to vector<96x128xf32>
    %30 = vector.extract_strided_slice %25 {offsets = [288, 0], sizes = [96, 128], strides = [1, 1]} : vector<384x128xf32> to vector<96x128xf32>
    %31 = arith.maximumf %29, %30 : vector<96x128xf32>
    %32 = arith.maximumf %28, %31 : vector<96x128xf32>
    %cst_13 = arith.constant 0.000000e+00 : f32
    %33 = vector.broadcast %cst_13 : f32 to vector<96x128xf32>
    %34 = arith.maximumf %32, %33 : vector<96x128xf32>
    %35 = arith.truncf %34 : vector<96x128xf32> to vector<96x128xbf16>
    %c0_14 = arith.constant 0 : index
    %c0_15 = arith.constant 0 : index
    %36 = vector.load %arg4[%c0_14, %c0_15] : memref<96x128xbf16, #tpu.memory_space<vmem>>, vector<96x128xbf16>
    tpu.vector_store %arg4[%c0_14, %c0_15], %35 {strides = array<i32>} : memref<96x128xbf16, #tpu.memory_space<vmem>>, vector<96x128xbf16>,
    return
  }
}

module attributes {stable_mosaic.version = 11 : i64} {
  func.func @_conv_bn_relu_pool_kernel(%arg0: memref<96x640xbf16, #tpu.memory_space<vmem>>, %arg1: memref<640x128xbf16, #tpu.memory_space<vmem>>, %arg2: memref<1x128xf32, #tpu.memory_space<vmem>>, %arg3: memref<1x128xf32, #tpu.memory_space<vmem>>, %arg4: memref<24x128xbf16, #tpu.memory_space<vmem>>) attributes {dimension_semantics = [], scalar_prefetch = 0 : i64, scratch_operands = 0 : i64, tpu.core_type = #tpu.core_type<tc>} {
    %c0 = arith.constant 0 : index
    %c0_0 = arith.constant 0 : index
    %0 = vector.load %arg0[%c0, %c0_0] : memref<96x640xbf16, #tpu.memory_space<vmem>>, vector<96x640xbf16>
    %c0_1 = arith.constant 0 : index
    %c0_2 = arith.constant 0 : index
    %1 = vector.load %arg1[%c0_1, %c0_2] : memref<640x128xbf16, #tpu.memory_space<vmem>>, vector<640x128xbf16>
    %cst = arith.constant dense<0.000000e+00> : vector<96x128xf32>
    %2 = tpu.matmul %0, %1, %cst {dimension_numbers = #tpu.dot_dimension_numbers<[1], [0], [0], [1], [0, 0, 1, 1], [], []>} : vector<96x640xbf16>, vector<640x128xbf16>, vector<96x128xf32> -> vector<96x128xf32>
    %cst_3 = arith.constant dense<0.000000e+00> : vector<128xf32>
    %3 = vector.multi_reduction <add>, %2, %cst_3 [0] : vector<96x128xf32> to vector<128xf32>
    %4 = vector.shape_cast %3 : vector<128xf32> to vector<1x128xf32>
    %cst_4 = arith.constant 0.010416667 : f32
    %5 = vector.broadcast %cst_4 : f32 to vector<1x128xf32>
    %6 = arith.mulf %4, %5 : vector<1x128xf32>
    %7 = vector.broadcast %6 : vector<1x128xf32> to vector<96x128xf32>
    %8 = arith.subf %2, %7 : vector<96x128xf32>
    %9 = arith.mulf %8, %8 : vector<96x128xf32>
    %cst_5 = arith.constant dense<0.000000e+00> : vector<128xf32>
    %10 = vector.multi_reduction <add>, %9, %cst_5 [0] : vector<96x128xf32> to vector<128xf32>
    %11 = vector.shape_cast %10 : vector<128xf32> to vector<1x128xf32>
    %cst_6 = arith.constant 0.010416667 : f32
    %12 = vector.broadcast %cst_6 : f32 to vector<1x128xf32>
    %13 = arith.mulf %11, %12 : vector<1x128xf32>
    %cst_7 = arith.constant 0.000000e+00 : f32
    %14 = vector.broadcast %cst_7 : f32 to vector<1x128xf32>
    %15 = arith.maximumf %13, %14 : vector<1x128xf32>
    %c0_8 = arith.constant 0 : index
    %c0_9 = arith.constant 0 : index
    %16 = vector.load %arg2[%c0_8, %c0_9] : memref<1x128xf32, #tpu.memory_space<vmem>>, vector<1x128xf32>
    %cst_10 = arith.constant 9.99999974E-6 : f32
    %17 = vector.broadcast %cst_10 : f32 to vector<1x128xf32>
    %18 = arith.addf %15, %17 : vector<1x128xf32>
    %19 = math.rsqrt %18 : vector<1x128xf32>
    %20 = arith.mulf %16, %19 : vector<1x128xf32>
    %21 = vector.broadcast %20 : vector<1x128xf32> to vector<96x128xf32>
    %22 = arith.mulf %8, %21 : vector<96x128xf32>
    %c0_11 = arith.constant 0 : index
    %c0_12 = arith.constant 0 : index
    %23 = vector.load %arg3[%c0_11, %c0_12] : memref<1x128xf32, #tpu.memory_space<vmem>>, vector<1x128xf32>
    %24 = vector.broadcast %23 : vector<1x128xf32> to vector<96x128xf32>
    %25 = arith.addf %22, %24 : vector<96x128xf32>
    %26 = vector.extract_strided_slice %25 {offsets = [0, 0], sizes = [24, 128], strides = [1, 1]} : vector<96x128xf32> to vector<24x128xf32>
    %27 = vector.extract_strided_slice %25 {offsets = [24, 0], sizes = [24, 128], strides = [1, 1]} : vector<96x128xf32> to vector<24x128xf32>
    %28 = arith.maximumf %26, %27 : vector<24x128xf32>
    %29 = vector.extract_strided_slice %25 {offsets = [48, 0], sizes = [24, 128], strides = [1, 1]} : vector<96x128xf32> to vector<24x128xf32>
    %30 = vector.extract_strided_slice %25 {offsets = [72, 0], sizes = [24, 128], strides = [1, 1]} : vector<96x128xf32> to vector<24x128xf32>
    %31 = arith.maximumf %29, %30 : vector<24x128xf32>
    %32 = arith.maximumf %28, %31 : vector<24x128xf32>
    %cst_13 = arith.constant 0.000000e+00 : f32
    %33 = vector.broadcast %cst_13 : f32 to vector<24x128xf32>
    %34 = arith.maximumf %32, %33 : vector<24x128xf32>
    %35 = arith.truncf %34 : vector<24x128xf32> to vector<24x128xbf16>
    %c0_14 = arith.constant 0 : index
    %c0_15 = arith.constant 0 : index
    %36 = vector.load %arg4[%c0_14, %c0_15] : memref<24x128xbf16, #tpu.memory_space<vmem>>, vector<24x128xbf16>
    tpu.vector_store %arg4[%c0_14, %c0_15], %35 {strides = array<i32>} : memref<24x128xbf16, #tpu.memory_space<vmem>>, vector<24x128xbf16>,
    return
  }
}

module attributes {stable_mosaic.version = 11 : i64} {
  func.func @_conv_bn_relu_pool_kernel(%arg0: memref<32x640xbf16, #tpu.memory_space<vmem>>, %arg1: memref<640x128xbf16, #tpu.memory_space<vmem>>, %arg2: memref<1x128xf32, #tpu.memory_space<vmem>>, %arg3: memref<1x128xf32, #tpu.memory_space<vmem>>, %arg4: memref<8x128xf32, #tpu.memory_space<vmem>>) attributes {dimension_semantics = [], scalar_prefetch = 0 : i64, scratch_operands = 0 : i64, tpu.core_type = #tpu.core_type<tc>} {
    %c0 = arith.constant 0 : index
    %c0_0 = arith.constant 0 : index
    %0 = vector.load %arg0[%c0, %c0_0] : memref<32x640xbf16, #tpu.memory_space<vmem>>, vector<32x640xbf16>
    %c0_1 = arith.constant 0 : index
    %c0_2 = arith.constant 0 : index
    %1 = vector.load %arg1[%c0_1, %c0_2] : memref<640x128xbf16, #tpu.memory_space<vmem>>, vector<640x128xbf16>
    %cst = arith.constant dense<0.000000e+00> : vector<32x128xf32>
    %2 = tpu.matmul %0, %1, %cst {dimension_numbers = #tpu.dot_dimension_numbers<[1], [0], [0], [1], [0, 0, 1, 1], [], []>} : vector<32x640xbf16>, vector<640x128xbf16>, vector<32x128xf32> -> vector<32x128xf32>
    %cst_3 = arith.constant dense<0.000000e+00> : vector<128xf32>
    %3 = vector.multi_reduction <add>, %2, %cst_3 [0] : vector<32x128xf32> to vector<128xf32>
    %4 = vector.shape_cast %3 : vector<128xf32> to vector<1x128xf32>
    %cst_4 = arith.constant 0.0416666679 : f32
    %5 = vector.broadcast %cst_4 : f32 to vector<1x128xf32>
    %6 = arith.mulf %4, %5 : vector<1x128xf32>
    %7 = vector.broadcast %6 : vector<1x128xf32> to vector<32x128xf32>
    %8 = arith.subf %2, %7 : vector<32x128xf32>
    %9 = arith.mulf %8, %8 : vector<32x128xf32>
    %cst_5 = arith.constant dense<0.000000e+00> : vector<128xf32>
    %10 = vector.multi_reduction <add>, %9, %cst_5 [0] : vector<32x128xf32> to vector<128xf32>
    %11 = vector.shape_cast %10 : vector<128xf32> to vector<1x128xf32>
    %12 = arith.mulf %6, %6 : vector<1x128xf32>
    %cst_6 = arith.constant 8.000000e+00 : f32
    %13 = vector.broadcast %cst_6 : f32 to vector<1x128xf32>
    %14 = arith.mulf %13, %12 : vector<1x128xf32>
    %15 = arith.subf %11, %14 : vector<1x128xf32>
    %cst_7 = arith.constant 0.0416666679 : f32
    %16 = vector.broadcast %cst_7 : f32 to vector<1x128xf32>
    %17 = arith.mulf %15, %16 : vector<1x128xf32>
    %cst_8 = arith.constant 0.000000e+00 : f32
    %18 = vector.broadcast %cst_8 : f32 to vector<1x128xf32>
    %19 = arith.maximumf %17, %18 : vector<1x128xf32>
    %c0_9 = arith.constant 0 : index
    %c0_10 = arith.constant 0 : index
    %20 = vector.load %arg2[%c0_9, %c0_10] : memref<1x128xf32, #tpu.memory_space<vmem>>, vector<1x128xf32>
    %cst_11 = arith.constant 9.99999974E-6 : f32
    %21 = vector.broadcast %cst_11 : f32 to vector<1x128xf32>
    %22 = arith.addf %19, %21 : vector<1x128xf32>
    %23 = math.rsqrt %22 : vector<1x128xf32>
    %24 = arith.mulf %20, %23 : vector<1x128xf32>
    %25 = vector.broadcast %24 : vector<1x128xf32> to vector<32x128xf32>
    %26 = arith.mulf %8, %25 : vector<32x128xf32>
    %c0_12 = arith.constant 0 : index
    %c0_13 = arith.constant 0 : index
    %27 = vector.load %arg3[%c0_12, %c0_13] : memref<1x128xf32, #tpu.memory_space<vmem>>, vector<1x128xf32>
    %28 = vector.broadcast %27 : vector<1x128xf32> to vector<32x128xf32>
    %29 = arith.addf %26, %28 : vector<32x128xf32>
    %30 = vector.extract_strided_slice %29 {offsets = [0, 0], sizes = [8, 128], strides = [1, 1]} : vector<32x128xf32> to vector<8x128xf32>
    %31 = vector.extract_strided_slice %29 {offsets = [8, 0], sizes = [8, 128], strides = [1, 1]} : vector<32x128xf32> to vector<8x128xf32>
    %32 = arith.maximumf %30, %31 : vector<8x128xf32>
    %33 = vector.extract_strided_slice %29 {offsets = [16, 0], sizes = [8, 128], strides = [1, 1]} : vector<32x128xf32> to vector<8x128xf32>
    %34 = vector.extract_strided_slice %29 {offsets = [24, 0], sizes = [8, 128], strides = [1, 1]} : vector<32x128xf32> to vector<8x128xf32>
    %35 = arith.maximumf %33, %34 : vector<8x128xf32>
    %36 = arith.maximumf %32, %35 : vector<8x128xf32>
    %cst_14 = arith.constant 0.000000e+00 : f32
    %37 = vector.broadcast %cst_14 : f32 to vector<8x128xf32>
    %38 = arith.maximumf %36, %37 : vector<8x128xf32>
    %c0_15 = arith.constant 0 : index
    %c0_16 = arith.constant 0 : index
    %39 = vector.load %arg4[%c0_15, %c0_16] : memref<8x128xf32, #tpu.memory_space<vmem>>, vector<8x128xf32>
    tpu.vector_store %arg4[%c0_15, %c0_16], %38 {strides = array<i32>} : memref<8x128xf32, #tpu.memory_space<vmem>>, vector<8x128xf32>,
    return
  }
}

module attributes {stable_mosaic.version = 11 : i64} {
  func.func @_proto_euclid_kernel(%arg0: memref<2x3x128xf32, #tpu.memory_space<vmem>>, %arg1: memref<6x128xf32, #tpu.memory_space<vmem>>, %arg2: memref<6x3xf32, #tpu.memory_space<vmem>>) attributes {dimension_semantics = [], scalar_prefetch = 0 : i64, scratch_operands = 0 : i64, tpu.core_type = #tpu.core_type<tc>} {
    %c0 = arith.constant 0 : index
    %c0_0 = arith.constant 0 : index
    %c0_1 = arith.constant 0 : index
    %0 = vector.load %arg0[%c0, %c0_0, %c0_1] : memref<2x3x128xf32, #tpu.memory_space<vmem>>, vector<2x3x128xf32>
    %cst = arith.constant dense<0.000000e+00> : vector<3x128xf32>
    %1 = vector.multi_reduction <add>, %0, %cst [0] : vector<2x3x128xf32> to vector<3x128xf32>
    %cst_2 = arith.constant 2.000000e+00 : f32
    %2 = vector.broadcast %cst_2 : f32 to vector<3x128xf32>
    %3 = arith.divf %1, %2 : vector<3x128xf32>
    %c0_3 = arith.constant 0 : index
    %c0_4 = arith.constant 0 : index
    %4 = vector.load %arg1[%c0_3, %c0_4] : memref<6x128xf32, #tpu.memory_space<vmem>>, vector<6x128xf32>
    %cst_5 = arith.constant dense<0.000000e+00> : vector<6x3xf32>
    %5 = tpu.matmul %4, %3, %cst_5 {dimension_numbers = #tpu.dot_dimension_numbers<[1], [1], [0], [0], [0, 0, 1, 0], [], []>} : vector<6x128xf32>, vector<3x128xf32>, vector<6x3xf32> -> vector<6x3xf32>
    %6 = arith.mulf %4, %4 : vector<6x128xf32>
    %cst_6 = arith.constant dense<0.000000e+00> : vector<6xf32>
    %7 = vector.multi_reduction <add>, %6, %cst_6 [1] : vector<6x128xf32> to vector<6xf32>
    %8 = vector.shape_cast %7 : vector<6xf32> to vector<6x1xf32>
    %9 = arith.mulf %3, %3 : vector<3x128xf32>
    %cst_7 = arith.constant dense<0.000000e+00> : vector<3xf32>
    %10 = vector.multi_reduction <add>, %9, %cst_7 [1] : vector<3x128xf32> to vector<3xf32>
    %11 = vector.shape_cast %10 : vector<3xf32> to vector<1x3xf32>
    %cst_8 = arith.constant 2.000000e+00 : f32
    %12 = vector.broadcast %cst_8 : f32 to vector<6x3xf32>
    %13 = arith.mulf %12, %5 : vector<6x3xf32>
    %14 = vector.broadcast %8 : vector<6x1xf32> to vector<6x3xf32>
    %15 = arith.subf %13, %14 : vector<6x3xf32>
    %16 = vector.broadcast %11 : vector<1x3xf32> to vector<6x3xf32>
    %17 = arith.subf %15, %16 : vector<6x3xf32>
    %cst_9 = arith.constant 1.000000e+00 : f32
    %18 = vector.broadcast %cst_9 : f32 to vector<6x3xf32>
    %19 = arith.mulf %17, %18 : vector<6x3xf32>
    %c0_10 = arith.constant 0 : index
    %c0_11 = arith.constant 0 : index
    %20 = vector.load %arg2[%c0_10, %c0_11] : memref<6x3xf32, #tpu.memory_space<vmem>>, vector<6x3xf32>
    tpu.vector_store %arg2[%c0_10, %c0_11], %19 {strides = array<i32>} : memref<6x3xf32, #tpu.memory_space<vmem>>, vector<6x3xf32>,
    return
  }
}

</mosaic_0001>

<llo_original>
// kernel: protomaml_forward.13
$region0: #{protomaml_forward.13}
  #allocation0 [shape = 'u32[]', space=smem, size = 0x4, offset = 0x4, fixed_abs, tag = 'smem constant byte address 0x4 - core index']
  #allocation1 [shape = 'u32[144,128]{1,0:T(1,128)}', space=vmem, size = 0x12000, scoped, tag = 'internal scratch']
  %s0 = inlined_call_operand.vmem [shape: bf16[1536,128], index: 0, kind: input, shape index: {}]
  %s1 = inlined_call_operand.vmem [shape: bf16[128,128], index: 1, kind: input, shape index: {}]
  %s2 = inlined_call_operand.vmem [shape: f32[1,128], index: 2, kind: input, shape index: {}]
  %s3 = inlined_call_operand.vmem [shape: f32[1,128], index: 3, kind: input, shape index: {}]
  %s4 = inlined_call_operand.vmem [shape: bf16[384,128], index: 4, kind: output, shape index: {}]
  %s5 = sld [smem:[#allocation0]]
  $region26: #{protomaml_forward.13} parent=0
    _
  %s7 = ssub.s32 1, %s5
  %s8 = scalar_select 0, %s7, %s5
  // Predicated region
  $region2: #{protomaml_forward.13} parent=0 // pred_check
    _
  $region3: #{protomaml_forward.13} parent=0 // pred_check_branch
    %10 = sbr.rel (0) target = $region5
  $region4: #{protomaml_forward.13} parent=0 // pred_region
    _
  $region5: #{protomaml_forward.13} parent=0 // pred_fallthru
    _
  // Predicated region
  $region6: #{protomaml_forward.13} parent=0 // pred_check
    _
  $region7: #{protomaml_forward.13} parent=0 // pred_check_branch
    %12 = sbr.rel (0) target = $region9
  $region8: #{protomaml_forward.13} parent=0 // pred_region
    _
  $region9: #{protomaml_forward.13} parent=0 // pred_fallthru
    _
  // Predicated region
  $region10: #{protomaml_forward.13} parent=0 // pred_check
    _
  $region11: #{protomaml_forward.13} parent=0 // pred_check_branch
    %14 = sbr.rel (0) target = $region13
  $region12: #{protomaml_forward.13} parent=0 // pred_region
    _
  $region13: #{protomaml_forward.13} parent=0 // pred_fallthru
    _
  // Predicated region
  $region14: #{protomaml_forward.13} parent=0 // pred_check
    _
  $region15: #{protomaml_forward.13} parent=0 // pred_check_branch
    %16 = sbr.rel (0) target = $region17
  $region16: #{protomaml_forward.13} parent=0 // pred_region
    _
  $region17: #{protomaml_forward.13} parent=0 // pred_fallthru
    _
  %v18 = vld [vmem:[%s0] sm:$0xf]
  %v19 = vld [vmem:[%s0 + $0x4] sm:$0xf]
  %v20 = vld [vmem:[%s0 + $0x8] sm:$0xf]
  %v21 = vld [vmem:[%s0 + $0xc] sm:$0xf]
  %v22 = vld [vmem:[%s0 + $0x10] sm:$0xf]
  %v23 = vld [vmem:[%s0 + $0x14] sm:$0xf]
  %v24 = vld [vmem:[%s0 + $0x18] sm:$0xf]
  %v25 = vld [vmem:[%s0 + $0x1c] sm:$0xf]
  %v26 = vld [vmem:[%s0 + $0x20] sm:$0xf]
  %v27 = vld [vmem:[%s0 + $0x24] sm:$0xf]
  %v28 = vld [vmem:[%s0 + $0x28] sm:$0xf]
  %v29 = vld [vmem:[%s0 + $0x2c] sm:$0xf]
  %v30 = vld [vmem:[%s0 + $0x30] sm:$0xf]
  %v31 = vld [vmem:[%s0 + $0x34] sm:$0xf]
  %v32 = vld [vmem:[%s0 + $0x38] sm:$0xf]
  %v33 = vld [vmem:[%s0 + $0x3c] sm:$0xf]
  %v34 = vld [vmem:[%s0 + $0x40] sm:$0xf]
  %v35 = vld [vmem:[%s0 + $0x44] sm:$0xf]
  %v36 = vld [vmem:[%s0 + $0x48] sm:$0xf]
  %v37 = vld [vmem:[%s0 + $0x4c] sm:$0xf]
  %v38 = vld [vmem:[%s0 + $0x50] sm:$0xf]
  %v39 = vld [vmem:[%s0 + $0x54] sm:$0xf]
  %v40 = vld [vmem:[%s0 + $0x58] sm:$0xf]
  %v41 = vld [vmem:[%s0 + $0x5c] sm:$0xf]
  %v42 = vld [vmem:[%s0 + $0x60] sm:$0xf]
  %v43 = vld [vmem:[%s0 + $0x64] sm:$0xf]
  %v44 = vld [vmem:[%s0 + $0x68] sm:$0xf]
  %v45 = vld [vmem:[%s0 + $0x6c] sm:$0xf]
  %v46 = vld [vmem:[%s0 + $0x70] sm:$0xf]
  %v47 = vld [vmem:[%s0 + $0x74] sm:$0xf]
  %v48 = vld [vmem:[%s0 + $0x78] sm:$0xf]
  %v49 = vld [vmem:[%s0 + $0x7c] sm:$0xf]
  %v50 = vld [vmem:[%s0 + $0x80] sm:$0xf]
  %v51 = vld [vmem:[%s0 + $0x84] sm:$0xf]
  %v52 = vld [vmem:[%s0 + $0x88] sm:$0xf]
  %v53 = vld [vmem:[%s0 + $0x8c] sm:$0xf]
  %v54 = vld [vmem:[%s0 + $0x90] sm:$0xf]
  %v55 = vld [vmem:[%s0 + $0x94] sm:$0xf]
  %v56 = vld [vmem:[%s0 + $0x98] sm:$0xf]
  %v57 = vld [vmem:[%s0 + $0x9c] sm:$0xf]
  %v58 = vld [vmem:[%s0 + $0xa0] sm:$0xf]
  %v59 = vld [vmem:[%s0 + $0xa4] sm:$0xf]
  %v60 = vld [vmem:[%s0 + $0xa8] sm:$0xf]
  %v61 = vld [vmem:[%s0 + $0xac] sm:$0xf]
  %v62 = vld [vmem:[%s0 + $0xb0] sm:$0xf]
  %v63 = vld [vmem:[%s0 + $0xb4] sm:$0xf]
  %v64 = vld [vmem:[%s0 + $0xb8] sm:$0xf]
  %v65 = vld [vmem:[%s0 + $0xbc] sm:$0xf]
  %v66 = vld [vmem:[%s0 + $0xc0] sm:$0xf]
  %v67 = vld [vmem:[%s0 + $0xc4] sm:$0xf]
  %v68 = vld [vmem:[%s0 + $0xc8] sm:$0xf]
  %v69 = vld [vmem:[%s0 + $0xcc] sm:$0xf]
  %v70 = vld [vmem:[%s0 + $0xd0] sm:$0xf]
  %v71 = vld [vmem:[%s0 + $0xd4] sm:$0xf]
  %v72 = vld [vmem:[%s0 + $0xd8] sm:$0xf]
  %v73 = vld [vmem:[%s0 + $0xdc] sm:$0xf]
  %v74 = vld [vmem:[%s0 + $0xe0] sm:$0xf]
  %v75 = vld [vmem:[%s0 + $0xe4] sm:$0xf]
  %v76 = vld [vmem:[%s0 + $0xe8] sm:$0xf]
  %v77 = vld [vmem:[%s0 + $0xec] sm:$0xf]
  %v78 = vld [vmem:[%s0 + $0xf0] sm:$0xf]
  %v79 = vld [vmem:[%s0 + $0xf4] sm:$0xf]
  %v80 = vld [vmem:[%s0 + $0xf8] sm:$0xf]
  %v81 = vld [vmem:[%s0 + $0xfc] sm:$0xf]
  %v82 = vld [vmem:[%s0 + $0x100] sm:$0xf]
  %v83 = vld [vmem:[%s0 + $0x104] sm:$0xf]
  %v84 = vld [vmem:[%s0 + $0x108] sm:$0xf]
  %v85 = vld [vmem:[%s0 + $0x10c] sm:$0xf]
  %v86 = vld [vmem:[%s0 + $0x110] sm:$0xf]
  %v87 = vld [vmem:[%s0 + $0x114] sm:$0xf]
  %v88 = vld [vmem:[%s0 + $0x118] sm:$0xf]
  %v89 = vld [vmem:[%s0 + $0x11c] sm:$0xf]
  %v90 = vld [vmem:[%s0 + $0x120] sm:$0xf]
  %v91 = vld [vmem:[%s0 + $0x124] sm:$0xf]
  %v92 = vld [vmem:[%s0 + $0x128] sm:$0xf]
  %v93 = vld [vmem:[%s0 + $0x12c] sm:$0xf]
  %v94 = vld [vmem:[%s0 + $0x130] sm:$0xf]
  %v95 = vld [vmem:[%s0 + $0x134] sm:$0xf]
  %v96 = vld [vmem:[%s0 + $0x138] sm:$0xf]
  %v97 = vld [vmem:[%s0 + $0x13c] sm:$0xf]
  %v98 = vld [vmem:[%s0 + $0x140] sm:$0xf]
  %v99 = vld [vmem:[%s0 + $0x144] sm:$0xf]
  %v100 = vld [vmem:[%s0 + $0x148] sm:$0xf]
  %v101 = vld [vmem:[%s0 + $0x14c] sm:$0xf]
  %v102 = vld [vmem:[%s0 + $0x150] sm:$0xf]
  %v103 = vld [vmem:[%s0 + $0x154] sm:$0xf]
  %v104 = vld [vmem:[%s0 + $0x158] sm:$0xf]
  %v105 = vld [vmem:[%s0 + $0x15c] sm:$0xf]
  %v106 = vld [vmem:[%s0 + $0x160] sm:$0xf]
  %v107 = vld [vmem:[%s0 + $0x164] sm:$0xf]
  %v108 = vld [vmem:[%s0 + $0x168] sm:$0xf]
  %v109 = vld [vmem:[%s0 + $0x16c] sm:$0xf]
  %v110 = vld [vmem:[%s0 + $0x170] sm:$0xf]
  %v111 = vld [vmem:[%s0 + $0x174] sm:$0xf]
  %v112 = vld [vmem:[%s0 + $0x178] sm:$0xf]
  %v113 = vld [vmem:[%s0 + $0x17c] sm:$0xf]
  %v114 = vld [vmem:[%s0 + $0x180] sm:$0xf]
  %v115 = vld [vmem:[%s0 + $0x184] sm:$0xf]
  %v116 = vld [vmem:[%s0 + $0x188] sm:$0xf]
  %v117 = vld [vmem:[%s0 + $0x18c] sm:$0xf]
  %v118 = vld [vmem:[%s0 + $0x190] sm:$0xf]
  %v119 = vld [vmem:[%s0 + $0x194] sm:$0xf]
  %v120 = vld [vmem:[%s0 + $0x198] sm:$0xf]
  %v121 = vld [vmem:[%s0 + $0x19c] sm:$0xf]
  %v122 = vld [vmem:[%s0 + $0x1a0] sm:$0xf]
  %v123 = vld [vmem:[%s0 + $0x1a4] sm:$0xf]
  %v124 = vld [vmem:[%s0 + $0x1a8] sm:$0xf]
  %v125 = vld [vmem:[%s0 + $0x1ac] sm:$0xf]
  %v126 = vld [vmem:[%s0 + $0x1b0] sm:$0xf]
  %v127 = vld [vmem:[%s0 + $0x1b4] sm:$0xf]
  %v128 = vld [vmem:[%s0 + $0x1b8] sm:$0xf]
  %v129 = vld [vmem:[%s0 + $0x1bc] sm:$0xf]
  %v130 = vld [vmem:[%s0 + $0x1c0] sm:$0xf]
  %v131 = vld [vmem:[%s0 + $0x1c4] sm:$0xf]
  %v132 = vld [vmem:[%s0 + $0x1c8] sm:$0xf]
  %v133 = vld [vmem:[%s0 + $0x1cc] sm:$0xf]
  %v134 = vld [vmem:[%s0 + $0x1d0] sm:$0xf]
  %v135 = vld [vmem:[%s0 + $0x1d4] sm:$0xf]
  %v136 = vld [vmem:[%s0 + $0x1d8] sm:$0xf]
  %v137 = vld [vmem:[%s0 + $0x1dc] sm:$0xf]
  %v138 = vld [vmem:[%s0 + $0x1e0] sm:$0xf]
  %v139 = vld [vmem:[%s0 + $0x1e4] sm:$0xf]
  %v140 = vld [vmem:[%s0 + $0x1e8] sm:$0xf]
  %v141 = vld [vmem:[%s0 + $0x1ec] sm:$0xf]
  %v142 = vld [vmem:[%s0 + $0x1f0] sm:$0xf]
  %v143 = vld [vmem:[%s0 + $0x1f4] sm:$0xf]
  %v144 = vld [vmem:[%s0 + $0x1f8] sm:$0xf]
  %v145 = vld [vmem:[%s0 + $0x1fc] sm:$0xf]
  %v146 = vld [vmem:[%s0 + $0x200] sm:$0xf]
  %v147 = vld [vmem:[%s0 + $0x204] sm:$0xf]
  %v148 = vld [vmem:[%s0 + $0x208] sm:$0xf]
  %v149 = vld [vmem:[%s0 + $0x20c] sm:$0xf]
  %v150 = vld [vmem:[%s0 + $0x210] sm:$0xf]
  %v151 = vld [vmem:[%s0 + $0x214] sm:$0xf]
  %v152 = vld [vmem:[%s0 + $0x218] sm:$0xf]
  %v153 = vld [vmem:[%s0 + $0x21c] sm:$0xf]
  %v154 = vld [vmem:[%s0 + $0x220] sm:$0xf]
  %v155 = vld [vmem:[%s0 + $0x224] sm:$0xf]
  %v156 = vld [vmem:[%s0 + $0x228] sm:$0xf]
  %v157 = vld [vmem:[%s0 + $0x22c] sm:$0xf]
  %v158 = vld [vmem:[%s0 + $0x230] sm:$0xf]
  %v159 = vld [vmem:[%s0 + $0x234] sm:$0xf]
  %v160 = vld [vmem:[%s0 + $0x238] sm:$0xf]
  %v161 = vld [vmem:[%s0 + $0x23c] sm:$0xf]
  %v162 = vld [vmem:[%s0 + $0x240] sm:$0xf]
  %v163 = vld [vmem:[%s0 + $0x244] sm:$0xf]
  %v164 = vld [vmem:[%s0 + $0x248] sm:$0xf]
  %v165 = vld [vmem:[%s0 + $0x24c] sm:$0xf]
  %v166 = vld [vmem:[%s0 + $0x250] sm:$0xf]
  %v167 = vld [vmem:[%s0 + $0x254] sm:$0xf]
  %v168 = vld [vmem:[%s0 + $0x258] sm:$0xf]
  %v169 = vld [vmem:[%s0 + $0x25c] sm:$0xf]
  %v170 = vld [vmem:[%s0 + $0x260] sm:$0xf]
  %v171 = vld [vmem:[%s0 + $0x264] sm:$0xf]
  %v172 = vld [vmem:[%s0 + $0x268] sm:$0xf]
  %v173 = vld [vmem:[%s0 + $0x26c] sm:$0xf]
  %v174 = vld [vmem:[%s0 + $0x270] sm:$0xf]
  %v175 = vld [vmem:[%s0 + $0x274] sm:$0xf]
  %v176 = vld [vmem:[%s0 + $0x278] sm:$0xf]
  %v177 = vld [vmem:[%s0 + $0x27c] sm:$0xf]
  %v178 = vld [vmem:[%s0 + $0x280] sm:$0xf]
  %v179 = vld [vmem:[%s0 + $0x284] sm:$0xf]
  %v180 = vld [vmem:[%s0 + $0x288] sm:$0xf]
  %v181 = vld [vmem:[%s0 + $0x28c] sm:$0xf]
  %v182 = vld [vmem:[%s0 + $0x290] sm:$0xf]
  %v183 = vld [vmem:[%s0 + $0x294] sm:$0xf]
  %v184 = vld [vmem:[%s0 + $0x298] sm:$0xf]
  %v185 = vld [vmem:[%s0 + $0x29c] sm:$0xf]
  %v186 = vld [vmem:[%s0 + $0x2a0] sm:$0xf]
  %v187 = vld [vmem:[%s0 + $0x2a4] sm:$0xf]
  %v188 = vld [vmem:[%s0 + $0x2a8] sm:$0xf]
  %v189 = vld [vmem:[%s0 + $0x2ac] sm:$0xf]
  %v190 = vld [vmem:[%s0 + $0x2b0] sm:$0xf]
  %v191 = vld [vmem:[%s0 + $0x2b4] sm:$0xf]
  %v192 = vld [vmem:[%s0 + $0x2b8] sm:$0xf]
  %v193 = vld [vmem:[%s0 + $0x2bc] sm:$0xf]
  %v194 = vld [vmem:[%s0 + $0x2c0] sm:$0xf]
  %v195 = vld [vmem:[%s0 + $0x2c4] sm:$0xf]
  %v196 = vld [vmem:[%s0 + $0x2c8] sm:$0xf]
  %v197 = vld [vmem:[%s0 + $0x2cc] sm:$0xf]
  %v198 = vld [vmem:[%s0 + $0x2d0] sm:$0xf]
  %v199 = vld [vmem:[%s0 + $0x2d4] sm:$0xf]
  %v200 = vld [vmem:[%s0 + $0x2d8] sm:$0xf]
  %v201 = vld [vmem:[%s0 + $0x2dc] sm:$0xf]
  %v202 = vld [vmem:[%s0 + $0x2e0] sm:$0xf]
  %v203 = vld [vmem:[%s0 + $0x2e4] sm:$0xf]
  %v204 = vld [vmem:[%s0 + $0x2e8] sm:$0xf]
  %v205 = vld [vmem:[%s0 + $0x2ec] sm:$0xf]
  %v206 = vld [vmem:[%s0 + $0x2f0] sm:$0xf]
  %v207 = vld [vmem:[%s0 + $0x2f4] sm:$0xf]
  %v208 = vld [vmem:[%s0 + $0x2f8] sm:$0xf]
  %v209 = vld [vmem:[%s0 + $0x2fc] sm:$0xf]
  %v210 = vld [vmem:[%s1] sm:$0xf]
  %v211 = vld [vmem:[%s1 + $0x4] sm:$0xf]
  %v212 = vld [vmem:[%s1 + $0x8] sm:$0xf]
  %v213 = vld [vmem:[%s1 + $0xc] sm:$0xf]
  %v214 = vld [vmem:[%s1 + $0x10] sm:$0xf]
  %v215 = vld [vmem:[%s1 + $0x14] sm:$0xf]
  %v216 = vld [vmem:[%s1 + $0x18] sm:$0xf]
  %v217 = vld [vmem:[%s1 + $0x1c] sm:$0xf]
  %v218 = vld [vmem:[%s1 + $0x20] sm:$0xf]
  %v219 = vld [vmem:[%s1 + $0x24] sm:$0xf]
  %v220 = vld [vmem:[%s1 + $0x28] sm:$0xf]
  %v221 = vld [vmem:[%s1 + $0x2c] sm:$0xf]
  %v222 = vld [vmem:[%s1 + $0x30] sm:$0xf]
  %v223 = vld [vmem:[%s1 + $0x34] sm:$0xf]
  %v224 = vld [vmem:[%s1 + $0x38] sm:$0xf]
  %v225 = vld [vmem:[%s1 + $0x3c] sm:$0xf]
  %v418 = vunpack.c.l.b16 %v18
  %v419 = vunpack.c.l.b16 %v19
  %v420 = vunpack.c.l.b16 %v20
  %v421 = vunpack.c.l.b16 %v21
  %v422 = vunpack.c.l.b16 %v22
  %v423 = vunpack.c.l.b16 %v23
  %v424 = vunpack.c.l.b16 %v24
  %v425 = vunpack.c.l.b16 %v25
  %v426 = vunpack.c.l.b16 %v26
  %v427 = vunpack.c.l.b16 %v27
  %v428 = vunpack.c.l.b16 %v28
  %v429 = vunpack.c.l.b16 %v29
  %v430 = vunpack.c.l.b16 %v30
  %v431 = vunpack.c.l.b16 %v31
  %v432 = vunpack.c.l.b16 %v32
  %v433 = vunpack.c.l.b16 %v33
  %v434 = vunpack.c.l.b16 %v34
  %v435 = vunpack.c.l.b16 %v35
  %v436 = vunpack.c.l.b16 %v36
  %v437 = vunpack.c.l.b16 %v37
  %v438 = vunpack.c.l.b16 %v38
  %v439 = vunpack.c.l.b16 %v39
  %v440 = vunpack.c.l.b16 %v40
  %v441 = vunpack.c.l.b16 %v41
  %v442 = vunpack.c.l.b16 %v42
  %v443 = vunpack.c.l.b16 %v43
  %v444 = vunpack.c.l.b16 %v44
  %v445 = vunpack.c.l.b16 %v45
  %v446 = vunpack.c.l.b16 %v46
  %v447 = vunpack.c.l.b16 %v47
  %v448 = vunpack.c.l.b16 %v48
  %v449 = vunpack.c.l.b16 %v49
  %v450 = vunpack.c.l.b16 %v50
  %v451 = vunpack.c.l.b16 %v51
  %v452 = vunpack.c.l.b16 %v52
  %v453 = vunpack.c.l.b16 %v53
  %v454 = vunpack.c.l.b16 %v54
  %v455 = vunpack.c.l.b16 %v55
  %v456 = vunpack.c.l.b16 %v56
  %v457 = vunpack.c.l.b16 %v57
  %v458 = vunpack.c.l.b16 %v58
  %v459 = vunpack.c.l.b16 %v59
  %v460 = vunpack.c.l.b16 %v60
  %v461 = vunpack.c.l.b16 %v61
  %v462 = vunpack.c.l.b16 %v62
  %v463 = vunpack.c.l.b16 %v63
  %v464 = vunpack.c.l.b16 %v64
  %v465 = vunpack.c.l.b16 %v65
  %v466 = vunpack.c.l.b16 %v66
  %v467 = vunpack.c.l.b16 %v67
  %v468 = vunpack.c.l.b16 %v68
  %v469 = vunpack.c.l.b16 %v69
  %v470 = vunpack.c.l.b16 %v70
  %v471 = vunpack.c.l.b16 %v71
  %v472 = vunpack.c.l.b16 %v72
  %v473 = vunpack.c.l.b16 %v73
  %v474 = vunpack.c.l.b16 %v74
  %v475 = vunpack.c.l.b16 %v75
  %v476 = vunpack.c.l.b16 %v76
  %v477 = vunpack.c.l.b16 %v77
  %v478 = vunpack.c.l.b16 %v78
  %v479 = vunpack.c.l.b16 %v79
  %v480 = vunpack.c.l.b16 %v80
  %v481 = vunpack.c.l.b16 %v81
  %v482 = vunpack.c.l.b16 %v82
  %v483 = vunpack.c.l.b16 %v83
  %v484 = vunpack.c.l.b16 %v84
  %v485 = vunpack.c.l.b16 %v85
  %v486 = vunpack.c.l.b16 %v86
  %v487 = vunpack.c.l.b16 %v87
  %v488 = vunpack.c.l.b16 %v88
  %v489 = vunpack.c.l.b16 %v89
  %v490 = vunpack.c.l.b16 %v90
  %v491 = vunpack.c.l.b16 %v91
  %v492 = vunpack.c.l.b16 %v92
  %v493 = vunpack.c.l.b16 %v93
  %v494 = vunpack.c.l.b16 %v94
  %v495 = vunpack.c.l.b16 %v95
  %v496 = vunpack.c.l.b16 %v96
  %v497 = vunpack.c.l.b16 %v97
  %v498 = vunpack.c.l.b16 %v98
  %v499 = vunpack.c.l.b16 %v99
  %v500 = vunpack.c.l.b16 %v100
  %v501 = vunpack.c.l.b16 %v101
  %v502 = vunpack.c.l.b16 %v102
  %v503 = vunpack.c.l.b16 %v103
  %v504 = vunpack.c.l.b16 %v104
  %v505 = vunpack.c.l.b16 %v105
  %v506 = vunpack.c.l.b16 %v106
  %v507 = vunpack.c.l.b16 %v107
  %v508 = vunpack.c.l.b16 %v108
  %v509 = vunpack.c.l.b16 %v109
  %v510 = vunpack.c.l.b16 %v110
  %v511 = vunpack.c.l.b16 %v111
  %v512 = vunpack.c.l.b16 %v112
  %v513 = vunpack.c.l.b16 %v113
  %v514 = vunpack.c.l.b16 %v114
  %v515 = vunpack.c.l.b16 %v115
  %v516 = vunpack.c.l.b16 %v116
  %v517 = vunpack.c.l.b16 %v117
  %v518 = vunpack.c.l.b16 %v118
  %v519 = vunpack.c.l.b16 %v119
  %v520 = vunpack.c.l.b16 %v120
  %v521 = vunpack.c.l.b16 %v121
  %v522 = vunpack.c.l.b16 %v122
  %v523 = vunpack.c.l.b16 %v123
  %v524 = vunpack.c.l.b16 %v124
  %v525 = vunpack.c.l.b16 %v125
  %v526 = vunpack.c.l.b16 %v126
  %v527 = vunpack.c.l.b16 %v127
  %v528 = vunpack.c.l.b16 %v128
  %v529 = vunpack.c.l.b16 %v129
  %v530 = vunpack.c.l.b16 %v130
  %v531 = vunpack.c.l.b16 %v131
  %v532 = vunpack.c.l.b16 %v132
  %v533 = vunpack.c.l.b16 %v133
  %v534 = vunpack.c.l.b16 %v134
  %v535 = vunpack.c.l.b16 %v135
  %v536 = vunpack.c.l.b16 %v136
  %v537 = vunpack.c.l.b16 %v137
  %v538 = vunpack.c.l.b16 %v138
  %v539 = vunpack.c.l.b16 %v139
  %v540 = vunpack.c.l.b16 %v140
  %v541 = vunpack.c.l.b16 %v141
  %v542 = vunpack.c.l.b16 %v142
  %v543 = vunpack.c.l.b16 %v143
  %v544 = vunpack.c.l.b16 %v144
  %v545 = vunpack.c.l.b16 %v145
  %v546 = vunpack.c.l.b16 %v146
  %v547 = vunpack.c.l.b16 %v147
  %v548 = vunpack.c.l.b16 %v148
  %v549 = vunpack.c.l.b16 %v149
  %v550 = vunpack.c.l.b16 %v150
  %v551 = vunpack.c.l.b16 %v151
  %v552 = vunpack.c.l.b16 %v152
  %v553 = vunpack.c.l.b16 %v153
  %v554 = vunpack.c.l.b16 %v154
  %v555 = vunpack.c.l.b16 %v155
  %v556 = vunpack.c.l.b16 %v156
  %v557 = vunpack.c.l.b16 %v157
  %v558 = vunpack.c.l.b16 %v158
  %v559 = vunpack.c.l.b16 %v159
  %v560 = vunpack.c.l.b16 %v160
  %v561 = vunpack.c.l.b16 %v161
  %v562 = vunpack.c.l.b16 %v162
  %v563 = vunpack.c.l.b16 %v163
  %v564 = vunpack.c.l.b16 %v164
  %v565 = vunpack.c.l.b16 %v165
  %v566 = vunpack.c.l.b16 %v166
  %v567 = vunpack.c.l.b16 %v167
  %v568 = vunpack.c.l.b16 %v168
  %v569 = vunpack.c.l.b16 %v169
  %v570 = vunpack.c.l.b16 %v170
  %v571 = vunpack.c.l.b16 %v171
  %v572 = vunpack.c.l.b16 %v172
  %v573 = vunpack.c.l.b16 %v173
  %v574 = vunpack.c.l.b16 %v174
  %v575 = vunpack.c.l.b16 %v175
  %v576 = vunpack.c.l.b16 %v176
  %v577 = vunpack.c.l.b16 %v177
  %v578 = vunpack.c.l.b16 %v178
  %v579 = vunpack.c.l.b16 %v179
  %v580 = vunpack.c.l.b16 %v180
  %v581 = vunpack.c.l.b16 %v181
  %v582 = vunpack.c.l.b16 %v182
  %v583 = vunpack.c.l.b16 %v183
  %v584 = vunpack.c.l.b16 %v184
  %v585 = vunpack.c.l.b16 %v185
  %v586 = vunpack.c.l.b16 %v186
  %v587 = vunpack.c.l.b16 %v187
  %v588 = vunpack.c.l.b16 %v188
  %v589 = vunpack.c.l.b16 %v189
  %v590 = vunpack.c.l.b16 %v190
  %v591 = vunpack.c.l.b16 %v191
  %v592 = vunpack.c.l.b16 %v192
  %v593 = vunpack.c.l.b16 %v193
  %v594 = vunpack.c.l.b16 %v194
  %v595 = vunpack.c.l.b16 %v195
  %v596 = vunpack.c.l.b16 %v196
  %v597 = vunpack.c.l.b16 %v197
  %v598 = vunpack.c.l.b16 %v198
  %v599 = vunpack.c.l.b16 %v199
  %v600 = vunpack.c.l.b16 %v200
  %v601 = vunpack.c.l.b16 %v201
  %v602 = vunpack.c.l.b16 %v202
  %v603 = vunpack.c.l.b16 %v203
  %v604 = vunpack.c.l.b16 %v204
  %v605 = vunpack.c.l.b16 %v205
  %v606 = vunpack.c.l.b16 %v206
  %v607 = vunpack.c.l.b16 %v207
  %v608 = vunpack.c.l.b16 %v208
  %v609 = vunpack.c.l.b16 %v209
  %v610 = vpack.c.b16 %v419, %v418
  %v611 = vpack.c.b16 %v421, %v420
  %v612 = vpack.c.b16 %v423, %v422
  %v613 = vpack.c.b16 %v425, %v424
  %v614 = vpack.c.b16 %v427, %v426
  %v615 = vpack.c.b16 %v429, %v428
  %v616 = vpack.c.b16 %v431, %v430
  %v617 = vpack.c.b16 %v433, %v432
  %v618 = vpack.c.b16 %v435, %v434
  %v619 = vpack.c.b16 %v437, %v436
  %v620 = vpack.c.b16 %v439, %v438
  %v621 = vpack.c.b16 %v441, %v440
  %v622 = vpack.c.b16 %v443, %v442
  %v623 = vpack.c.b16 %v445, %v444
  %v624 = vpack.c.b16 %v447, %v446
  %v625 = vpack.c.b16 %v449, %v448
  %v626 = vpack.c.b16 %v451, %v450
  %v627 = vpack.c.b16 %v453, %v452
  %v628 = vpack.c.b16 %v455, %v454
  %v629 = vpack.c.b16 %v457, %v456
  %v630 = vpack.c.b16 %v459, %v458
  %v631 = vpack.c.b16 %v461, %v460
  %v632 = vpack.c.b16 %v463, %v462
  %v633 = vpack.c.b16 %v465, %v464
  %v634 = vpack.c.b16 %v467, %v466
  %v635 = vpack.c.b16 %v469, %v468
  %v636 = vpack.c.b16 %v471, %v470
  %v637 = vpack.c.b16 %v473, %v472
  %v638 = vpack.c.b16 %v475, %v474
  %v639 = vpack.c.b16 %v477, %v476
  %v640 = vpack.c.b16 %v479, %v478
  %v641 = vpack.c.b16 %v481, %v480
  %v642 = vpack.c.b16 %v483, %v482
  %v643 = vpack.c.b16 %v485, %v484
  %v644 = vpack.c.b16 %v487, %v486
  %v645 = vpack.c.b16 %v489, %v488
  %v646 = vpack.c.b16 %v491, %v490
  %v647 = vpack.c.b16 %v493, %v492
  %v648 = vpack.c.b16 %v495, %v494
  %v649 = vpack.c.b16 %v497, %v496
  %v650 = vpack.c.b16 %v499, %v498
  %v651 = vpack.c.b16 %v501, %v500
  %v652 = vpack.c.b16 %v503, %v502
  %v653 = vpack.c.b16 %v505, %v504
  %v654 = vpack.c.b16 %v507, %v506
  %v655 = vpack.c.b16 %v509, %v508
  %v656 = vpack.c.b16 %v511, %v510
  %v657 = vpack.c.b16 %v513, %v512
  %v658 = vpack.c.b16 %v515, %v514
  %v659 = vpack.c.b16 %v517, %v516
  %v660 = vpack.c.b16 %v519, %v518
  %v661 = vpack.c.b16 %v521, %v520
  %v662 = vpack.c.b16 %v523, %v522
  %v663 = vpack.c.b16 %v525, %v524
  %v664 = vpack.c.b16 %v527, %v526
  %v665 = vpack.c.b16 %v529, %v528
  %v666 = vpack.c.b16 %v531, %v530
  %v667 = vpack.c.b16 %v533, %v532
  %v668 = vpack.c.b16 %v535, %v534
  %v669 = vpack.c.b16 %v537, %v536
  %v670 = vpack.c.b16 %v539, %v538
  %v671 = vpack.c.b16 %v541, %v540
  %v672 = vpack.c.b16 %v543, %v542
  %v673 = vpack.c.b16 %v545, %v544
  %v674 = vpack.c.b16 %v547, %v546
  %v675 = vpack.c.b16 %v549, %v548
  %v676 = vpack.c.b16 %v551, %v550
  %v677 = vpack.c.b16 %v553, %v552
  %v678 = vpack.c.b16 %v555, %v554
  %v679 = vpack.c.b16 %v557, %v556
  %v680 = vpack.c.b16 %v559, %v558
  %v681 = vpack.c.b16 %v561, %v560
  %v682 = vpack.c.b16 %v563, %v562
  %v683 = vpack.c.b16 %v565, %v564
  %v684 = vpack.c.b16 %v567, %v566
  %v685 = vpack.c.b16 %v569, %v568
  %v686 = vpack.c.b16 %v571, %v570
  %v687 = vpack.c.b16 %v573, %v572
  %v688 = vpack.c.b16 %v575, %v574
  %v689 = vpack.c.b16 %v577, %v576
  %v690 = vpack.c.b16 %v579, %v578
  %v691 = vpack.c.b16 %v581, %v580
  %v692 = vpack.c.b16 %v583, %v582
  %v693 = vpack.c.b16 %v585, %v584
  %v694 = vpack.c.b16 %v587, %v586
  %v695 = vpack.c.b16 %v589, %v588
  %v696 = vpack.c.b16 %v591, %v590
  %v697 = vpack.c.b16 %v593, %v592
  %v698 = vpack.c.b16 %v595, %v594
  %v699 = vpack.c.b16 %v597, %v596
  %v700 = vpack.c.b16 %v599, %v598
  %v701 = vpack.c.b16 %v601, %v600
  %v702 = vpack.c.b16 %v603, %v602
  %v703 = vpack.c.b16 %v605, %v604
  %v704 = vpack.c.b16 %v607, %v606
  %v705 = vpack.c.b16 %v609, %v608
  %v818 = vunpack.c.l.b16 %v210
  %v819 = vunpack.c.l.b16 %v211
  %v820 = vunpack.c.l.b16 %v212
  %v821 = vunpack.c.l.b16 %v213
  %v822 = vunpack.c.l.b16 %v214
  %v823 = vunpack.c.l.b16 %v215
  %v824 = vunpack.c.l.b16 %v216
  %v825 = vunpack.c.l.b16 %v217
  %v826 = vunpack.c.l.b16 %v218
  %v827 = vunpack.c.l.b16 %v219
  %v828 = vunpack.c.l.b16 %v220
  %v829 = vunpack.c.l.b16 %v221
  %v830 = vunpack.c.l.b16 %v222
  %v831 = vunpack.c.l.b16 %v223
  %v832 = vunpack.c.l.b16 %v224
  %v833 = vunpack.c.l.b16 %v225
  %v834 = vpack.c.b16 %v819, %v818
  %v835 = vpack.c.b16 %v821, %v820
  %v836 = vpack.c.b16 %v823, %v822
  %v837 = vpack.c.b16 %v825, %v824
  %v838 = vpack.c.b16 %v827, %v826
  %v839 = vpack.c.b16 %v829, %v828
  %v840 = vpack.c.b16 %v831, %v830
  %v841 = vpack.c.b16 %v833, %v832
  %850 = vmatprep.subr.bf16.mxu0 0
  %851 = vmatpush1.bf16.msra.mxu0 %v834
  %852 = vmatprep.subr.bf16.mxu0 0
  %853 = vmatpush1.bf16.msra.mxu0 %v835
  %854 = vmatprep.subr.bf16.mxu0 0
  %855 = vmatpush1.bf16.msra.mxu0 %v836
  %856 = vmatprep.subr.bf16.mxu0 0
  %857 = vmatpush1.bf16.msra.mxu0 %v837
  %858 = vmatprep.subr.bf16.mxu0 0
  %859 = vmatpush1.bf16.msra.mxu0 %v838
  %860 = vmatprep.subr.bf16.mxu0 0
  %861 = vmatpush1.bf16.msra.mxu0 %v839
  %862 = vmatprep.subr.bf16.mxu0 0
  %863 = vmatpush1.bf16.msra.mxu0 %v840
  %864 = vmatprep.subr.bf16.mxu0 0
  %865 = vmatpush1.bf16.msra.mxu0 %v841
  %866 = vmatprep.subr.bf16.mxu0 0
  %867 = vmatpush1.bf16.msra.mxu0 0
  %868 = vmatprep.subr.bf16.mxu0 0
  %869 = vmatpush1.bf16.msra.mxu0 0
  %870 = vmatprep.subr.bf16.mxu0 0
  %871 = vmatpush1.bf16.msra.mxu0 0
  %872 = vmatprep.subr.bf16.mxu0 0
  %873 = vmatpush1.bf16.msra.mxu0 0
  %874 = vmatprep.subr.bf16.mxu0 0
  %875 = vmatpush1.bf16.msra.mxu0 0
  %876 = vmatprep.subr.bf16.mxu0 0
  %877 = vmatpush1.bf16.msra.mxu0 0
  %878 = vmatprep.subr.bf16.mxu0 0
  %879 = vmatpush1.bf16.msra.mxu0 0
  %880 = vmatprep.subr.bf16.mxu0 0
  %881 = vmatpush1.bf16.msra.mxu0 0
  %882 = vmatprep.mubr.bf16.mxu0 0
  %883 = vmatmul.mubr.bf16.gmra.mrb[0].mxu0 %v610
  %v884 = vpop.f32.mrb[0].mxu0
  %v885 = vadd.f32 0.0, %v884
  %v886 = vpop.f32.mrb[0].mxu0
  %v887 = vpop.f32.mrb[0].mxu0
  %v888 = vadd.f32 0.0, %v887
  %v889 = vpop.f32.mrb[0].mxu0
  %890 = vmatprep.mubr.bf16.mxu0 0
  %891 = vmatmul.mubr.bf16.gmra.mrb[0].mxu0 %v611
  %v892 = vpop.f32.mrb[0].mxu0
  %v893 = vadd.f32 0.0, %v892
  %v894 = vpop.f32.mrb[0].mxu0
  %v895 = vpop.f32.mrb[0].mxu0
  %v896 = vadd.f32 0.0, %v895
  %v897 = vpop.f32.mrb[0].mxu0
  %898 = vmatprep.mubr.bf16.mxu0 0
  %899 = vmatmul.mubr.bf16.gmra.mrb[0].mxu0 %v612
  %v900 = vpop.f32.mrb[0].mxu0
  %v901 = vadd.f32 0.0, %v900
  %v902 = vpop.f32.mrb[0].mxu0
  %v903 = vpop.f32.mrb[0].mxu0
  %v904 = vadd.f32 0.0, %v903
  %v905 = vpop.f32.mrb[0].mxu0
  %906 = vmatprep.mubr.bf16.mxu0 0
  %907 = vmatmul.mubr.bf16.gmra.mrb[0].mxu0 %v613
  %v908 = vpop.f32.mrb[0].mxu0
  %v909 = vadd.f32 0.0, %v908
  %v910 = vpop.f32.mrb[0].mxu0
  %v911 = vpop.f32.mrb[0].mxu0
  %v912 = vadd.f32 0.0, %v911
  %v913 = vpop.f32.mrb[0].mxu0
  %914 = vmatprep.mubr.bf16.mxu0 0
  %915 = vmatmul.mubr.bf16.gmra.mrb[0].mxu0 %v614
  %v916 = vpop.f32.mrb[0].mxu0
  %v917 = vadd.f32 0.0, %v916
  %v918 = vpop.f32.mrb[0].mxu0
  %v919 = vpop.f32.mrb[0].mxu0
  %v920 = vadd.f32 0.0, %v919
  %v921 = vpop.f32.mrb[0].mxu0
  %922 = vmatprep.mubr.bf16.mxu0 0
  %923 = vmatmul.mubr.bf16.gmra.mrb[0].mxu0 %v615
  %v924 = vpop.f32.mrb[0].mxu0
  %v925 = vadd.f32 0.0, %v924
  %v926 = vpop.f32.mrb[0].mxu0
  %v927 = vpop.f32.mrb[0].mxu0
  %v928 = vadd.f32 0.0, %v927
  %v929 = vpop.f32.mrb[0].mxu0
  %930 = vmatprep.mubr.bf16.mxu0 0
  %931 = vmatmul.mubr.bf16.gmra.mrb[0].mxu0 %v616
  %v932 = vpop.f32.mrb[0].mxu0
  %v933 = vadd.f32 0.0, %v932
  %v934 = vpop.f32.mrb[0].mxu0
  %v935 = vpop.f32.mrb[0].mxu0
  %v936 = vadd.f32 0.0, %v935
  %v937 = vpop.f32.mrb[0].mxu0
  %938 = vmatprep.mubr.bf16.mxu0 0
  %939 = vmatmul.mubr.bf16.gmra.mrb[0].mxu0 %v617
  %v940 = vpop.f32.mrb[0].mxu0
  %v941 = vadd.f32 0.0, %v940
  %v942 = vpop.f32.mrb[0].mxu0
  %v943 = vpop.f32.mrb[0].mxu0
  %v944 = vadd.f32 0.0, %v943
  %v945 = vpop.f32.mrb[0].mxu0
  %946 = vmatprep.mubr.bf16.mxu0 0
  %947 = vmatmul.mubr.bf16.gmra.mrb[0].mxu0 %v618
  %v948 = vpop.f32.mrb[0].mxu0
  %v949 = vadd.f32 0.0, %v948
  %v950 = vpop.f32.mrb[0].mxu0
  %v951 = vpop.f32.mrb[0].mxu0
  %v952 = vadd.f32 0.0, %v951
  %v953 = vpop.f32.mrb[0].mxu0
  %954 = vmatprep.mubr.bf16.mxu0 0
  %955 = vmatmul.mubr.bf16.gmra.mrb[0].mxu0 %v619
  %v956 = vpop.f32.mrb[0].mxu0
  %v957 = vadd.f32 0.0, %v956
  %v958 = vpop.f32.mrb[0].mxu0
  %v959 = vpop.f32.mrb[0].mxu0
  %v960 = vadd.f32 0.0, %v959
  %v961 = vpop.f32.mrb[0].mxu0
  %962 = vmatprep.mubr.bf16.mxu0 0
  %963 = vmatmul.mubr.bf16.gmra.mrb[0].mxu0 %v620
  %v964 = vpop.f32.mrb[0].mxu0
  %v965 = vadd.f32 0.0, %v964
  %v966 = vpop.f32.mrb[0].mxu0
  %v967 = vpop.f32.mrb[0].mxu0
  %v968 = vadd.f32 0.0, %v967
  %v969 = vpop.f32.mrb[0].mxu0
  %970 = vmatprep.mubr.bf16.mxu0 0
  %971 = vmatmul.mubr.bf16.gmra.mrb[0].mxu0 %v621
  %v972 = vpop.f32.mrb[0].mxu0
  %v973 = vadd.f32 0.0, %v972
  %v974 = vpop.f32.mrb[0].mxu0
  %v975 = vpop.f32.mrb[0].mxu0
  %v976 = vadd.f32 0.0, %v975
  %v977 = vpop.f32.mrb[0].mxu0
  %978 = vmatprep.mubr.bf16.mxu0 0
  %979 = vmatmul.mubr.bf16.gmra.mrb[0].mxu0 %v622
  %v980 = vpop.f32.mrb[0].mxu0
  %v981 = vadd.f32 0.0, %v980
  %v982 = vpop.f32.mrb[0].mxu0
  %v983 = vpop.f32.mrb[0].mxu0
  %v984 = vadd.f32 0.0, %v983
  %v985 = vpop.f32.mrb[0].mxu0
  %986 = vmatprep.mubr.bf16.mxu0 0
  %987 = vmatmul.mubr.bf16.gmra.mrb[0].mxu0 %v623
  %v988 = vpop.f32.mrb[0].mxu0
  %v989 = vadd.f32 0.0, %v988
  %v990 = vpop.f32.mrb[0].mxu0
  %v991 = vpop.f32.mrb[0].mxu0
  %v992 = vadd.f32 0.0, %v991
  %v993 = vpop.f32.mrb[0].mxu0
  %994 = vmatprep.mubr.bf16.mxu0 0
  %995 = vmatmul.mubr.bf16.gmra.mrb[0].mxu0 %v624
  %v996 = vpop.f32.mrb[0].mxu0
  %v997 = vadd.f32 0.0, %v996
  %v998 = vpop.f32.mrb[0].mxu0
  %v999 = vpop.f32.mrb[0].mxu0
  %v1000 = vadd.f32 0.0, %v999
  %v1001 = vpop.f32.mrb[0].mxu0
  %1002 = vmatprep.mubr.bf16.mxu0 0
  %1003 = vmatmul.mubr.bf16.gmra.mrb[0].mxu0 %v625
  %v1004 = vpop.f32.mrb[0].mxu0
  %v1005 = vadd.f32 0.0, %v1004
  %v1006 = vpop.f32.mrb[0].mxu0
  %v1007 = vpop.f32.mrb[0].mxu0
  %v1008 = vadd.f32 0.0, %v1007
  %v1009 = vpop.f32.mrb[0].mxu0
  %1010 = vmatprep.mubr.bf16.mxu0 0
  %1011 = vmatmul.mubr.bf16.gmra.mrb[0].mxu0 %v626
  %v1012 = vpop.f32.mrb[0].mxu0
  %v1013 = vadd.f32 0.0, %v1012
  %v1014 = vpop.f32.mrb[0].mxu0
  %v1015 = vpop.f32.mrb[0].mxu0
  %v1016 = vadd.f32 0.0, %v1015
  %v1017 = vpop.f32.mrb[0].mxu0
  %1018 = vmatprep.mubr.bf16.mxu0 0
  %1019 = vmatmul.mubr.bf16.gmra.mrb[0].mxu0 %v627
  %v1020 = vpop.f32.mrb[0].mxu0
  %v1021 = vadd.f32 0.0, %v1020
  %v1022 = vpop.f32.mrb[0].mxu0
  %v1023 = vpop.f32.mrb[0].mxu0
  %v1024 = vadd.f32 0.0, %v1023
  %v1025 = vpop.f32.mrb[0].mxu0
  %1026 = vmatprep.mubr.bf16.mxu0 0
  %1027 = vmatmul.mubr.bf16.gmra.mrb[0].mxu0 %v628
  %v1028 = vpop.f32.mrb[0].mxu0
  %v1029 = vadd.f32 0.0, %v1028
  %v1030 = vpop.f32.mrb[0].mxu0
  %v1031 = vpop.f32.mrb[0].mxu0
  %v1032 = vadd.f32 0.0, %v1031
  %v1033 = vpop.f32.mrb[0].mxu0
  %1034 = vmatprep.mubr.bf16.mxu0 0
  %1035 = vmatmul.mubr.bf16.gmra.mrb[0].mxu0 %v629
  %v1036 = vpop.f32.mrb[0].mxu0
  %v1037 = vadd.f32 0.0, %v1036
  %v1038 = vpop.f32.mrb[0].mxu0
  %v1039 = vpop.f32.mrb[0].mxu0
  %v1040 = vadd.f32 0.0, %v1039
  %v1041 = vpop.f32.mrb[0].mxu0
  %1042 = vmatprep.mubr.bf16.mxu0 0
  %1043 = vmatmul.mubr.bf16.gmra.mrb[0].mxu0 %v630
  %v1044 = vpop.f32.mrb[0].mxu0
  %v1045 = vadd.f32 0.0, %v1044
  %v1046 = vpop.f32.mrb[0].mxu0
  %v1047 = vpop.f32.mrb[0].mxu0
  %v1048 = vadd.f32 0.0, %v1047
  %v1049 = vpop.f32.mrb[0].mxu0
  %1050 = vmatprep.mubr.bf16.mxu0 0
  %1051 = vmatmul.mubr.bf16.gmra.mrb[0].mxu0 %v631
  %v1052 = vpop.f32.mrb[0].mxu0
  %v1053 = vadd.f32 0.0, %v1052
  %v1054 = vpop.f32.mrb[0].mxu0
  %v1055 = vpop.f32.mrb[0].mxu0
  %v1056 = vadd.f32 0.0, %v1055
  %v1057 = vpop.f32.mrb[0].mxu0
  %1058 = vmatprep.mubr.bf16.mxu0 0
  %1059 = vmatmul.mubr.bf16.gmra.mrb[0].mxu0 %v632
  %v1060 = vpop.f32.mrb[0].mxu0
  %v1061 = vadd.f32 0.0, %v1060
  %v1062 = vpop.f32.mrb[0].mxu0
  %v1063 = vpop.f32.mrb[0].mxu0
  %v1064 = vadd.f32 0.0, %v1063
  %v1065 = vpop.f32.mrb[0].mxu0
  %1066 = vmatprep.mubr.bf16.mxu0 0
  %1067 = vmatmul.mubr.bf16.gmra.mrb[0].mxu0 %v633
  %v1068 = vpop.f32.mrb[0].mxu0
  %v1069 = vadd.f32 0.0, %v1068
  %v1070 = vpop.f32.mrb[0].mxu0
  %v1071 = vpop.f32.mrb[0].mxu0
  %v1072 = vadd.f32 0.0, %v1071
  %v1073 = vpop.f32.mrb[0].mxu0
  %1074 = vmatprep.mubr.bf16.mxu0 0
  %1075 = vmatmul.mubr.bf16.gmra.mrb[0].mxu0 %v634
  %v1076 = vpop.f32.mrb[0].mxu0
  %v1077 = vadd.f32 0.0, %v1076
  %v1078 = vpop.f32.mrb[0].mxu0
  %v1079 = vpop.f32.mrb[0].mxu0
  %v1080 = vadd.f32 0.0, %v1079
  %v1081 = vpop.f32.mrb[0].mxu0
  %1082 = vmatprep.mubr.bf16.mxu0 0
  %1083 = vmatmul.mubr.bf16.gmra.mrb[0].mxu0 %v635
  %v1084 = vpop.f32.mrb[0].mxu0
  %v1085 = vadd.f32 0.0, %v1084
  %v1086 = vpop.f32.mrb[0].mxu0
  %v1087 = vpop.f32.mrb[0].mxu0
  %v1088 = vadd.f32 0.0, %v1087
  %v1089 = vpop.f32.mrb[0].mxu0
  %1090 = vmatprep.mubr.bf16.mxu0 0
  %1091 = vmatmul.mubr.bf16.gmra.mrb[0].mxu0 %v636
  %v1092 = vpop.f32.mrb[0].mxu0
  %v1093 = vadd.f32 0.0, %v1092
  %v1094 = vpop.f32.mrb[0].mxu0
  %v1095 = vpop.f32.mrb[0].mxu0
  %v1096 = vadd.f32 0.0, %v1095
  %v1097 = vpop.f32.mrb[0].mxu0
  %1098 = vmatprep.mubr.bf16.mxu0 0
  %1099 = vmatmul.mubr.bf16.gmra.mrb[0].mxu0 %v637
  %v1100 = vpop.f32.mrb[0].mxu0
  %v1101 = vadd.f32 0.0, %v1100
  %v1102 = vpop.f32.mrb[0].mxu0
  %v1103 = vpop.f32.mrb[0].mxu0
  %v1104 = vadd.f32 0.0, %v1103
  %v1105 = vpop.f32.mrb[0].mxu0
  %1106 = vmatprep.mubr.bf16.mxu0 0
  %1107 = vmatmul.mubr.bf16.gmra.mrb[0].mxu0 %v638
  %v1108 = vpop.f32.mrb[0].mxu0
  %v1109 = vadd.f32 0.0, %v1108
  %v1110 = vpop.f32.mrb[0].mxu0
  %v1111 = vpop.f32.mrb[0].mxu0
  %v1112 = vadd.f32 0.0, %v1111
  %v1113 = vpop.f32.mrb[0].mxu0
  %1114 = vmatprep.mubr.bf16.mxu0 0
  %1115 = vmatmul.mubr.bf16.gmra.mrb[0].mxu0 %v639
  %v1116 = vpop.f32.mrb[0].mxu0
  %v1117 = vadd.f32 0.0, %v1116
  %v1118 = vpop.f32.mrb[0].mxu0
  %v1119 = vpop.f32.mrb[0].mxu0
  %v1120 = vadd.f32 0.0, %v1119
  %v1121 = vpop.f32.mrb[0].mxu0
  %1122 = vmatprep.mubr.bf16.mxu0 0
  %1123 = vmatmul.mubr.bf16.gmra.mrb[0].mxu0 %v640
  %v1124 = vpop.f32.mrb[0].mxu0
  %v1125 = vadd.f32 0.0, %v1124
  %v1126 = vpop.f32.mrb[0].mxu0
  %v1127 = vpop.f32.mrb[0].mxu0
  %v1128 = vadd.f32 0.0, %v1127
  %v1129 = vpop.f32.mrb[0].mxu0
  %1130 = vmatprep.mubr.bf16.mxu0 0
  %1131 = vmatmul.mubr.bf16.gmra.mrb[0].mxu0 %v641
  %v1132 = vpop.f32.mrb[0].mxu0
  %v1133 = vadd.f32 0.0, %v1132
  %v1134 = vpop.f32.mrb[0].mxu0
  %v1135 = vpop.f32.mrb[0].mxu0
  %v1136 = vadd.f32 0.0, %v1135
  %v1137 = vpop.f32.mrb[0].mxu0
  %1138 = vmatprep.mubr.bf16.mxu0 0
  %1139 = vmatmul.mubr.bf16.gmra.mrb[0].mxu0 %v642
  %v1140 = vpop.f32.mrb[0].mxu0
  %v1141 = vadd.f32 0.0, %v1140
  %v1142 = vpop.f32.mrb[0].mxu0
  %v1143 = vpop.f32.mrb[0].mxu0
  %v1144 = vadd.f32 0.0, %v1143
  %v1145 = vpop.f32.mrb[0].mxu0
  %1146 = vmatprep.mubr.bf16.mxu0 0
  %1147 = vmatmul.mubr.bf16.gmra.mrb[0].mxu0 %v643
  %v1148 = vpop.f32.mrb[0].mxu0
  %v1149 = vadd.f32 0.0, %v1148
  %v1150 = vpop.f32.mrb[0].mxu0
  %v1151 = vpop.f32.mrb[0].mxu0
  %v1152 = vadd.f32 0.0, %v1151
  %v1153 = vpop.f32.mrb[0].mxu0
  %1154 = vmatprep.mubr.bf16.mxu0 0
  %1155 = vmatmul.mubr.bf16.gmra.mrb[0].mxu0 %v644
  %v1156 = vpop.f32.mrb[0].mxu0
  %v1157 = vadd.f32 0.0, %v1156
  %v1158 = vpop.f32.mrb[0].mxu0
  %v1159 = vpop.f32.mrb[0].mxu0
  %v1160 = vadd.f32 0.0, %v1159
  %v1161 = vpop.f32.mrb[0].mxu0
  %1162 = vmatprep.mubr.bf16.mxu0 0
  %1163 = vmatmul.mubr.bf16.gmra.mrb[0].mxu0 %v645
  %v1164 = vpop.f32.mrb[0].mxu0
  %v1165 = vadd.f32 0.0, %v1164
  %v1166 = vpop.f32.mrb[0].mxu0
  %v1167 = vpop.f32.mrb[0].mxu0
  %v1168 = vadd.f32 0.0, %v1167
  %v1169 = vpop.f32.mrb[0].mxu0
  %1170 = vmatprep.mubr.bf16.mxu0 0
  %1171 = vmatmul.mubr.bf16.gmra.mrb[0].mxu0 %v646
  %v1172 = vpop.f32.mrb[0].mxu0
  %v1173 = vadd.f32 0.0, %v1172
  %v1174 = vpop.f32.mrb[0].mxu0
  %v1175 = vpop.f32.mrb[0].mxu0
  %v1176 = vadd.f32 0.0, %v1175
  %v1177 = vpop.f32.mrb[0].mxu0
  %1178 = vmatprep.mubr.bf16.mxu0 0
  %1179 = vmatmul.mubr.bf16.gmra.mrb[0].mxu0 %v647
  %v1180 = vpop.f32.mrb[0].mxu0
  %v1181 = vadd.f32 0.0, %v1180
  %v1182 = vpop.f32.mrb[0].mxu0
  %v1183 = vpop.f32.mrb[0].mxu0
  %v1184 = vadd.f32 0.0, %v1183
  %v1185 = vpop.f32.mrb[0].mxu0
  %1186 = vmatprep.mubr.bf16.mxu0 0
  %1187 = vmatmul.mubr.bf16.gmra.mrb[0].mxu0 %v648
  %v1188 = vpop.f32.mrb[0].mxu0
  %v1189 = vadd.f32 0.0, %v1188
  %v1190 = vpop.f32.mrb[0].mxu0
  %v1191 = vpop.f32.mrb[0].mxu0
  %v1192 = vadd.f32 0.0, %v1191
  %v1193 = vpop.f32.mrb[0].mxu0
  %1194 = vmatprep.mubr.bf16.mxu0 0
  %1195 = vmatmul.mubr.bf16.gmra.mrb[0].mxu0 %v649
  %v1196 = vpop.f32.mrb[0].mxu0
  %v1197 = vadd.f32 0.0, %v1196
  %v1198 = vpop.f32.mrb[0].mxu0
  %v1199 = vpop.f32.mrb[0].mxu0
  %v1200 = vadd.f32 0.0, %v1199
  %v1201 = vpop.f32.mrb[0].mxu0
  %1202 = vmatprep.mubr.bf16.mxu0 0
  %1203 = vmatmul.mubr.bf16.gmra.mrb[0].mxu0 %v650
  %v1204 = vpop.f32.mrb[0].mxu0
  %v1205 = vadd.f32 0.0, %v1204
  %v1206 = vpop.f32.mrb[0].mxu0
  %v1207 = vpop.f32.mrb[0].mxu0
  %v1208 = vadd.f32 0.0, %v1207
  %v1209 = vpop.f32.mrb[0].mxu0
  %1210 = vmatprep.mubr.bf16.mxu0 0
  %1211 = vmatmul.mubr.bf16.gmra.mrb[0].mxu0 %v651
  %v1212 = vpop.f32.mrb[0].mxu0
  %v1213 = vadd.f32 0.0, %v1212
  %v1214 = vpop.f32.mrb[0].mxu0
  %v1215 = vpop.f32.mrb[0].mxu0
  %v1216 = vadd.f32 0.0, %v1215
  %v1217 = vpop.f32.mrb[0].mxu0
  %1218 = vmatprep.mubr.bf16.mxu0 0
  %1219 = vmatmul.mubr.bf16.gmra.mrb[0].mxu0 %v652
  %v1220 = vpop.f32.mrb[0].mxu0
  %v1221 = vadd.f32 0.0, %v1220
  %v1222 = vpop.f32.mrb[0].mxu0
  %v1223 = vpop.f32.mrb[0].mxu0
  %v1224 = vadd.f32 0.0, %v1223
  %v1225 = vpop.f32.mrb[0].mxu0
  %1226 = vmatprep.mubr.bf16.mxu0 0
  %1227 = vmatmul.mubr.bf16.gmra.mrb[0].mxu0 %v653
  %v1228 = vpop.f32.mrb[0].mxu0
  %v1229 = vadd.f32 0.0, %v1228
  %v1230 = vpop.f32.mrb[0].mxu0
  %v1231 = vpop.f32.mrb[0].mxu0
  %v1232 = vadd.f32 0.0, %v1231
  %v1233 = vpop.f32.mrb[0].mxu0
  %1234 = vmatprep.mubr.bf16.mxu0 0
  %1235 = vmatmul.mubr.bf16.gmra.mrb[0].mxu0 %v654
  %v1236 = vpop.f32.mrb[0].mxu0
  %v1237 = vadd.f32 0.0, %v1236
  %v1238 = vpop.f32.mrb[0].mxu0
  %v1239 = vpop.f32.mrb[0].mxu0
  %v1240 = vadd.f32 0.0, %v1239
  %v1241 = vpop.f32.mrb[0].mxu0
  %1242 = vmatprep.mubr.bf16.mxu0 0
  %1243 = vmatmul.mubr.bf16.gmra.mrb[0].mxu0 %v655
  %v1244 = vpop.f32.mrb[0].mxu0
  %v1245 = vadd.f32 0.0, %v1244
  %v1246 = vpop.f32.mrb[0].mxu0
  %v1247 = vpop.f32.mrb[0].mxu0
  %v1248 = vadd.f32 0.0, %v1247
  %v1249 = vpop.f32.mrb[0].mxu0
  %1250 = vmatprep.mubr.bf16.mxu0 0
  %1251 = vmatmul.mubr.bf16.gmra.mrb[0].mxu0 %v656
  %v1252 = vpop.f32.mrb[0].mxu0
  %v1253 = vadd.f32 0.0, %v1252
  %v1254 = vpop.f32.mrb[0].mxu0
  %v1255 = vpop.f32.mrb[0].mxu0
  %v1256 = vadd.f32 0.0, %v1255
  %v1257 = vpop.f32.mrb[0].mxu0
  %1258 = vmatprep.mubr.bf16.mxu0 0
  %1259 = vmatmul.mubr.bf16.gmra.mrb[0].mxu0 %v657
  %v1260 = vpop.f32.mrb[0].mxu0
  %v1261 = vadd.f32 0.0, %v1260
  %v1262 = vpop.f32.mrb[0].mxu0
  %v1263 = vpop.f32.mrb[0].mxu0
  %v1264 = vadd.f32 0.0, %v1263
  %v1265 = vpop.f32.mrb[0].mxu0
  %1266 = vmatprep.mubr.bf16.mxu0 0
  %1267 = vmatmul.mubr.bf16.gmra.mrb[0].mxu0 %v658
  %v1268 = vpop.f32.mrb[0].mxu0
  %v1269 = vadd.f32 0.0, %v1268
  %v1270 = vpop.f32.mrb[0].mxu0
  %v1271 = vpop.f32.mrb[0].mxu0
  %v1272 = vadd.f32 0.0, %v1271
  %v1273 = vpop.f32.mrb[0].mxu0
  %1274 = vmatprep.mubr.bf16.mxu0 0
  %1275 = vmatmul.mubr.bf16.gmra.mrb[0].mxu0 %v659
  %v1276 = vpop.f32.mrb[0].mxu0
  %v1277 = vadd.f32 0.0, %v1276
  %v1278 = vpop.f32.mrb[0].mxu0
  %v1279 = vpop.f32.mrb[0].mxu0
  %v1280 = vadd.f32 0.0, %v1279
  %v1281 = vpop.f32.mrb[0].mxu0
  %1282 = vmatprep.mubr.bf16.mxu0 0
  %1283 = vmatmul.mubr.bf16.gmra.mrb[0].mxu0 %v660
  %v1284 = vpop.f32.mrb[0].mxu0
  %v1285 = vadd.f32 0.0, %v1284
  %v1286 = vpop.f32.mrb[0].mxu0
  %v1287 = vpop.f32.mrb[0].mxu0
  %v1288 = vadd.f32 0.0, %v1287
  %v1289 = vpop.f32.mrb[0].mxu0
  %1290 = vmatprep.mubr.bf16.mxu0 0
  %1291 = vmatmul.mubr.bf16.gmra.mrb[0].mxu0 %v661
  %v1292 = vpop.f32.mrb[0].mxu0
  %v1293 = vadd.f32 0.0, %v1292
  %v1294 = vpop.f32.mrb[0].mxu0
  %v1295 = vpop.f32.mrb[0].mxu0
  %v1296 = vadd.f32 0.0, %v1295
  %v1297 = vpop.f32.mrb[0].mxu0
  %1298 = vmatprep.mubr.bf16.mxu0 0
  %1299 = vmatmul.mubr.bf16.gmra.mrb[0].mxu0 %v662
  %v1300 = vpop.f32.mrb[0].mxu0
  %v1301 = vadd.f32 0.0, %v1300
  %v1302 = vpop.f32.mrb[0].mxu0
  %v1303 = vpop.f32.mrb[0].mxu0
  %v1304 = vadd.f32 0.0, %v1303
  %v1305 = vpop.f32.mrb[0].mxu0
  %1306 = vmatprep.mubr.bf16.mxu0 0
  %1307 = vmatmul.mubr.bf16.gmra.mrb[0].mxu0 %v663
  %v1308 = vpop.f32.mrb[0].mxu0
  %v1309 = vadd.f32 0.0, %v1308
  %v1310 = vpop.f32.mrb[0].mxu0
  %v1311 = vpop.f32.mrb[0].mxu0
  %v1312 = vadd.f32 0.0, %v1311
  %v1313 = vpop.f32.mrb[0].mxu0
  %1314 = vmatprep.mubr.bf16.mxu0 0
  %1315 = vmatmul.mubr.bf16.gmra.mrb[0].mxu0 %v664
  %v1316 = vpop.f32.mrb[0].mxu0
  %v1317 = vadd.f32 0.0, %v1316
  %v1318 = vpop.f32.mrb[0].mxu0
  %v1319 = vpop.f32.mrb[0].mxu0
  %v1320 = vadd.f32 0.0, %v1319
  %v1321 = vpop.f32.mrb[0].mxu0
  %1322 = vmatprep.mubr.bf16.mxu0 0
  %1323 = vmatmul.mubr.bf16.gmra.mrb[0].mxu0 %v665
  %v1324 = vpop.f32.mrb[0].mxu0
  %v1325 = vadd.f32 0.0, %v1324
  %v1326 = vpop.f32.mrb[0].mxu0
  %v1327 = vpop.f32.mrb[0].mxu0
  %v1328 = vadd.f32 0.0, %v1327
  %v1329 = vpop.f32.mrb[0].mxu0
  %1330 = vmatprep.mubr.bf16.mxu0 0
  %1331 = vmatmul.mubr.bf16.gmra.mrb[0].mxu0 %v666
  %v1332 = vpop.f32.mrb[0].mxu0
  %v1333 = vadd.f32 0.0, %v1332
  %v1334 = vpop.f32.mrb[0].mxu0
  %v1335 = vpop.f32.mrb[0].mxu0
  %v1336 = vadd.f32 0.0, %v1335
  %v1337 = vpop.f32.mrb[0].mxu0
  %1338 = vmatprep.mubr.bf16.mxu0 0
  %1339 = vmatmul.mubr.bf16.gmra.mrb[0].mxu0 %v667
  %v1340 = vpop.f32.mrb[0].mxu0
  %v1341 = vadd.f32 0.0, %v1340
  %v1342 = vpop.f32.mrb[0].mxu0
  %v1343 = vpop.f32.mrb[0].mxu0
  %v1344 = vadd.f32 0.0, %v1343
  %v1345 = vpop.f32.mrb[0].mxu0
  %1346 = vmatprep.mubr.bf16.mxu0 0
  %1347 = vmatmul.mubr.bf16.gmra.mrb[0].mxu0 %v668
  %v1348 = vpop.f32.mrb[0].mxu0
  %v1349 = vadd.f32 0.0, %v1348
  %v1350 = vpop.f32.mrb[0].mxu0
  %v1351 = vpop.f32.mrb[0].mxu0
  %v1352 = vadd.f32 0.0, %v1351
  %v1353 = vpop.f32.mrb[0].mxu0
  %1354 = vmatprep.mubr.bf16.mxu0 0
  %1355 = vmatmul.mubr.bf16.gmra.mrb[0].mxu0 %v669
  %v1356 = vpop.f32.mrb[0].mxu0
  %v1357 = vadd.f32 0.0, %v1356
  %v1358 = vpop.f32.mrb[0].mxu0
  %v1359 = vpop.f32.mrb[0].mxu0
  %v1360 = vadd.f32 0.0, %v1359
  %v1361 = vpop.f32.mrb[0].mxu0
  %1362 = vmatprep.mubr.bf16.mxu0 0
  %1363 = vmatmul.mubr.bf16.gmra.mrb[0].mxu0 %v670
  %v1364 = vpop.f32.mrb[0].mxu0
  %v1365 = vadd.f32 0.0, %v1364
  %v1366 = vpop.f32.mrb[0].mxu0
  %v1367 = vpop.f32.mrb[0].mxu0
  %v1368 = vadd.f32 0.0, %v1367
  %v1369 = vpop.f32.mrb[0].mxu0
  %1370 = vmatprep.mubr.bf16.mxu0 0
  %1371 = vmatmul.mubr.bf16.gmra.mrb[0].mxu0 %v671
  %v1372 = vpop.f32.mrb[0].mxu0
  %v1373 = vadd.f32 0.0, %v1372
  %v1374 = vpop.f32.mrb[0].mxu0
  %v1375 = vpop.f32.mrb[0].mxu0
  %v1376 = vadd.f32 0.0, %v1375
  %v1377 = vpop.f32.mrb[0].mxu0
  %1378 = vmatprep.mubr.bf16.mxu0 0
  %1379 = vmatmul.mubr.bf16.gmra.mrb[0].mxu0 %v672
  %v1380 = vpop.f32.mrb[0].mxu0
  %v1381 = vadd.f32 0.0, %v1380
  %v1382 = vpop.f32.mrb[0].mxu0
  %v1383 = vpop.f32.mrb[0].mxu0
  %v1384 = vadd.f32 0.0, %v1383
  %v1385 = vpop.f32.mrb[0].mxu0
  %1386 = vmatprep.mubr.bf16.mxu0 0
  %1387 = vmatmul.mubr.bf16.gmra.mrb[0].mxu0 %v673
  %v1388 = vpop.f32.mrb[0].mxu0
  %v1389 = vadd.f32 0.0, %v1388
  %v1390 = vpop.f32.mrb[0].mxu0
  %v1391 = vpop.f32.mrb[0].mxu0
  %v1392 = vadd.f32 0.0, %v1391
  %v1393 = vpop.f32.mrb[0].mxu0
  %1394 = vmatprep.mubr.bf16.mxu0 0
  %1395 = vmatmul.mubr.bf16.gmra.mrb[0].mxu0 %v674
  %v1396 = vpop.f32.mrb[0].mxu0
  %v1397 = vadd.f32 0.0, %v1396
  %v1398 = vpop.f32.mrb[0].mxu0
  %v1399 = vpop.f32.mrb[0].mxu0
  %v1400 = vadd.f32 0.0, %v1399
  %v1401 = vpop.f32.mrb[0].mxu0
  %1402 = vmatprep.mubr.bf16.mxu0 0
  %1403 = vmatmul.mubr.bf16.gmra.mrb[0].mxu0 %v675
  %v1404 = vpop.f32.mrb[0].mxu0
  %v1405 = vadd.f32 0.0, %v1404
  %v1406 = vpop.f32.mrb[0].mxu0
  %v1407 = vpop.f32.mrb[0].mxu0
  %v1408 = vadd.f32 0.0, %v1407
  %v1409 = vpop.f32.mrb[0].mxu0
  %1410 = vmatprep.mubr.bf16.mxu0 0
  %1411 = vmatmul.mubr.bf16.gmra.mrb[0].mxu0 %v676
  %v1412 = vpop.f32.mrb[0].mxu0
  %v1413 = vadd.f32 0.0, %v1412
  %v1414 = vpop.f32.mrb[0].mxu0
  %v1415 = vpop.f32.mrb[0].mxu0
  %v1416 = vadd.f32 0.0, %v1415
  %v1417 = vpop.f32.mrb[0].mxu0
  %1418 = vmatprep.mubr.bf16.mxu0 0
  %1419 = vmatmul.mubr.bf16.gmra.mrb[0].mxu0 %v677
  %v1420 = vpop.f32.mrb[0].mxu0
  %v1421 = vadd.f32 0.0, %v1420
  %v1422 = vpop.f32.mrb[0].mxu0
  %v1423 = vpop.f32.mrb[0].mxu0
  %v1424 = vadd.f32 0.0, %v1423
  %v1425 = vpop.f32.mrb[0].mxu0
  %1426 = vmatprep.mubr.bf16.mxu0 0
  %1427 = vmatmul.mubr.bf16.gmra.mrb[0].mxu0 %v678
  %v1428 = vpop.f32.mrb[0].mxu0
  %v1429 = vadd.f32 0.0, %v1428
  %v1430 = vpop.f32.mrb[0].mxu0
  %v1431 = vpop.f32.mrb[0].mxu0
  %v1432 = vadd.f32 0.0, %v1431
  %v1433 = vpop.f32.mrb[0].mxu0
  %1434 = vmatprep.mubr.bf16.mxu0 0
  %1435 = vmatmul.mubr.bf16.gmra.mrb[0].mxu0 %v679
  %v1436 = vpop.f32.mrb[0].mxu0
  %v1437 = vadd.f32 0.0, %v1436
  %v1438 = vpop.f32.mrb[0].mxu0
  %v1439 = vpop.f32.mrb[0].mxu0
  %v1440 = vadd.f32 0.0, %v1439
  %v1441 = vpop.f32.mrb[0].mxu0
  %1442 = vmatprep.mubr.bf16.mxu0 0
  %1443 = vmatmul.mubr.bf16.gmra.mrb[0].mxu0 %v680
  %v1444 = vpop.f32.mrb[0].mxu0
  %v1445 = vadd.f32 0.0, %v1444
  %v1446 = vpop.f32.mrb[0].mxu0
  %v1447 = vpop.f32.mrb[0].mxu0
  %v1448 = vadd.f32 0.0, %v1447
  %v1449 = vpop.f32.mrb[0].mxu0
  %1450 = vmatprep.mubr.bf16.mxu0 0
  %1451 = vmatmul.mubr.bf16.gmra.mrb[0].mxu0 %v681
  %v1452 = vpop.f32.mrb[0].mxu0
  %v1453 = vadd.f32 0.0, %v1452
  %v1454 = vpop.f32.mrb[0].mxu0
  %v1455 = vpop.f32.mrb[0].mxu0
  %v1456 = vadd.f32 0.0, %v1455
  %v1457 = vpop.f32.mrb[0].mxu0
  %1458 = vmatprep.mubr.bf16.mxu0 0
  %1459 = vmatmul.mubr.bf16.gmra.mrb[0].mxu0 %v682
  %v1460 = vpop.f32.mrb[0].mxu0
  %v1461 = vadd.f32 0.0, %v1460
  %v1462 = vpop.f32.mrb[0].mxu0
  %v1463 = vpop.f32.mrb[0].mxu0
  %v1464 = vadd.f32 0.0, %v1463
  %v1465 = vpop.f32.mrb[0].mxu0
  %1466 = vmatprep.mubr.bf16.mxu0 0
  %1467 = vmatmul.mubr.bf16.gmra.mrb[0].mxu0 %v683
  %v1468 = vpop.f32.mrb[0].mxu0
  %v1469 = vadd.f32 0.0, %v1468
  %v1470 = vpop.f32.mrb[0].mxu0
  %v1471 = vpop.f32.mrb[0].mxu0
  %v1472 = vadd.f32 0.0, %v1471
  %v1473 = vpop.f32.mrb[0].mxu0
  %1474 = vmatprep.mubr.bf16.mxu0 0
  %1475 = vmatmul.mubr.bf16.gmra.mrb[0].mxu0 %v684
  %v1476 = vpop.f32.mrb[0].mxu0
  %v1477 = vadd.f32 0.0, %v1476
  %v1478 = vpop.f32.mrb[0].mxu0
  %v1479 = vpop.f32.mrb[0].mxu0
  %v1480 = vadd.f32 0.0, %v1479
  %v1481 = vpop.f32.mrb[0].mxu0
  %1482 = vmatprep.mubr.bf16.mxu0 0
  %1483 = vmatmul.mubr.bf16.gmra.mrb[0].mxu0 %v685
  %v1484 = vpop.f32.mrb[0].mxu0
  %v1485 = vadd.f32 0.0, %v1484
  %v1486 = vpop.f32.mrb[0].mxu0
  %v1487 = vpop.f32.mrb[0].mxu0
  %v1488 = vadd.f32 0.0, %v1487
  %v1489 = vpop.f32.mrb[0].mxu0
  %1490 = vmatprep.mubr.bf16.mxu0 0
  %1491 = vmatmul.mubr.bf16.gmra.mrb[0].mxu0 %v686
  %v1492 = vpop.f32.mrb[0].mxu0
  %v1493 = vadd.f32 0.0, %v1492
  %v1494 = vpop.f32.mrb[0].mxu0
  %v1495 = vpop.f32.mrb[0].mxu0
  %v1496 = vadd.f32 0.0, %v1495
  %v1497 = vpop.f32.mrb[0].mxu0
  %1498 = vmatprep.mubr.bf16.mxu0 0
  %1499 = vmatmul.mubr.bf16.gmra.mrb[0].mxu0 %v687
  %v1500 = vpop.f32.mrb[0].mxu0
  %v1501 = vadd.f32 0.0, %v1500
  %v1502 = vpop.f32.mrb[0].mxu0
  %v1503 = vpop.f32.mrb[0].mxu0
  %v1504 = vadd.f32 0.0, %v1503
  %v1505 = vpop.f32.mrb[0].mxu0
  %1506 = vmatprep.mubr.bf16.mxu0 0
  %1507 = vmatmul.mubr.bf16.gmra.mrb[0].mxu0 %v688
  %v1508 = vpop.f32.mrb[0].mxu0
  %v1509 = vadd.f32 0.0, %v1508
  %v1510 = vpop.f32.mrb[0].mxu0
  %v1511 = vpop.f32.mrb[0].mxu0
  %v1512 = vadd.f32 0.0, %v1511
  %v1513 = vpop.f32.mrb[0].mxu0
  %1514 = vmatprep.mubr.bf16.mxu0 0
  %1515 = vmatmul.mubr.bf16.gmra.mrb[0].mxu0 %v689
  %v1516 = vpop.f32.mrb[0].mxu0
  %v1517 = vadd.f32 0.0, %v1516
  %v1518 = vpop.f32.mrb[0].mxu0
  %v1519 = vpop.f32.mrb[0].mxu0
  %v1520 = vadd.f32 0.0, %v1519
  %v1521 = vpop.f32.mrb[0].mxu0
  %1522 = vmatprep.mubr.bf16.mxu0 0
  %1523 = vmatmul.mubr.bf16.gmra.mrb[0].mxu0 %v690
  %v1524 = vpop.f32.mrb[0].mxu0
  %v1525 = vadd.f32 0.0, %v1524
  %v1526 = vpop.f32.mrb[0].mxu0
  %v1527 = vpop.f32.mrb[0].mxu0
  %v1528 = vadd.f32 0.0, %v1527
  %v1529 = vpop.f32.mrb[0].mxu0
  %1530 = vmatprep.mubr.bf16.mxu0 0
  %1531 = vmatmul.mubr.bf16.gmra.mrb[0].mxu0 %v691
  %v1532 = vpop.f32.mrb[0].mxu0
  %v1533 = vadd.f32 0.0, %v1532
  %v1534 = vpop.f32.mrb[0].mxu0
  %v1535 = vpop.f32.mrb[0].mxu0
  %v1536 = vadd.f32 0.0, %v1535
  %v1537 = vpop.f32.mrb[0].mxu0
  %1538 = vmatprep.mubr.bf16.mxu0 0
  %1539 = vmatmul.mubr.bf16.gmra.mrb[0].mxu0 %v692
  %v1540 = vpop.f32.mrb[0].mxu0
  %v1541 = vadd.f32 0.0, %v1540
  %v1542 = vpop.f32.mrb[0].mxu0
  %v1543 = vpop.f32.mrb[0].mxu0
  %v1544 = vadd.f32 0.0, %v1543
  %v1545 = vpop.f32.mrb[0].mxu0
  %1546 = vmatprep.mubr.bf16.mxu0 0
  %1547 = vmatmul.mubr.bf16.gmra.mrb[0].mxu0 %v693
  %v1548 = vpop.f32.mrb[0].mxu0
  %v1549 = vadd.f32 0.0, %v1548
  %v1550 = vpop.f32.mrb[0].mxu0
  %v1551 = vpop.f32.mrb[0].mxu0
  %v1552 = vadd.f32 0.0, %v1551
  %v1553 = vpop.f32.mrb[0].mxu0
  %1554 = vmatprep.mubr.bf16.mxu0 0
  %1555 = vmatmul.mubr.bf16.gmra.mrb[0].mxu0 %v694
  %v1556 = vpop.f32.mrb[0].mxu0
  %v1557 = vadd.f32 0.0, %v1556
  %v1558 = vpop.f32.mrb[0].mxu0
  %v1559 = vpop.f32.mrb[0].mxu0
  %v1560 = vadd.f32 0.0, %v1559
  %v1561 = vpop.f32.mrb[0].mxu0
  %1562 = vmatprep.mubr.bf16.mxu0 0
  %1563 = vmatmul.mubr.bf16.gmra.mrb[0].mxu0 %v695
  %v1564 = vpop.f32.mrb[0].mxu0
  %v1565 = vadd.f32 0.0, %v1564
  %v1566 = vpop.f32.mrb[0].mxu0
  %v1567 = vpop.f32.mrb[0].mxu0
  %v1568 = vadd.f32 0.0, %v1567
  %v1569 = vpop.f32.mrb[0].mxu0
  %1570 = vmatprep.mubr.bf16.mxu0 0
  %1571 = vmatmul.mubr.bf16.gmra.mrb[0].mxu0 %v696
  %v1572 = vpop.f32.mrb[0].mxu0
  %v1573 = vadd.f32 0.0, %v1572
  %v1574 = vpop.f32.mrb[0].mxu0
  %v1575 = vpop.f32.mrb[0].mxu0
  %v1576 = vadd.f32 0.0, %v1575
  %v1577 = vpop.f32.mrb[0].mxu0
  %1578 = vmatprep.mubr.bf16.mxu0 0
  %1579 = vmatmul.mubr.bf16.gmra.mrb[0].mxu0 %v697
  %v1580 = vpop.f32.mrb[0].mxu0
  %v1581 = vadd.f32 0.0, %v1580
  %v1582 = vpop.f32.mrb[0].mxu0
  %v1583 = vpop.f32.mrb[0].mxu0
  %v1584 = vadd.f32 0.0, %v1583
  %v1585 = vpop.f32.mrb[0].mxu0
  %1586 = vmatprep.mubr.bf16.mxu0 0
  %1587 = vmatmul.mubr.bf16.gmra.mrb[0].mxu0 %v698
  %v1588 = vpop.f32.mrb[0].mxu0
  %v1589 = vadd.f32 0.0, %v1588
  %v1590 = vpop.f32.mrb[0].mxu0
  %v1591 = vpop.f32.mrb[0].mxu0
  %v1592 = vadd.f32 0.0, %v1591
  %v1593 = vpop.f32.mrb[0].mxu0
  %1594 = vmatprep.mubr.bf16.mxu0 0
  %1595 = vmatmul.mubr.bf16.gmra.mrb[0].mxu0 %v699
  %v1596 = vpop.f32.mrb[0].mxu0
  %v1597 = vadd.f32 0.0, %v1596
  %v1598 = vpop.f32.mrb[0].mxu0
  %v1599 = vpop.f32.mrb[0].mxu0
  %v1600 = vadd.f32 0.0, %v1599
  %v1601 = vpop.f32.mrb[0].mxu0
  %1602 = vmatprep.mubr.bf16.mxu0 0
  %1603 = vmatmul.mubr.bf16.gmra.mrb[0].mxu0 %v700
  %v1604 = vpop.f32.mrb[0].mxu0
  %v1605 = vadd.f32 0.0, %v1604
  %v1606 = vpop.f32.mrb[0].mxu0
  %v1607 = vpop.f32.mrb[0].mxu0
  %v1608 = vadd.f32 0.0, %v1607
  %v1609 = vpop.f32.mrb[0].mxu0
  %1610 = vmatprep.mubr.bf16.mxu0 0
  %1611 = vmatmul.mubr.bf16.gmra.mrb[0].mxu0 %v701
  %v1612 = vpop.f32.mrb[0].mxu0
  %v1613 = vadd.f32 0.0, %v1612
  %v1614 = vpop.f32.mrb[0].mxu0
  %v1615 = vpop.f32.mrb[0].mxu0
  %v1616 = vadd.f32 0.0, %v1615
  %v1617 = vpop.f32.mrb[0].mxu0
  %1618 = vmatprep.mubr.bf16.mxu0 0
  %1619 = vmatmul.mubr.bf16.gmra.mrb[0].mxu0 %v702
  %v1620 = vpop.f32.mrb[0].mxu0
  %v1621 = vadd.f32 0.0, %v1620
  %v1622 = vpop.f32.mrb[0].mxu0
  %v1623 = vpop.f32.mrb[0].mxu0
  %v1624 = vadd.f32 0.0, %v1623
  %v1625 = vpop.f32.mrb[0].mxu0
  %1626 = vmatprep.mubr.bf16.mxu0 0
  %1627 = vmatmul.mubr.bf16.gmra.mrb[0].mxu0 %v703
  %v1628 = vpop.f32.mrb[0].mxu0
  %v1629 = vadd.f32 0.0, %v1628
  %v1630 = vpop.f32.mrb[0].mxu0
  %v1631 = vpop.f32.mrb[0].mxu0
  %v1632 = vadd.f32 0.0, %v1631
  %v1633 = vpop.f32.mrb[0].mxu0
  %1634 = vmatprep.mubr.bf16.mxu0 0
  %1635 = vmatmul.mubr.bf16.gmra.mrb[0].mxu0 %v704
  %v1636 = vpop.f32.mrb[0].mxu0
  %v1637 = vadd.f32 0.0, %v1636
  %v1638 = vpop.f32.mrb[0].mxu0
  %v1639 = vpop.f32.mrb[0].mxu0
  %v1640 = vadd.f32 0.0, %v1639
  %v1641 = vpop.f32.mrb[0].mxu0
  %1642 = vmatprep.mubr.bf16.mxu0 0
  %1643 = vmatmul.mubr.bf16.gmra.mrb[0].mxu0 %v705
  %v1644 = vpop.f32.mrb[0].mxu0
  %v1645 = vadd.f32 0.0, %v1644
  %v1646 = vpop.f32.mrb[0].mxu0
  %v1647 = vpop.f32.mrb[0].mxu0
  %v1648 = vadd.f32 0.0, %v1647
  %v1649 = vpop.f32.mrb[0].mxu0
  %1650 = vdwg.mxu0
  %v1651 = vadd.f32 %v885, %v888
  %v1652 = vadd.f32 %v1651, %v893
  %v1653 = vadd.f32 %v1652, %v896
  %v1654 = vadd.f32 %v1653, %v901
  %v1655 = vadd.f32 %v1654, %v904
  %v1656 = vadd.f32 %v1655, %v909
  %v1657 = vadd.f32 %v1656, %v912
  %v1658 = vadd.f32 %v1657, %v917
  %v1659 = vadd.f32 %v1658, %v920
  %v1660 = vadd.f32 %v1659, %v925
  %v1661 = vadd.f32 %v1660, %v928
  %v1662 = vadd.f32 %v1661, %v933
  %v1663 = vadd.f32 %v1662, %v936
  %v1664 = vadd.f32 %v1663, %v941
  %v1665 = vadd.f32 %v1664, %v944
  %v1666 = vadd.f32 %v1665, %v949
  %v1667 = vadd.f32 %v1666, %v952
  %v1668 = vadd.f32 %v1667, %v957
  %v1669 = vadd.f32 %v1668, %v960
  %v1670 = vadd.f32 %v1669, %v965
  %v1671 = vadd.f32 %v1670, %v968
  %v1672 = vadd.f32 %v1671, %v973
  %v1673 = vadd.f32 %v1672, %v976
  %v1674 = vadd.f32 %v1673, %v981
  %v1675 = vadd.f32 %v1674, %v984
  %v1676 = vadd.f32 %v1675, %v989
  %v1677 = vadd.f32 %v1676, %v992
  %v1678 = vadd.f32 %v1677, %v997
  %v1679 = vadd.f32 %v1678, %v1000
  %v1680 = vadd.f32 %v1679, %v1005
  %v1681 = vadd.f32 %v1680, %v1008
  %v1682 = vadd.f32 %v1681, %v1013
  %v1683 = vadd.f32 %v1682, %v1016
  %v1684 = vadd.f32 %v1683, %v1021
  %v1685 = vadd.f32 %v1684, %v1024
  %v1686 = vadd.f32 %v1685, %v1029
  %v1687 = vadd.f32 %v1686, %v1032
  %v1688 = vadd.f32 %v1687, %v1037
  %v1689 = vadd.f32 %v1688, %v1040
  %v1690 = vadd.f32 %v1689, %v1045
  %v1691 = vadd.f32 %v1690, %v1048
  %v1692 = vadd.f32 %v1691, %v1053
  %v1693 = vadd.f32 %v1692, %v1056
  %v1694 = vadd.f32 %v1693, %v1061
  %v1695 = vadd.f32 %v1694, %v1064
  %v1696 = vadd.f32 %v1695, %v1069
  %v1697 = vadd.f32 %v1696, %v1072
  %v1698 = vadd.f32 %v1697, %v1077
  %v1699 = vadd.f32 %v1698, %v1080
  %v1700 = vadd.f32 %v1699, %v1085
  %v1701 = vadd.f32 %v1700, %v1088
  %v1702 = vadd.f32 %v1701, %v1093
  %v1703 = vadd.f32 %v1702, %v1096
  %v1704 = vadd.f32 %v1703, %v1101
  %v1705 = vadd.f32 %v1704, %v1104
  %v1706 = vadd.f32 %v1705, %v1109
  %v1707 = vadd.f32 %v1706, %v1112
  %v1708 = vadd.f32 %v1707, %v1117
  %v1709 = vadd.f32 %v1708, %v1120
  %v1710 = vadd.f32 %v1709, %v1125
  %v1711 = vadd.f32 %v1710, %v1128
  %v1712 = vadd.f32 %v1711, %v1133
  %v1713 = vadd.f32 %v1712, %v1136
  %v1714 = vadd.f32 %v1713, %v1141
  %v1715 = vadd.f32 %v1714, %v1144
  %v1716 = vadd.f32 %v1715, %v1149
  %v1717 = vadd.f32 %v1716, %v1152
  %v1718 = vadd.f32 %v1717, %v1157
  %v1719 = vadd.f32 %v1718, %v1160
  %v1720 = vadd.f32 %v1719, %v1165
  %v1721 = vadd.f32 %v1720, %v1168
  %v1722 = vadd.f32 %v1721, %v1173
  %v1723 = vadd.f32 %v1722, %v1176
  %v1724 = vadd.f32 %v1723, %v1181
  %v1725 = vadd.f32 %v1724, %v1184
  %v1726 = vadd.f32 %v1725, %v1189
  %v1727 = vadd.f32 %v1726, %v1192
  %v1728 = vadd.f32 %v1727, %v1197
  %v1729 = vadd.f32 %v1728, %v1200
  %v1730 = vadd.f32 %v1729, %v1205
  %v1731 = vadd.f32 %v1730, %v1208
  %v1732 = vadd.f32 %v1731, %v1213
  %v1733 = vadd.f32 %v1732, %v1216
  %v1734 = vadd.f32 %v1733, %v1221
  %v1735 = vadd.f32 %v1734, %v1224
  %v1736 = vadd.f32 %v1735, %v1229
  %v1737 = vadd.f32 %v1736, %v1232
  %v1738 = vadd.f32 %v1737, %v1237
  %v1739 = vadd.f32 %v1738, %v1240
  %v1740 = vadd.f32 %v1739, %v1245
  %v1741 = vadd.f32 %v1740, %v1248
  %v1742 = vadd.f32 %v1741, %v1253
  %v1743 = vadd.f32 %v1742, %v1256
  %v1744 = vadd.f32 %v1743, %v1261
  %v1745 = vadd.f32 %v1744, %v1264
  %v1746 = vadd.f32 %v1745, %v1269
  %v1747 = vadd.f32 %v1746, %v1272
  %v1748 = vadd.f32 %v1747, %v1277
  %v1749 = vadd.f32 %v1748, %v1280
  %v1750 = vadd.f32 %v1749, %v1285
  %v1751 = vadd.f32 %v1750, %v1288
  %v1752 = vadd.f32 %v1751, %v1293
  %v1753 = vadd.f32 %v1752, %v1296
  %v1754 = vadd.f32 %v1753, %v1301
  %v1755 = vadd.f32 %v1754, %v1304
  %v1756 = vadd.f32 %v1755, %v1309
  %v1757 = vadd.f32 %v1756, %v1312
  %v1758 = vadd.f32 %v1757, %v1317
  %v1759 = vadd.f32 %v1758, %v1320
  %v1760 = vadd.f32 %v1759, %v1325
  %v1761 = vadd.f32 %v1760, %v1328
  %v1762 = vadd.f32 %v1761, %v1333
  %v1763 = vadd.f32 %v1762, %v1336
  %v1764 = vadd.f32 %v1763, %v1341
  %v1765 = vadd.f32 %v1764, %v1344
  %v1766 = vadd.f32 %v1765, %v1349
  %v1767 = vadd.f32 %v1766, %v1352
  %v1768 = vadd.f32 %v1767, %v1357
  %v1769 = vadd.f32 %v1768, %v1360
  %v1770 = vadd.f32 %v1769, %v1365
  %v1771 = vadd.f32 %v1770, %v1368
  %v1772 = vadd.f32 %v1771, %v1373
  %v1773 = vadd.f32 %v1772, %v1376
  %v1774 = vadd.f32 %v1773, %v1381
  %v1775 = vadd.f32 %v1774, %v1384
  %v1776 = vadd.f32 %v1775, %v1389
  %v1777 = vadd.f32 %v1776, %v1392
  %v1778 = vadd.f32 %v1777, %v1397
  %v1779 = vadd.f32 %v1778, %v1400
  %v1780 = vadd.f32 %v1779, %v1405
  %v1781 = vadd.f32 %v1780, %v1408
  %v1782 = vadd.f32 %v1781, %v1413
  %v1783 = vadd.f32 %v1782, %v1416
  %v1784 = vadd.f32 %v1783, %v1421
  %v1785 = vadd.f32 %v1784, %v1424
  %v1786 = vadd.f32 %v1785, %v1429
  %v1787 = vadd.f32 %v1786, %v1432
  %v1788 = vadd.f32 %v1787, %v1437
  %v1789 = vadd.f32 %v1788, %v1440
  %v1790 = vadd.f32 %v1789, %v1445
  %v1791 = vadd.f32 %v1790, %v1448
  %v1792 = vadd.f32 %v1791, %v1453
  %v1793 = vadd.f32 %v1792, %v1456
  %v1794 = vadd.f32 %v1793, %v1461
  %v1795 = vadd.f32 %v1794, %v1464
  %v1796 = vadd.f32 %v1795, %v1469
  %v1797 = vadd.f32 %v1796, %v1472
  %v1798 = vadd.f32 %v1797, %v1477
  %v1799 = vadd.f32 %v1798, %v1480
  %v1800 = vadd.f32 %v1799, %v1485
  %v1801 = vadd.f32 %v1800, %v1488
  %v1802 = vadd.f32 %v1801, %v1493
  %v1803 = vadd.f32 %v1802, %v1496
  %v1804 = vadd.f32 %v1803, %v1501
  %v1805 = vadd.f32 %v1804, %v1504
  %v1806 = vadd.f32 %v1805, %v1509
  %v1807 = vadd.f32 %v1806, %v1512
  %v1808 = vadd.f32 %v1807, %v1517
  %v1809 = vadd.f32 %v1808, %v1520
  %v1810 = vadd.f32 %v1809, %v1525
  %v1811 = vadd.f32 %v1810, %v1528
  %v1812 = vadd.f32 %v1811, %v1533
  %v1813 = vadd.f32 %v1812, %v1536
  %v1814 = vadd.f32 %v1813, %v1541
  %v1815 = vadd.f32 %v1814, %v1544
  %v1816 = vadd.f32 %v1815, %v1549
  %v1817 = vadd.f32 %v1816, %v1552
  %v1818 = vadd.f32 %v1817, %v1557
  %v1819 = vadd.f32 %v1818, %v1560
  %v1820 = vadd.f32 %v1819, %v1565
  %v1821 = vadd.f32 %v1820, %v1568
  %v1822 = vadd.f32 %v1821, %v1573
  %v1823 = vadd.f32 %v1822, %v1576
  %v1824 = vadd.f32 %v1823, %v1581
  %v1825 = vadd.f32 %v1824, %v1584
  %v1826 = vadd.f32 %v1825, %v1589
  %v1827 = vadd.f32 %v1826, %v1592
  %v1828 = vadd.f32 %v1827, %v1597
  %v1829 = vadd.f32 %v1828, %v1600
  %v1830 = vadd.f32 %v1829, %v1605
  %v1831 = vadd.f32 %v1830, %v1608
  %v1832 = vadd.f32 %v1831, %v1613
  %v1833 = vadd.f32 %v1832, %v1616
  %v1834 = vadd.f32 %v1833, %v1621
  %v1835 = vadd.f32 %v1834, %v1624
  %v1836 = vadd.f32 %v1835, %v1629
  %v1837 = vadd.f32 %v1836, %v1632
  %v1838 = vadd.f32 %v1837, %v1637
  %v1839 = vadd.f32 %v1838, %v1640
  %v1840 = vadd.f32 %v1839, %v1645
  %v1841 = vadd.f32 %v1840, %v1648
  %v1842 = vrot.slane %v1841, 4
  %v1843 = vadd.f32 %v1841, %v1842
  %v1844 = vrot.slane %v1843, 2
  %v1845 = vadd.f32 %v1843, %v1844
  %v1846 = vrot.slane %v1845, 1
  %v1847 = vadd.f32 %v1845, %v1846
  %v1848 = vmul.f32 %v1847, 0.0006510417
  %v1849 = vsub.f32 %v885, %v1848
  %v1850 = vsub.f32 %v888, %v1848
  %v1851 = vsub.f32 %v893, %v1848
  %v1852 = vsub.f32 %v896, %v1848
  %v1853 = vsub.f32 %v901, %v1848
  %v1854 = vsub.f32 %v904, %v1848
  %v1855 = vsub.f32 %v909, %v1848
  %v1856 = vsub.f32 %v912, %v1848
  %v1857 = vsub.f32 %v917, %v1848
  %v1858 = vsub.f32 %v920, %v1848
  %v1859 = vsub.f32 %v925, %v1848
  %v1860 = vsub.f32 %v928, %v1848
  %v1861 = vsub.f32 %v933, %v1848
  %v1862 = vsub.f32 %v936, %v1848
  %v1863 = vsub.f32 %v941, %v1848
  %v1864 = vsub.f32 %v944, %v1848
  %v1865 = vsub.f32 %v949, %v1848
  %v1866 = vsub.f32 %v952, %v1848
  %v1867 = vsub.f32 %v957, %v1848
  %v1868 = vsub.f32 %v960, %v1848
  %v1869 = vsub.f32 %v965, %v1848
  %v1870 = vsub.f32 %v968, %v1848
  %v1871 = vsub.f32 %v973, %v1848
  %v1872 = vsub.f32 %v976, %v1848
  %v1873 = vsub.f32 %v981, %v1848
  %v1874 = vsub.f32 %v984, %v1848
  %v1875 = vsub.f32 %v989, %v1848
  %v1876 = vsub.f32 %v992, %v1848
  %v1877 = vsub.f32 %v997, %v1848
  %v1878 = vsub.f32 %v1000, %v1848
  %v1879 = vsub.f32 %v1005, %v1848
  %v1880 = vsub.f32 %v1008, %v1848
  %v1881 = vsub.f32 %v1013, %v1848
  %v1882 = vsub.f32 %v1016, %v1848
  %v1883 = vsub.f32 %v1021, %v1848
  %v1884 = vsub.f32 %v1024, %v1848
  %v1885 = vsub.f32 %v1029, %v1848
  %v1886 = vsub.f32 %v1032, %v1848
  %v1887 = vsub.f32 %v1037, %v1848
  %v1888 = vsub.f32 %v1040, %v1848
  %v1889 = vsub.f32 %v1045, %v1848
  %v1890 = vsub.f32 %v1048, %v1848
  %v1891 = vsub.f32 %v1053, %v1848
  %v1892 = vsub.f32 %v1056, %v1848
  %v1893 = vsub.f32 %v1061, %v1848
  %v1894 = vsub.f32 %v1064, %v1848
  %v1895 = vsub.f32 %v1069, %v1848
  %v1896 = vsub.f32 %v1072, %v1848
  %v1897 = vsub.f32 %v1077, %v1848
  %v1898 = vsub.f32 %v1080, %v1848
  %v1899 = vsub.f32 %v1085, %v1848
  %v1900 = vsub.f32 %v1088, %v1848
  %v1901 = vsub.f32 %v1093, %v1848
  %v1902 = vsub.f32 %v1096, %v1848
  %v1903 = vsub.f32 %v1101, %v1848
  %v1904 = vsub.f32 %v1104, %v1848
  %v1905 = vsub.f32 %v1109, %v1848
  %v1906 = vsub.f32 %v1112, %v1848
  %v1907 = vsub.f32 %v1117, %v1848
  %v1908 = vsub.f32 %v1120, %v1848
  %v1909 = vsub.f32 %v1125, %v1848
  %v1910 = vsub.f32 %v1128, %v1848
  %v1911 = vsub.f32 %v1133, %v1848
  %v1912 = vsub.f32 %v1136, %v1848
  %v1913 = vsub.f32 %v1141, %v1848
  %v1914 = vsub.f32 %v1144, %v1848
  %v1915 = vsub.f32 %v1149, %v1848
  %v1916 = vsub.f32 %v1152, %v1848
  %v1917 = vsub.f32 %v1157, %v1848
  %v1918 = vsub.f32 %v1160, %v1848
  %v1919 = vsub.f32 %v1165, %v1848
  %v1920 = vsub.f32 %v1168, %v1848
  %v1921 = vsub.f32 %v1173, %v1848
  %v1922 = vsub.f32 %v1176, %v1848
  %v1923 = vsub.f32 %v1181, %v1848
  %v1924 = vsub.f32 %v1184, %v1848
  %v1925 = vsub.f32 %v1189, %v1848
  %v1926 = vsub.f32 %v1192, %v1848
  %v1927 = vsub.f32 %v1197, %v1848
  %v1928 = vsub.f32 %v1200, %v1848
  %v1929 = vsub.f32 %v1205, %v1848
  %v1930 = vsub.f32 %v1208, %v1848
  %v1931 = vsub.f32 %v1213, %v1848
  %v1932 = vsub.f32 %v1216, %v1848
  %v1933 = vsub.f32 %v1221, %v1848
  %v1934 = vsub.f32 %v1224, %v1848
  %v1935 = vsub.f32 %v1229, %v1848
  %v1936 = vsub.f32 %v1232, %v1848
  %v1937 = vsub.f32 %v1237, %v1848
  %v1938 = vsub.f32 %v1240, %v1848
  %v1939 = vsub.f32 %v1245, %v1848
  %v1940 = vsub.f32 %v1248, %v1848
  %v1941 = vsub.f32 %v1253, %v1848
  %v1942 = vsub.f32 %v1256, %v1848
  %v1943 = vsub.f32 %v1261, %v1848
  %v1944 = vsub.f32 %v1264, %v1848
  %v1945 = vsub.f32 %v1269, %v1848
  %v1946 = vsub.f32 %v1272, %v1848
  %v1947 = vsub.f32 %v1277, %v1848
  %v1948 = vsub.f32 %v1280, %v1848
  %v1949 = vsub.f32 %v1285, %v1848
  %v1950 = vsub.f32 %v1288, %v1848
  %v1951 = vsub.f32 %v1293, %v1848
  %v1952 = vsub.f32 %v1296, %v1848
  %v1953 = vsub.f32 %v1301, %v1848
  %v1954 = vsub.f32 %v1304, %v1848
  %v1955 = vsub.f32 %v1309, %v1848
  %v1956 = vsub.f32 %v1312, %v1848
  %v1957 = vsub.f32 %v1317, %v1848
  %v1958 = vsub.f32 %v1320, %v1848
  %v1959 = vsub.f32 %v1325, %v1848
  %v1960 = vsub.f32 %v1328, %v1848
  %v1961 = vsub.f32 %v1333, %v1848
  %v1962 = vsub.f32 %v1336, %v1848
  %v1963 = vsub.f32 %v1341, %v1848
  %v1964 = vsub.f32 %v1344, %v1848
  %v1965 = vsub.f32 %v1349, %v1848
  %v1966 = vsub.f32 %v1352, %v1848
  %v1967 = vsub.f32 %v1357, %v1848
  %v1968 = vsub.f32 %v1360, %v1848
  %v1969 = vsub.f32 %v1365, %v1848
  %v1970 = vsub.f32 %v1368, %v1848
  %v1971 = vsub.f32 %v1373, %v1848
  %v1972 = vsub.f32 %v1376, %v1848
  %v1973 = vsub.f32 %v1381, %v1848
  %v1974 = vsub.f32 %v1384, %v1848
  %v1975 = vsub.f32 %v1389, %v1848
  %v1976 = vsub.f32 %v1392, %v1848
  %v1977 = vsub.f32 %v1397, %v1848
  %v1978 = vsub.f32 %v1400, %v1848
  %v1979 = vsub.f32 %v1405, %v1848
  %v1980 = vsub.f32 %v1408, %v1848
  %v1981 = vsub.f32 %v1413, %v1848
  %v1982 = vsub.f32 %v1416, %v1848
  %v1983 = vsub.f32 %v1421, %v1848
  %v1984 = vsub.f32 %v1424, %v1848
  %v1985 = vsub.f32 %v1429, %v1848
  %v1986 = vsub.f32 %v1432, %v1848
  %v1987 = vsub.f32 %v1437, %v1848
  %v1988 = vsub.f32 %v1440, %v1848
  %v1989 = vsub.f32 %v1445, %v1848
  %v1990 = vsub.f32 %v1448, %v1848
  %v1991 = vsub.f32 %v1453, %v1848
  %v1992 = vsub.f32 %v1456, %v1848
  %v1993 = vsub.f32 %v1461, %v1848
  %v1994 = vsub.f32 %v1464, %v1848
  %v1995 = vsub.f32 %v1469, %v1848
  %v1996 = vsub.f32 %v1472, %v1848
  %v1997 = vsub.f32 %v1477, %v1848
  %v1998 = vsub.f32 %v1480, %v1848
  %v1999 = vsub.f32 %v1485, %v1848
  %v2000 = vsub.f32 %v1488, %v1848
  %v2001 = vsub.f32 %v1493, %v1848
  %v2002 = vsub.f32 %v1496, %v1848
  %v2003 = vsub.f32 %v1501, %v1848
  %v2004 = vsub.f32 %v1504, %v1848
  %v2005 = vsub.f32 %v1509, %v1848
  %v2006 = vsub.f32 %v1512, %v1848
  %v2007 = vsub.f32 %v1517, %v1848
  %v2008 = vsub.f32 %v1520, %v1848
  %v2009 = vsub.f32 %v1525, %v1848
  %v2010 = vsub.f32 %v1528, %v1848
  %v2011 = vsub.f32 %v1533, %v1848
  %v2012 = vsub.f32 %v1536, %v1848
  %v2013 = vsub.f32 %v1541, %v1848
  %v2014 = vsub.f32 %v1544, %v1848
  %v2015 = vsub.f32 %v1549, %v1848
  %v2016 = vsub.f32 %v1552, %v1848
  %v2017 = vsub.f32 %v1557, %v1848
  %v2018 = vsub.f32 %v1560, %v1848
  %v2019 = vsub.f32 %v1565, %v1848
  %v2020 = vsub.f32 %v1568, %v1848
  %v2021 = vsub.f32 %v1573, %v1848
  %v2022 = vsub.f32 %v1576, %v1848
  %v2023 = vsub.f32 %v1581, %v1848
  %v2024 = vsub.f32 %v1584, %v1848
  %v2025 = vsub.f32 %v1589, %v1848
  %v2026 = vsub.f32 %v1592, %v1848
  %v2027 = vsub.f32 %v1597, %v1848
  %v2028 = vsub.f32 %v1600, %v1848
  %v2029 = vsub.f32 %v1605, %v1848
  %v2030 = vsub.f32 %v1608, %v1848
  %v2031 = vsub.f32 %v1613, %v1848
  %v2032 = vsub.f32 %v1616, %v1848
  %v2033 = vsub.f32 %v1621, %v1848
  %v2034 = vsub.f32 %v1624, %v1848
  %v2035 = vsub.f32 %v1629, %v1848
  %v2036 = vsub.f32 %v1632, %v1848
  %v2037 = vsub.f32 %v1637, %v1848
  %v2038 = vsub.f32 %v1640, %v1848
  %v2039 = vsub.f32 %v1645, %v1848
  %v2040 = vsub.f32 %v1648, %v1848
  %v2041 = vmul.f32 %v1849, %v1849
  %v2042 = vmul.f32 %v1850, %v1850
  %v2043 = vmul.f32 %v1851, %v1851
  %v2044 = vmul.f32 %v1852, %v1852
  %v2045 = vmul.f32 %v1853, %v1853
  %v2046 = vmul.f32 %v1854, %v1854
  %v2047 = vmul.f32 %v1855, %v1855
  %v2048 = vmul.f32 %v1856, %v1856
  %v2049 = vmul.f32 %v1857, %v1857
  %v2050 = vmul.f32 %v1858, %v1858
  %v2051 = vmul.f32 %v1859, %v1859
  %v2052 = vmul.f32 %v1860, %v1860
  %v2053 = vmul.f32 %v1861, %v1861
  %v2054 = vmul.f32 %v1862, %v1862
  %v2055 = vmul.f32 %v1863, %v1863
  %v2056 = vmul.f32 %v1864, %v1864
  %v2057 = vmul.f32 %v1865, %v1865
  %v2058 = vmul.f32 %v1866, %v1866
  %v2059 = vmul.f32 %v1867, %v1867
  %v2060 = vmul.f32 %v1868, %v1868
  %v2061 = vmul.f32 %v1869, %v1869
  %v2062 = vmul.f32 %v1870, %v1870
  %v2063 = vmul.f32 %v1871, %v1871
  %v2064 = vmul.f32 %v1872, %v1872
  %v2065 = vmul.f32 %v1873, %v1873
  %v2066 = vmul.f32 %v1874, %v1874
  %v2067 = vmul.f32 %v1875, %v1875
  %v2068 = vmul.f32 %v1876, %v1876
  %v2069 = vmul.f32 %v1877, %v1877
  %v2070 = vmul.f32 %v1878, %v1878
  %v2071 = vmul.f32 %v1879, %v1879
  %v2072 = vmul.f32 %v1880, %v1880
  %v2073 = vmul.f32 %v1881, %v1881
  %v2074 = vmul.f32 %v1882, %v1882
  %v2075 = vmul.f32 %v1883, %v1883
  %v2076 = vmul.f32 %v1884, %v1884
  %v2077 = vmul.f32 %v1885, %v1885
  %v2078 = vmul.f32 %v1886, %v1886
  %v2079 = vmul.f32 %v1887, %v1887
  %v2080 = vmul.f32 %v1888, %v1888
  %v2081 = vmul.f32 %v1889, %v1889
  %v2082 = vmul.f32 %v1890, %v1890
  %v2083 = vmul.f32 %v1891, %v1891
  %v2084 = vmul.f32 %v1892, %v1892
  %v2085 = vmul.f32 %v1893, %v1893
  %v2086 = vmul.f32 %v1894, %v1894
  %v2087 = vmul.f32 %v1895, %v1895
  %v2088 = vmul.f32 %v1896, %v1896
  %v2089 = vmul.f32 %v1897, %v1897
  %v2090 = vmul.f32 %v1898, %v1898
  %v2091 = vmul.f32 %v1899, %v1899
  %v2092 = vmul.f32 %v1900, %v1900
  %v2093 = vmul.f32 %v1901, %v1901
  %v2094 = vmul.f32 %v1902, %v1902
  %v2095 = vmul.f32 %v1903, %v1903
  %v2096 = vmul.f32 %v1904, %v1904
  %v2097 = vmul.f32 %v1905, %v1905
  %v2098 = vmul.f32 %v1906, %v1906
  %v2099 = vmul.f32 %v1907, %v1907
  %v2100 = vmul.f32 %v1908, %v1908
  %v2101 = vmul.f32 %v1909, %v1909
  %v2102 = vmul.f32 %v1910, %v1910
  %v2103 = vmul.f32 %v1911, %v1911
  %v2104 = vmul.f32 %v1912, %v1912
  %v2105 = vmul.f32 %v1913, %v1913
  %v2106 = vmul.f32 %v1914, %v1914
  %v2107 = vmul.f32 %v1915, %v1915
  %v2108 = vmul.f32 %v1916, %v1916
  %v2109 = vmul.f32 %v1917, %v1917
  %v2110 = vmul.f32 %v1918, %v1918
  %v2111 = vmul.f32 %v1919, %v1919
  %v2112 = vmul.f32 %v1920, %v1920
  %v2113 = vmul.f32 %v1921, %v1921
  %v2114 = vmul.f32 %v1922, %v1922
  %v2115 = vmul.f32 %v1923, %v1923
  %v2116 = vmul.f32 %v1924, %v1924
  %v2117 = vmul.f32 %v1925, %v1925
  %v2118 = vmul.f32 %v1926, %v1926
  %v2119 = vmul.f32 %v1927, %v1927
  %v2120 = vmul.f32 %v1928, %v1928
  %v2121 = vmul.f32 %v1929, %v1929
  %v2122 = vmul.f32 %v1930, %v1930
  %v2123 = vmul.f32 %v1931, %v1931
  %v2124 = vmul.f32 %v1932, %v1932
  %v2125 = vmul.f32 %v1933, %v1933
  %v2126 = vmul.f32 %v1934, %v1934
  %v2127 = vmul.f32 %v1935, %v1935
  %v2128 = vmul.f32 %v1936, %v1936
  %v2129 = vmul.f32 %v1937, %v1937
  %v2130 = vmul.f32 %v1938, %v1938
  %v2131 = vmul.f32 %v1939, %v1939
  %v2132 = vmul.f32 %v1940, %v1940
  %v2133 = vmul.f32 %v1941, %v1941
  %v2134 = vmul.f32 %v1942, %v1942
  %v2135 = vmul.f32 %v1943, %v1943
  %v2136 = vmul.f32 %v1944, %v1944
  %v2137 = vmul.f32 %v1945, %v1945
  %v2138 = vmul.f32 %v1946, %v1946
  %v2139 = vmul.f32 %v1947, %v1947
  %v2140 = vmul.f32 %v1948, %v1948
  %v2141 = vmul.f32 %v1949, %v1949
  %v2142 = vmul.f32 %v1950, %v1950
  %v2143 = vmul.f32 %v1951, %v1951
  %v2144 = vmul.f32 %v1952, %v1952
  %v2145 = vmul.f32 %v1953, %v1953
  %v2146 = vmul.f32 %v1954, %v1954
  %v2147 = vmul.f32 %v1955, %v1955
  %v2148 = vmul.f32 %v1956, %v1956
  %v2149 = vmul.f32 %v1957, %v1957
  %v2150 = vmul.f32 %v1958, %v1958
  %v2151 = vmul.f32 %v1959, %v1959
  %v2152 = vmul.f32 %v1960, %v1960
  %v2153 = vmul.f32 %v1961, %v1961
  %v2154 = vmul.f32 %v1962, %v1962
  %v2155 = vmul.f32 %v1963, %v1963
  %v2156 = vmul.f32 %v1964, %v1964
  %v2157 = vmul.f32 %v1965, %v1965
  %v2158 = vmul.f32 %v1966, %v1966
  %v2159 = vmul.f32 %v1967, %v1967
  %v2160 = vmul.f32 %v1968, %v1968
  %v2161 = vmul.f32 %v1969, %v1969
  %v2162 = vmul.f32 %v1970, %v1970
  %v2163 = vmul.f32 %v1971, %v1971
  %v2164 = vmul.f32 %v1972, %v1972
  %v2165 = vmul.f32 %v1973, %v1973
  %v2166 = vmul.f32 %v1974, %v1974
  %v2167 = vmul.f32 %v1975, %v1975
  %v2168 = vmul.f32 %v1976, %v1976
  %v2169 = vmul.f32 %v1977, %v1977
  %v2170 = vmul.f32 %v1978, %v1978
  %v2171 = vmul.f32 %v1979, %v1979
  %v2172 = vmul.f32 %v1980, %v1980
  %v2173 = vmul.f32 %v1981, %v1981
  %v2174 = vmul.f32 %v1982, %v1982
  %v2175 = vmul.f32 %v1983, %v1983
  %v2176 = vmul.f32 %v1984, %v1984
  %v2177 = vmul.f32 %v1985, %v1985
  %v2178 = vmul.f32 %v1986, %v1986
  %v2179 = vmul.f32 %v1987, %v1987
  %v2180 = vmul.f32 %v1988, %v1988
  %v2181 = vmul.f32 %v1989, %v1989
  %v2182 = vmul.f32 %v1990, %v1990
  %v2183 = vmul.f32 %v1991, %v1991
  %v2184 = vmul.f32 %v1992, %v1992
  %v2185 = vmul.f32 %v1993, %v1993
  %v2186 = vmul.f32 %v1994, %v1994
  %v2187 = vmul.f32 %v1995, %v1995
  %v2188 = vmul.f32 %v1996, %v1996
  %v2189 = vmul.f32 %v1997, %v1997
  %v2190 = vmul.f32 %v1998, %v1998
  %v2191 = vmul.f32 %v1999, %v1999
  %v2192 = vmul.f32 %v2000, %v2000
  %v2193 = vmul.f32 %v2001, %v2001
  %v2194 = vmul.f32 %v2002, %v2002
  %v2195 = vmul.f32 %v2003, %v2003
  %v2196 = vmul.f32 %v2004, %v2004
  %v2197 = vmul.f32 %v2005, %v2005
  %v2198 = vmul.f32 %v2006, %v2006
  %v2199 = vmul.f32 %v2007, %v2007
  %v2200 = vmul.f32 %v2008, %v2008
  %v2201 = vmul.f32 %v2009, %v2009
  %v2202 = vmul.f32 %v2010, %v2010
  %v2203 = vmul.f32 %v2011, %v2011
  %v2204 = vmul.f32 %v2012, %v2012
  %v2205 = vmul.f32 %v2013, %v2013
  %v2206 = vmul.f32 %v2014, %v2014
  %v2207 = vmul.f32 %v2015, %v2015
  %v2208 = vmul.f32 %v2016, %v2016
  %v2209 = vmul.f32 %v2017, %v2017
  %v2210 = vmul.f32 %v2018, %v2018
  %v2211 = vmul.f32 %v2019, %v2019
  %v2212 = vmul.f32 %v2020, %v2020
  %v2213 = vmul.f32 %v2021, %v2021
  %v2214 = vmul.f32 %v2022, %v2022
  %v2215 = vmul.f32 %v2023, %v2023
  %v2216 = vmul.f32 %v2024, %v2024
  %v2217 = vmul.f32 %v2025, %v2025
  %v2218 = vmul.f32 %v2026, %v2026
  %v2219 = vmul.f32 %v2027, %v2027
  %v2220 = vmul.f32 %v2028, %v2028
  %v2221 = vmul.f32 %v2029, %v2029
  %v2222 = vmul.f32 %v2030, %v2030
  %v2223 = vmul.f32 %v2031, %v2031
  %v2224 = vmul.f32 %v2032, %v2032
  %v2225 = vmul.f32 %v2033, %v2033
  %v2226 = vmul.f32 %v2034, %v2034
  %v2227 = vmul.f32 %v2035, %v2035
  %v2228 = vmul.f32 %v2036, %v2036
  %v2229 = vmul.f32 %v2037, %v2037
  %v2230 = vmul.f32 %v2038, %v2038
  %v2231 = vmul.f32 %v2039, %v2039
  %v2232 = vmul.f32 %v2040, %v2040
  %v2233 = vadd.f32 %v2041, %v2042
  %v2234 = vadd.f32 %v2233, %v2043
  %v2235 = vadd.f32 %v2234, %v2044
  %v2236 = vadd.f32 %v2235, %v2045
  %v2237 = vadd.f32 %v2236, %v2046
  %v2238 = vadd.f32 %v2237, %v2047
  %v2239 = vadd.f32 %v2238, %v2048
  %v2240 = vadd.f32 %v2239, %v2049
  %v2241 = vadd.f32 %v2240, %v2050
  %v2242 = vadd.f32 %v2241, %v2051
  %v2243 = vadd.f32 %v2242, %v2052
  %v2244 = vadd.f32 %v2243, %v2053
  %v2245 = vadd.f32 %v2244, %v2054
  %v2246 = vadd.f32 %v2245, %v2055
  %v2247 = vadd.f32 %v2246, %v2056
  %v2248 = vadd.f32 %v2247, %v2057
  %v2249 = vadd.f32 %v2248, %v2058
  %v2250 = vadd.f32 %v2249, %v2059
  %v2251 = vadd.f32 %v2250, %v2060
  %v2252 = vadd.f32 %v2251, %v2061
  %v2253 = vadd.f32 %v2252, %v2062
  %v2254 = vadd.f32 %v2253, %v2063
  %v2255 = vadd.f32 %v2254, %v2064
  %v2256 = vadd.f32 %v2255, %v2065
  %v2257 = vadd.f32 %v2256, %v2066
  %v2258 = vadd.f32 %v2257, %v2067
  %v2259 = vadd.f32 %v2258, %v2068
  %v2260 = vadd.f32 %v2259, %v2069
  %v2261 = vadd.f32 %v2260, %v2070
  %v2262 = vadd.f32 %v2261, %v2071
  %v2263 = vadd.f32 %v2262, %v2072
  %v2264 = vadd.f32 %v2263, %v2073
  %v2265 = vadd.f32 %v2264, %v2074
  %v2266 = vadd.f32 %v2265, %v2075
  %v2267 = vadd.f32 %v2266, %v2076
  %v2268 = vadd.f32 %v2267, %v2077
  %v2269 = vadd.f32 %v2268, %v2078
  %v2270 = vadd.f32 %v2269, %v2079
  %v2271 = vadd.f32 %v2270, %v2080
  %v2272 = vadd.f32 %v2271, %v2081
  %v2273 = vadd.f32 %v2272, %v2082
  %v2274 = vadd.f32 %v2273, %v2083
  %v2275 = vadd.f32 %v2274, %v2084
  %v2276 = vadd.f32 %v2275, %v2085
  %v2277 = vadd.f32 %v2276, %v2086
  %v2278 = vadd.f32 %v2277, %v2087
  %v2279 = vadd.f32 %v2278, %v2088
  %v2280 = vadd.f32 %v2279, %v2089
  %v2281 = vadd.f32 %v2280, %v2090
  %v2282 = vadd.f32 %v2281, %v2091
  %v2283 = vadd.f32 %v2282, %v2092
  %v2284 = vadd.f32 %v2283, %v2093
  %v2285 = vadd.f32 %v2284, %v2094
  %v2286 = vadd.f32 %v2285, %v2095
  %v2287 = vadd.f32 %v2286, %v2096
  %v2288 = vadd.f32 %v2287, %v2097
  %v2289 = vadd.f32 %v2288, %v2098
  %v2290 = vadd.f32 %v2289, %v2099
  %v2291 = vadd.f32 %v2290, %v2100
  %v2292 = vadd.f32 %v2291, %v2101
  %v2293 = vadd.f32 %v2292, %v2102
  %v2294 = vadd.f32 %v2293, %v2103
  %v2295 = vadd.f32 %v2294, %v2104
  %v2296 = vadd.f32 %v2295, %v2105
  %v2297 = vadd.f32 %v2296, %v2106
  %v2298 = vadd.f32 %v2297, %v2107
  %v2299 = vadd.f32 %v2298, %v2108
  %v2300 = vadd.f32 %v2299, %v2109
  %v2301 = vadd.f32 %v2300, %v2110
  %v2302 = vadd.f32 %v2301, %v2111
  %v2303 = vadd.f32 %v2302, %v2112
  %v2304 = vadd.f32 %v2303, %v2113
  %v2305 = vadd.f32 %v2304, %v2114
  %v2306 = vadd.f32 %v2305, %v2115
  %v2307 = vadd.f32 %v2306, %v2116
  %v2308 = vadd.f32 %v2307, %v2117
  %v2309 = vadd.f32 %v2308, %v2118
  %v2310 = vadd.f32 %v2309, %v2119
  %v2311 = vadd.f32 %v2310, %v2120
  %v2312 = vadd.f32 %v2311, %v2121
  %v2313 = vadd.f32 %v2312, %v2122
  %v2314 = vadd.f32 %v2313, %v2123
  %v2315 = vadd.f32 %v2314, %v2124
  %v2316 = vadd.f32 %v2315, %v2125
  %v2317 = vadd.f32 %v2316, %v2126
  %v2318 = vadd.f32 %v2317, %v2127
  %v2319 = vadd.f32 %v2318, %v2128
  %v2320 = vadd.f32 %v2319, %v2129
  %v2321 = vadd.f32 %v2320, %v2130
  %v2322 = vadd.f32 %v2321, %v2131
  %v2323 = vadd.f32 %v2322, %v2132
  %v2324 = vadd.f32 %v2323, %v2133
  %v2325 = vadd.f32 %v2324, %v2134
  %v2326 = vadd.f32 %v2325, %v2135
  %v2327 = vadd.f32 %v2326, %v2136
  %v2328 = vadd.f32 %v2327, %v2137
  %v2329 = vadd.f32 %v2328, %v2138
  %v2330 = vadd.f32 %v2329, %v2139
  %v2331 = vadd.f32 %v2330, %v2140
  %v2332 = vadd.f32 %v2331, %v2141
  %v2333 = vadd.f32 %v2332, %v2142
  %v2334 = vadd.f32 %v2333, %v2143
  %v2335 = vadd.f32 %v2334, %v2144
  %v2336 = vadd.f32 %v2335, %v2145
  %v2337 = vadd.f32 %v2336, %v2146
  %v2338 = vadd.f32 %v2337, %v2147
  %v2339 = vadd.f32 %v2338, %v2148
  %v2340 = vadd.f32 %v2339, %v2149
  %v2341 = vadd.f32 %v2340, %v2150
  %v2342 = vadd.f32 %v2341, %v2151
  %v2343 = vadd.f32 %v2342, %v2152
  %v2344 = vadd.f32 %v2343, %v2153
  %v2345 = vadd.f32 %v2344, %v2154
  %v2346 = vadd.f32 %v2345, %v2155
  %v2347 = vadd.f32 %v2346, %v2156
  %v2348 = vadd.f32 %v2347, %v2157
  %v2349 = vadd.f32 %v2348, %v2158
  %v2350 = vadd.f32 %v2349, %v2159
  %v2351 = vadd.f32 %v2350, %v2160
  %v2352 = vadd.f32 %v2351, %v2161
  %v2353 = vadd.f32 %v2352, %v2162
  %v2354 = vadd.f32 %v2353, %v2163
  %v2355 = vadd.f32 %v2354, %v2164
  %v2356 = vadd.f32 %v2355, %v2165
  %v2357 = vadd.f32 %v2356, %v2166
  %v2358 = vadd.f32 %v2357, %v2167
  %v2359 = vadd.f32 %v2358, %v2168
  %v2360 = vadd.f32 %v2359, %v2169
  %v2361 = vadd.f32 %v2360, %v2170
  %v2362 = vadd.f32 %v2361, %v2171
  %v2363 = vadd.f32 %v2362, %v2172
  %v2364 = vadd.f32 %v2363, %v2173
  %v2365 = vadd.f32 %v2364, %v2174
  %v2366 = vadd.f32 %v2365, %v2175
  %v2367 = vadd.f32 %v2366, %v2176
  %v2368 = vadd.f32 %v2367, %v2177
  %v2369 = vadd.f32 %v2368, %v2178
  %v2370 = vadd.f32 %v2369, %v2179
  %v2371 = vadd.f32 %v2370, %v2180
  %v2372 = vadd.f32 %v2371, %v2181
  %v2373 = vadd.f32 %v2372, %v2182
  %v2374 = vadd.f32 %v2373, %v2183
  %v2375 = vadd.f32 %v2374, %v2184
  %v2376 = vadd.f32 %v2375, %v2185
  %v2377 = vadd.f32 %v2376, %v2186
  %v2378 = vadd.f32 %v2377, %v2187
  %v2379 = vadd.f32 %v2378, %v2188
  %v2380 = vadd.f32 %v2379, %v2189
  %v2381 = vadd.f32 %v2380, %v2190
  %v2382 = vadd.f32 %v2381, %v2191
  %v2383 = vadd.f32 %v2382, %v2192
  %v2384 = vadd.f32 %v2383, %v2193
  %v2385 = vadd.f32 %v2384, %v2194
  %v2386 = vadd.f32 %v2385, %v2195
  %v2387 = vadd.f32 %v2386, %v2196
  %v2388 = vadd.f32 %v2387, %v2197
  %v2389 = vadd.f32 %v2388, %v2198
  %v2390 = vadd.f32 %v2389, %v2199
  %v2391 = vadd.f32 %v2390, %v2200
  %v2392 = vadd.f32 %v2391, %v2201
  %v2393 = vadd.f32 %v2392, %v2202
  %v2394 = vadd.f32 %v2393, %v2203
  %v2395 = vadd.f32 %v2394, %v2204
  %v2396 = vadd.f32 %v2395, %v2205
  %v2397 = vadd.f32 %v2396, %v2206
  %v2398 = vadd.f32 %v2397, %v2207
  %v2399 = vadd.f32 %v2398, %v2208
  %v2400 = vadd.f32 %v2399, %v2209
  %v2401 = vadd.f32 %v2400, %v2210
  %v2402 = vadd.f32 %v2401, %v2211
  %v2403 = vadd.f32 %v2402, %v2212
  %v2404 = vadd.f32 %v2403, %v2213
  %v2405 = vadd.f32 %v2404, %v2214
  %v2406 = vadd.f32 %v2405, %v2215
  %v2407 = vadd.f32 %v2406, %v2216
  %v2408 = vadd.f32 %v2407, %v2217
  %v2409 = vadd.f32 %v2408, %v2218
  %v2410 = vadd.f32 %v2409, %v2219
  %v2411 = vadd.f32 %v2410, %v2220
  %v2412 = vadd.f32 %v2411, %v2221
  %v2413 = vadd.f32 %v2412, %v2222
  %v2414 = vadd.f32 %v2413, %v2223
  %v2415 = vadd.f32 %v2414, %v2224
  %v2416 = vadd.f32 %v2415, %v2225
  %v2417 = vadd.f32 %v2416, %v2226
  %v2418 = vadd.f32 %v2417, %v2227
  %v2419 = vadd.f32 %v2418, %v2228
  %v2420 = vadd.f32 %v2419, %v2229
  %v2421 = vadd.f32 %v2420, %v2230
  %v2422 = vadd.f32 %v2421, %v2231
  %v2423 = vadd.f32 %v2422, %v2232
  %v2424 = vrot.slane %v2423, 4
  %v2425 = vadd.f32 %v2423, %v2424
  %v2426 = vrot.slane %v2425, 2
  %v2427 = vadd.f32 %v2425, %v2426
  %v2428 = vrot.slane %v2427, 1
  %v2429 = vadd.f32 %v2427, %v2428
  %v2430 = vmul.f32 %v2429, 0.0006510417
  %v2431 = vmax.f32 %v2430, 0.0
  %v2432 = vld [vmem:[%s2] sm:$0x1]
  %v2433 = vadd.f32 %v2431, 1e-05
  %v2434 = vrsqrt.pop %v2433
  %v2435 = vmul.f32 %v2432, %v2434
  %v2437 = vlaneseq
  %v2438 = vshrl.u32 %v2437, 7
  %v2439 = vsub.s32 0, %v2438
  %v2440 = vrot.slane %v2435, %v2439
  %v2442 = vmul.f32 %v1849, %v2440
  %v2443 = vmul.f32 %v1850, %v2440
  %v2444 = vmul.f32 %v1851, %v2440
  %v2445 = vmul.f32 %v1852, %v2440
  %v2446 = vmul.f32 %v1853, %v2440
  %v2447 = vmul.f32 %v1854, %v2440
  %v2448 = vmul.f32 %v1855, %v2440
  %v2449 = vmul.f32 %v1856, %v2440
  %v2450 = vmul.f32 %v1857, %v2440
  %v2451 = vmul.f32 %v1858, %v2440
  %v2452 = vmul.f32 %v1859, %v2440
  %v2453 = vmul.f32 %v1860, %v2440
  %v2454 = vmul.f32 %v1861, %v2440
  %v2455 = vmul.f32 %v1862, %v2440
  %v2456 = vmul.f32 %v1863, %v2440
  %v2457 = vmul.f32 %v1864, %v2440
  %v2458 = vmul.f32 %v1865, %v2440
  %v2459 = vmul.f32 %v1866, %v2440
  %v2460 = vmul.f32 %v1867, %v2440
  %v2461 = vmul.f32 %v1868, %v2440
  %v2462 = vmul.f32 %v1869, %v2440
  %v2463 = vmul.f32 %v1870, %v2440
  %v2464 = vmul.f32 %v1871, %v2440
  %v2465 = vmul.f32 %v1872, %v2440
  %v2466 = vmul.f32 %v1873, %v2440
  %v2467 = vmul.f32 %v1874, %v2440
  %v2468 = vmul.f32 %v1875, %v2440
  %v2469 = vmul.f32 %v1876, %v2440
  %v2470 = vmul.f32 %v1877, %v2440
  %v2471 = vmul.f32 %v1878, %v2440
  %v2472 = vmul.f32 %v1879, %v2440
  %v2473 = vmul.f32 %v1880, %v2440
  %v2474 = vmul.f32 %v1881, %v2440
  %v2475 = vmul.f32 %v1882, %v2440
  %v2476 = vmul.f32 %v1883, %v2440
  %v2477 = vmul.f32 %v1884, %v2440
  %v2478 = vmul.f32 %v1885, %v2440
  %v2479 = vmul.f32 %v1886, %v2440
  %v2480 = vmul.f32 %v1887, %v2440
  %v2481 = vmul.f32 %v1888, %v2440
  %v2482 = vmul.f32 %v1889, %v2440
  %v2483 = vmul.f32 %v1890, %v2440
  %v2484 = vmul.f32 %v1891, %v2440
  %v2485 = vmul.f32 %v1892, %v2440
  %v2486 = vmul.f32 %v1893, %v2440
  %v2487 = vmul.f32 %v1894, %v2440
  %v2488 = vmul.f32 %v1895, %v2440
  %v2489 = vmul.f32 %v1896, %v2440
  %v2490 = vmul.f32 %v1897, %v2440
  %v2491 = vmul.f32 %v1898, %v2440
  %v2492 = vmul.f32 %v1899, %v2440
  %v2493 = vmul.f32 %v1900, %v2440
  %v2494 = vmul.f32 %v1901, %v2440
  %v2495 = vmul.f32 %v1902, %v2440
  %v2496 = vmul.f32 %v1903, %v2440
  %v2497 = vmul.f32 %v1904, %v2440
  %v2498 = vmul.f32 %v1905, %v2440
  %v2499 = vmul.f32 %v1906, %v2440
  %v2500 = vmul.f32 %v1907, %v2440
  %v2501 = vmul.f32 %v1908, %v2440
  %v2502 = vmul.f32 %v1909, %v2440
  %v2503 = vmul.f32 %v1910, %v2440
  %v2504 = vmul.f32 %v1911, %v2440
  %v2505 = vmul.f32 %v1912, %v2440
  %v2506 = vmul.f32 %v1913, %v2440
  %v2507 = vmul.f32 %v1914, %v2440
  %v2508 = vmul.f32 %v1915, %v2440
  %v2509 = vmul.f32 %v1916, %v2440
  %v2510 = vmul.f32 %v1917, %v2440
  %v2511 = vmul.f32 %v1918, %v2440
  %v2512 = vmul.f32 %v1919, %v2440
  %v2513 = vmul.f32 %v1920, %v2440
  %v2514 = vmul.f32 %v1921, %v2440
  %v2515 = vmul.f32 %v1922, %v2440
  %v2516 = vmul.f32 %v1923, %v2440
  %v2517 = vmul.f32 %v1924, %v2440
  %v2518 = vmul.f32 %v1925, %v2440
  %v2519 = vmul.f32 %v1926, %v2440
  %v2520 = vmul.f32 %v1927, %v2440
  %v2521 = vmul.f32 %v1928, %v2440
  %v2522 = vmul.f32 %v1929, %v2440
  %v2523 = vmul.f32 %v1930, %v2440
  %v2524 = vmul.f32 %v1931, %v2440
  %v2525 = vmul.f32 %v1932, %v2440
  %v2526 = vmul.f32 %v1933, %v2440
  %v2527 = vmul.f32 %v1934, %v2440
  %v2528 = vmul.f32 %v1935, %v2440
  %v2529 = vmul.f32 %v1936, %v2440
  %v2530 = vmul.f32 %v1937, %v2440
  %v2531 = vmul.f32 %v1938, %v2440
  %v2532 = vmul.f32 %v1939, %v2440
  %v2533 = vmul.f32 %v1940, %v2440
  %v2534 = vmul.f32 %v1941, %v2440
  %v2535 = vmul.f32 %v1942, %v2440
  %v2536 = vmul.f32 %v1943, %v2440
  %v2537 = vmul.f32 %v1944, %v2440
  %v2538 = vmul.f32 %v1945, %v2440
  %v2539 = vmul.f32 %v1946, %v2440
  %v2540 = vmul.f32 %v1947, %v2440
  %v2541 = vmul.f32 %v1948, %v2440
  %v2542 = vmul.f32 %v1949, %v2440
  %v2543 = vmul.f32 %v1950, %v2440
  %v2544 = vmul.f32 %v1951, %v2440
  %v2545 = vmul.f32 %v1952, %v2440
  %v2546 = vmul.f32 %v1953, %v2440
  %v2547 = vmul.f32 %v1954, %v2440
  %v2548 = vmul.f32 %v1955, %v2440
  %v2549 = vmul.f32 %v1956, %v2440
  %v2550 = vmul.f32 %v1957, %v2440
  %v2551 = vmul.f32 %v1958, %v2440
  %v2552 = vmul.f32 %v1959, %v2440
  %v2553 = vmul.f32 %v1960, %v2440
  %v2554 = vmul.f32 %v1961, %v2440
  %v2555 = vmul.f32 %v1962, %v2440
  %v2556 = vmul.f32 %v1963, %v2440
  %v2557 = vmul.f32 %v1964, %v2440
  %v2558 = vmul.f32 %v1965, %v2440
  %v2559 = vmul.f32 %v1966, %v2440
  %v2560 = vmul.f32 %v1967, %v2440
  %v2561 = vmul.f32 %v1968, %v2440
  %v2562 = vmul.f32 %v1969, %v2440
  %v2563 = vmul.f32 %v1970, %v2440
  %v2564 = vmul.f32 %v1971, %v2440
  %v2565 = vmul.f32 %v1972, %v2440
  %v2566 = vmul.f32 %v1973, %v2440
  %v2567 = vmul.f32 %v1974, %v2440
  %v2568 = vmul.f32 %v1975, %v2440
  %v2569 = vmul.f32 %v1976, %v2440
  %v2570 = vmul.f32 %v1977, %v2440
  %v2571 = vmul.f32 %v1978, %v2440
  %v2572 = vmul.f32 %v1979, %v2440
  %v2573 = vmul.f32 %v1980, %v2440
  %v2574 = vmul.f32 %v1981, %v2440
  %v2575 = vmul.f32 %v1982, %v2440
  %v2576 = vmul.f32 %v1983, %v2440
  %v2577 = vmul.f32 %v1984, %v2440
  %v2578 = vmul.f32 %v1985, %v2440
  %v2579 = vmul.f32 %v1986, %v2440
  %v2580 = vmul.f32 %v1987, %v2440
  %v2581 = vmul.f32 %v1988, %v2440
  %v2582 = vmul.f32 %v1989, %v2440
  %v2583 = vmul.f32 %v1990, %v2440
  %v2584 = vmul.f32 %v1991, %v2440
  %v2585 = vmul.f32 %v1992, %v2440
  %v2586 = vmul.f32 %v1993, %v2440
  %v2587 = vmul.f32 %v1994, %v2440
  %v2588 = vmul.f32 %v1995, %v2440
  %v2589 = vmul.f32 %v1996, %v2440
  %v2590 = vmul.f32 %v1997, %v2440
  %v2591 = vmul.f32 %v1998, %v2440
  %v2592 = vmul.f32 %v1999, %v2440
  %v2593 = vmul.f32 %v2000, %v2440
  %v2594 = vmul.f32 %v2001, %v2440
  %v2595 = vmul.f32 %v2002, %v2440
  %v2596 = vmul.f32 %v2003, %v2440
  %v2597 = vmul.f32 %v2004, %v2440
  %v2598 = vmul.f32 %v2005, %v2440
  %v2599 = vmul.f32 %v2006, %v2440
  %v2600 = vmul.f32 %v2007, %v2440
  %v2601 = vmul.f32 %v2008, %v2440
  %v2602 = vmul.f32 %v2009, %v2440
  %v2603 = vmul.f32 %v2010, %v2440
  %v2604 = vmul.f32 %v2011, %v2440
  %v2605 = vmul.f32 %v2012, %v2440
  %v2606 = vmul.f32 %v2013, %v2440
  %v2607 = vmul.f32 %v2014, %v2440
  %v2608 = vmul.f32 %v2015, %v2440
  %v2609 = vmul.f32 %v2016, %v2440
  %v2610 = vmul.f32 %v2017, %v2440
  %v2611 = vmul.f32 %v2018, %v2440
  %v2612 = vmul.f32 %v2019, %v2440
  %v2613 = vmul.f32 %v2020, %v2440
  %v2614 = vmul.f32 %v2021, %v2440
  %v2615 = vmul.f32 %v2022, %v2440
  %v2616 = vmul.f32 %v2023, %v2440
  %v2617 = vmul.f32 %v2024, %v2440
  %v2618 = vmul.f32 %v2025, %v2440
  %v2619 = vmul.f32 %v2026, %v2440
  %v2620 = vmul.f32 %v2027, %v2440
  %v2621 = vmul.f32 %v2028, %v2440
  %v2622 = vmul.f32 %v2029, %v2440
  %v2623 = vmul.f32 %v2030, %v2440
  %v2624 = vmul.f32 %v2031, %v2440
  %v2625 = vmul.f32 %v2032, %v2440
  %v2626 = vmul.f32 %v2033, %v2440
  %v2627 = vmul.f32 %v2034, %v2440
  %v2628 = vmul.f32 %v2035, %v2440
  %v2629 = vmul.f32 %v2036, %v2440
  %v2630 = vmul.f32 %v2037, %v2440
  %v2631 = vmul.f32 %v2038, %v2440
  %v2632 = vmul.f32 %v2039, %v2440
  %v2633 = vmul.f32 %v2040, %v2440
  %v2634 = vld [vmem:[%s3] sm:$0x1]
  %v2636 = vlaneseq
  %v2637 = vshrl.u32 %v2636, 7
  %v2638 = vsub.s32 0, %v2637
  %v2639 = vrot.slane %v2634, %v2638
  %v2641 = vadd.f32 %v2442, %v2639
  %v2642 = vadd.f32 %v2443, %v2639
  %v2643 = vadd.f32 %v2444, %v2639
  %v2644 = vadd.f32 %v2445, %v2639
  %v2645 = vadd.f32 %v2446, %v2639
  %v2646 = vadd.f32 %v2447, %v2639
  %v2647 = vadd.f32 %v2448, %v2639
  %v2648 = vadd.f32 %v2449, %v2639
  %v2649 = vadd.f32 %v2450, %v2639
  %v2650 = vadd.f32 %v2451, %v2639
  %v2651 = vadd.f32 %v2452, %v2639
  %v2652 = vadd.f32 %v2453, %v2639
  %v2653 = vadd.f32 %v2454, %v2639
  %v2654 = vadd.f32 %v2455, %v2639
  %v2655 = vadd.f32 %v2456, %v2639
  %v2656 = vadd.f32 %v2457, %v2639
  %v2657 = vadd.f32 %v2458, %v2639
  %v2658 = vadd.f32 %v2459, %v2639
  %v2659 = vadd.f32 %v2460, %v2639
  %v2660 = vadd.f32 %v2461, %v2639
  %v2661 = vadd.f32 %v2462, %v2639
  %v2662 = vadd.f32 %v2463, %v2639
  %v2663 = vadd.f32 %v2464, %v2639
  %v2664 = vadd.f32 %v2465, %v2639
  %v2665 = vadd.f32 %v2466, %v2639
  %v2666 = vadd.f32 %v2467, %v2639
  %v2667 = vadd.f32 %v2468, %v2639
  %v2668 = vadd.f32 %v2469, %v2639
  %v2669 = vadd.f32 %v2470, %v2639
  %v2670 = vadd.f32 %v2471, %v2639
  %v2671 = vadd.f32 %v2472, %v2639
  %v2672 = vadd.f32 %v2473, %v2639
  %v2673 = vadd.f32 %v2474, %v2639
  %v2674 = vadd.f32 %v2475, %v2639
  %v2675 = vadd.f32 %v2476, %v2639
  %v2676 = vadd.f32 %v2477, %v2639
  %v2677 = vadd.f32 %v2478, %v2639
  %v2678 = vadd.f32 %v2479, %v2639
  %v2679 = vadd.f32 %v2480, %v2639
  %v2680 = vadd.f32 %v2481, %v2639
  %v2681 = vadd.f32 %v2482, %v2639
  %v2682 = vadd.f32 %v2483, %v2639
  %v2683 = vadd.f32 %v2484, %v2639
  %v2684 = vadd.f32 %v2485, %v2639
  %v2685 = vadd.f32 %v2486, %v2639
  %v2686 = vadd.f32 %v2487, %v2639
  %v2687 = vadd.f32 %v2488, %v2639
  %v2688 = vadd.f32 %v2489, %v2639
  %v2689 = vadd.f32 %v2490, %v2639
  %v2690 = vadd.f32 %v2491, %v2639
  %v2691 = vadd.f32 %v2492, %v2639
  %v2692 = vadd.f32 %v2493, %v2639
  %v2693 = vadd.f32 %v2494, %v2639
  %v2694 = vadd.f32 %v2495, %v2639
  %v2695 = vadd.f32 %v2496, %v2639
  %v2696 = vadd.f32 %v2497, %v2639
  %v2697 = vadd.f32 %v2498, %v2639
  %v2698 = vadd.f32 %v2499, %v2639
  %v2699 = vadd.f32 %v2500, %v2639
  %v2700 = vadd.f32 %v2501, %v2639
  %v2701 = vadd.f32 %v2502, %v2639
  %v2702 = vadd.f32 %v2503, %v2639
  %v2703 = vadd.f32 %v2504, %v2639
  %v2704 = vadd.f32 %v2505, %v2639
  %v2705 = vadd.f32 %v2506, %v2639
  %v2706 = vadd.f32 %v2507, %v2639
  %v2707 = vadd.f32 %v2508, %v2639
  %v2708 = vadd.f32 %v2509, %v2639
  %v2709 = vadd.f32 %v2510, %v2639
  %v2710 = vadd.f32 %v2511, %v2639
  %v2711 = vadd.f32 %v2512, %v2639
  %v2712 = vadd.f32 %v2513, %v2639
  %v2713 = vadd.f32 %v2514, %v2639
  %v2714 = vadd.f32 %v2515, %v2639
  %v2715 = vadd.f32 %v2516, %v2639
  %v2716 = vadd.f32 %v2517, %v2639
  %v2717 = vadd.f32 %v2518, %v2639
  %v2718 = vadd.f32 %v2519, %v2639
  %v2719 = vadd.f32 %v2520, %v2639
  %v2720 = vadd.f32 %v2521, %v2639
  %v2721 = vadd.f32 %v2522, %v2639
  %v2722 = vadd.f32 %v2523, %v2639
  %v2723 = vadd.f32 %v2524, %v2639
  %v2724 = vadd.f32 %v2525, %v2639
  %v2725 = vadd.f32 %v2526, %v2639
  %v2726 = vadd.f32 %v2527, %v2639
  %v2727 = vadd.f32 %v2528, %v2639
  %v2728 = vadd.f32 %v2529, %v2639
  %v2729 = vadd.f32 %v2530, %v2639
  %v2730 = vadd.f32 %v2531, %v2639
  %v2731 = vadd.f32 %v2532, %v2639
  %v2732 = vadd.f32 %v2533, %v2639
  %v2733 = vadd.f32 %v2534, %v2639
  %v2734 = vadd.f32 %v2535, %v2639
  %v2735 = vadd.f32 %v2536, %v2639
  %v2736 = vadd.f32 %v2537, %v2639
  %v2737 = vadd.f32 %v2538, %v2639
  %v2738 = vadd.f32 %v2539, %v2639
  %v2739 = vadd.f32 %v2540, %v2639
  %v2740 = vadd.f32 %v2541, %v2639
  %v2741 = vadd.f32 %v2542, %v2639
  %v2742 = vadd.f32 %v2543, %v2639
  %v2743 = vadd.f32 %v2544, %v2639
  %v2744 = vadd.f32 %v2545, %v2639
  %v2745 = vadd.f32 %v2546, %v2639
  %v2746 = vadd.f32 %v2547, %v2639
  %v2747 = vadd.f32 %v2548, %v2639
  %v2748 = vadd.f32 %v2549, %v2639
  %v2749 = vadd.f32 %v2550, %v2639
  %v2750 = vadd.f32 %v2551, %v2639
  %v2751 = vadd.f32 %v2552, %v2639
  %v2752 = vadd.f32 %v2553, %v2639
  %v2753 = vadd.f32 %v2554, %v2639
  %v2754 = vadd.f32 %v2555, %v2639
  %v2755 = vadd.f32 %v2556, %v2639
  %v2756 = vadd.f32 %v2557, %v2639
  %v2757 = vadd.f32 %v2558, %v2639
  %v2758 = vadd.f32 %v2559, %v2639
  %v2759 = vadd.f32 %v2560, %v2639
  %v2760 = vadd.f32 %v2561, %v2639
  %v2761 = vadd.f32 %v2562, %v2639
  %v2762 = vadd.f32 %v2563, %v2639
  %v2763 = vadd.f32 %v2564, %v2639
  %v2764 = vadd.f32 %v2565, %v2639
  %v2765 = vadd.f32 %v2566, %v2639
  %v2766 = vadd.f32 %v2567, %v2639
  %v2767 = vadd.f32 %v2568, %v2639
  %v2768 = vadd.f32 %v2569, %v2639
  %v2769 = vadd.f32 %v2570, %v2639
  %v2770 = vadd.f32 %v2571, %v2639
  %v2771 = vadd.f32 %v2572, %v2639
  %v2772 = vadd.f32 %v2573, %v2639
  %v2773 = vadd.f32 %v2574, %v2639
  %v2774 = vadd.f32 %v2575, %v2639
  %v2775 = vadd.f32 %v2576, %v2639
  %v2776 = vadd.f32 %v2577, %v2639
  %v2777 = vadd.f32 %v2578, %v2639
  %v2778 = vadd.f32 %v2579, %v2639
  %v2779 = vadd.f32 %v2580, %v2639
  %v2780 = vadd.f32 %v2581, %v2639
  %v2781 = vadd.f32 %v2582, %v2639
  %v2782 = vadd.f32 %v2583, %v2639
  %v2783 = vadd.f32 %v2584, %v2639
  %v2784 = vadd.f32 %v2585, %v2639
  %v2785 = vadd.f32 %v2586, %v2639
  %v2786 = vadd.f32 %v2587, %v2639
  %v2787 = vadd.f32 %v2588, %v2639
  %v2788 = vadd.f32 %v2589, %v2639
  %v2789 = vadd.f32 %v2590, %v2639
  %v2790 = vadd.f32 %v2591, %v2639
  %v2791 = vadd.f32 %v2592, %v2639
  %v2792 = vadd.f32 %v2593, %v2639
  %v2793 = vadd.f32 %v2594, %v2639
  %v2794 = vadd.f32 %v2595, %v2639
  %v2795 = vadd.f32 %v2596, %v2639
  %v2796 = vadd.f32 %v2597, %v2639
  %v2797 = vadd.f32 %v2598, %v2639
  %v2798 = vadd.f32 %v2599, %v2639
  %v2799 = vadd.f32 %v2600, %v2639
  %v2800 = vadd.f32 %v2601, %v2639
  %v2801 = vadd.f32 %v2602, %v2639
  %v2802 = vadd.f32 %v2603, %v2639
  %v2803 = vadd.f32 %v2604, %v2639
  %v2804 = vadd.f32 %v2605, %v2639
  %v2805 = vadd.f32 %v2606, %v2639
  %v2806 = vadd.f32 %v2607, %v2639
  %v2807 = vadd.f32 %v2608, %v2639
  %v2808 = vadd.f32 %v2609, %v2639
  %v2809 = vadd.f32 %v2610, %v2639
  %v2810 = vadd.f32 %v2611, %v2639
  %v2811 = vadd.f32 %v2612, %v2639
  %v2812 = vadd.f32 %v2613, %v2639
  %v2813 = vadd.f32 %v2614, %v2639
  %v2814 = vadd.f32 %v2615, %v2639
  %v2815 = vadd.f32 %v2616, %v2639
  %v2816 = vadd.f32 %v2617, %v2639
  %v2817 = vadd.f32 %v2618, %v2639
  %v2818 = vadd.f32 %v2619, %v2639
  %v2819 = vadd.f32 %v2620, %v2639
  %v2820 = vadd.f32 %v2621, %v2639
  %v2821 = vadd.f32 %v2622, %v2639
  %v2822 = vadd.f32 %v2623, %v2639
  %v2823 = vadd.f32 %v2624, %v2639
  %v2824 = vadd.f32 %v2625, %v2639
  %v2825 = vadd.f32 %v2626, %v2639
  %v2826 = vadd.f32 %v2627, %v2639
  %v2827 = vadd.f32 %v2628, %v2639
  %v2828 = vadd.f32 %v2629, %v2639
  %v2829 = vadd.f32 %v2630, %v2639
  %v2830 = vadd.f32 %v2631, %v2639
  %v2831 = vadd.f32 %v2632, %v2639
  %v2832 = vadd.f32 %v2633, %v2639
  %v2833 = vmax.f32 %v2641, %v2689
  %v2834 = vmax.f32 %v2642, %v2690
  %v2835 = vmax.f32 %v2643, %v2691
  %v2836 = vmax.f32 %v2644, %v2692
  %v2837 = vmax.f32 %v2645, %v2693
  %v2838 = vmax.f32 %v2646, %v2694
  %v2839 = vmax.f32 %v2647, %v2695
  %v2840 = vmax.f32 %v2648, %v2696
  %v2841 = vmax.f32 %v2649, %v2697
  %v2842 = vmax.f32 %v2650, %v2698
  %v2843 = vmax.f32 %v2651, %v2699
  %v2844 = vmax.f32 %v2652, %v2700
  %v2845 = vmax.f32 %v2653, %v2701
  %v2846 = vmax.f32 %v2654, %v2702
  %v2847 = vmax.f32 %v2655, %v2703
  %v2848 = vmax.f32 %v2656, %v2704
  %v2849 = vmax.f32 %v2657, %v2705
  %v2850 = vmax.f32 %v2658, %v2706
  %v2851 = vmax.f32 %v2659, %v2707
  %v2852 = vmax.f32 %v2660, %v2708
  %v2853 = vmax.f32 %v2661, %v2709
  %v2854 = vmax.f32 %v2662, %v2710
  %v2855 = vmax.f32 %v2663, %v2711
  %v2856 = vmax.f32 %v2664, %v2712
  %v2857 = vmax.f32 %v2665, %v2713
  %v2858 = vmax.f32 %v2666, %v2714
  %v2859 = vmax.f32 %v2667, %v2715
  %v2860 = vmax.f32 %v2668, %v2716
  %v2861 = vmax.f32 %v2669, %v2717
  %v2862 = vmax.f32 %v2670, %v2718
  %v2863 = vmax.f32 %v2671, %v2719
  %v2864 = vmax.f32 %v2672, %v2720
  %v2865 = vmax.f32 %v2673, %v2721
  %v2866 = vmax.f32 %v2674, %v2722
  %v2867 = vmax.f32 %v2675, %v2723
  %v2868 = vmax.f32 %v2676, %v2724
  %v2869 = vmax.f32 %v2677, %v2725
  %v2870 = vmax.f32 %v2678, %v2726
  %v2871 = vmax.f32 %v2679, %v2727
  %v2872 = vmax.f32 %v2680, %v2728
  %v2873 = vmax.f32 %v2681, %v2729
  %v2874 = vmax.f32 %v2682, %v2730
  %v2875 = vmax.f32 %v2683, %v2731
  %v2876 = vmax.f32 %v2684, %v2732
  %v2877 = vmax.f32 %v2685, %v2733
  %v2878 = vmax.f32 %v2686, %v2734
  %v2879 = vmax.f32 %v2687, %v2735
  %v2880 = vmax.f32 %v2688, %v2736
  %v2881 = vmax.f32 %v2737, %v2785
  %v2882 = vmax.f32 %v2738, %v2786
  %v2883 = vmax.f32 %v2739, %v2787
  %v2884 = vmax.f32 %v2740, %v2788
  %v2885 = vmax.f32 %v2741, %v2789
  %v2886 = vmax.f32 %v2742, %v2790
  %v2887 = vmax.f32 %v2743, %v2791
  %v2888 = vmax.f32 %v2744, %v2792
  %v2889 = vmax.f32 %v2745, %v2793
  %v2890 = vmax.f32 %v2746, %v2794
  %v2891 = vmax.f32 %v2747, %v2795
  %v2892 = vmax.f32 %v2748, %v2796
  %v2893 = vmax.f32 %v2749, %v2797
  %v2894 = vmax.f32 %v2750, %v2798
  %v2895 = vmax.f32 %v2751, %v2799
  %v2896 = vmax.f32 %v2752, %v2800
  %v2897 = vmax.f32 %v2753, %v2801
  %v2898 = vmax.f32 %v2754, %v2802
  %v2899 = vmax.f32 %v2755, %v2803
  %v2900 = vmax.f32 %v2756, %v2804
  %v2901 = vmax.f32 %v2757, %v2805
  %v2902 = vmax.f32 %v2758, %v2806
  %v2903 = vmax.f32 %v2759, %v2807
  %v2904 = vmax.f32 %v2760, %v2808
  %v2905 = vmax.f32 %v2761, %v2809
  %v2906 = vmax.f32 %v2762, %v2810
  %v2907 = vmax.f32 %v2763, %v2811
  %v2908 = vmax.f32 %v2764, %v2812
  %v2909 = vmax.f32 %v2765, %v2813
  %v2910 = vmax.f32 %v2766, %v2814
  %v2911 = vmax.f32 %v2767, %v2815
  %v2912 = vmax.f32 %v2768, %v2816
  %v2913 = vmax.f32 %v2769, %v2817
  %v2914 = vmax.f32 %v2770, %v2818
  %v2915 = vmax.f32 %v2771, %v2819
  %v2916 = vmax.f32 %v2772, %v2820
  %v2917 = vmax.f32 %v2773, %v2821
  %v2918 = vmax.f32 %v2774, %v2822
  %v2919 = vmax.f32 %v2775, %v2823
  %v2920 = vmax.f32 %v2776, %v2824
  %v2921 = vmax.f32 %v2777, %v2825
  %v2922 = vmax.f32 %v2778, %v2826
  %v2923 = vmax.f32 %v2779, %v2827
  %v2924 = vmax.f32 %v2780, %v2828
  %v2925 = vmax.f32 %v2781, %v2829
  %v2926 = vmax.f32 %v2782, %v2830
  %v2927 = vmax.f32 %v2783, %v2831
  %v2928 = vmax.f32 %v2784, %v2832
  %v2929 = vmax.f32 %v2833, %v2881
  %v2930 = vmax.f32 %v2834, %v2882
  %v2931 = vmax.f32 %v2835, %v2883
  %v2932 = vmax.f32 %v2836, %v2884
  %v2933 = vmax.f32 %v2837, %v2885
  %v2934 = vmax.f32 %v2838, %v2886
  %v2935 = vmax.f32 %v2839, %v2887
  %v2936 = vmax.f32 %v2840, %v2888
  %v2937 = vmax.f32 %v2841, %v2889
  %v2938 = vmax.f32 %v2842, %v2890
  %v2939 = vmax.f32 %v2843, %v2891
  %v2940 = vmax.f32 %v2844, %v2892
  %v2941 = vmax.f32 %v2845, %v2893
  %v2942 = vmax.f32 %v2846, %v2894
  %v2943 = vmax.f32 %v2847, %v2895
  %v2944 = vmax.f32 %v2848, %v2896
  %v2945 = vmax.f32 %v2849, %v2897
  %v2946 = vmax.f32 %v2850, %v2898
  %v2947 = vmax.f32 %v2851, %v2899
  %v2948 = vmax.f32 %v2852, %v2900
  %v2949 = vmax.f32 %v2853, %v2901
  %v2950 = vmax.f32 %v2854, %v2902
  %v2951 = vmax.f32 %v2855, %v2903
  %v2952 = vmax.f32 %v2856, %v2904
  %v2953 = vmax.f32 %v2857, %v2905
  %v2954 = vmax.f32 %v2858, %v2906
  %v2955 = vmax.f32 %v2859, %v2907
  %v2956 = vmax.f32 %v2860, %v2908
  %v2957 = vmax.f32 %v2861, %v2909
  %v2958 = vmax.f32 %v2862, %v2910
  %v2959 = vmax.f32 %v2863, %v2911
  %v2960 = vmax.f32 %v2864, %v2912
  %v2961 = vmax.f32 %v2865, %v2913
  %v2962 = vmax.f32 %v2866, %v2914
  %v2963 = vmax.f32 %v2867, %v2915
  %v2964 = vmax.f32 %v2868, %v2916
  %v2965 = vmax.f32 %v2869, %v2917
  %v2966 = vmax.f32 %v2870, %v2918
  %v2967 = vmax.f32 %v2871, %v2919
  %v2968 = vmax.f32 %v2872, %v2920
  %v2969 = vmax.f32 %v2873, %v2921
  %v2970 = vmax.f32 %v2874, %v2922
  %v2971 = vmax.f32 %v2875, %v2923
  %v2972 = vmax.f32 %v2876, %v2924
  %v2973 = vmax.f32 %v2877, %v2925
  %v2974 = vmax.f32 %v2878, %v2926
  %v2975 = vmax.f32 %v2879, %v2927
  %v2976 = vmax.f32 %v2880, %v2928
  %v2977 = vmax.f32 %v2929, 0.0
  %v2978 = vmax.f32 %v2930, 0.0
  %v2979 = vmax.f32 %v2931, 0.0
  %v2980 = vmax.f32 %v2932, 0.0
  %v2981 = vmax.f32 %v2933, 0.0
  %v2982 = vmax.f32 %v2934, 0.0
  %v2983 = vmax.f32 %v2935, 0.0
  %v2984 = vmax.f32 %v2936, 0.0
  %v2985 = vmax.f32 %v2937, 0.0
  %v2986 = vmax.f32 %v2938, 0.0
  %v2987 = vmax.f32 %v2939, 0.0
  %v2988 = vmax.f32 %v2940, 0.0
  %v2989 = vmax.f32 %v2941, 0.0
  %v2990 = vmax.f32 %v2942, 0.0
  %v2991 = vmax.f32 %v2943, 0.0
  %v2992 = vmax.f32 %v2944, 0.0
  %v2993 = vmax.f32 %v2945, 0.0
  %v2994 = vmax.f32 %v2946, 0.0
  %v2995 = vmax.f32 %v2947, 0.0
  %v2996 = vmax.f32 %v2948, 0.0
  %v2997 = vmax.f32 %v2949, 0.0
  %v2998 = vmax.f32 %v2950, 0.0
  %v2999 = vmax.f32 %v2951, 0.0
  %v3000 = vmax.f32 %v2952, 0.0
  %v3001 = vmax.f32 %v2953, 0.0
  %v3002 = vmax.f32 %v2954, 0.0
  %v3003 = vmax.f32 %v2955, 0.0
  %v3004 = vmax.f32 %v2956, 0.0
  %v3005 = vmax.f32 %v2957, 0.0
  %v3006 = vmax.f32 %v2958, 0.0
  %v3007 = vmax.f32 %v2959, 0.0
  %v3008 = vmax.f32 %v2960, 0.0
  %v3009 = vmax.f32 %v2961, 0.0
  %v3010 = vmax.f32 %v2962, 0.0
  %v3011 = vmax.f32 %v2963, 0.0
  %v3012 = vmax.f32 %v2964, 0.0
  %v3013 = vmax.f32 %v2965, 0.0
  %v3014 = vmax.f32 %v2966, 0.0
  %v3015 = vmax.f32 %v2967, 0.0
  %v3016 = vmax.f32 %v2968, 0.0
  %v3017 = vmax.f32 %v2969, 0.0
  %v3018 = vmax.f32 %v2970, 0.0
  %v3019 = vmax.f32 %v2971, 0.0
  %v3020 = vmax.f32 %v2972, 0.0
  %v3021 = vmax.f32 %v2973, 0.0
  %v3022 = vmax.f32 %v2974, 0.0
  %v3023 = vmax.f32 %v2975, 0.0
  %v3024 = vmax.f32 %v2976, 0.0
  %v3025 = vpack.c.bf16 %v2978, %v2977
  %v3026 = vpack.c.bf16 %v2980, %v2979
  %v3027 = vpack.c.bf16 %v2982, %v2981
  %v3028 = vpack.c.bf16 %v2984, %v2983
  %v3029 = vpack.c.bf16 %v2986, %v2985
  %v3030 = vpack.c.bf16 %v2988, %v2987
  %v3031 = vpack.c.bf16 %v2990, %v2989
  %v3032 = vpack.c.bf16 %v2992, %v2991
  %v3033 = vpack.c.bf16 %v2994, %v2993
  %v3034 = vpack.c.bf16 %v2996, %v2995
  %v3035 = vpack.c.bf16 %v2998, %v2997
  %v3036 = vpack.c.bf16 %v3000, %v2999
  %v3037 = vpack.c.bf16 %v3002, %v3001
  %v3038 = vpack.c.bf16 %v3004, %v3003
  %v3039 = vpack.c.bf16 %v3006, %v3005
  %v3040 = vpack.c.bf16 %v3008, %v3007
  %v3041 = vpack.c.bf16 %v3010, %v3009
  %v3042 = vpack.c.bf16 %v3012, %v3011
  %v3043 = vpack.c.bf16 %v3014, %v3013
  %v3044 = vpack.c.bf16 %v3016, %v3015
  %v3045 = vpack.c.bf16 %v3018, %v3017
  %v3046 = vpack.c.bf16 %v3020, %v3019
  %v3047 = vpack.c.bf16 %v3022, %v3021
  %v3048 = vpack.c.bf16 %v3024, %v3023
  %v3073 = vunpack.c.l.b16 %v3025
  %v3074 = vunpack.c.h.b16 %v3025
  %v3075 = vunpack.c.l.b16 %v3026
  %v3076 = vunpack.c.h.b16 %v3026
  %v3077 = vunpack.c.l.b16 %v3027
  %v3078 = vunpack.c.h.b16 %v3027
  %v3079 = vunpack.c.l.b16 %v3028
  %v3080 = vunpack.c.h.b16 %v3028
  %v3081 = vunpack.c.l.b16 %v3029
  %v3082 = vunpack.c.h.b16 %v3029
  %v3083 = vunpack.c.l.b16 %v3030
  %v3084 = vunpack.c.h.b16 %v3030
  %v3085 = vunpack.c.l.b16 %v3031
  %v3086 = vunpack.c.h.b16 %v3031
  %v3087 = vunpack.c.l.b16 %v3032
  %v3088 = vunpack.c.h.b16 %v3032
  %v3089 = vunpack.c.l.b16 %v3033
  %v3090 = vunpack.c.h.b16 %v3033
  %v3091 = vunpack.c.l.b16 %v3034
  %v3092 = vunpack.c.h.b16 %v3034
  %v3093 = vunpack.c.l.b16 %v3035
  %v3094 = vunpack.c.h.b16 %v3035
  %v3095 = vunpack.c.l.b16 %v3036
  %v3096 = vunpack.c.h.b16 %v3036
  %v3097 = vunpack.c.l.b16 %v3037
  %v3098 = vunpack.c.h.b16 %v3037
  %v3099 = vunpack.c.l.b16 %v3038
  %v3100 = vunpack.c.h.b16 %v3038
  %v3101 = vunpack.c.l.b16 %v3039
  %v3102 = vunpack.c.h.b16 %v3039
  %v3103 = vunpack.c.l.b16 %v3040
  %v3104 = vunpack.c.h.b16 %v3040
  %v3105 = vunpack.c.l.b16 %v3041
  %v3106 = vunpack.c.h.b16 %v3041
  %v3107 = vunpack.c.l.b16 %v3042
  %v3108 = vunpack.c.h.b16 %v3042
  %v3109 = vunpack.c.l.b16 %v3043
  %v3110 = vunpack.c.h.b16 %v3043
  %v3111 = vunpack.c.l.b16 %v3044
  %v3112 = vunpack.c.h.b16 %v3044
  %v3113 = vunpack.c.l.b16 %v3045
  %v3114 = vunpack.c.h.b16 %v3045
  %v3115 = vunpack.c.l.b16 %v3046
  %v3116 = vunpack.c.h.b16 %v3046
  %v3117 = vunpack.c.l.b16 %v3047
  %v3118 = vunpack.c.h.b16 %v3047
  %v3119 = vunpack.c.l.b16 %v3048
  %v3120 = vunpack.c.h.b16 %v3048
  %v3121 = vpack.c.b16 %v3073, %v3073
  %v3122 = vpack.c.b16 %v3074, %v3074
  %v3123 = vpack.c.b16 %v3075, %v3075
  %v3124 = vpack.c.b16 %v3076, %v3076
  %v3125 = vpack.c.b16 %v3077, %v3077
  %v3126 = vpack.c.b16 %v3078, %v3078
  %v3127 = vpack.c.b16 %v3079, %v3079
  %v3128 = vpack.c.b16 %v3080, %v3080
  %v3129 = vpack.c.b16 %v3081, %v3081
  %v3130 = vpack.c.b16 %v3082, %v3082
  %v3131 = vpack.c.b16 %v3083, %v3083
  %v3132 = vpack.c.b16 %v3084, %v3084
  %v3133 = vpack.c.b16 %v3085, %v3085
  %v3134 = vpack.c.b16 %v3086, %v3086
  %v3135 = vpack.c.b16 %v3087, %v3087
  %v3136 = vpack.c.b16 %v3088, %v3088
  %v3137 = vpack.c.b16 %v3089, %v3089
  %v3138 = vpack.c.b16 %v3090, %v3090
  %v3139 = vpack.c.b16 %v3091, %v3091
  %v3140 = vpack.c.b16 %v3092, %v3092
  %v3141 = vpack.c.b16 %v3093, %v3093
  %v3142 = vpack.c.b16 %v3094, %v3094
  %v3143 = vpack.c.b16 %v3095, %v3095
  %v3144 = vpack.c.b16 %v3096, %v3096
  %v3145 = vpack.c.b16 %v3097, %v3097
  %v3146 = vpack.c.b16 %v3098, %v3098
  %v3147 = vpack.c.b16 %v3099, %v3099
  %v3148 = vpack.c.b16 %v3100, %v3100
  %v3149 = vpack.c.b16 %v3101, %v3101
  %v3150 = vpack.c.b16 %v3102, %v3102
  %v3151 = vpack.c.b16 %v3103, %v3103
  %v3152 = vpack.c.b16 %v3104, %v3104
  %v3153 = vpack.c.b16 %v3105, %v3105
  %v3154 = vpack.c.b16 %v3106, %v3106
  %v3155 = vpack.c.b16 %v3107, %v3107
  %v3156 = vpack.c.b16 %v3108, %v3108
  %v3157 = vpack.c.b16 %v3109, %v3109
  %v3158 = vpack.c.b16 %v3110, %v3110
  %v3159 = vpack.c.b16 %v3111, %v3111
  %v3160 = vpack.c.b16 %v3112, %v3112
  %v3161 = vpack.c.b16 %v3113, %v3113
  %v3162 = vpack.c.b16 %v3114, %v3114
  %v3163 = vpack.c.b16 %v3115, %v3115
  %v3164 = vpack.c.b16 %v3116, %v3116
  %v3165 = vpack.c.b16 %v3117, %v3117
  %v3166 = vpack.c.b16 %v3118, %v3118
  %v3167 = vpack.c.b16 %v3119, %v3119
  %v3168 = vpack.c.b16 %v3120, %v3120
  %3217 = vst [vmem:[%s4] sm:$0xf] %v3121
  %3218 = vst [vmem:[%s4 + $0x4] sm:$0xf] %v3122
  %3219 = vst [vmem:[%s4 + $0x8] sm:$0xf] %v3123
  %3220 = vst [vmem:[%s4 + $0xc] sm:$0xf] %v3124
  %3221 = vst [vmem:[%s4 + $0x10] sm:$0xf] %v3125
  %3222 = vst [vmem:[%s4 + $0x14] sm:$0xf] %v3126
  %3223 = vst [vmem:[%s4 + $0x18] sm:$0xf] %v3127
  %3224 = vst [vmem:[%s4 + $0x1c] sm:$0xf] %v3128
  %3225 = vst [vmem:[%s4 + $0x20] sm:$0xf] %v3129
  %3226 = vst [vmem:[%s4 + $0x24] sm:$0xf] %v3130
  %3227 = vst [vmem:[%s4 + $0x28] sm:$0xf] %v3131
  %3228 = vst [vmem:[%s4 + $0x2c] sm:$0xf] %v3132
  %3229 = vst [vmem:[%s4 + $0x30] sm:$0xf] %v3133
  %3230 = vst [vmem:[%s4 + $0x34] sm:$0xf] %v3134
  %3231 = vst [vmem:[%s4 + $0x38] sm:$0xf] %v3135
  %3232 = vst [vmem:[%s4 + $0x3c] sm:$0xf] %v3136
  %3233 = vst [vmem:[%s4 + $0x40] sm:$0xf] %v3137
  %3234 = vst [vmem:[%s4 + $0x44] sm:$0xf] %v3138
  %3235 = vst [vmem:[%s4 + $0x48] sm:$0xf] %v3139
  %3236 = vst [vmem:[%s4 + $0x4c] sm:$0xf] %v3140
  %3237 = vst [vmem:[%s4 + $0x50] sm:$0xf] %v3141
  %3238 = vst [vmem:[%s4 + $0x54] sm:$0xf] %v3142
  %3239 = vst [vmem:[%s4 + $0x58] sm:$0xf] %v3143
  %3240 = vst [vmem:[%s4 + $0x5c] sm:$0xf] %v3144
  %3241 = vst [vmem:[%s4 + $0x60] sm:$0xf] %v3145
  %3242 = vst [vmem:[%s4 + $0x64] sm:$0xf] %v3146
  %3243 = vst [vmem:[%s4 + $0x68] sm:$0xf] %v3147
  %3244 = vst [vmem:[%s4 + $0x6c] sm:$0xf] %v3148
  %3245 = vst [vmem:[%s4 + $0x70] sm:$0xf] %v3149
  %3246 = vst [vmem:[%s4 + $0x74] sm:$0xf] %v3150
  %3247 = vst [vmem:[%s4 + $0x78] sm:$0xf] %v3151
  %3248 = vst [vmem:[%s4 + $0x7c] sm:$0xf] %v3152
  %3249 = vst [vmem:[%s4 + $0x80] sm:$0xf] %v3153
  %3250 = vst [vmem:[%s4 + $0x84] sm:$0xf] %v3154
  %3251 = vst [vmem:[%s4 + $0x88] sm:$0xf] %v3155
  %3252 = vst [vmem:[%s4 + $0x8c] sm:$0xf] %v3156
  %3253 = vst [vmem:[%s4 + $0x90] sm:$0xf] %v3157
  %3254 = vst [vmem:[%s4 + $0x94] sm:$0xf] %v3158
  %3255 = vst [vmem:[%s4 + $0x98] sm:$0xf] %v3159
  %3256 = vst [vmem:[%s4 + $0x9c] sm:$0xf] %v3160
  %3257 = vst [vmem:[%s4 + $0xa0] sm:$0xf] %v3161
  %3258 = vst [vmem:[%s4 + $0xa4] sm:$0xf] %v3162
  %3259 = vst [vmem:[%s4 + $0xa8] sm:$0xf] %v3163
  %3260 = vst [vmem:[%s4 + $0xac] sm:$0xf] %v3164
  %3261 = vst [vmem:[%s4 + $0xb0] sm:$0xf] %v3165
  %3262 = vst [vmem:[%s4 + $0xb4] sm:$0xf] %v3166
  %3263 = vst [vmem:[%s4 + $0xb8] sm:$0xf] %v3167
  %3264 = vst [vmem:[%s4 + $0xbc] sm:$0xf] %v3168
  // Predicated region
  $region18: #{protomaml_forward.13} parent=0 // pred_check
    _
  $region19: #{protomaml_forward.13} parent=0 // pred_check_branch
    %3266 = sbr.rel (0) target = $region21
  $region20: #{protomaml_forward.13} parent=0 // pred_region
    _
  $region21: #{protomaml_forward.13} parent=0 // pred_fallthru
    _
  // Predicated region
  $region22: #{protomaml_forward.13} parent=0 // pred_check
    _
  $region23: #{protomaml_forward.13} parent=0 // pred_check_branch
    %3268 = sbr.rel (0) target = $region25
  $region24: #{protomaml_forward.13} parent=0 // pred_region
    _
  $region25: #{protomaml_forward.13} parent=0 // pred_fallthru
    _

// kernel: protomaml_forward.14
$region0: #{protomaml_forward.14}
  #allocation0 [shape = 'u32[]', space=smem, size = 0x4, offset = 0x4, fixed_abs, tag = 'smem constant byte address 0x4 - core index']
  #allocation1 [shape = 'u32[144,128]{1,0:T(1,128)}', space=vmem, size = 0x12000, scoped, tag = 'internal scratch']
  %s0 = inlined_call_operand.vmem [shape: bf16[384,640], index: 0, kind: input, shape index: {}]
  %s1 = inlined_call_operand.vmem [shape: bf16[640,128], index: 1, kind: input, shape index: {}]
  %s2 = inlined_call_operand.vmem [shape: f32[1,128], index: 2, kind: input, shape index: {}]
  %s3 = inlined_call_operand.vmem [shape: f32[1,128], index: 3, kind: input, shape index: {}]
  %s4 = inlined_call_operand.vmem [shape: bf16[96,128], index: 4, kind: output, shape index: {}]
  %s5 = sld [smem:[#allocation0]]
  $region26: #{protomaml_forward.14} parent=0
    _
  %s7 = ssub.s32 1, %s5
  %s8 = scalar_select 0, %s7, %s5
  // Predicated region
  $region2: #{protomaml_forward.14} parent=0 // pred_check
    _
  $region3: #{protomaml_forward.14} parent=0 // pred_check_branch
    %10 = sbr.rel (0) target = $region5
  $region4: #{protomaml_forward.14} parent=0 // pred_region
    _
  $region5: #{protomaml_forward.14} parent=0 // pred_fallthru
    _
  // Predicated region
  $region6: #{protomaml_forward.14} parent=0 // pred_check
    _
  $region7: #{protomaml_forward.14} parent=0 // pred_check_branch
    %12 = sbr.rel (0) target = $region9
  $region8: #{protomaml_forward.14} parent=0 // pred_region
    _
  $region9: #{protomaml_forward.14} parent=0 // pred_fallthru
    _
  // Predicated region
  $region10: #{protomaml_forward.14} parent=0 // pred_check
    _
  $region11: #{protomaml_forward.14} parent=0 // pred_check_branch
    %14 = sbr.rel (0) target = $region13
  $region12: #{protomaml_forward.14} parent=0 // pred_region
    _
  $region13: #{protomaml_forward.14} parent=0 // pred_fallthru
    _
  // Predicated region
  $region14: #{protomaml_forward.14} parent=0 // pred_check
    _
  $region15: #{protomaml_forward.14} parent=0 // pred_check_branch
    %16 = sbr.rel (0) target = $region17
  $region16: #{protomaml_forward.14} parent=0 // pred_region
    _
  $region17: #{protomaml_forward.14} parent=0 // pred_fallthru
    _
  %v18 = vld [vmem:[%s0] sm:$0xff]
  %v19 = vld [vmem:[%s0 + $0x8] sm:$0xff]
  %v20 = vld [vmem:[%s0 + $0x10] sm:$0xf]
  %v21 = vld [vmem:[%s0 + $0x14] sm:$0xff]
  %v22 = vld [vmem:[%s0 + $0x1c] sm:$0xff]
  %v23 = vld [vmem:[%s0 + $0x24] sm:$0xf]
  %v24 = vld [vmem:[%s0 + $0x28] sm:$0xff]
  %v25 = vld [vmem:[%s0 + $0x30] sm:$0xff]
  %v26 = vld [vmem:[%s0 + $0x38] sm:$0xf]
  %v27 = vld [vmem:[%s0 + $0x3c] sm:$0xff]
  %v28 = vld [vmem:[%s0 + $0x44] sm:$0xff]
  %v29 = vld [vmem:[%s0 + $0x4c] sm:$0xf]
  %v30 = vld [vmem:[%s0 + $0x50] sm:$0xff]
  %v31 = vld [vmem:[%s0 + $0x58] sm:$0xff]
  %v32 = vld [vmem:[%s0 + $0x60] sm:$0xf]
  %v33 = vld [vmem:[%s0 + $0x64] sm:$0xff]
  %v34 = vld [vmem:[%s0 + $0x6c] sm:$0xff]
  %v35 = vld [vmem:[%s0 + $0x74] sm:$0xf]
  %v36 = vld [vmem:[%s0 + $0x78] sm:$0xff]
  %v37 = vld [vmem:[%s0 + $0x80] sm:$0xff]
  %v38 = vld [vmem:[%s0 + $0x88] sm:$0xf]
  %v39 = vld [vmem:[%s0 + $0x8c] sm:$0xff]
  %v40 = vld [vmem:[%s0 + $0x94] sm:$0xff]
  %v41 = vld [vmem:[%s0 + $0x9c] sm:$0xf]
  %v42 = vld [vmem:[%s0 + $0xa0] sm:$0xff]
  %v43 = vld [vmem:[%s0 + $0xa8] sm:$0xff]
  %v44 = vld [vmem:[%s0 + $0xb0] sm:$0xf]
  %v45 = vld [vmem:[%s0 + $0xb4] sm:$0xff]
  %v46 = vld [vmem:[%s0 + $0xbc] sm:$0xff]
  %v47 = vld [vmem:[%s0 + $0xc4] sm:$0xf]
  %v48 = vld [vmem:[%s0 + $0xc8] sm:$0xff]
  %v49 = vld [vmem:[%s0 + $0xd0] sm:$0xff]
  %v50 = vld [vmem:[%s0 + $0xd8] sm:$0xf]
  %v51 = vld [vmem:[%s0 + $0xdc] sm:$0xff]
  %v52 = vld [vmem:[%s0 + $0xe4] sm:$0xff]
  %v53 = vld [vmem:[%s0 + $0xec] sm:$0xf]
  %v54 = vld [vmem:[%s0 + $0xf0] sm:$0xff]
  %v55 = vld [vmem:[%s0 + $0xf8] sm:$0xff]
  %v56 = vld [vmem:[%s0 + $0x100] sm:$0xf]
  %v57 = vld [vmem:[%s0 + $0x104] sm:$0xff]
  %v58 = vld [vmem:[%s0 + $0x10c] sm:$0xff]
  %v59 = vld [vmem:[%s0 + $0x114] sm:$0xf]
  %v60 = vld [vmem:[%s0 + $0x118] sm:$0xff]
  %v61 = vld [vmem:[%s0 + $0x120] sm:$0xff]
  %v62 = vld [vmem:[%s0 + $0x128] sm:$0xf]
  %v63 = vld [vmem:[%s0 + $0x12c] sm:$0xff]
  %v64 = vld [vmem:[%s0 + $0x134] sm:$0xff]
  %v65 = vld [vmem:[%s0 + $0x13c] sm:$0xf]
  %v66 = vld [vmem:[%s0 + $0x140] sm:$0xff]
  %v67 = vld [vmem:[%s0 + $0x148] sm:$0xff]
  %v68 = vld [vmem:[%s0 + $0x150] sm:$0xf]
  %v69 = vld [vmem:[%s0 + $0x154] sm:$0xff]
  %v70 = vld [vmem:[%s0 + $0x15c] sm:$0xff]
  %v71 = vld [vmem:[%s0 + $0x164] sm:$0xf]
  %v72 = vld [vmem:[%s0 + $0x168] sm:$0xff]
  %v73 = vld [vmem:[%s0 + $0x170] sm:$0xff]
  %v74 = vld [vmem:[%s0 + $0x178] sm:$0xf]
  %v75 = vld [vmem:[%s0 + $0x17c] sm:$0xff]
  %v76 = vld [vmem:[%s0 + $0x184] sm:$0xff]
  %v77 = vld [vmem:[%s0 + $0x18c] sm:$0xf]
  %v78 = vld [vmem:[%s0 + $0x190] sm:$0xff]
  %v79 = vld [vmem:[%s0 + $0x198] sm:$0xff]
  %v80 = vld [vmem:[%s0 + $0x1a0] sm:$0xf]
  %v81 = vld [vmem:[%s0 + $0x1a4] sm:$0xff]
  %v82 = vld [vmem:[%s0 + $0x1ac] sm:$0xff]
  %v83 = vld [vmem:[%s0 + $0x1b4] sm:$0xf]
  %v84 = vld [vmem:[%s0 + $0x1b8] sm:$0xff]
  %v85 = vld [vmem:[%s0 + $0x1c0] sm:$0xff]
  %v86 = vld [vmem:[%s0 + $0x1c8] sm:$0xf]
  %v87 = vld [vmem:[%s0 + $0x1cc] sm:$0xff]
  %v88 = vld [vmem:[%s0 + $0x1d4] sm:$0xff]
  %v89 = vld [vmem:[%s0 + $0x1dc] sm:$0xf]
  %v90 = vld [vmem:[%s0 + $0x1e0] sm:$0xff]
  %v91 = vld [vmem:[%s0 + $0x1e8] sm:$0xff]
  %v92 = vld [vmem:[%s0 + $0x1f0] sm:$0xf]
  %v93 = vld [vmem:[%s0 + $0x1f4] sm:$0xff]
  %v94 = vld [vmem:[%s0 + $0x1fc] sm:$0xff]
  %v95 = vld [vmem:[%s0 + $0x204] sm:$0xf]
  %v96 = vld [vmem:[%s0 + $0x208] sm:$0xff]
  %v97 = vld [vmem:[%s0 + $0x210] sm:$0xff]
  %v98 = vld [vmem:[%s0 + $0x218] sm:$0xf]
  %v99 = vld [vmem:[%s0 + $0x21c] sm:$0xff]
  %v100 = vld [vmem:[%s0 + $0x224] sm:$0xff]
  %v101 = vld [vmem:[%s0 + $0x22c] sm:$0xf]
  %v102 = vld [vmem:[%s0 + $0x230] sm:$0xff]
  %v103 = vld [vmem:[%s0 + $0x238] sm:$0xff]
  %v104 = vld [vmem:[%s0 + $0x240] sm:$0xf]
  %v105 = vld [vmem:[%s0 + $0x244] sm:$0xff]
  %v106 = vld [vmem:[%s0 + $0x24c] sm:$0xff]
  %v107 = vld [vmem:[%s0 + $0x254] sm:$0xf]
  %v108 = vld [vmem:[%s0 + $0x258] sm:$0xff]
  %v109 = vld [vmem:[%s0 + $0x260] sm:$0xff]
  %v110 = vld [vmem:[%s0 + $0x268] sm:$0xf]
  %v111 = vld [vmem:[%s0 + $0x26c] sm:$0xff]
  %v112 = vld [vmem:[%s0 + $0x274] sm:$0xff]
  %v113 = vld [vmem:[%s0 + $0x27c] sm:$0xf]
  %v114 = vld [vmem:[%s0 + $0x280] sm:$0xff]
  %v115 = vld [vmem:[%s0 + $0x288] sm:$0xff]
  %v116 = vld [vmem:[%s0 + $0x290] sm:$0xf]
  %v117 = vld [vmem:[%s0 + $0x294] sm:$0xff]
  %v118 = vld [vmem:[%s0 + $0x29c] sm:$0xff]
  %v119 = vld [vmem:[%s0 + $0x2a4] sm:$0xf]
  %v120 = vld [vmem:[%s0 + $0x2a8] sm:$0xff]
  %v121 = vld [vmem:[%s0 + $0x2b0] sm:$0xff]
  %v122 = vld [vmem:[%s0 + $0x2b8] sm:$0xf]
  %v123 = vld [vmem:[%s0 + $0x2bc] sm:$0xff]
  %v124 = vld [vmem:[%s0 + $0x2c4] sm:$0xff]
  %v125 = vld [vmem:[%s0 + $0x2cc] sm:$0xf]
  %v126 = vld [vmem:[%s0 + $0x2d0] sm:$0xff]
  %v127 = vld [vmem:[%s0 + $0x2d8] sm:$0xff]
  %v128 = vld [vmem:[%s0 + $0x2e0] sm:$0xf]
  %v129 = vld [vmem:[%s0 + $0x2e4] sm:$0xff]
  %v130 = vld [vmem:[%s0 + $0x2ec] sm:$0xff]
  %v131 = vld [vmem:[%s0 + $0x2f4] sm:$0xf]
  %v132 = vld [vmem:[%s0 + $0x2f8] sm:$0xff]
  %v133 = vld [vmem:[%s0 + $0x300] sm:$0xff]
  %v134 = vld [vmem:[%s0 + $0x308] sm:$0xf]
  %v135 = vld [vmem:[%s0 + $0x30c] sm:$0xff]
  %v136 = vld [vmem:[%s0 + $0x314] sm:$0xff]
  %v137 = vld [vmem:[%s0 + $0x31c] sm:$0xf]
  %v138 = vld [vmem:[%s0 + $0x320] sm:$0xff]
  %v139 = vld [vmem:[%s0 + $0x328] sm:$0xff]
  %v140 = vld [vmem:[%s0 + $0x330] sm:$0xf]
  %v141 = vld [vmem:[%s0 + $0x334] sm:$0xff]
  %v142 = vld [vmem:[%s0 + $0x33c] sm:$0xff]
  %v143 = vld [vmem:[%s0 + $0x344] sm:$0xf]
  %v144 = vld [vmem:[%s0 + $0x348] sm:$0xff]
  %v145 = vld [vmem:[%s0 + $0x350] sm:$0xff]
  %v146 = vld [vmem:[%s0 + $0x358] sm:$0xf]
  %v147 = vld [vmem:[%s0 + $0x35c] sm:$0xff]
  %v148 = vld [vmem:[%s0 + $0x364] sm:$0xff]
  %v149 = vld [vmem:[%s0 + $0x36c] sm:$0xf]
  %v150 = vld [vmem:[%s0 + $0x370] sm:$0xff]
  %v151 = vld [vmem:[%s0 + $0x378] sm:$0xff]
  %v152 = vld [vmem:[%s0 + $0x380] sm:$0xf]
  %v153 = vld [vmem:[%s0 + $0x384] sm:$0xff]
  %v154 = vld [vmem:[%s0 + $0x38c] sm:$0xff]
  %v155 = vld [vmem:[%s0 + $0x394] sm:$0xf]
  %v156 = vld [vmem:[%s0 + $0x398] sm:$0xff]
  %v157 = vld [vmem:[%s0 + $0x3a0] sm:$0xff]
  %v158 = vld [vmem:[%s0 + $0x3a8] sm:$0xf]
  %v159 = vld [vmem:[%s0 + $0x3ac] sm:$0xff]
  %v160 = vld [vmem:[%s0 + $0x3b4] sm:$0xff]
  %v161 = vld [vmem:[%s0 + $0x3bc] sm:$0xf]
  %v162 = vld [vmem:[%s1] sm:$0xf]
  %v163 = vld [vmem:[%s1 + $0x4] sm:$0xf]
  %v164 = vld [vmem:[%s1 + $0x8] sm:$0xf]
  %v165 = vld [vmem:[%s1 + $0xc] sm:$0xf]
  %v166 = vld [vmem:[%s1 + $0x10] sm:$0xf]
  %v167 = vld [vmem:[%s1 + $0x14] sm:$0xf]
  %v168 = vld [vmem:[%s1 + $0x18] sm:$0xf]
  %v169 = vld [vmem:[%s1 + $0x1c] sm:$0xf]
  %v170 = vld [vmem:[%s1 + $0x20] sm:$0xf]
  %v171 = vld [vmem:[%s1 + $0x24] sm:$0xf]
  %v172 = vld [vmem:[%s1 + $0x28] sm:$0xf]
  %v173 = vld [vmem:[%s1 + $0x2c] sm:$0xf]
  %v174 = vld [vmem:[%s1 + $0x30] sm:$0xf]
  %v175 = vld [vmem:[%s1 + $0x34] sm:$0xf]
  %v176 = vld [vmem:[%s1 + $0x38] sm:$0xf]
  %v177 = vld [vmem:[%s1 + $0x3c] sm:$0xf]
  %v178 = vld [vmem:[%s1 + $0x40] sm:$0xf]
  %v179 = vld [vmem:[%s1 + $0x44] sm:$0xf]
  %v180 = vld [vmem:[%s1 + $0x48] sm:$0xf]
  %v181 = vld [vmem:[%s1 + $0x4c] sm:$0xf]
  %v182 = vld [vmem:[%s1 + $0x50] sm:$0xf]
  %v183 = vld [vmem:[%s1 + $0x54] sm:$0xf]
  %v184 = vld [vmem:[%s1 + $0x58] sm:$0xf]
  %v185 = vld [vmem:[%s1 + $0x5c] sm:$0xf]
  %v186 = vld [vmem:[%s1 + $0x60] sm:$0xf]
  %v187 = vld [vmem:[%s1 + $0x64] sm:$0xf]
  %v188 = vld [vmem:[%s1 + $0x68] sm:$0xf]
  %v189 = vld [vmem:[%s1 + $0x6c] sm:$0xf]
  %v190 = vld [vmem:[%s1 + $0x70] sm:$0xf]
  %v191 = vld [vmem:[%s1 + $0x74] sm:$0xf]
  %v192 = vld [vmem:[%s1 + $0x78] sm:$0xf]
  %v193 = vld [vmem:[%s1 + $0x7c] sm:$0xf]
  %v194 = vld [vmem:[%s1 + $0x80] sm:$0xf]
  %v195 = vld [vmem:[%s1 + $0x84] sm:$0xf]
  %v196 = vld [vmem:[%s1 + $0x88] sm:$0xf]
  %v197 = vld [vmem:[%s1 + $0x8c] sm:$0xf]
  %v198 = vld [vmem:[%s1 + $0x90] sm:$0xf]
  %v199 = vld [vmem:[%s1 + $0x94] sm:$0xf]
  %v200 = vld [vmem:[%s1 + $0x98] sm:$0xf]
  %v201 = vld [vmem:[%s1 + $0x9c] sm:$0xf]
  %v202 = vld [vmem:[%s1 + $0xa0] sm:$0xf]
  %v203 = vld [vmem:[%s1 + $0xa4] sm:$0xf]
  %v204 = vld [vmem:[%s1 + $0xa8] sm:$0xf]
  %v205 = vld [vmem:[%s1 + $0xac] sm:$0xf]
  %v206 = vld [vmem:[%s1 + $0xb0] sm:$0xf]
  %v207 = vld [vmem:[%s1 + $0xb4] sm:$0xf]
  %v208 = vld [vmem:[%s1 + $0xb8] sm:$0xf]
  %v209 = vld [vmem:[%s1 + $0xbc] sm:$0xf]
  %v210 = vld [vmem:[%s1 + $0xc0] sm:$0xf]
  %v211 = vld [vmem:[%s1 + $0xc4] sm:$0xf]
  %v212 = vld [vmem:[%s1 + $0xc8] sm:$0xf]
  %v213 = vld [vmem:[%s1 + $0xcc] sm:$0xf]
  %v214 = vld [vmem:[%s1 + $0xd0] sm:$0xf]
  %v215 = vld [vmem:[%s1 + $0xd4] sm:$0xf]
  %v216 = vld [vmem:[%s1 + $0xd8] sm:$0xf]
  %v217 = vld [vmem:[%s1 + $0xdc] sm:$0xf]
  %v218 = vld [vmem:[%s1 + $0xe0] sm:$0xf]
  %v219 = vld [vmem:[%s1 + $0xe4] sm:$0xf]
  %v220 = vld [vmem:[%s1 + $0xe8] sm:$0xf]
  %v221 = vld [vmem:[%s1 + $0xec] sm:$0xf]
  %v222 = vld [vmem:[%s1 + $0xf0] sm:$0xf]
  %v223 = vld [vmem:[%s1 + $0xf4] sm:$0xf]
  %v224 = vld [vmem:[%s1 + $0xf8] sm:$0xf]
  %v225 = vld [vmem:[%s1 + $0xfc] sm:$0xf]
  %v226 = vld [vmem:[%s1 + $0x100] sm:$0xf]
  %v227 = vld [vmem:[%s1 + $0x104] sm:$0xf]
  %v228 = vld [vmem:[%s1 + $0x108] sm:$0xf]
  %v229 = vld [vmem:[%s1 + $0x10c] sm:$0xf]
  %v230 = vld [vmem:[%s1 + $0x110] sm:$0xf]
  %v231 = vld [vmem:[%s1 + $0x114] sm:$0xf]
  %v232 = vld [vmem:[%s1 + $0x118] sm:$0xf]
  %v233 = vld [vmem:[%s1 + $0x11c] sm:$0xf]
  %v234 = vld [vmem:[%s1 + $0x120] sm:$0xf]
  %v235 = vld [vmem:[%s1 + $0x124] sm:$0xf]
  %v236 = vld [vmem:[%s1 + $0x128] sm:$0xf]
  %v237 = vld [vmem:[%s1 + $0x12c] sm:$0xf]
  %v238 = vld [vmem:[%s1 + $0x130] sm:$0xf]
  %v239 = vld [vmem:[%s1 + $0x134] sm:$0xf]
  %v240 = vld [vmem:[%s1 + $0x138] sm:$0xf]
  %v241 = vld [vmem:[%s1 + $0x13c] sm:$0xf]
  %v386 = vunpack.c.l.b16 %v18
  %v387 = vunpack.c.h.b16 %v18
  %v388 = vunpack.c.l.b16 %v19
  %v389 = vunpack.c.h.b16 %v19
  %v390 = vunpack.c.l.b16 %v20
  %v391 = vunpack.c.l.b16 %v21
  %v392 = vunpack.c.h.b16 %v21
  %v393 = vunpack.c.l.b16 %v22
  %v394 = vunpack.c.h.b16 %v22
  %v395 = vunpack.c.l.b16 %v23
  %v396 = vunpack.c.l.b16 %v24
  %v397 = vunpack.c.h.b16 %v24
  %v398 = vunpack.c.l.b16 %v25
  %v399 = vunpack.c.h.b16 %v25
  %v400 = vunpack.c.l.b16 %v26
  %v401 = vunpack.c.l.b16 %v27
  %v402 = vunpack.c.h.b16 %v27
  %v403 = vunpack.c.l.b16 %v28
  %v404 = vunpack.c.h.b16 %v28
  %v405 = vunpack.c.l.b16 %v29
  %v406 = vunpack.c.l.b16 %v30
  %v407 = vunpack.c.h.b16 %v30
  %v408 = vunpack.c.l.b16 %v31
  %v409 = vunpack.c.h.b16 %v31
  %v410 = vunpack.c.l.b16 %v32
  %v411 = vunpack.c.l.b16 %v33
  %v412 = vunpack.c.h.b16 %v33
  %v413 = vunpack.c.l.b16 %v34
  %v414 = vunpack.c.h.b16 %v34
  %v415 = vunpack.c.l.b16 %v35
  %v416 = vunpack.c.l.b16 %v36
  %v417 = vunpack.c.h.b16 %v36
  %v418 = vunpack.c.l.b16 %v37
  %v419 = vunpack.c.h.b16 %v37
  %v420 = vunpack.c.l.b16 %v38
  %v421 = vunpack.c.l.b16 %v39
  %v422 = vunpack.c.h.b16 %v39
  %v423 = vunpack.c.l.b16 %v40
  %v424 = vunpack.c.h.b16 %v40
  %v425 = vunpack.c.l.b16 %v41
  %v426 = vunpack.c.l.b16 %v42
  %v427 = vunpack.c.h.b16 %v42
  %v428 = vunpack.c.l.b16 %v43
  %v429 = vunpack.c.h.b16 %v43
  %v430 = vunpack.c.l.b16 %v44
  %v431 = vunpack.c.l.b16 %v45
  %v432 = vunpack.c.h.b16 %v45
  %v433 = vunpack.c.l.b16 %v46
  %v434 = vunpack.c.h.b16 %v46
  %v435 = vunpack.c.l.b16 %v47
  %v436 = vunpack.c.l.b16 %v48
  %v437 = vunpack.c.h.b16 %v48
  %v438 = vunpack.c.l.b16 %v49
  %v439 = vunpack.c.h.b16 %v49
  %v440 = vunpack.c.l.b16 %v50
  %v441 = vunpack.c.l.b16 %v51
  %v442 = vunpack.c.h.b16 %v51
  %v443 = vunpack.c.l.b16 %v52
  %v444 = vunpack.c.h.b16 %v52
  %v445 = vunpack.c.l.b16 %v53
  %v446 = vunpack.c.l.b16 %v54
  %v447 = vunpack.c.h.b16 %v54
  %v448 = vunpack.c.l.b16 %v55
  %v449 = vunpack.c.h.b16 %v55
  %v450 = vunpack.c.l.b16 %v56
  %v451 = vunpack.c.l.b16 %v57
  %v452 = vunpack.c.h.b16 %v57
  %v453 = vunpack.c.l.b16 %v58
  %v454 = vunpack.c.h.b16 %v58
  %v455 = vunpack.c.l.b16 %v59
  %v456 = vunpack.c.l.b16 %v60
  %v457 = vunpack.c.h.b16 %v60
  %v458 = vunpack.c.l.b16 %v61
  %v459 = vunpack.c.h.b16 %v61
  %v460 = vunpack.c.l.b16 %v62
  %v461 = vunpack.c.l.b16 %v63
  %v462 = vunpack.c.h.b16 %v63
  %v463 = vunpack.c.l.b16 %v64
  %v464 = vunpack.c.h.b16 %v64
  %v465 = vunpack.c.l.b16 %v65
  %v466 = vunpack.c.l.b16 %v66
  %v467 = vunpack.c.h.b16 %v66
  %v468 = vunpack.c.l.b16 %v67
  %v469 = vunpack.c.h.b16 %v67
  %v470 = vunpack.c.l.b16 %v68
  %v471 = vunpack.c.l.b16 %v69
  %v472 = vunpack.c.h.b16 %v69
  %v473 = vunpack.c.l.b16 %v70
  %v474 = vunpack.c.h.b16 %v70
  %v475 = vunpack.c.l.b16 %v71
  %v476 = vunpack.c.l.b16 %v72
  %v477 = vunpack.c.h.b16 %v72
  %v478 = vunpack.c.l.b16 %v73
  %v479 = vunpack.c.h.b16 %v73
  %v480 = vunpack.c.l.b16 %v74
  %v481 = vunpack.c.l.b16 %v75
  %v482 = vunpack.c.h.b16 %v75
  %v483 = vunpack.c.l.b16 %v76
  %v484 = vunpack.c.h.b16 %v76
  %v485 = vunpack.c.l.b16 %v77
  %v486 = vunpack.c.l.b16 %v78
  %v487 = vunpack.c.h.b16 %v78
  %v488 = vunpack.c.l.b16 %v79
  %v489 = vunpack.c.h.b16 %v79
  %v490 = vunpack.c.l.b16 %v80
  %v491 = vunpack.c.l.b16 %v81
  %v492 = vunpack.c.h.b16 %v81
  %v493 = vunpack.c.l.b16 %v82
  %v494 = vunpack.c.h.b16 %v82
  %v495 = vunpack.c.l.b16 %v83
  %v496 = vunpack.c.l.b16 %v84
  %v497 = vunpack.c.h.b16 %v84
  %v498 = vunpack.c.l.b16 %v85
  %v499 = vunpack.c.h.b16 %v85
  %v500 = vunpack.c.l.b16 %v86
  %v501 = vunpack.c.l.b16 %v87
  %v502 = vunpack.c.h.b16 %v87
  %v503 = vunpack.c.l.b16 %v88
  %v504 = vunpack.c.h.b16 %v88
  %v505 = vunpack.c.l.b16 %v89
  %v506 = vunpack.c.l.b16 %v90
  %v507 = vunpack.c.h.b16 %v90
  %v508 = vunpack.c.l.b16 %v91
  %v509 = vunpack.c.h.b16 %v91
  %v510 = vunpack.c.l.b16 %v92
  %v511 = vunpack.c.l.b16 %v93
  %v512 = vunpack.c.h.b16 %v93
  %v513 = vunpack.c.l.b16 %v94
  %v514 = vunpack.c.h.b16 %v94
  %v515 = vunpack.c.l.b16 %v95
  %v516 = vunpack.c.l.b16 %v96
  %v517 = vunpack.c.h.b16 %v96
  %v518 = vunpack.c.l.b16 %v97
  %v519 = vunpack.c.h.b16 %v97
  %v520 = vunpack.c.l.b16 %v98
  %v521 = vunpack.c.l.b16 %v99
  %v522 = vunpack.c.h.b16 %v99
  %v523 = vunpack.c.l.b16 %v100
  %v524 = vunpack.c.h.b16 %v100
  %v525 = vunpack.c.l.b16 %v101
  %v526 = vunpack.c.l.b16 %v102
  %v527 = vunpack.c.h.b16 %v102
  %v528 = vunpack.c.l.b16 %v103
  %v529 = vunpack.c.h.b16 %v103
  %v530 = vunpack.c.l.b16 %v104
  %v531 = vunpack.c.l.b16 %v105
  %v532 = vunpack.c.h.b16 %v105
  %v533 = vunpack.c.l.b16 %v106
  %v534 = vunpack.c.h.b16 %v106
  %v535 = vunpack.c.l.b16 %v107
  %v536 = vunpack.c.l.b16 %v108
  %v537 = vunpack.c.h.b16 %v108
  %v538 = vunpack.c.l.b16 %v109
  %v539 = vunpack.c.h.b16 %v109
  %v540 = vunpack.c.l.b16 %v110
  %v541 = vunpack.c.l.b16 %v111
  %v542 = vunpack.c.h.b16 %v111
  %v543 = vunpack.c.l.b16 %v112
  %v544 = vunpack.c.h.b16 %v112
  %v545 = vunpack.c.l.b16 %v113
  %v546 = vunpack.c.l.b16 %v114
  %v547 = vunpack.c.h.b16 %v114
  %v548 = vunpack.c.l.b16 %v115
  %v549 = vunpack.c.h.b16 %v115
  %v550 = vunpack.c.l.b16 %v116
  %v551 = vunpack.c.l.b16 %v117
  %v552 = vunpack.c.h.b16 %v117
  %v553 = vunpack.c.l.b16 %v118
  %v554 = vunpack.c.h.b16 %v118
  %v555 = vunpack.c.l.b16 %v119
  %v556 = vunpack.c.l.b16 %v120
  %v557 = vunpack.c.h.b16 %v120
  %v558 = vunpack.c.l.b16 %v121
  %v559 = vunpack.c.h.b16 %v121
  %v560 = vunpack.c.l.b16 %v122
  %v561 = vunpack.c.l.b16 %v123
  %v562 = vunpack.c.h.b16 %v123
  %v563 = vunpack.c.l.b16 %v124
  %v564 = vunpack.c.h.b16 %v124
  %v565 = vunpack.c.l.b16 %v125
  %v566 = vunpack.c.l.b16 %v126
  %v567 = vunpack.c.h.b16 %v126
  %v568 = vunpack.c.l.b16 %v127
  %v569 = vunpack.c.h.b16 %v127
  %v570 = vunpack.c.l.b16 %v128
  %v571 = vunpack.c.l.b16 %v129
  %v572 = vunpack.c.h.b16 %v129
  %v573 = vunpack.c.l.b16 %v130
  %v574 = vunpack.c.h.b16 %v130
  %v575 = vunpack.c.l.b16 %v131
  %v576 = vunpack.c.l.b16 %v132
  %v577 = vunpack.c.h.b16 %v132
  %v578 = vunpack.c.l.b16 %v133
  %v579 = vunpack.c.h.b16 %v133
  %v580 = vunpack.c.l.b16 %v134
  %v581 = vunpack.c.l.b16 %v135
  %v582 = vunpack.c.h.b16 %v135
  %v583 = vunpack.c.l.b16 %v136
  %v584 = vunpack.c.h.b16 %v136
  %v585 = vunpack.c.l.b16 %v137
  %v586 = vunpack.c.l.b16 %v138
  %v587 = vunpack.c.h.b16 %v138
  %v588 = vunpack.c.l.b16 %v139
  %v589 = vunpack.c.h.b16 %v139
  %v590 = vunpack.c.l.b16 %v140
  %v591 = vunpack.c.l.b16 %v141
  %v592 = vunpack.c.h.b16 %v141
  %v593 = vunpack.c.l.b16 %v142
  %v594 = vunpack.c.h.b16 %v142
  %v595 = vunpack.c.l.b16 %v143
  %v596 = vunpack.c.l.b16 %v144
  %v597 = vunpack.c.h.b16 %v144
  %v598 = vunpack.c.l.b16 %v145
  %v599 = vunpack.c.h.b16 %v145
  %v600 = vunpack.c.l.b16 %v146
  %v601 = vunpack.c.l.b16 %v147
  %v602 = vunpack.c.h.b16 %v147
  %v603 = vunpack.c.l.b16 %v148
  %v604 = vunpack.c.h.b16 %v148
  %v605 = vunpack.c.l.b16 %v149
  %v606 = vunpack.c.l.b16 %v150
  %v607 = vunpack.c.h.b16 %v150
  %v608 = vunpack.c.l.b16 %v151
  %v609 = vunpack.c.h.b16 %v151
  %v610 = vunpack.c.l.b16 %v152
  %v611 = vunpack.c.l.b16 %v153
  %v612 = vunpack.c.h.b16 %v153
  %v613 = vunpack.c.l.b16 %v154
  %v614 = vunpack.c.h.b16 %v154
  %v615 = vunpack.c.l.b16 %v155
  %v616 = vunpack.c.l.b16 %v156
  %v617 = vunpack.c.h.b16 %v156
  %v618 = vunpack.c.l.b16 %v157
  %v619 = vunpack.c.h.b16 %v157
  %v620 = vunpack.c.l.b16 %v158
  %v621 = vunpack.c.l.b16 %v159
  %v622 = vunpack.c.h.b16 %v159
  %v623 = vunpack.c.l.b16 %v160
  %v624 = vunpack.c.h.b16 %v160
  %v625 = vunpack.c.l.b16 %v161
  %v626 = vpack.c.b16 %v391, %v386
  %v627 = vpack.c.b16 %v392, %v387
  %v628 = vpack.c.b16 %v393, %v388
  %v629 = vpack.c.b16 %v394, %v389
  %v630 = vpack.c.b16 %v395, %v390
  %v631 = vpack.c.b16 %v401, %v396
  %v632 = vpack.c.b16 %v402, %v397
  %v633 = vpack.c.b16 %v403, %v398
  %v634 = vpack.c.b16 %v404, %v399
  %v635 = vpack.c.b16 %v405, %v400
  %v636 = vpack.c.b16 %v411, %v406
  %v637 = vpack.c.b16 %v412, %v407
  %v638 = vpack.c.b16 %v413, %v408
  %v639 = vpack.c.b16 %v414, %v409
  %v640 = vpack.c.b16 %v415, %v410
  %v641 = vpack.c.b16 %v421, %v416
  %v642 = vpack.c.b16 %v422, %v417
  %v643 = vpack.c.b16 %v423, %v418
  %v644 = vpack.c.b16 %v424, %v419
  %v645 = vpack.c.b16 %v425, %v420
  %v646 = vpack.c.b16 %v431, %v426
  %v647 = vpack.c.b16 %v432, %v427
  %v648 = vpack.c.b16 %v433, %v428
  %v649 = vpack.c.b16 %v434, %v429
  %v650 = vpack.c.b16 %v435, %v430
  %v651 = vpack.c.b16 %v441, %v436
  %v652 = vpack.c.b16 %v442, %v437
  %v653 = vpack.c.b16 %v443, %v438
  %v654 = vpack.c.b16 %v444, %v439
  %v655 = vpack.c.b16 %v445, %v440
  %v656 = vpack.c.b16 %v451, %v446
  %v657 = vpack.c.b16 %v452, %v447
  %v658 = vpack.c.b16 %v453, %v448
  %v659 = vpack.c.b16 %v454, %v449
  %v660 = vpack.c.b16 %v455, %v450
  %v661 = vpack.c.b16 %v461, %v456
  %v662 = vpack.c.b16 %v462, %v457
  %v663 = vpack.c.b16 %v463, %v458
  %v664 = vpack.c.b16 %v464, %v459
  %v665 = vpack.c.b16 %v465, %v460
  %v666 = vpack.c.b16 %v471, %v466
  %v667 = vpack.c.b16 %v472, %v467
  %v668 = vpack.c.b16 %v473, %v468
  %v669 = vpack.c.b16 %v474, %v469
  %v670 = vpack.c.b16 %v475, %v470
  %v671 = vpack.c.b16 %v481, %v476
  %v672 = vpack.c.b16 %v482, %v477
  %v673 = vpack.c.b16 %v483, %v478
  %v674 = vpack.c.b16 %v484, %v479
  %v675 = vpack.c.b16 %v485, %v480
  %v676 = vpack.c.b16 %v491, %v486
  %v677 = vpack.c.b16 %v492, %v487
  %v678 = vpack.c.b16 %v493, %v488
  %v679 = vpack.c.b16 %v494, %v489
  %v680 = vpack.c.b16 %v495, %v490
  %v681 = vpack.c.b16 %v501, %v496
  %v682 = vpack.c.b16 %v502, %v497
  %v683 = vpack.c.b16 %v503, %v498
  %v684 = vpack.c.b16 %v504, %v499
  %v685 = vpack.c.b16 %v505, %v500
  %v686 = vpack.c.b16 %v511, %v506
  %v687 = vpack.c.b16 %v512, %v507
  %v688 = vpack.c.b16 %v513, %v508
  %v689 = vpack.c.b16 %v514, %v509
  %v690 = vpack.c.b16 %v515, %v510
  %v691 = vpack.c.b16 %v521, %v516
  %v692 = vpack.c.b16 %v522, %v517
  %v693 = vpack.c.b16 %v523, %v518
  %v694 = vpack.c.b16 %v524, %v519
  %v695 = vpack.c.b16 %v525, %v520
  %v696 = vpack.c.b16 %v531, %v526
  %v697 = vpack.c.b16 %v532, %v527
  %v698 = vpack.c.b16 %v533, %v528
  %v699 = vpack.c.b16 %v534, %v529
  %v700 = vpack.c.b16 %v535, %v530
  %v701 = vpack.c.b16 %v541, %v536
  %v702 = vpack.c.b16 %v542, %v537
  %v703 = vpack.c.b16 %v543, %v538
  %v704 = vpack.c.b16 %v544, %v539
  %v705 = vpack.c.b16 %v545, %v540
  %v706 = vpack.c.b16 %v551, %v546
  %v707 = vpack.c.b16 %v552, %v547
  %v708 = vpack.c.b16 %v553, %v548
  %v709 = vpack.c.b16 %v554, %v549
  %v710 = vpack.c.b16 %v555, %v550
  %v711 = vpack.c.b16 %v561, %v556
  %v712 = vpack.c.b16 %v562, %v557
  %v713 = vpack.c.b16 %v563, %v558
  %v714 = vpack.c.b16 %v564, %v559
  %v715 = vpack.c.b16 %v565, %v560
  %v716 = vpack.c.b16 %v571, %v566
  %v717 = vpack.c.b16 %v572, %v567
  %v718 = vpack.c.b16 %v573, %v568
  %v719 = vpack.c.b16 %v574, %v569
  %v720 = vpack.c.b16 %v575, %v570
  %v721 = vpack.c.b16 %v581, %v576
  %v722 = vpack.c.b16 %v582, %v577
  %v723 = vpack.c.b16 %v583, %v578
  %v724 = vpack.c.b16 %v584, %v579
  %v725 = vpack.c.b16 %v585, %v580
  %v726 = vpack.c.b16 %v591, %v586
  %v727 = vpack.c.b16 %v592, %v587
  %v728 = vpack.c.b16 %v593, %v588
  %v729 = vpack.c.b16 %v594, %v589
  %v730 = vpack.c.b16 %v595, %v590
  %v731 = vpack.c.b16 %v601, %v596
  %v732 = vpack.c.b16 %v602, %v597
  %v733 = vpack.c.b16 %v603, %v598
  %v734 = vpack.c.b16 %v604, %v599
  %v735 = vpack.c.b16 %v605, %v600
  %v736 = vpack.c.b16 %v611, %v606
  %v737 = vpack.c.b16 %v612, %v607
  %v738 = vpack.c.b16 %v613, %v608
  %v739 = vpack.c.b16 %v614, %v609
  %v740 = vpack.c.b16 %v615, %v610
  %v741 = vpack.c.b16 %v621, %v616
  %v742 = vpack.c.b16 %v622, %v617
  %v743 = vpack.c.b16 %v623, %v618
  %v744 = vpack.c.b16 %v624, %v619
  %v745 = vpack.c.b16 %v625, %v620
  %v946 = vunpack.c.l.b16 %v162
  %v947 = vunpack.c.l.b16 %v163
  %v948 = vunpack.c.l.b16 %v164
  %v949 = vunpack.c.l.b16 %v165
  %v950 = vunpack.c.l.b16 %v166
  %v951 = vunpack.c.l.b16 %v167
  %v952 = vunpack.c.l.b16 %v168
  %v953 = vunpack.c.l.b16 %v169
  %v954 = vunpack.c.l.b16 %v170
  %v955 = vunpack.c.l.b16 %v171
  %v956 = vunpack.c.l.b16 %v172
  %v957 = vunpack.c.l.b16 %v173
  %v958 = vunpack.c.l.b16 %v174
  %v959 = vunpack.c.l.b16 %v175
  %v960 = vunpack.c.l.b16 %v176
  %v961 = vunpack.c.l.b16 %v177
  %v962 = vunpack.c.l.b16 %v178
  %v963 = vunpack.c.l.b16 %v179
  %v964 = vunpack.c.l.b16 %v180
  %v965 = vunpack.c.l.b16 %v181
  %v966 = vunpack.c.l.b16 %v182
  %v967 = vunpack.c.l.b16 %v183
  %v968 = vunpack.c.l.b16 %v184
  %v969 = vunpack.c.l.b16 %v185
  %v970 = vunpack.c.l.b16 %v186
  %v971 = vunpack.c.l.b16 %v187
  %v972 = vunpack.c.l.b16 %v188
  %v973 = vunpack.c.l.b16 %v189
  %v974 = vunpack.c.l.b16 %v190
  %v975 = vunpack.c.l.b16 %v191
  %v976 = vunpack.c.l.b16 %v192
  %v977 = vunpack.c.l.b16 %v193
  %v978 = vunpack.c.l.b16 %v194
  %v979 = vunpack.c.l.b16 %v195
  %v980 = vunpack.c.l.b16 %v196
  %v981 = vunpack.c.l.b16 %v197
  %v982 = vunpack.c.l.b16 %v198
  %v983 = vunpack.c.l.b16 %v199
  %v984 = vunpack.c.l.b16 %v200
  %v985 = vunpack.c.l.b16 %v201
  %v986 = vunpack.c.l.b16 %v202
  %v987 = vunpack.c.l.b16 %v203
  %v988 = vunpack.c.l.b16 %v204
  %v989 = vunpack.c.l.b16 %v205
  %v990 = vunpack.c.l.b16 %v206
  %v991 = vunpack.c.l.b16 %v207
  %v992 = vunpack.c.l.b16 %v208
  %v993 = vunpack.c.l.b16 %v209
  %v994 = vunpack.c.l.b16 %v210
  %v995 = vunpack.c.l.b16 %v211
  %v996 = vunpack.c.l.b16 %v212
  %v997 = vunpack.c.l.b16 %v213
  %v998 = vunpack.c.l.b16 %v214
  %v999 = vunpack.c.l.b16 %v215
  %v1000 = vunpack.c.l.b16 %v216
  %v1001 = vunpack.c.l.b16 %v217
  %v1002 = vunpack.c.l.b16 %v218
  %v1003 = vunpack.c.l.b16 %v219
  %v1004 = vunpack.c.l.b16 %v220
  %v1005 = vunpack.c.l.b16 %v221
  %v1006 = vunpack.c.l.b16 %v222
  %v1007 = vunpack.c.l.b16 %v223
  %v1008 = vunpack.c.l.b16 %v224
  %v1009 = vunpack.c.l.b16 %v225
  %v1010 = vunpack.c.l.b16 %v226
  %v1011 = vunpack.c.l.b16 %v227
  %v1012 = vunpack.c.l.b16 %v228
  %v1013 = vunpack.c.l.b16 %v229
  %v1014 = vunpack.c.l.b16 %v230
  %v1015 = vunpack.c.l.b16 %v231
  %v1016 = vunpack.c.l.b16 %v232
  %v1017 = vunpack.c.l.b16 %v233
  %v1018 = vunpack.c.l.b16 %v234
  %v1019 = vunpack.c.l.b16 %v235
  %v1020 = vunpack.c.l.b16 %v236
  %v1021 = vunpack.c.l.b16 %v237
  %v1022 = vunpack.c.l.b16 %v238
  %v1023 = vunpack.c.l.b16 %v239
  %v1024 = vunpack.c.l.b16 %v240
  %v1025 = vunpack.c.l.b16 %v241
  %v1026 = vpack.c.b16 %v947, %v946
  %v1027 = vpack.c.b16 %v949, %v948
  %v1028 = vpack.c.b16 %v951, %v950
  %v1029 = vpack.c.b16 %v953, %v952
  %v1030 = vpack.c.b16 %v955, %v954
  %v1031 = vpack.c.b16 %v957, %v956
  %v1032 = vpack.c.b16 %v959, %v958
  %v1033 = vpack.c.b16 %v961, %v960
  %v1034 = vpack.c.b16 %v963, %v962
  %v1035 = vpack.c.b16 %v965, %v964
  %v1036 = vpack.c.b16 %v967, %v966
  %v1037 = vpack.c.b16 %v969, %v968
  %v1038 = vpack.c.b16 %v971, %v970
  %v1039 = vpack.c.b16 %v973, %v972
  %v1040 = vpack.c.b16 %v975, %v974
  %v1041 = vpack.c.b16 %v977, %v976
  %v1042 = vpack.c.b16 %v979, %v978
  %v1043 = vpack.c.b16 %v981, %v980
  %v1044 = vpack.c.b16 %v983, %v982
  %v1045 = vpack.c.b16 %v985, %v984
  %v1046 = vpack.c.b16 %v987, %v986
  %v1047 = vpack.c.b16 %v989, %v988
  %v1048 = vpack.c.b16 %v991, %v990
  %v1049 = vpack.c.b16 %v993, %v992
  %v1050 = vpack.c.b16 %v995, %v994
  %v1051 = vpack.c.b16 %v997, %v996
  %v1052 = vpack.c.b16 %v999, %v998
  %v1053 = vpack.c.b16 %v1001, %v1000
  %v1054 = vpack.c.b16 %v1003, %v1002
  %v1055 = vpack.c.b16 %v1005, %v1004
  %v1056 = vpack.c.b16 %v1007, %v1006
  %v1057 = vpack.c.b16 %v1009, %v1008
  %v1058 = vpack.c.b16 %v1011, %v1010
  %v1059 = vpack.c.b16 %v1013, %v1012
  %v1060 = vpack.c.b16 %v1015, %v1014
  %v1061 = vpack.c.b16 %v1017, %v1016
  %v1062 = vpack.c.b16 %v1019, %v1018
  %v1063 = vpack.c.b16 %v1021, %v1020
  %v1064 = vpack.c.b16 %v1023, %v1022
  %v1065 = vpack.c.b16 %v1025, %v1024
  %1106 = vmatprep.subr.bf16.mxu0 0
  %1107 = vmatpush1.bf16.msra.mxu0 %v1026
  %1108 = vmatprep.subr.bf16.mxu0 0
  %1109 = vmatpush1.bf16.msra.mxu0 %v1027
  %1110 = vmatprep.subr.bf16.mxu0 0
  %1111 = vmatpush1.bf16.msra.mxu0 %v1028
  %1112 = vmatprep.subr.bf16.mxu0 0
  %1113 = vmatpush1.bf16.msra.mxu0 %v1029
  %1114 = vmatprep.subr.bf16.mxu0 0
  %1115 = vmatpush1.bf16.msra.mxu0 %v1030
  %1116 = vmatprep.subr.bf16.mxu0 0
  %1117 = vmatpush1.bf16.msra.mxu0 %v1031
  %1118 = vmatprep.subr.bf16.mxu0 0
  %1119 = vmatpush1.bf16.msra.mxu0 %v1032
  %1120 = vmatprep.subr.bf16.mxu0 0
  %1121 = vmatpush1.bf16.msra.mxu0 %v1033
  %1122 = vmatprep.subr.bf16.mxu0 0
  %1123 = vmatpush1.bf16.msra.mxu0 %v1034
  %1124 = vmatprep.subr.bf16.mxu0 0
  %1125 = vmatpush1.bf16.msra.mxu0 %v1035
  %1126 = vmatprep.subr.bf16.mxu0 0
  %1127 = vmatpush1.bf16.msra.mxu0 %v1036
  %1128 = vmatprep.subr.bf16.mxu0 0
  %1129 = vmatpush1.bf16.msra.mxu0 %v1037
  %1130 = vmatprep.subr.bf16.mxu0 0
  %1131 = vmatpush1.bf16.msra.mxu0 %v1038
  %1132 = vmatprep.subr.bf16.mxu0 0
  %1133 = vmatpush1.bf16.msra.mxu0 %v1039
  %1134 = vmatprep.subr.bf16.mxu0 0
  %1135 = vmatpush1.bf16.msra.mxu0 %v1040
  %1136 = vmatprep.subr.bf16.mxu0 0
  %1137 = vmatpush1.bf16.msra.mxu0 %v1041
  %1138 = vmatprep.mubr.bf16.mxu0 %v627
  %1139 = vmatmul.mubr.bf16.gmra.mrb[0].mxu0 %v626
  %v1140 = vpop.f32.mrb[0].mxu0
  %v1141 = vadd.f32 0.0, %v1140
  %v1142 = vpop.f32.mrb[0].mxu0
  %v1143 = vpop.f32.mrb[0].mxu0
  %v1144 = vadd.f32 0.0, %v1143
  %v1145 = vpop.f32.mrb[0].mxu0
  %1146 = vmatprep.mubr.bf16.mxu0 %v632
  %1147 = vmatmul.mubr.bf16.gmra.mrb[0].mxu0 %v631
  %v1148 = vpop.f32.mrb[0].mxu0
  %v1149 = vadd.f32 0.0, %v1148
  %v1150 = vpop.f32.mrb[0].mxu0
  %v1151 = vpop.f32.mrb[0].mxu0
  %v1152 = vadd.f32 0.0, %v1151
  %v1153 = vpop.f32.mrb[0].mxu0
  %1154 = vmatprep.mubr.bf16.mxu0 %v637
  %1155 = vmatmul.mubr.bf16.gmra.mrb[0].mxu0 %v636
  %v1156 = vpop.f32.mrb[0].mxu0
  %v1157 = vadd.f32 0.0, %v1156
  %v1158 = vpop.f32.mrb[0].mxu0
  %v1159 = vpop.f32.mrb[0].mxu0
  %v1160 = vadd.f32 0.0, %v1159
  %v1161 = vpop.f32.mrb[0].mxu0
  %1162 = vmatprep.mubr.bf16.mxu0 %v642
  %1163 = vmatmul.mubr.bf16.gmra.mrb[0].mxu0 %v641
  %v1164 = vpop.f32.mrb[0].mxu0
  %v1165 = vadd.f32 0.0, %v1164
  %v1166 = vpop.f32.mrb[0].mxu0
  %v1167 = vpop.f32.mrb[0].mxu0
  %v1168 = vadd.f32 0.0, %v1167
  %v1169 = vpop.f32.mrb[0].mxu0
  %1170 = vmatprep.mubr.bf16.mxu0 %v647
  %1171 = vmatmul.mubr.bf16.gmra.mrb[0].mxu0 %v646
  %v1172 = vpop.f32.mrb[0].mxu0
  %v1173 = vadd.f32 0.0, %v1172
  %v1174 = vpop.f32.mrb[0].mxu0
  %v1175 = vpop.f32.mrb[0].mxu0
  %v1176 = vadd.f32 0.0, %v1175
  %v1177 = vpop.f32.mrb[0].mxu0
  %1178 = vmatprep.mubr.bf16.mxu0 %v652
  %1179 = vmatmul.mubr.bf16.gmra.mrb[0].mxu0 %v651
  %v1180 = vpop.f32.mrb[0].mxu0
  %v1181 = vadd.f32 0.0, %v1180
  %v1182 = vpop.f32.mrb[0].mxu0
  %v1183 = vpop.f32.mrb[0].mxu0
  %v1184 = vadd.f32 0.0, %v1183
  %v1185 = vpop.f32.mrb[0].mxu0
  %1186 = vmatprep.mubr.bf16.mxu0 %v657
  %1187 = vmatmul.mubr.bf16.gmra.mrb[0].mxu0 %v656
  %v1188 = vpop.f32.mrb[0].mxu0
  %v1189 = vadd.f32 0.0, %v1188
  %v1190 = vpop.f32.mrb[0].mxu0
  %v1191 = vpop.f32.mrb[0].mxu0
  %v1192 = vadd.f32 0.0, %v1191
  %v1193 = vpop.f32.mrb[0].mxu0
  %1194 = vmatprep.mubr.bf16.mxu0 %v662
  %1195 = vmatmul.mubr.bf16.gmra.mrb[0].mxu0 %v661
  %v1196 = vpop.f32.mrb[0].mxu0
  %v1197 = vadd.f32 0.0, %v1196
  %v1198 = vpop.f32.mrb[0].mxu0
  %v1199 = vpop.f32.mrb[0].mxu0
  %v1200 = vadd.f32 0.0, %v1199
  %v1201 = vpop.f32.mrb[0].mxu0
  %1202 = vmatprep.mubr.bf16.mxu0 %v667
  %1203 = vmatmul.mubr.bf16.gmra.mrb[0].mxu0 %v666
  %v1204 = vpop.f32.mrb[0].mxu0
  %v1205 = vadd.f32 0.0, %v1204
  %v1206 = vpop.f32.mrb[0].mxu0
  %v1207 = vpop.f32.mrb[0].mxu0
  %v1208 = vadd.f32 0.0, %v1207
  %v1209 = vpop.f32.mrb[0].mxu0
  %1210 = vmatprep.mubr.bf16.mxu0 %v672
  %1211 = vmatmul.mubr.bf16.gmra.mrb[0].mxu0 %v671
  %v1212 = vpop.f32.mrb[0].mxu0
  %v1213 = vadd.f32 0.0, %v1212
  %v1214 = vpop.f32.mrb[0].mxu0
  %v1215 = vpop.f32.mrb[0].mxu0
  %v1216 = vadd.f32 0.0, %v1215
  %v1217 = vpop.f32.mrb[0].mxu0
  %1218 = vmatprep.mubr.bf16.mxu0 %v677
  %1219 = vmatmul.mubr.bf16.gmra.mrb[0].mxu0 %v676
  %v1220 = vpop.f32.mrb[0].mxu0
  %v1221 = vadd.f32 0.0, %v1220
  %v1222 = vpop.f32.mrb[0].mxu0
  %v1223 = vpop.f32.mrb[0].mxu0
  %v1224 = vadd.f32 0.0, %v1223
  %v1225 = vpop.f32.mrb[0].mxu0
  %1226 = vmatprep.mubr.bf16.mxu0 %v682
  %1227 = vmatmul.mubr.bf16.gmra.mrb[0].mxu0 %v681
  %v1228 = vpop.f32.mrb[0].mxu0
  %v1229 = vadd.f32 0.0, %v1228
  %v1230 = vpop.f32.mrb[0].mxu0
  %v1231 = vpop.f32.mrb[0].mxu0
  %v1232 = vadd.f32 0.0, %v1231
  %v1233 = vpop.f32.mrb[0].mxu0
  %1234 = vmatprep.mubr.bf16.mxu0 %v687
  %1235 = vmatmul.mubr.bf16.gmra.mrb[0].mxu0 %v686
  %v1236 = vpop.f32.mrb[0].mxu0
  %v1237 = vadd.f32 0.0, %v1236
  %v1238 = vpop.f32.mrb[0].mxu0
  %v1239 = vpop.f32.mrb[0].mxu0
  %v1240 = vadd.f32 0.0, %v1239
  %v1241 = vpop.f32.mrb[0].mxu0
  %1242 = vmatprep.mubr.bf16.mxu0 %v692
  %1243 = vmatmul.mubr.bf16.gmra.mrb[0].mxu0 %v691
  %v1244 = vpop.f32.mrb[0].mxu0
  %v1245 = vadd.f32 0.0, %v1244
  %v1246 = vpop.f32.mrb[0].mxu0
  %v1247 = vpop.f32.mrb[0].mxu0
  %v1248 = vadd.f32 0.0, %v1247
  %v1249 = vpop.f32.mrb[0].mxu0
  %1250 = vmatprep.mubr.bf16.mxu0 %v697
  %1251 = vmatmul.mubr.bf16.gmra.mrb[0].mxu0 %v696
  %v1252 = vpop.f32.mrb[0].mxu0
  %v1253 = vadd.f32 0.0, %v1252
  %v1254 = vpop.f32.mrb[0].mxu0
  %v1255 = vpop.f32.mrb[0].mxu0
  %v1256 = vadd.f32 0.0, %v1255
  %v1257 = vpop.f32.mrb[0].mxu0
  %1258 = vmatprep.mubr.bf16.mxu0 %v702
  %1259 = vmatmul.mubr.bf16.gmra.mrb[0].mxu0 %v701
  %v1260 = vpop.f32.mrb[0].mxu0
  %v1261 = vadd.f32 0.0, %v1260
  %v1262 = vpop.f32.mrb[0].mxu0
  %v1263 = vpop.f32.mrb[0].mxu0
  %v1264 = vadd.f32 0.0, %v1263
  %v1265 = vpop.f32.mrb[0].mxu0
  %1266 = vmatprep.mubr.bf16.mxu0 %v707
  %1267 = vmatmul.mubr.bf16.gmra.mrb[0].mxu0 %v706
  %v1268 = vpop.f32.mrb[0].mxu0
  %v1269 = vadd.f32 0.0, %v1268
  %v1270 = vpop.f32.mrb[0].mxu0
  %v1271 = vpop.f32.mrb[0].mxu0
  %v1272 = vadd.f32 0.0, %v1271
  %v1273 = vpop.f32.mrb[0].mxu0
  %1274 = vmatprep.mubr.bf16.mxu0 %v712
  %1275 = vmatmul.mubr.bf16.gmra.mrb[0].mxu0 %v711
  %v1276 = vpop.f32.mrb[0].mxu0
  %v1277 = vadd.f32 0.0, %v1276
  %v1278 = vpop.f32.mrb[0].mxu0
  %v1279 = vpop.f32.mrb[0].mxu0
  %v1280 = vadd.f32 0.0, %v1279
  %v1281 = vpop.f32.mrb[0].mxu0
  %1282 = vmatprep.mubr.bf16.mxu0 %v717
  %1283 = vmatmul.mubr.bf16.gmra.mrb[0].mxu0 %v716
  %v1284 = vpop.f32.mrb[0].mxu0
  %v1285 = vadd.f32 0.0, %v1284
  %v1286 = vpop.f32.mrb[0].mxu0
  %v1287 = vpop.f32.mrb[0].mxu0
  %v1288 = vadd.f32 0.0, %v1287
  %v1289 = vpop.f32.mrb[0].mxu0
  %1290 = vmatprep.mubr.bf16.mxu0 %v722
  %1291 = vmatmul.mubr.bf16.gmra.mrb[0].mxu0 %v721
  %v1292 = vpop.f32.mrb[0].mxu0
  %v1293 = vadd.f32 0.0, %v1292
  %v1294 = vpop.f32.mrb[0].mxu0
  %v1295 = vpop.f32.mrb[0].mxu0
  %v1296 = vadd.f32 0.0, %v1295
  %v1297 = vpop.f32.mrb[0].mxu0
  %1298 = vmatprep.mubr.bf16.mxu0 %v727
  %1299 = vmatmul.mubr.bf16.gmra.mrb[0].mxu0 %v726
  %v1300 = vpop.f32.mrb[0].mxu0
  %v1301 = vadd.f32 0.0, %v1300
  %v1302 = vpop.f32.mrb[0].mxu0
  %v1303 = vpop.f32.mrb[0].mxu0
  %v1304 = vadd.f32 0.0, %v1303
  %v1305 = vpop.f32.mrb[0].mxu0
  %1306 = vmatprep.mubr.bf16.mxu0 %v732
  %1307 = vmatmul.mubr.bf16.gmra.mrb[0].mxu0 %v731
  %v1308 = vpop.f32.mrb[0].mxu0
  %v1309 = vadd.f32 0.0, %v1308
  %v1310 = vpop.f32.mrb[0].mxu0
  %v1311 = vpop.f32.mrb[0].mxu0
  %v1312 = vadd.f32 0.0, %v1311
  %v1313 = vpop.f32.mrb[0].mxu0
  %1314 = vmatprep.mubr.bf16.mxu0 %v737
  %1315 = vmatmul.mubr.bf16.gmra.mrb[0].mxu0 %v736
  %v1316 = vpop.f32.mrb[0].mxu0
  %v1317 = vadd.f32 0.0, %v1316
  %v1318 = vpop.f32.mrb[0].mxu0
  %v1319 = vpop.f32.mrb[0].mxu0
  %v1320 = vadd.f32 0.0, %v1319
  %v1321 = vpop.f32.mrb[0].mxu0
  %1322 = vmatprep.mubr.bf16.mxu0 %v742
  %1323 = vmatmul.mubr.bf16.gmra.mrb[0].mxu0 %v741
  %v1324 = vpop.f32.mrb[0].mxu0
  %v1325 = vadd.f32 0.0, %v1324
  %v1326 = vpop.f32.mrb[0].mxu0
  %v1327 = vpop.f32.mrb[0].mxu0
  %v1328 = vadd.f32 0.0, %v1327
  %v1329 = vpop.f32.mrb[0].mxu0
  %1330 = vdwg.mxu0
  %1331 = vmatprep.subr.bf16.mxu0 0
  %1332 = vmatpush1.bf16.msra.mxu0 %v1042
  %1333 = vmatprep.subr.bf16.mxu0 0
  %1334 = vmatpush1.bf16.msra.mxu0 %v1043
  %1335 = vmatprep.subr.bf16.mxu0 0
  %1336 = vmatpush1.bf16.msra.mxu0 %v1044
  %1337 = vmatprep.subr.bf16.mxu0 0
  %1338 = vmatpush1.bf16.msra.mxu0 %v1045
  %1339 = vmatprep.subr.bf16.mxu0 0
  %1340 = vmatpush1.bf16.msra.mxu0 %v1046
  %1341 = vmatprep.subr.bf16.mxu0 0
  %1342 = vmatpush1.bf16.msra.mxu0 %v1047
  %1343 = vmatprep.subr.bf16.mxu0 0
  %1344 = vmatpush1.bf16.msra.mxu0 %v1048
  %1345 = vmatprep.subr.bf16.mxu0 0
  %1346 = vmatpush1.bf16.msra.mxu0 %v1049
  %1347 = vmatprep.subr.bf16.mxu0 0
  %1348 = vmatpush1.bf16.msra.mxu0 %v1050
  %1349 = vmatprep.subr.bf16.mxu0 0
  %1350 = vmatpush1.bf16.msra.mxu0 %v1051
  %1351 = vmatprep.subr.bf16.mxu0 0
  %1352 = vmatpush1.bf16.msra.mxu0 %v1052
  %1353 = vmatprep.subr.bf16.mxu0 0
  %1354 = vmatpush1.bf16.msra.mxu0 %v1053
  %1355 = vmatprep.subr.bf16.mxu0 0
  %1356 = vmatpush1.bf16.msra.mxu0 %v1054
  %1357 = vmatprep.subr.bf16.mxu0 0
  %1358 = vmatpush1.bf16.msra.mxu0 %v1055
  %1359 = vmatprep.subr.bf16.mxu0 0
  %1360 = vmatpush1.bf16.msra.mxu0 %v1056
  %1361 = vmatprep.subr.bf16.mxu0 0
  %1362 = vmatpush1.bf16.msra.mxu0 %v1057
  %1363 = vmatprep.mubr.bf16.mxu0 %v629
  %1364 = vmatmul.mubr.bf16.gmra.mrb[0].mxu0 %v628
  %v1365 = vpop.f32.mrb[0].mxu0
  %v1366 = vadd.f32 %v1141, %v1365
  %v1367 = vpop.f32.mrb[0].mxu0
  %v1368 = vpop.f32.mrb[0].mxu0
  %v1369 = vadd.f32 %v1144, %v1368
  %v1370 = vpop.f32.mrb[0].mxu0
  %1371 = vmatprep.mubr.bf16.mxu0 %v634
  %1372 = vmatmul.mubr.bf16.gmra.mrb[0].mxu0 %v633
  %v1373 = vpop.f32.mrb[0].mxu0
  %v1374 = vadd.f32 %v1149, %v1373
  %v1375 = vpop.f32.mrb[0].mxu0
  %v1376 = vpop.f32.mrb[0].mxu0
  %v1377 = vadd.f32 %v1152, %v1376
  %v1378 = vpop.f32.mrb[0].mxu0
  %1379 = vmatprep.mubr.bf16.mxu0 %v639
  %1380 = vmatmul.mubr.bf16.gmra.mrb[0].mxu0 %v638
  %v1381 = vpop.f32.mrb[0].mxu0
  %v1382 = vadd.f32 %v1157, %v1381
  %v1383 = vpop.f32.mrb[0].mxu0
  %v1384 = vpop.f32.mrb[0].mxu0
  %v1385 = vadd.f32 %v1160, %v1384
  %v1386 = vpop.f32.mrb[0].mxu0
  %1387 = vmatprep.mubr.bf16.mxu0 %v644
  %1388 = vmatmul.mubr.bf16.gmra.mrb[0].mxu0 %v643
  %v1389 = vpop.f32.mrb[0].mxu0
  %v1390 = vadd.f32 %v1165, %v1389
  %v1391 = vpop.f32.mrb[0].mxu0
  %v1392 = vpop.f32.mrb[0].mxu0
  %v1393 = vadd.f32 %v1168, %v1392
  %v1394 = vpop.f32.mrb[0].mxu0
  %1395 = vmatprep.mubr.bf16.mxu0 %v649
  %1396 = vmatmul.mubr.bf16.gmra.mrb[0].mxu0 %v648
  %v1397 = vpop.f32.mrb[0].mxu0
  %v1398 = vadd.f32 %v1173, %v1397
  %v1399 = vpop.f32.mrb[0].mxu0
  %v1400 = vpop.f32.mrb[0].mxu0
  %v1401 = vadd.f32 %v1176, %v1400
  %v1402 = vpop.f32.mrb[0].mxu0
  %1403 = vmatprep.mubr.bf16.mxu0 %v654
  %1404 = vmatmul.mubr.bf16.gmra.mrb[0].mxu0 %v653
  %v1405 = vpop.f32.mrb[0].mxu0
  %v1406 = vadd.f32 %v1181, %v1405
  %v1407 = vpop.f32.mrb[0].mxu0
  %v1408 = vpop.f32.mrb[0].mxu0
  %v1409 = vadd.f32 %v1184, %v1408
  %v1410 = vpop.f32.mrb[0].mxu0
  %1411 = vmatprep.mubr.bf16.mxu0 %v659
  %1412 = vmatmul.mubr.bf16.gmra.mrb[0].mxu0 %v658
  %v1413 = vpop.f32.mrb[0].mxu0
  %v1414 = vadd.f32 %v1189, %v1413
  %v1415 = vpop.f32.mrb[0].mxu0
  %v1416 = vpop.f32.mrb[0].mxu0
  %v1417 = vadd.f32 %v1192, %v1416
  %v1418 = vpop.f32.mrb[0].mxu0
  %1419 = vmatprep.mubr.bf16.mxu0 %v664
  %1420 = vmatmul.mubr.bf16.gmra.mrb[0].mxu0 %v663
  %v1421 = vpop.f32.mrb[0].mxu0
  %v1422 = vadd.f32 %v1197, %v1421
  %v1423 = vpop.f32.mrb[0].mxu0
  %v1424 = vpop.f32.mrb[0].mxu0
  %v1425 = vadd.f32 %v1200, %v1424
  %v1426 = vpop.f32.mrb[0].mxu0
  %1427 = vmatprep.mubr.bf16.mxu0 %v669
  %1428 = vmatmul.mubr.bf16.gmra.mrb[0].mxu0 %v668
  %v1429 = vpop.f32.mrb[0].mxu0
  %v1430 = vadd.f32 %v1205, %v1429
  %v1431 = vpop.f32.mrb[0].mxu0
  %v1432 = vpop.f32.mrb[0].mxu0
  %v1433 = vadd.f32 %v1208, %v1432
  %v1434 = vpop.f32.mrb[0].mxu0
  %1435 = vmatprep.mubr.bf16.mxu0 %v674
  %1436 = vmatmul.mubr.bf16.gmra.mrb[0].mxu0 %v673
  %v1437 = vpop.f32.mrb[0].mxu0
  %v1438 = vadd.f32 %v1213, %v1437
  %v1439 = vpop.f32.mrb[0].mxu0
  %v1440 = vpop.f32.mrb[0].mxu0
  %v1441 = vadd.f32 %v1216, %v1440
  %v1442 = vpop.f32.mrb[0].mxu0
  %1443 = vmatprep.mubr.bf16.mxu0 %v679
  %1444 = vmatmul.mubr.bf16.gmra.mrb[0].mxu0 %v678
  %v1445 = vpop.f32.mrb[0].mxu0
  %v1446 = vadd.f32 %v1221, %v1445
  %v1447 = vpop.f32.mrb[0].mxu0
  %v1448 = vpop.f32.mrb[0].mxu0
  %v1449 = vadd.f32 %v1224, %v1448
  %v1450 = vpop.f32.mrb[0].mxu0
  %1451 = vmatprep.mubr.bf16.mxu0 %v684
  %1452 = vmatmul.mubr.bf16.gmra.mrb[0].mxu0 %v683
  %v1453 = vpop.f32.mrb[0].mxu0
  %v1454 = vadd.f32 %v1229, %v1453
  %v1455 = vpop.f32.mrb[0].mxu0
  %v1456 = vpop.f32.mrb[0].mxu0
  %v1457 = vadd.f32 %v1232, %v1456
  %v1458 = vpop.f32.mrb[0].mxu0
  %1459 = vmatprep.mubr.bf16.mxu0 %v689
  %1460 = vmatmul.mubr.bf16.gmra.mrb[0].mxu0 %v688
  %v1461 = vpop.f32.mrb[0].mxu0
  %v1462 = vadd.f32 %v1237, %v1461
  %v1463 = vpop.f32.mrb[0].mxu0
  %v1464 = vpop.f32.mrb[0].mxu0
  %v1465 = vadd.f32 %v1240, %v1464
  %v1466 = vpop.f32.mrb[0].mxu0
  %1467 = vmatprep.mubr.bf16.mxu0 %v694
  %1468 = vmatmul.mubr.bf16.gmra.mrb[0].mxu0 %v693
  %v1469 = vpop.f32.mrb[0].mxu0
  %v1470 = vadd.f32 %v1245, %v1469
  %v1471 = vpop.f32.mrb[0].mxu0
  %v1472 = vpop.f32.mrb[0].mxu0
  %v1473 = vadd.f32 %v1248, %v1472
  %v1474 = vpop.f32.mrb[0].mxu0
  %1475 = vmatprep.mubr.bf16.mxu0 %v699
  %1476 = vmatmul.mubr.bf16.gmra.mrb[0].mxu0 %v698
  %v1477 = vpop.f32.mrb[0].mxu0
  %v1478 = vadd.f32 %v1253, %v1477
  %v1479 = vpop.f32.mrb[0].mxu0
  %v1480 = vpop.f32.mrb[0].mxu0
  %v1481 = vadd.f32 %v1256, %v1480
  %v1482 = vpop.f32.mrb[0].mxu0
  %1483 = vmatprep.mubr.bf16.mxu0 %v704
  %1484 = vmatmul.mubr.bf16.gmra.mrb[0].mxu0 %v703
  %v1485 = vpop.f32.mrb[0].mxu0
  %v1486 = vadd.f32 %v1261, %v1485
  %v1487 = vpop.f32.mrb[0].mxu0
  %v1488 = vpop.f32.mrb[0].mxu0
  %v1489 = vadd.f32 %v1264, %v1488
  %v1490 = vpop.f32.mrb[0].mxu0
  %1491 = vmatprep.mubr.bf16.mxu0 %v709
  %1492 = vmatmul.mubr.bf16.gmra.mrb[0].mxu0 %v708
  %v1493 = vpop.f32.mrb[0].mxu0
  %v1494 = vadd.f32 %v1269, %v1493
  %v1495 = vpop.f32.mrb[0].mxu0
  %v1496 = vpop.f32.mrb[0].mxu0
  %v1497 = vadd.f32 %v1272, %v1496
  %v1498 = vpop.f32.mrb[0].mxu0
  %1499 = vmatprep.mubr.bf16.mxu0 %v714
  %1500 = vmatmul.mubr.bf16.gmra.mrb[0].mxu0 %v713
  %v1501 = vpop.f32.mrb[0].mxu0
  %v1502 = vadd.f32 %v1277, %v1501
  %v1503 = vpop.f32.mrb[0].mxu0
  %v1504 = vpop.f32.mrb[0].mxu0
  %v1505 = vadd.f32 %v1280, %v1504
  %v1506 = vpop.f32.mrb[0].mxu0
  %1507 = vmatprep.mubr.bf16.mxu0 %v719
  %1508 = vmatmul.mubr.bf16.gmra.mrb[0].mxu0 %v718
  %v1509 = vpop.f32.mrb[0].mxu0
  %v1510 = vadd.f32 %v1285, %v1509
  %v1511 = vpop.f32.mrb[0].mxu0
  %v1512 = vpop.f32.mrb[0].mxu0
  %v1513 = vadd.f32 %v1288, %v1512
  %v1514 = vpop.f32.mrb[0].mxu0
  %1515 = vmatprep.mubr.bf16.mxu0 %v724
  %1516 = vmatmul.mubr.bf16.gmra.mrb[0].mxu0 %v723
  %v1517 = vpop.f32.mrb[0].mxu0
  %v1518 = vadd.f32 %v1293, %v1517
  %v1519 = vpop.f32.mrb[0].mxu0
  %v1520 = vpop.f32.mrb[0].mxu0
  %v1521 = vadd.f32 %v1296, %v1520
  %v1522 = vpop.f32.mrb[0].mxu0
  %1523 = vmatprep.mubr.bf16.mxu0 %v729
  %1524 = vmatmul.mubr.bf16.gmra.mrb[0].mxu0 %v728
  %v1525 = vpop.f32.mrb[0].mxu0
  %v1526 = vadd.f32 %v1301, %v1525
  %v1527 = vpop.f32.mrb[0].mxu0
  %v1528 = vpop.f32.mrb[0].mxu0
  %v1529 = vadd.f32 %v1304, %v1528
  %v1530 = vpop.f32.mrb[0].mxu0
  %1531 = vmatprep.mubr.bf16.mxu0 %v734
  %1532 = vmatmul.mubr.bf16.gmra.mrb[0].mxu0 %v733
  %v1533 = vpop.f32.mrb[0].mxu0
  %v1534 = vadd.f32 %v1309, %v1533
  %v1535 = vpop.f32.mrb[0].mxu0
  %v1536 = vpop.f32.mrb[0].mxu0
  %v1537 = vadd.f32 %v1312, %v1536
  %v1538 = vpop.f32.mrb[0].mxu0
  %1539 = vmatprep.mubr.bf16.mxu0 %v739
  %1540 = vmatmul.mubr.bf16.gmra.mrb[0].mxu0 %v738
  %v1541 = vpop.f32.mrb[0].mxu0
  %v1542 = vadd.f32 %v1317, %v1541
  %v1543 = vpop.f32.mrb[0].mxu0
  %v1544 = vpop.f32.mrb[0].mxu0
  %v1545 = vadd.f32 %v1320, %v1544
  %v1546 = vpop.f32.mrb[0].mxu0
  %1547 = vmatprep.mubr.bf16.mxu0 %v744
  %1548 = vmatmul.mubr.bf16.gmra.mrb[0].mxu0 %v743
  %v1549 = vpop.f32.mrb[0].mxu0
  %v1550 = vadd.f32 %v1325, %v1549
  %v1551 = vpop.f32.mrb[0].mxu0
  %v1552 = vpop.f32.mrb[0].mxu0
  %v1553 = vadd.f32 %v1328, %v1552
  %v1554 = vpop.f32.mrb[0].mxu0
  %1555 = vdwg.mxu0
  %1556 = vmatprep.subr.bf16.mxu0 0
  %1557 = vmatpush1.bf16.msra.mxu0 %v1058
  %1558 = vmatprep.subr.bf16.mxu0 0
  %1559 = vmatpush1.bf16.msra.mxu0 %v1059
  %1560 = vmatprep.subr.bf16.mxu0 0
  %1561 = vmatpush1.bf16.msra.mxu0 %v1060
  %1562 = vmatprep.subr.bf16.mxu0 0
  %1563 = vmatpush1.bf16.msra.mxu0 %v1061
  %1564 = vmatprep.subr.bf16.mxu0 0
  %1565 = vmatpush1.bf16.msra.mxu0 %v1062
  %1566 = vmatprep.subr.bf16.mxu0 0
  %1567 = vmatpush1.bf16.msra.mxu0 %v1063
  %1568 = vmatprep.subr.bf16.mxu0 0
  %1569 = vmatpush1.bf16.msra.mxu0 %v1064
  %1570 = vmatprep.subr.bf16.mxu0 0
  %1571 = vmatpush1.bf16.msra.mxu0 %v1065
  %1572 = vmatprep.subr.bf16.mxu0 0
  %1573 = vmatpush1.bf16.msra.mxu0 0
  %1574 = vmatprep.subr.bf16.mxu0 0
  %1575 = vmatpush1.bf16.msra.mxu0 0
  %1576 = vmatprep.subr.bf16.mxu0 0
  %1577 = vmatpush1.bf16.msra.mxu0 0
  %1578 = vmatprep.subr.bf16.mxu0 0
  %1579 = vmatpush1.bf16.msra.mxu0 0
  %1580 = vmatprep.subr.bf16.mxu0 0
  %1581 = vmatpush1.bf16.msra.mxu0 0
  %1582 = vmatprep.subr.bf16.mxu0 0
  %1583 = vmatpush1.bf16.msra.mxu0 0
  %1584 = vmatprep.subr.bf16.mxu0 0
  %1585 = vmatpush1.bf16.msra.mxu0 0
  %1586 = vmatprep.subr.bf16.mxu0 0
  %1587 = vmatpush1.bf16.msra.mxu0 0
  %1588 = vmatprep.mubr.bf16.mxu0 0
  %1589 = vmatmul.mubr.bf16.gmra.mrb[0].mxu0 %v630
  %v1590 = vpop.f32.mrb[0].mxu0
  %v1591 = vadd.f32 %v1366, %v1590
  %v1592 = vpop.f32.mrb[0].mxu0
  %v1593 = vpop.f32.mrb[0].mxu0
  %v1594 = vadd.f32 %v1369, %v1593
  %v1595 = vpop.f32.mrb[0].mxu0
  %1596 = vmatprep.mubr.bf16.mxu0 0
  %1597 = vmatmul.mubr.bf16.gmra.mrb[0].mxu0 %v635
  %v1598 = vpop.f32.mrb[0].mxu0
  %v1599 = vadd.f32 %v1374, %v1598
  %v1600 = vpop.f32.mrb[0].mxu0
  %v1601 = vpop.f32.mrb[0].mxu0
  %v1602 = vadd.f32 %v1377, %v1601
  %v1603 = vpop.f32.mrb[0].mxu0
  %1604 = vmatprep.mubr.bf16.mxu0 0
  %1605 = vmatmul.mubr.bf16.gmra.mrb[0].mxu0 %v640
  %v1606 = vpop.f32.mrb[0].mxu0
  %v1607 = vadd.f32 %v1382, %v1606
  %v1608 = vpop.f32.mrb[0].mxu0
  %v1609 = vpop.f32.mrb[0].mxu0
  %v1610 = vadd.f32 %v1385, %v1609
  %v1611 = vpop.f32.mrb[0].mxu0
  %1612 = vmatprep.mubr.bf16.mxu0 0
  %1613 = vmatmul.mubr.bf16.gmra.mrb[0].mxu0 %v645
  %v1614 = vpop.f32.mrb[0].mxu0
  %v1615 = vadd.f32 %v1390, %v1614
  %v1616 = vpop.f32.mrb[0].mxu0
  %v1617 = vpop.f32.mrb[0].mxu0
  %v1618 = vadd.f32 %v1393, %v1617
  %v1619 = vpop.f32.mrb[0].mxu0
  %1620 = vmatprep.mubr.bf16.mxu0 0
  %1621 = vmatmul.mubr.bf16.gmra.mrb[0].mxu0 %v650
  %v1622 = vpop.f32.mrb[0].mxu0
  %v1623 = vadd.f32 %v1398, %v1622
  %v1624 = vpop.f32.mrb[0].mxu0
  %v1625 = vpop.f32.mrb[0].mxu0
  %v1626 = vadd.f32 %v1401, %v1625
  %v1627 = vpop.f32.mrb[0].mxu0
  %1628 = vmatprep.mubr.bf16.mxu0 0
  %1629 = vmatmul.mubr.bf16.gmra.mrb[0].mxu0 %v655
  %v1630 = vpop.f32.mrb[0].mxu0
  %v1631 = vadd.f32 %v1406, %v1630
  %v1632 = vpop.f32.mrb[0].mxu0
  %v1633 = vpop.f32.mrb[0].mxu0
  %v1634 = vadd.f32 %v1409, %v1633
  %v1635 = vpop.f32.mrb[0].mxu0
  %1636 = vmatprep.mubr.bf16.mxu0 0
  %1637 = vmatmul.mubr.bf16.gmra.mrb[0].mxu0 %v660
  %v1638 = vpop.f32.mrb[0].mxu0
  %v1639 = vadd.f32 %v1414, %v1638
  %v1640 = vpop.f32.mrb[0].mxu0
  %v1641 = vpop.f32.mrb[0].mxu0
  %v1642 = vadd.f32 %v1417, %v1641
  %v1643 = vpop.f32.mrb[0].mxu0
  %1644 = vmatprep.mubr.bf16.mxu0 0
  %1645 = vmatmul.mubr.bf16.gmra.mrb[0].mxu0 %v665
  %v1646 = vpop.f32.mrb[0].mxu0
  %v1647 = vadd.f32 %v1422, %v1646
  %v1648 = vpop.f32.mrb[0].mxu0
  %v1649 = vpop.f32.mrb[0].mxu0
  %v1650 = vadd.f32 %v1425, %v1649
  %v1651 = vpop.f32.mrb[0].mxu0
  %1652 = vmatprep.mubr.bf16.mxu0 0
  %1653 = vmatmul.mubr.bf16.gmra.mrb[0].mxu0 %v670
  %v1654 = vpop.f32.mrb[0].mxu0
  %v1655 = vadd.f32 %v1430, %v1654
  %v1656 = vpop.f32.mrb[0].mxu0
  %v1657 = vpop.f32.mrb[0].mxu0
  %v1658 = vadd.f32 %v1433, %v1657
  %v1659 = vpop.f32.mrb[0].mxu0
  %1660 = vmatprep.mubr.bf16.mxu0 0
  %1661 = vmatmul.mubr.bf16.gmra.mrb[0].mxu0 %v675
  %v1662 = vpop.f32.mrb[0].mxu0
  %v1663 = vadd.f32 %v1438, %v1662
  %v1664 = vpop.f32.mrb[0].mxu0
  %v1665 = vpop.f32.mrb[0].mxu0
  %v1666 = vadd.f32 %v1441, %v1665
  %v1667 = vpop.f32.mrb[0].mxu0
  %1668 = vmatprep.mubr.bf16.mxu0 0
  %1669 = vmatmul.mubr.bf16.gmra.mrb[0].mxu0 %v680
  %v1670 = vpop.f32.mrb[0].mxu0
  %v1671 = vadd.f32 %v1446, %v1670
  %v1672 = vpop.f32.mrb[0].mxu0
  %v1673 = vpop.f32.mrb[0].mxu0
  %v1674 = vadd.f32 %v1449, %v1673
  %v1675 = vpop.f32.mrb[0].mxu0
  %1676 = vmatprep.mubr.bf16.mxu0 0
  %1677 = vmatmul.mubr.bf16.gmra.mrb[0].mxu0 %v685
  %v1678 = vpop.f32.mrb[0].mxu0
  %v1679 = vadd.f32 %v1454, %v1678
  %v1680 = vpop.f32.mrb[0].mxu0
  %v1681 = vpop.f32.mrb[0].mxu0
  %v1682 = vadd.f32 %v1457, %v1681
  %v1683 = vpop.f32.mrb[0].mxu0
  %1684 = vmatprep.mubr.bf16.mxu0 0
  %1685 = vmatmul.mubr.bf16.gmra.mrb[0].mxu0 %v690
  %v1686 = vpop.f32.mrb[0].mxu0
  %v1687 = vadd.f32 %v1462, %v1686
  %v1688 = vpop.f32.mrb[0].mxu0
  %v1689 = vpop.f32.mrb[0].mxu0
  %v1690 = vadd.f32 %v1465, %v1689
  %v1691 = vpop.f32.mrb[0].mxu0
  %1692 = vmatprep.mubr.bf16.mxu0 0
  %1693 = vmatmul.mubr.bf16.gmra.mrb[0].mxu0 %v695
  %v1694 = vpop.f32.mrb[0].mxu0
  %v1695 = vadd.f32 %v1470, %v1694
  %v1696 = vpop.f32.mrb[0].mxu0
  %v1697 = vpop.f32.mrb[0].mxu0
  %v1698 = vadd.f32 %v1473, %v1697
  %v1699 = vpop.f32.mrb[0].mxu0
  %1700 = vmatprep.mubr.bf16.mxu0 0
  %1701 = vmatmul.mubr.bf16.gmra.mrb[0].mxu0 %v700
  %v1702 = vpop.f32.mrb[0].mxu0
  %v1703 = vadd.f32 %v1478, %v1702
  %v1704 = vpop.f32.mrb[0].mxu0
  %v1705 = vpop.f32.mrb[0].mxu0
  %v1706 = vadd.f32 %v1481, %v1705
  %v1707 = vpop.f32.mrb[0].mxu0
  %1708 = vmatprep.mubr.bf16.mxu0 0
  %1709 = vmatmul.mubr.bf16.gmra.mrb[0].mxu0 %v705
  %v1710 = vpop.f32.mrb[0].mxu0
  %v1711 = vadd.f32 %v1486, %v1710
  %v1712 = vpop.f32.mrb[0].mxu0
  %v1713 = vpop.f32.mrb[0].mxu0
  %v1714 = vadd.f32 %v1489, %v1713
  %v1715 = vpop.f32.mrb[0].mxu0
  %1716 = vmatprep.mubr.bf16.mxu0 0
  %1717 = vmatmul.mubr.bf16.gmra.mrb[0].mxu0 %v710
  %v1718 = vpop.f32.mrb[0].mxu0
  %v1719 = vadd.f32 %v1494, %v1718
  %v1720 = vpop.f32.mrb[0].mxu0
  %v1721 = vpop.f32.mrb[0].mxu0
  %v1722 = vadd.f32 %v1497, %v1721
  %v1723 = vpop.f32.mrb[0].mxu0
  %1724 = vmatprep.mubr.bf16.mxu0 0
  %1725 = vmatmul.mubr.bf16.gmra.mrb[0].mxu0 %v715
  %v1726 = vpop.f32.mrb[0].mxu0
  %v1727 = vadd.f32 %v1502, %v1726
  %v1728 = vpop.f32.mrb[0].mxu0
  %v1729 = vpop.f32.mrb[0].mxu0
  %v1730 = vadd.f32 %v1505, %v1729
  %v1731 = vpop.f32.mrb[0].mxu0
  %1732 = vmatprep.mubr.bf16.mxu0 0
  %1733 = vmatmul.mubr.bf16.gmra.mrb[0].mxu0 %v720
  %v1734 = vpop.f32.mrb[0].mxu0
  %v1735 = vadd.f32 %v1510, %v1734
  %v1736 = vpop.f32.mrb[0].mxu0
  %v1737 = vpop.f32.mrb[0].mxu0
  %v1738 = vadd.f32 %v1513, %v1737
  %v1739 = vpop.f32.mrb[0].mxu0
  %1740 = vmatprep.mubr.bf16.mxu0 0
  %1741 = vmatmul.mubr.bf16.gmra.mrb[0].mxu0 %v725
  %v1742 = vpop.f32.mrb[0].mxu0
  %v1743 = vadd.f32 %v1518, %v1742
  %v1744 = vpop.f32.mrb[0].mxu0
  %v1745 = vpop.f32.mrb[0].mxu0
  %v1746 = vadd.f32 %v1521, %v1745
  %v1747 = vpop.f32.mrb[0].mxu0
  %1748 = vmatprep.mubr.bf16.mxu0 0
  %1749 = vmatmul.mubr.bf16.gmra.mrb[0].mxu0 %v730
  %v1750 = vpop.f32.mrb[0].mxu0
  %v1751 = vadd.f32 %v1526, %v1750
  %v1752 = vpop.f32.mrb[0].mxu0
  %v1753 = vpop.f32.mrb[0].mxu0
  %v1754 = vadd.f32 %v1529, %v1753
  %v1755 = vpop.f32.mrb[0].mxu0
  %1756 = vmatprep.mubr.bf16.mxu0 0
  %1757 = vmatmul.mubr.bf16.gmra.mrb[0].mxu0 %v735
  %v1758 = vpop.f32.mrb[0].mxu0
  %v1759 = vadd.f32 %v1534, %v1758
  %v1760 = vpop.f32.mrb[0].mxu0
  %v1761 = vpop.f32.mrb[0].mxu0
  %v1762 = vadd.f32 %v1537, %v1761
  %v1763 = vpop.f32.mrb[0].mxu0
  %1764 = vmatprep.mubr.bf16.mxu0 0
  %1765 = vmatmul.mubr.bf16.gmra.mrb[0].mxu0 %v740
  %v1766 = vpop.f32.mrb[0].mxu0
  %v1767 = vadd.f32 %v1542, %v1766
  %v1768 = vpop.f32.mrb[0].mxu0
  %v1769 = vpop.f32.mrb[0].mxu0
  %v1770 = vadd.f32 %v1545, %v1769
  %v1771 = vpop.f32.mrb[0].mxu0
  %1772 = vmatprep.mubr.bf16.mxu0 0
  %1773 = vmatmul.mubr.bf16.gmra.mrb[0].mxu0 %v745
  %v1774 = vpop.f32.mrb[0].mxu0
  %v1775 = vadd.f32 %v1550, %v1774
  %v1776 = vpop.f32.mrb[0].mxu0
  %v1777 = vpop.f32.mrb[0].mxu0
  %v1778 = vadd.f32 %v1553, %v1777
  %v1779 = vpop.f32.mrb[0].mxu0
  %1780 = vdwg.mxu0
  %v1781 = vadd.f32 %v1591, %v1594
  %v1782 = vadd.f32 %v1781, %v1599
  %v1783 = vadd.f32 %v1782, %v1602
  %v1784 = vadd.f32 %v1783, %v1607
  %v1785 = vadd.f32 %v1784, %v1610
  %v1786 = vadd.f32 %v1785, %v1615
  %v1787 = vadd.f32 %v1786, %v1618
  %v1788 = vadd.f32 %v1787, %v1623
  %v1789 = vadd.f32 %v1788, %v1626
  %v1790 = vadd.f32 %v1789, %v1631
  %v1791 = vadd.f32 %v1790, %v1634
  %v1792 = vadd.f32 %v1791, %v1639
  %v1793 = vadd.f32 %v1792, %v1642
  %v1794 = vadd.f32 %v1793, %v1647
  %v1795 = vadd.f32 %v1794, %v1650
  %v1796 = vadd.f32 %v1795, %v1655
  %v1797 = vadd.f32 %v1796, %v1658
  %v1798 = vadd.f32 %v1797, %v1663
  %v1799 = vadd.f32 %v1798, %v1666
  %v1800 = vadd.f32 %v1799, %v1671
  %v1801 = vadd.f32 %v1800, %v1674
  %v1802 = vadd.f32 %v1801, %v1679
  %v1803 = vadd.f32 %v1802, %v1682
  %v1804 = vadd.f32 %v1803, %v1687
  %v1805 = vadd.f32 %v1804, %v1690
  %v1806 = vadd.f32 %v1805, %v1695
  %v1807 = vadd.f32 %v1806, %v1698
  %v1808 = vadd.f32 %v1807, %v1703
  %v1809 = vadd.f32 %v1808, %v1706
  %v1810 = vadd.f32 %v1809, %v1711
  %v1811 = vadd.f32 %v1810, %v1714
  %v1812 = vadd.f32 %v1811, %v1719
  %v1813 = vadd.f32 %v1812, %v1722
  %v1814 = vadd.f32 %v1813, %v1727
  %v1815 = vadd.f32 %v1814, %v1730
  %v1816 = vadd.f32 %v1815, %v1735
  %v1817 = vadd.f32 %v1816, %v1738
  %v1818 = vadd.f32 %v1817, %v1743
  %v1819 = vadd.f32 %v1818, %v1746
  %v1820 = vadd.f32 %v1819, %v1751
  %v1821 = vadd.f32 %v1820, %v1754
  %v1822 = vadd.f32 %v1821, %v1759
  %v1823 = vadd.f32 %v1822, %v1762
  %v1824 = vadd.f32 %v1823, %v1767
  %v1825 = vadd.f32 %v1824, %v1770
  %v1826 = vadd.f32 %v1825, %v1775
  %v1827 = vadd.f32 %v1826, %v1778
  %v1828 = vrot.slane %v1827, 4
  %v1829 = vadd.f32 %v1827, %v1828
  %v1830 = vrot.slane %v1829, 2
  %v1831 = vadd.f32 %v1829, %v1830
  %v1832 = vrot.slane %v1831, 1
  %v1833 = vadd.f32 %v1831, %v1832
  %v1834 = vmul.f32 %v1833, 0.0026041667
  %v1835 = vsub.f32 %v1591, %v1834
  %v1836 = vsub.f32 %v1594, %v1834
  %v1837 = vsub.f32 %v1599, %v1834
  %v1838 = vsub.f32 %v1602, %v1834
  %v1839 = vsub.f32 %v1607, %v1834
  %v1840 = vsub.f32 %v1610, %v1834
  %v1841 = vsub.f32 %v1615, %v1834
  %v1842 = vsub.f32 %v1618, %v1834
  %v1843 = vsub.f32 %v1623, %v1834
  %v1844 = vsub.f32 %v1626, %v1834
  %v1845 = vsub.f32 %v1631, %v1834
  %v1846 = vsub.f32 %v1634, %v1834
  %v1847 = vsub.f32 %v1639, %v1834
  %v1848 = vsub.f32 %v1642, %v1834
  %v1849 = vsub.f32 %v1647, %v1834
  %v1850 = vsub.f32 %v1650, %v1834
  %v1851 = vsub.f32 %v1655, %v1834
  %v1852 = vsub.f32 %v1658, %v1834
  %v1853 = vsub.f32 %v1663, %v1834
  %v1854 = vsub.f32 %v1666, %v1834
  %v1855 = vsub.f32 %v1671, %v1834
  %v1856 = vsub.f32 %v1674, %v1834
  %v1857 = vsub.f32 %v1679, %v1834
  %v1858 = vsub.f32 %v1682, %v1834
  %v1859 = vsub.f32 %v1687, %v1834
  %v1860 = vsub.f32 %v1690, %v1834
  %v1861 = vsub.f32 %v1695, %v1834
  %v1862 = vsub.f32 %v1698, %v1834
  %v1863 = vsub.f32 %v1703, %v1834
  %v1864 = vsub.f32 %v1706, %v1834
  %v1865 = vsub.f32 %v1711, %v1834
  %v1866 = vsub.f32 %v1714, %v1834
  %v1867 = vsub.f32 %v1719, %v1834
  %v1868 = vsub.f32 %v1722, %v1834
  %v1869 = vsub.f32 %v1727, %v1834
  %v1870 = vsub.f32 %v1730, %v1834
  %v1871 = vsub.f32 %v1735, %v1834
  %v1872 = vsub.f32 %v1738, %v1834
  %v1873 = vsub.f32 %v1743, %v1834
  %v1874 = vsub.f32 %v1746, %v1834
  %v1875 = vsub.f32 %v1751, %v1834
  %v1876 = vsub.f32 %v1754, %v1834
  %v1877 = vsub.f32 %v1759, %v1834
  %v1878 = vsub.f32 %v1762, %v1834
  %v1879 = vsub.f32 %v1767, %v1834
  %v1880 = vsub.f32 %v1770, %v1834
  %v1881 = vsub.f32 %v1775, %v1834
  %v1882 = vsub.f32 %v1778, %v1834
  %v1883 = vmul.f32 %v1835, %v1835
  %v1884 = vmul.f32 %v1836, %v1836
  %v1885 = vmul.f32 %v1837, %v1837
  %v1886 = vmul.f32 %v1838, %v1838
  %v1887 = vmul.f32 %v1839, %v1839
  %v1888 = vmul.f32 %v1840, %v1840
  %v1889 = vmul.f32 %v1841, %v1841
  %v1890 = vmul.f32 %v1842, %v1842
  %v1891 = vmul.f32 %v1843, %v1843
  %v1892 = vmul.f32 %v1844, %v1844
  %v1893 = vmul.f32 %v1845, %v1845
  %v1894 = vmul.f32 %v1846, %v1846
  %v1895 = vmul.f32 %v1847, %v1847
  %v1896 = vmul.f32 %v1848, %v1848
  %v1897 = vmul.f32 %v1849, %v1849
  %v1898 = vmul.f32 %v1850, %v1850
  %v1899 = vmul.f32 %v1851, %v1851
  %v1900 = vmul.f32 %v1852, %v1852
  %v1901 = vmul.f32 %v1853, %v1853
  %v1902 = vmul.f32 %v1854, %v1854
  %v1903 = vmul.f32 %v1855, %v1855
  %v1904 = vmul.f32 %v1856, %v1856
  %v1905 = vmul.f32 %v1857, %v1857
  %v1906 = vmul.f32 %v1858, %v1858
  %v1907 = vmul.f32 %v1859, %v1859
  %v1908 = vmul.f32 %v1860, %v1860
  %v1909 = vmul.f32 %v1861, %v1861
  %v1910 = vmul.f32 %v1862, %v1862
  %v1911 = vmul.f32 %v1863, %v1863
  %v1912 = vmul.f32 %v1864, %v1864
  %v1913 = vmul.f32 %v1865, %v1865
  %v1914 = vmul.f32 %v1866, %v1866
  %v1915 = vmul.f32 %v1867, %v1867
  %v1916 = vmul.f32 %v1868, %v1868
  %v1917 = vmul.f32 %v1869, %v1869
  %v1918 = vmul.f32 %v1870, %v1870
  %v1919 = vmul.f32 %v1871, %v1871
  %v1920 = vmul.f32 %v1872, %v1872
  %v1921 = vmul.f32 %v1873, %v1873
  %v1922 = vmul.f32 %v1874, %v1874
  %v1923 = vmul.f32 %v1875, %v1875
  %v1924 = vmul.f32 %v1876, %v1876
  %v1925 = vmul.f32 %v1877, %v1877
  %v1926 = vmul.f32 %v1878, %v1878
  %v1927 = vmul.f32 %v1879, %v1879
  %v1928 = vmul.f32 %v1880, %v1880
  %v1929 = vmul.f32 %v1881, %v1881
  %v1930 = vmul.f32 %v1882, %v1882
  %v1931 = vadd.f32 %v1883, %v1884
  %v1932 = vadd.f32 %v1931, %v1885
  %v1933 = vadd.f32 %v1932, %v1886
  %v1934 = vadd.f32 %v1933, %v1887
  %v1935 = vadd.f32 %v1934, %v1888
  %v1936 = vadd.f32 %v1935, %v1889
  %v1937 = vadd.f32 %v1936, %v1890
  %v1938 = vadd.f32 %v1937, %v1891
  %v1939 = vadd.f32 %v1938, %v1892
  %v1940 = vadd.f32 %v1939, %v1893
  %v1941 = vadd.f32 %v1940, %v1894
  %v1942 = vadd.f32 %v1941, %v1895
  %v1943 = vadd.f32 %v1942, %v1896
  %v1944 = vadd.f32 %v1943, %v1897
  %v1945 = vadd.f32 %v1944, %v1898
  %v1946 = vadd.f32 %v1945, %v1899
  %v1947 = vadd.f32 %v1946, %v1900
  %v1948 = vadd.f32 %v1947, %v1901
  %v1949 = vadd.f32 %v1948, %v1902
  %v1950 = vadd.f32 %v1949, %v1903
  %v1951 = vadd.f32 %v1950, %v1904
  %v1952 = vadd.f32 %v1951, %v1905
  %v1953 = vadd.f32 %v1952, %v1906
  %v1954 = vadd.f32 %v1953, %v1907
  %v1955 = vadd.f32 %v1954, %v1908
  %v1956 = vadd.f32 %v1955, %v1909
  %v1957 = vadd.f32 %v1956, %v1910
  %v1958 = vadd.f32 %v1957, %v1911
  %v1959 = vadd.f32 %v1958, %v1912
  %v1960 = vadd.f32 %v1959, %v1913
  %v1961 = vadd.f32 %v1960, %v1914
  %v1962 = vadd.f32 %v1961, %v1915
  %v1963 = vadd.f32 %v1962, %v1916
  %v1964 = vadd.f32 %v1963, %v1917
  %v1965 = vadd.f32 %v1964, %v1918
  %v1966 = vadd.f32 %v1965, %v1919
  %v1967 = vadd.f32 %v1966, %v1920
  %v1968 = vadd.f32 %v1967, %v1921
  %v1969 = vadd.f32 %v1968, %v1922
  %v1970 = vadd.f32 %v1969, %v1923
  %v1971 = vadd.f32 %v1970, %v1924
  %v1972 = vadd.f32 %v1971, %v1925
  %v1973 = vadd.f32 %v1972, %v1926
  %v1974 = vadd.f32 %v1973, %v1927
  %v1975 = vadd.f32 %v1974, %v1928
  %v1976 = vadd.f32 %v1975, %v1929
  %v1977 = vadd.f32 %v1976, %v1930
  %v1978 = vrot.slane %v1977, 4
  %v1979 = vadd.f32 %v1977, %v1978
  %v1980 = vrot.slane %v1979, 2
  %v1981 = vadd.f32 %v1979, %v1980
  %v1982 = vrot.slane %v1981, 1
  %v1983 = vadd.f32 %v1981, %v1982
  %v1984 = vmul.f32 %v1983, 0.0026041667
  %v1985 = vmax.f32 %v1984, 0.0
  %v1986 = vld [vmem:[%s2] sm:$0x1]
  %v1987 = vadd.f32 %v1985, 1e-05
  %v1988 = vrsqrt.pop %v1987
  %v1989 = vmul.f32 %v1986, %v1988
  %v1991 = vlaneseq
  %v1992 = vshrl.u32 %v1991, 7
  %v1993 = vsub.s32 0, %v1992
  %v1994 = vrot.slane %v1989, %v1993
  %v1996 = vmul.f32 %v1835, %v1994
  %v1997 = vmul.f32 %v1836, %v1994
  %v1998 = vmul.f32 %v1837, %v1994
  %v1999 = vmul.f32 %v1838, %v1994
  %v2000 = vmul.f32 %v1839, %v1994
  %v2001 = vmul.f32 %v1840, %v1994
  %v2002 = vmul.f32 %v1841, %v1994
  %v2003 = vmul.f32 %v1842, %v1994
  %v2004 = vmul.f32 %v1843, %v1994
  %v2005 = vmul.f32 %v1844, %v1994
  %v2006 = vmul.f32 %v1845, %v1994
  %v2007 = vmul.f32 %v1846, %v1994
  %v2008 = vmul.f32 %v1847, %v1994
  %v2009 = vmul.f32 %v1848, %v1994
  %v2010 = vmul.f32 %v1849, %v1994
  %v2011 = vmul.f32 %v1850, %v1994
  %v2012 = vmul.f32 %v1851, %v1994
  %v2013 = vmul.f32 %v1852, %v1994
  %v2014 = vmul.f32 %v1853, %v1994
  %v2015 = vmul.f32 %v1854, %v1994
  %v2016 = vmul.f32 %v1855, %v1994
  %v2017 = vmul.f32 %v1856, %v1994
  %v2018 = vmul.f32 %v1857, %v1994
  %v2019 = vmul.f32 %v1858, %v1994
  %v2020 = vmul.f32 %v1859, %v1994
  %v2021 = vmul.f32 %v1860, %v1994
  %v2022 = vmul.f32 %v1861, %v1994
  %v2023 = vmul.f32 %v1862, %v1994
  %v2024 = vmul.f32 %v1863, %v1994
  %v2025 = vmul.f32 %v1864, %v1994
  %v2026 = vmul.f32 %v1865, %v1994
  %v2027 = vmul.f32 %v1866, %v1994
  %v2028 = vmul.f32 %v1867, %v1994
  %v2029 = vmul.f32 %v1868, %v1994
  %v2030 = vmul.f32 %v1869, %v1994
  %v2031 = vmul.f32 %v1870, %v1994
  %v2032 = vmul.f32 %v1871, %v1994
  %v2033 = vmul.f32 %v1872, %v1994
  %v2034 = vmul.f32 %v1873, %v1994
  %v2035 = vmul.f32 %v1874, %v1994
  %v2036 = vmul.f32 %v1875, %v1994
  %v2037 = vmul.f32 %v1876, %v1994
  %v2038 = vmul.f32 %v1877, %v1994
  %v2039 = vmul.f32 %v1878, %v1994
  %v2040 = vmul.f32 %v1879, %v1994
  %v2041 = vmul.f32 %v1880, %v1994
  %v2042 = vmul.f32 %v1881, %v1994
  %v2043 = vmul.f32 %v1882, %v1994
  %v2044 = vld [vmem:[%s3] sm:$0x1]
  %v2046 = vlaneseq
  %v2047 = vshrl.u32 %v2046, 7
  %v2048 = vsub.s32 0, %v2047
  %v2049 = vrot.slane %v2044, %v2048
  %v2051 = vadd.f32 %v1996, %v2049
  %v2052 = vadd.f32 %v1997, %v2049
  %v2053 = vadd.f32 %v1998, %v2049
  %v2054 = vadd.f32 %v1999, %v2049
  %v2055 = vadd.f32 %v2000, %v2049
  %v2056 = vadd.f32 %v2001, %v2049
  %v2057 = vadd.f32 %v2002, %v2049
  %v2058 = vadd.f32 %v2003, %v2049
  %v2059 = vadd.f32 %v2004, %v2049
  %v2060 = vadd.f32 %v2005, %v2049
  %v2061 = vadd.f32 %v2006, %v2049
  %v2062 = vadd.f32 %v2007, %v2049
  %v2063 = vadd.f32 %v2008, %v2049
  %v2064 = vadd.f32 %v2009, %v2049
  %v2065 = vadd.f32 %v2010, %v2049
  %v2066 = vadd.f32 %v2011, %v2049
  %v2067 = vadd.f32 %v2012, %v2049
  %v2068 = vadd.f32 %v2013, %v2049
  %v2069 = vadd.f32 %v2014, %v2049
  %v2070 = vadd.f32 %v2015, %v2049
  %v2071 = vadd.f32 %v2016, %v2049
  %v2072 = vadd.f32 %v2017, %v2049
  %v2073 = vadd.f32 %v2018, %v2049
  %v2074 = vadd.f32 %v2019, %v2049
  %v2075 = vadd.f32 %v2020, %v2049
  %v2076 = vadd.f32 %v2021, %v2049
  %v2077 = vadd.f32 %v2022, %v2049
  %v2078 = vadd.f32 %v2023, %v2049
  %v2079 = vadd.f32 %v2024, %v2049
  %v2080 = vadd.f32 %v2025, %v2049
  %v2081 = vadd.f32 %v2026, %v2049
  %v2082 = vadd.f32 %v2027, %v2049
  %v2083 = vadd.f32 %v2028, %v2049
  %v2084 = vadd.f32 %v2029, %v2049
  %v2085 = vadd.f32 %v2030, %v2049
  %v2086 = vadd.f32 %v2031, %v2049
  %v2087 = vadd.f32 %v2032, %v2049
  %v2088 = vadd.f32 %v2033, %v2049
  %v2089 = vadd.f32 %v2034, %v2049
  %v2090 = vadd.f32 %v2035, %v2049
  %v2091 = vadd.f32 %v2036, %v2049
  %v2092 = vadd.f32 %v2037, %v2049
  %v2093 = vadd.f32 %v2038, %v2049
  %v2094 = vadd.f32 %v2039, %v2049
  %v2095 = vadd.f32 %v2040, %v2049
  %v2096 = vadd.f32 %v2041, %v2049
  %v2097 = vadd.f32 %v2042, %v2049
  %v2098 = vadd.f32 %v2043, %v2049
  %v2099 = vmax.f32 %v2051, %v2063
  %v2100 = vmax.f32 %v2052, %v2064
  %v2101 = vmax.f32 %v2053, %v2065
  %v2102 = vmax.f32 %v2054, %v2066
  %v2103 = vmax.f32 %v2055, %v2067
  %v2104 = vmax.f32 %v2056, %v2068
  %v2105 = vmax.f32 %v2057, %v2069
  %v2106 = vmax.f32 %v2058, %v2070
  %v2107 = vmax.f32 %v2059, %v2071
  %v2108 = vmax.f32 %v2060, %v2072
  %v2109 = vmax.f32 %v2061, %v2073
  %v2110 = vmax.f32 %v2062, %v2074
  %v2111 = vmax.f32 %v2075, %v2087
  %v2112 = vmax.f32 %v2076, %v2088
  %v2113 = vmax.f32 %v2077, %v2089
  %v2114 = vmax.f32 %v2078, %v2090
  %v2115 = vmax.f32 %v2079, %v2091
  %v2116 = vmax.f32 %v2080, %v2092
  %v2117 = vmax.f32 %v2081, %v2093
  %v2118 = vmax.f32 %v2082, %v2094
  %v2119 = vmax.f32 %v2083, %v2095
  %v2120 = vmax.f32 %v2084, %v2096
  %v2121 = vmax.f32 %v2085, %v2097
  %v2122 = vmax.f32 %v2086, %v2098
  %v2123 = vmax.f32 %v2099, %v2111
  %v2124 = vmax.f32 %v2100, %v2112
  %v2125 = vmax.f32 %v2101, %v2113
  %v2126 = vmax.f32 %v2102, %v2114
  %v2127 = vmax.f32 %v2103, %v2115
  %v2128 = vmax.f32 %v2104, %v2116
  %v2129 = vmax.f32 %v2105, %v2117
  %v2130 = vmax.f32 %v2106, %v2118
  %v2131 = vmax.f32 %v2107, %v2119
  %v2132 = vmax.f32 %v2108, %v2120
  %v2133 = vmax.f32 %v2109, %v2121
  %v2134 = vmax.f32 %v2110, %v2122
  %v2135 = vmax.f32 %v2123, 0.0
  %v2136 = vmax.f32 %v2124, 0.0
  %v2137 = vmax.f32 %v2125, 0.0
  %v2138 = vmax.f32 %v2126, 0.0
  %v2139 = vmax.f32 %v2127, 0.0
  %v2140 = vmax.f32 %v2128, 0.0
  %v2141 = vmax.f32 %v2129, 0.0
  %v2142 = vmax.f32 %v2130, 0.0
  %v2143 = vmax.f32 %v2131, 0.0
  %v2144 = vmax.f32 %v2132, 0.0
  %v2145 = vmax.f32 %v2133, 0.0
  %v2146 = vmax.f32 %v2134, 0.0
  %v2147 = vpack.c.bf16 %v2136, %v2135
  %v2148 = vpack.c.bf16 %v2138, %v2137
  %v2149 = vpack.c.bf16 %v2140, %v2139
  %v2150 = vpack.c.bf16 %v2142, %v2141
  %v2151 = vpack.c.bf16 %v2144, %v2143
  %v2152 = vpack.c.bf16 %v2146, %v2145
  %v2159 = vunpack.c.l.b16 %v2147
  %v2160 = vunpack.c.h.b16 %v2147
  %v2161 = vunpack.c.l.b16 %v2148
  %v2162 = vunpack.c.h.b16 %v2148
  %v2163 = vunpack.c.l.b16 %v2149
  %v2164 = vunpack.c.h.b16 %v2149
  %v2165 = vunpack.c.l.b16 %v2150
  %v2166 = vunpack.c.h.b16 %v2150
  %v2167 = vunpack.c.l.b16 %v2151
  %v2168 = vunpack.c.h.b16 %v2151
  %v2169 = vunpack.c.l.b16 %v2152
  %v2170 = vunpack.c.h.b16 %v2152
  %v2171 = vpack.c.b16 %v2159, %v2159
  %v2172 = vpack.c.b16 %v2160, %v2160
  %v2173 = vpack.c.b16 %v2161, %v2161
  %v2174 = vpack.c.b16 %v2162, %v2162
  %v2175 = vpack.c.b16 %v2163, %v2163
  %v2176 = vpack.c.b16 %v2164, %v2164
  %v2177 = vpack.c.b16 %v2165, %v2165
  %v2178 = vpack.c.b16 %v2166, %v2166
  %v2179 = vpack.c.b16 %v2167, %v2167
  %v2180 = vpack.c.b16 %v2168, %v2168
  %v2181 = vpack.c.b16 %v2169, %v2169
  %v2182 = vpack.c.b16 %v2170, %v2170
  %2195 = vst [vmem:[%s4] sm:$0xf] %v2171
  %2196 = vst [vmem:[%s4 + $0x4] sm:$0xf] %v2172
  %2197 = vst [vmem:[%s4 + $0x8] sm:$0xf] %v2173
  %2198 = vst [vmem:[%s4 + $0xc] sm:$0xf] %v2174
  %2199 = vst [vmem:[%s4 + $0x10] sm:$0xf] %v2175
  %2200 = vst [vmem:[%s4 + $0x14] sm:$0xf] %v2176
  %2201 = vst [vmem:[%s4 + $0x18] sm:$0xf] %v2177
  %2202 = vst [vmem:[%s4 + $0x1c] sm:$0xf] %v2178
  %2203 = vst [vmem:[%s4 + $0x20] sm:$0xf] %v2179
  %2204 = vst [vmem:[%s4 + $0x24] sm:$0xf] %v2180
  %2205 = vst [vmem:[%s4 + $0x28] sm:$0xf] %v2181
  %2206 = vst [vmem:[%s4 + $0x2c] sm:$0xf] %v2182
  // Predicated region
  $region18: #{protomaml_forward.14} parent=0 // pred_check
    _
  $region19: #{protomaml_forward.14} parent=0 // pred_check_branch
    %2208 = sbr.rel (0) target = $region21
  $region20: #{protomaml_forward.14} parent=0 // pred_region
    _
  $region21: #{protomaml_forward.14} parent=0 // pred_fallthru
    _
  // Predicated region
  $region22: #{protomaml_forward.14} parent=0 // pred_check
    _
  $region23: #{protomaml_forward.14} parent=0 // pred_check_branch
    %2210 = sbr.rel (0) target = $region25
  $region24: #{protomaml_forward.14} parent=0 // pred_region
    _
  $region25: #{protomaml_forward.14} parent=0 // pred_fallthru
    _

// kernel: protomaml_forward.15
$region0: #{protomaml_forward.15}
  #allocation0 [shape = 'u32[]', space=smem, size = 0x4, offset = 0x4, fixed_abs, tag = 'smem constant byte address 0x4 - core index']
  #allocation1 [shape = 'u32[144,128]{1,0:T(1,128)}', space=vmem, size = 0x12000, scoped, tag = 'internal scratch']
  %s0 = inlined_call_operand.vmem [shape: bf16[96,640], index: 0, kind: input, shape index: {}]
  %s1 = inlined_call_operand.vmem [shape: bf16[640,128], index: 1, kind: input, shape index: {}]
  %s2 = inlined_call_operand.vmem [shape: f32[1,128], index: 2, kind: input, shape index: {}]
  %s3 = inlined_call_operand.vmem [shape: f32[1,128], index: 3, kind: input, shape index: {}]
  %s4 = inlined_call_operand.vmem [shape: bf16[24,128], index: 4, kind: output, shape index: {}]
  %s5 = sld [smem:[#allocation0]]
  $region26: #{protomaml_forward.15} parent=0
    _
  %s7 = ssub.s32 1, %s5
  %s8 = scalar_select 0, %s7, %s5
  // Predicated region
  $region2: #{protomaml_forward.15} parent=0 // pred_check
    _
  $region3: #{protomaml_forward.15} parent=0 // pred_check_branch
    %10 = sbr.rel (0) target = $region5
  $region4: #{protomaml_forward.15} parent=0 // pred_region
    _
  $region5: #{protomaml_forward.15} parent=0 // pred_fallthru
    _
  // Predicated region
  $region6: #{protomaml_forward.15} parent=0 // pred_check
    _
  $region7: #{protomaml_forward.15} parent=0 // pred_check_branch
    %12 = sbr.rel (0) target = $region9
  $region8: #{protomaml_forward.15} parent=0 // pred_region
    _
  $region9: #{protomaml_forward.15} parent=0 // pred_fallthru
    _
  // Predicated region
  $region10: #{protomaml_forward.15} parent=0 // pred_check
    _
  $region11: #{protomaml_forward.15} parent=0 // pred_check_branch
    %14 = sbr.rel (0) target = $region13
  $region12: #{protomaml_forward.15} parent=0 // pred_region
    _
  $region13: #{protomaml_forward.15} parent=0 // pred_fallthru
    _
  // Predicated region
  $region14: #{protomaml_forward.15} parent=0 // pred_check
    _
  $region15: #{protomaml_forward.15} parent=0 // pred_check_branch
    %16 = sbr.rel (0) target = $region17
  $region16: #{protomaml_forward.15} parent=0 // pred_region
    _
  $region17: #{protomaml_forward.15} parent=0 // pred_fallthru
    _
  %v18 = vld [vmem:[%s0] sm:$0xff]
  %v19 = vld [vmem:[%s0 + $0x8] sm:$0xff]
  %v20 = vld [vmem:[%s0 + $0x10] sm:$0xf]
  %v21 = vld [vmem:[%s0 + $0x14] sm:$0xff]
  %v22 = vld [vmem:[%s0 + $0x1c] sm:$0xff]
  %v23 = vld [vmem:[%s0 + $0x24] sm:$0xf]
  %v24 = vld [vmem:[%s0 + $0x28] sm:$0xff]
  %v25 = vld [vmem:[%s0 + $0x30] sm:$0xff]
  %v26 = vld [vmem:[%s0 + $0x38] sm:$0xf]
  %v27 = vld [vmem:[%s0 + $0x3c] sm:$0xff]
  %v28 = vld [vmem:[%s0 + $0x44] sm:$0xff]
  %v29 = vld [vmem:[%s0 + $0x4c] sm:$0xf]
  %v30 = vld [vmem:[%s0 + $0x50] sm:$0xff]
  %v31 = vld [vmem:[%s0 + $0x58] sm:$0xff]
  %v32 = vld [vmem:[%s0 + $0x60] sm:$0xf]
  %v33 = vld [vmem:[%s0 + $0x64] sm:$0xff]
  %v34 = vld [vmem:[%s0 + $0x6c] sm:$0xff]
  %v35 = vld [vmem:[%s0 + $0x74] sm:$0xf]
  %v36 = vld [vmem:[%s0 + $0x78] sm:$0xff]
  %v37 = vld [vmem:[%s0 + $0x80] sm:$0xff]
  %v38 = vld [vmem:[%s0 + $0x88] sm:$0xf]
  %v39 = vld [vmem:[%s0 + $0x8c] sm:$0xff]
  %v40 = vld [vmem:[%s0 + $0x94] sm:$0xff]
  %v41 = vld [vmem:[%s0 + $0x9c] sm:$0xf]
  %v42 = vld [vmem:[%s0 + $0xa0] sm:$0xff]
  %v43 = vld [vmem:[%s0 + $0xa8] sm:$0xff]
  %v44 = vld [vmem:[%s0 + $0xb0] sm:$0xf]
  %v45 = vld [vmem:[%s0 + $0xb4] sm:$0xff]
  %v46 = vld [vmem:[%s0 + $0xbc] sm:$0xff]
  %v47 = vld [vmem:[%s0 + $0xc4] sm:$0xf]
  %v48 = vld [vmem:[%s0 + $0xc8] sm:$0xff]
  %v49 = vld [vmem:[%s0 + $0xd0] sm:$0xff]
  %v50 = vld [vmem:[%s0 + $0xd8] sm:$0xf]
  %v51 = vld [vmem:[%s0 + $0xdc] sm:$0xff]
  %v52 = vld [vmem:[%s0 + $0xe4] sm:$0xff]
  %v53 = vld [vmem:[%s0 + $0xec] sm:$0xf]
  %v54 = vld [vmem:[%s1] sm:$0xf]
  %v55 = vld [vmem:[%s1 + $0x4] sm:$0xf]
  %v56 = vld [vmem:[%s1 + $0x8] sm:$0xf]
  %v57 = vld [vmem:[%s1 + $0xc] sm:$0xf]
  %v58 = vld [vmem:[%s1 + $0x10] sm:$0xf]
  %v59 = vld [vmem:[%s1 + $0x14] sm:$0xf]
  %v60 = vld [vmem:[%s1 + $0x18] sm:$0xf]
  %v61 = vld [vmem:[%s1 + $0x1c] sm:$0xf]
  %v62 = vld [vmem:[%s1 + $0x20] sm:$0xf]
  %v63 = vld [vmem:[%s1 + $0x24] sm:$0xf]
  %v64 = vld [vmem:[%s1 + $0x28] sm:$0xf]
  %v65 = vld [vmem:[%s1 + $0x2c] sm:$0xf]
  %v66 = vld [vmem:[%s1 + $0x30] sm:$0xf]
  %v67 = vld [vmem:[%s1 + $0x34] sm:$0xf]
  %v68 = vld [vmem:[%s1 + $0x38] sm:$0xf]
  %v69 = vld [vmem:[%s1 + $0x3c] sm:$0xf]
  %v70 = vld [vmem:[%s1 + $0x40] sm:$0xf]
  %v71 = vld [vmem:[%s1 + $0x44] sm:$0xf]
  %v72 = vld [vmem:[%s1 + $0x48] sm:$0xf]
  %v73 = vld [vmem:[%s1 + $0x4c] sm:$0xf]
  %v74 = vld [vmem:[%s1 + $0x50] sm:$0xf]
  %v75 = vld [vmem:[%s1 + $0x54] sm:$0xf]
  %v76 = vld [vmem:[%s1 + $0x58] sm:$0xf]
  %v77 = vld [vmem:[%s1 + $0x5c] sm:$0xf]
  %v78 = vld [vmem:[%s1 + $0x60] sm:$0xf]
  %v79 = vld [vmem:[%s1 + $0x64] sm:$0xf]
  %v80 = vld [vmem:[%s1 + $0x68] sm:$0xf]
  %v81 = vld [vmem:[%s1 + $0x6c] sm:$0xf]
  %v82 = vld [vmem:[%s1 + $0x70] sm:$0xf]
  %v83 = vld [vmem:[%s1 + $0x74] sm:$0xf]
  %v84 = vld [vmem:[%s1 + $0x78] sm:$0xf]
  %v85 = vld [vmem:[%s1 + $0x7c] sm:$0xf]
  %v86 = vld [vmem:[%s1 + $0x80] sm:$0xf]
  %v87 = vld [vmem:[%s1 + $0x84] sm:$0xf]
  %v88 = vld [vmem:[%s1 + $0x88] sm:$0xf]
  %v89 = vld [vmem:[%s1 + $0x8c] sm:$0xf]
  %v90 = vld [vmem:[%s1 + $0x90] sm:$0xf]
  %v91 = vld [vmem:[%s1 + $0x94] sm:$0xf]
  %v92 = vld [vmem:[%s1 + $0x98] sm:$0xf]
  %v93 = vld [vmem:[%s1 + $0x9c] sm:$0xf]
  %v94 = vld [vmem:[%s1 + $0xa0] sm:$0xf]
  %v95 = vld [vmem:[%s1 + $0xa4] sm:$0xf]
  %v96 = vld [vmem:[%s1 + $0xa8] sm:$0xf]
  %v97 = vld [vmem:[%s1 + $0xac] sm:$0xf]
  %v98 = vld [vmem:[%s1 + $0xb0] sm:$0xf]
  %v99 = vld [vmem:[%s1 + $0xb4] sm:$0xf]
  %v100 = vld [vmem:[%s1 + $0xb8] sm:$0xf]
  %v101 = vld [vmem:[%s1 + $0xbc] sm:$0xf]
  %v102 = vld [vmem:[%s1 + $0xc0] sm:$0xf]
  %v103 = vld [vmem:[%s1 + $0xc4] sm:$0xf]
  %v104 = vld [vmem:[%s1 + $0xc8] sm:$0xf]
  %v105 = vld [vmem:[%s1 + $0xcc] sm:$0xf]
  %v106 = vld [vmem:[%s1 + $0xd0] sm:$0xf]
  %v107 = vld [vmem:[%s1 + $0xd4] sm:$0xf]
  %v108 = vld [vmem:[%s1 + $0xd8] sm:$0xf]
  %v109 = vld [vmem:[%s1 + $0xdc] sm:$0xf]
  %v110 = vld [vmem:[%s1 + $0xe0] sm:$0xf]
  %v111 = vld [vmem:[%s1 + $0xe4] sm:$0xf]
  %v112 = vld [vmem:[%s1 + $0xe8] sm:$0xf]
  %v113 = vld [vmem:[%s1 + $0xec] sm:$0xf]
  %v114 = vld [vmem:[%s1 + $0xf0] sm:$0xf]
  %v115 = vld [vmem:[%s1 + $0xf4] sm:$0xf]
  %v116 = vld [vmem:[%s1 + $0xf8] sm:$0xf]
  %v117 = vld [vmem:[%s1 + $0xfc] sm:$0xf]
  %v118 = vld [vmem:[%s1 + $0x100] sm:$0xf]
  %v119 = vld [vmem:[%s1 + $0x104] sm:$0xf]
  %v120 = vld [vmem:[%s1 + $0x108] sm:$0xf]
  %v121 = vld [vmem:[%s1 + $0x10c] sm:$0xf]
  %v122 = vld [vmem:[%s1 + $0x110] sm:$0xf]
  %v123 = vld [vmem:[%s1 + $0x114] sm:$0xf]
  %v124 = vld [vmem:[%s1 + $0x118] sm:$0xf]
  %v125 = vld [vmem:[%s1 + $0x11c] sm:$0xf]
  %v126 = vld [vmem:[%s1 + $0x120] sm:$0xf]
  %v127 = vld [vmem:[%s1 + $0x124] sm:$0xf]
  %v128 = vld [vmem:[%s1 + $0x128] sm:$0xf]
  %v129 = vld [vmem:[%s1 + $0x12c] sm:$0xf]
  %v130 = vld [vmem:[%s1 + $0x130] sm:$0xf]
  %v131 = vld [vmem:[%s1 + $0x134] sm:$0xf]
  %v132 = vld [vmem:[%s1 + $0x138] sm:$0xf]
  %v133 = vld [vmem:[%s1 + $0x13c] sm:$0xf]
  %v170 = vunpack.c.l.b16 %v18
  %v171 = vunpack.c.h.b16 %v18
  %v172 = vunpack.c.l.b16 %v19
  %v173 = vunpack.c.h.b16 %v19
  %v174 = vunpack.c.l.b16 %v20
  %v175 = vunpack.c.l.b16 %v21
  %v176 = vunpack.c.h.b16 %v21
  %v177 = vunpack.c.l.b16 %v22
  %v178 = vunpack.c.h.b16 %v22
  %v179 = vunpack.c.l.b16 %v23
  %v180 = vunpack.c.l.b16 %v24
  %v181 = vunpack.c.h.b16 %v24
  %v182 = vunpack.c.l.b16 %v25
  %v183 = vunpack.c.h.b16 %v25
  %v184 = vunpack.c.l.b16 %v26
  %v185 = vunpack.c.l.b16 %v27
  %v186 = vunpack.c.h.b16 %v27
  %v187 = vunpack.c.l.b16 %v28
  %v188 = vunpack.c.h.b16 %v28
  %v189 = vunpack.c.l.b16 %v29
  %v190 = vunpack.c.l.b16 %v30
  %v191 = vunpack.c.h.b16 %v30
  %v192 = vunpack.c.l.b16 %v31
  %v193 = vunpack.c.h.b16 %v31
  %v194 = vunpack.c.l.b16 %v32
  %v195 = vunpack.c.l.b16 %v33
  %v196 = vunpack.c.h.b16 %v33
  %v197 = vunpack.c.l.b16 %v34
  %v198 = vunpack.c.h.b16 %v34
  %v199 = vunpack.c.l.b16 %v35
  %v200 = vunpack.c.l.b16 %v36
  %v201 = vunpack.c.h.b16 %v36
  %v202 = vunpack.c.l.b16 %v37
  %v203 = vunpack.c.h.b16 %v37
  %v204 = vunpack.c.l.b16 %v38
  %v205 = vunpack.c.l.b16 %v39
  %v206 = vunpack.c.h.b16 %v39
  %v207 = vunpack.c.l.b16 %v40
  %v208 = vunpack.c.h.b16 %v40
  %v209 = vunpack.c.l.b16 %v41
  %v210 = vunpack.c.l.b16 %v42
  %v211 = vunpack.c.h.b16 %v42
  %v212 = vunpack.c.l.b16 %v43
  %v213 = vunpack.c.h.b16 %v43
  %v214 = vunpack.c.l.b16 %v44
  %v215 = vunpack.c.l.b16 %v45
  %v216 = vunpack.c.h.b16 %v45
  %v217 = vunpack.c.l.b16 %v46
  %v218 = vunpack.c.h.b16 %v46
  %v219 = vunpack.c.l.b16 %v47
  %v220 = vunpack.c.l.b16 %v48
  %v221 = vunpack.c.h.b16 %v48
  %v222 = vunpack.c.l.b16 %v49
  %v223 = vunpack.c.h.b16 %v49
  %v224 = vunpack.c.l.b16 %v50
  %v225 = vunpack.c.l.b16 %v51
  %v226 = vunpack.c.h.b16 %v51
  %v227 = vunpack.c.l.b16 %v52
  %v228 = vunpack.c.h.b16 %v52
  %v229 = vunpack.c.l.b16 %v53
  %v230 = vpack.c.b16 %v175, %v170
  %v231 = vpack.c.b16 %v176, %v171
  %v232 = vpack.c.b16 %v177, %v172
  %v233 = vpack.c.b16 %v178, %v173
  %v234 = vpack.c.b16 %v179, %v174
  %v235 = vpack.c.b16 %v185, %v180
  %v236 = vpack.c.b16 %v186, %v181
  %v237 = vpack.c.b16 %v187, %v182
  %v238 = vpack.c.b16 %v188, %v183
  %v239 = vpack.c.b16 %v189, %v184
  %v240 = vpack.c.b16 %v195, %v190
  %v241 = vpack.c.b16 %v196, %v191
  %v242 = vpack.c.b16 %v197, %v192
  %v243 = vpack.c.b16 %v198, %v193
  %v244 = vpack.c.b16 %v199, %v194
  %v245 = vpack.c.b16 %v205, %v200
  %v246 = vpack.c.b16 %v206, %v201
  %v247 = vpack.c.b16 %v207, %v202
  %v248 = vpack.c.b16 %v208, %v203
  %v249 = vpack.c.b16 %v209, %v204
  %v250 = vpack.c.b16 %v215, %v210
  %v251 = vpack.c.b16 %v216, %v211
  %v252 = vpack.c.b16 %v217, %v212
  %v253 = vpack.c.b16 %v218, %v213
  %v254 = vpack.c.b16 %v219, %v214
  %v255 = vpack.c.b16 %v225, %v220
  %v256 = vpack.c.b16 %v226, %v221
  %v257 = vpack.c.b16 %v227, %v222
  %v258 = vpack.c.b16 %v228, %v223
  %v259 = vpack.c.b16 %v229, %v224
  %v370 = vunpack.c.l.b16 %v54
  %v371 = vunpack.c.l.b16 %v55
  %v372 = vunpack.c.l.b16 %v56
  %v373 = vunpack.c.l.b16 %v57
  %v374 = vunpack.c.l.b16 %v58
  %v375 = vunpack.c.l.b16 %v59
  %v376 = vunpack.c.l.b16 %v60
  %v377 = vunpack.c.l.b16 %v61
  %v378 = vunpack.c.l.b16 %v62
  %v379 = vunpack.c.l.b16 %v63
  %v380 = vunpack.c.l.b16 %v64
  %v381 = vunpack.c.l.b16 %v65
  %v382 = vunpack.c.l.b16 %v66
  %v383 = vunpack.c.l.b16 %v67
  %v384 = vunpack.c.l.b16 %v68
  %v385 = vunpack.c.l.b16 %v69
  %v386 = vunpack.c.l.b16 %v70
  %v387 = vunpack.c.l.b16 %v71
  %v388 = vunpack.c.l.b16 %v72
  %v389 = vunpack.c.l.b16 %v73
  %v390 = vunpack.c.l.b16 %v74
  %v391 = vunpack.c.l.b16 %v75
  %v392 = vunpack.c.l.b16 %v76
  %v393 = vunpack.c.l.b16 %v77
  %v394 = vunpack.c.l.b16 %v78
  %v395 = vunpack.c.l.b16 %v79
  %v396 = vunpack.c.l.b16 %v80
  %v397 = vunpack.c.l.b16 %v81
  %v398 = vunpack.c.l.b16 %v82
  %v399 = vunpack.c.l.b16 %v83
  %v400 = vunpack.c.l.b16 %v84
  %v401 = vunpack.c.l.b16 %v85
  %v402 = vunpack.c.l.b16 %v86
  %v403 = vunpack.c.l.b16 %v87
  %v404 = vunpack.c.l.b16 %v88
  %v405 = vunpack.c.l.b16 %v89
  %v406 = vunpack.c.l.b16 %v90
  %v407 = vunpack.c.l.b16 %v91
  %v408 = vunpack.c.l.b16 %v92
  %v409 = vunpack.c.l.b16 %v93
  %v410 = vunpack.c.l.b16 %v94
  %v411 = vunpack.c.l.b16 %v95
  %v412 = vunpack.c.l.b16 %v96
  %v413 = vunpack.c.l.b16 %v97
  %v414 = vunpack.c.l.b16 %v98
  %v415 = vunpack.c.l.b16 %v99
  %v416 = vunpack.c.l.b16 %v100
  %v417 = vunpack.c.l.b16 %v101
  %v418 = vunpack.c.l.b16 %v102
  %v419 = vunpack.c.l.b16 %v103
  %v420 = vunpack.c.l.b16 %v104
  %v421 = vunpack.c.l.b16 %v105
  %v422 = vunpack.c.l.b16 %v106
  %v423 = vunpack.c.l.b16 %v107
  %v424 = vunpack.c.l.b16 %v108
  %v425 = vunpack.c.l.b16 %v109
  %v426 = vunpack.c.l.b16 %v110
  %v427 = vunpack.c.l.b16 %v111
  %v428 = vunpack.c.l.b16 %v112
  %v429 = vunpack.c.l.b16 %v113
  %v430 = vunpack.c.l.b16 %v114
  %v431 = vunpack.c.l.b16 %v115
  %v432 = vunpack.c.l.b16 %v116
  %v433 = vunpack.c.l.b16 %v117
  %v434 = vunpack.c.l.b16 %v118
  %v435 = vunpack.c.l.b16 %v119
  %v436 = vunpack.c.l.b16 %v120
  %v437 = vunpack.c.l.b16 %v121
  %v438 = vunpack.c.l.b16 %v122
  %v439 = vunpack.c.l.b16 %v123
  %v440 = vunpack.c.l.b16 %v124
  %v441 = vunpack.c.l.b16 %v125
  %v442 = vunpack.c.l.b16 %v126
  %v443 = vunpack.c.l.b16 %v127
  %v444 = vunpack.c.l.b16 %v128
  %v445 = vunpack.c.l.b16 %v129
  %v446 = vunpack.c.l.b16 %v130
  %v447 = vunpack.c.l.b16 %v131
  %v448 = vunpack.c.l.b16 %v132
  %v449 = vunpack.c.l.b16 %v133
  %v450 = vpack.c.b16 %v371, %v370
  %v451 = vpack.c.b16 %v373, %v372
  %v452 = vpack.c.b16 %v375, %v374
  %v453 = vpack.c.b16 %v377, %v376
  %v454 = vpack.c.b16 %v379, %v378
  %v455 = vpack.c.b16 %v381, %v380
  %v456 = vpack.c.b16 %v383, %v382
  %v457 = vpack.c.b16 %v385, %v384
  %v458 = vpack.c.b16 %v387, %v386
  %v459 = vpack.c.b16 %v389, %v388
  %v460 = vpack.c.b16 %v391, %v390
  %v461 = vpack.c.b16 %v393, %v392
  %v462 = vpack.c.b16 %v395, %v394
  %v463 = vpack.c.b16 %v397, %v396
  %v464 = vpack.c.b16 %v399, %v398
  %v465 = vpack.c.b16 %v401, %v400
  %v466 = vpack.c.b16 %v403, %v402
  %v467 = vpack.c.b16 %v405, %v404
  %v468 = vpack.c.b16 %v407, %v406
  %v469 = vpack.c.b16 %v409, %v408
  %v470 = vpack.c.b16 %v411, %v410
  %v471 = vpack.c.b16 %v413, %v412
  %v472 = vpack.c.b16 %v415, %v414
  %v473 = vpack.c.b16 %v417, %v416
  %v474 = vpack.c.b16 %v419, %v418
  %v475 = vpack.c.b16 %v421, %v420
  %v476 = vpack.c.b16 %v423, %v422
  %v477 = vpack.c.b16 %v425, %v424
  %v478 = vpack.c.b16 %v427, %v426
  %v479 = vpack.c.b16 %v429, %v428
  %v480 = vpack.c.b16 %v431, %v430
  %v481 = vpack.c.b16 %v433, %v432
  %v482 = vpack.c.b16 %v435, %v434
  %v483 = vpack.c.b16 %v437, %v436
  %v484 = vpack.c.b16 %v439, %v438
  %v485 = vpack.c.b16 %v441, %v440
  %v486 = vpack.c.b16 %v443, %v442
  %v487 = vpack.c.b16 %v445, %v444
  %v488 = vpack.c.b16 %v447, %v446
  %v489 = vpack.c.b16 %v449, %v448
  %530 = vmatprep.subr.bf16.mxu0 0
  %531 = vmatpush1.bf16.msra.mxu0 %v450
  %532 = vmatprep.subr.bf16.mxu0 0
  %533 = vmatpush1.bf16.msra.mxu0 %v451
  %534 = vmatprep.subr.bf16.mxu0 0
  %535 = vmatpush1.bf16.msra.mxu0 %v452
  %536 = vmatprep.subr.bf16.mxu0 0
  %537 = vmatpush1.bf16.msra.mxu0 %v453
  %538 = vmatprep.subr.bf16.mxu0 0
  %539 = vmatpush1.bf16.msra.mxu0 %v454
  %540 = vmatprep.subr.bf16.mxu0 0
  %541 = vmatpush1.bf16.msra.mxu0 %v455
  %542 = vmatprep.subr.bf16.mxu0 0
  %543 = vmatpush1.bf16.msra.mxu0 %v456
  %544 = vmatprep.subr.bf16.mxu0 0
  %545 = vmatpush1.bf16.msra.mxu0 %v457
  %546 = vmatprep.subr.bf16.mxu0 0
  %547 = vmatpush1.bf16.msra.mxu0 %v458
  %548 = vmatprep.subr.bf16.mxu0 0
  %549 = vmatpush1.bf16.msra.mxu0 %v459
  %550 = vmatprep.subr.bf16.mxu0 0
  %551 = vmatpush1.bf16.msra.mxu0 %v460
  %552 = vmatprep.subr.bf16.mxu0 0
  %553 = vmatpush1.bf16.msra.mxu0 %v461
  %554 = vmatprep.subr.bf16.mxu0 0
  %555 = vmatpush1.bf16.msra.mxu0 %v462
  %556 = vmatprep.subr.bf16.mxu0 0
  %557 = vmatpush1.bf16.msra.mxu0 %v463
  %558 = vmatprep.subr.bf16.mxu0 0
  %559 = vmatpush1.bf16.msra.mxu0 %v464
  %560 = vmatprep.subr.bf16.mxu0 0
  %561 = vmatpush1.bf16.msra.mxu0 %v465
  %562 = vmatprep.mubr.bf16.mxu0 %v231
  %563 = vmatmul.mubr.bf16.gmra.mrb[0].mxu0 %v230
  %v564 = vpop.f32.mrb[0].mxu0
  %v565 = vadd.f32 0.0, %v564
  %v566 = vpop.f32.mrb[0].mxu0
  %v567 = vpop.f32.mrb[0].mxu0
  %v568 = vadd.f32 0.0, %v567
  %v569 = vpop.f32.mrb[0].mxu0
  %570 = vmatprep.mubr.bf16.mxu0 %v236
  %571 = vmatmul.mubr.bf16.gmra.mrb[0].mxu0 %v235
  %v572 = vpop.f32.mrb[0].mxu0
  %v573 = vadd.f32 0.0, %v572
  %v574 = vpop.f32.mrb[0].mxu0
  %v575 = vpop.f32.mrb[0].mxu0
  %v576 = vadd.f32 0.0, %v575
  %v577 = vpop.f32.mrb[0].mxu0
  %578 = vmatprep.mubr.bf16.mxu0 %v241
  %579 = vmatmul.mubr.bf16.gmra.mrb[0].mxu0 %v240
  %v580 = vpop.f32.mrb[0].mxu0
  %v581 = vadd.f32 0.0, %v580
  %v582 = vpop.f32.mrb[0].mxu0
  %v583 = vpop.f32.mrb[0].mxu0
  %v584 = vadd.f32 0.0, %v583
  %v585 = vpop.f32.mrb[0].mxu0
  %586 = vmatprep.mubr.bf16.mxu0 %v246
  %587 = vmatmul.mubr.bf16.gmra.mrb[0].mxu0 %v245
  %v588 = vpop.f32.mrb[0].mxu0
  %v589 = vadd.f32 0.0, %v588
  %v590 = vpop.f32.mrb[0].mxu0
  %v591 = vpop.f32.mrb[0].mxu0
  %v592 = vadd.f32 0.0, %v591
  %v593 = vpop.f32.mrb[0].mxu0
  %594 = vmatprep.mubr.bf16.mxu0 %v251
  %595 = vmatmul.mubr.bf16.gmra.mrb[0].mxu0 %v250
  %v596 = vpop.f32.mrb[0].mxu0
  %v597 = vadd.f32 0.0, %v596
  %v598 = vpop.f32.mrb[0].mxu0
  %v599 = vpop.f32.mrb[0].mxu0
  %v600 = vadd.f32 0.0, %v599
  %v601 = vpop.f32.mrb[0].mxu0
  %602 = vmatprep.mubr.bf16.mxu0 %v256
  %603 = vmatmul.mubr.bf16.gmra.mrb[0].mxu0 %v255
  %v604 = vpop.f32.mrb[0].mxu0
  %v605 = vadd.f32 0.0, %v604
  %v606 = vpop.f32.mrb[0].mxu0
  %v607 = vpop.f32.mrb[0].mxu0
  %v608 = vadd.f32 0.0, %v607
  %v609 = vpop.f32.mrb[0].mxu0
  %610 = vdwg.mxu0
  %611 = vmatprep.subr.bf16.mxu0 0
  %612 = vmatpush1.bf16.msra.mxu0 %v466
  %613 = vmatprep.subr.bf16.mxu0 0
  %614 = vmatpush1.bf16.msra.mxu0 %v467
  %615 = vmatprep.subr.bf16.mxu0 0
  %616 = vmatpush1.bf16.msra.mxu0 %v468
  %617 = vmatprep.subr.bf16.mxu0 0
  %618 = vmatpush1.bf16.msra.mxu0 %v469
  %619 = vmatprep.subr.bf16.mxu0 0
  %620 = vmatpush1.bf16.msra.mxu0 %v470
  %621 = vmatprep.subr.bf16.mxu0 0
  %622 = vmatpush1.bf16.msra.mxu0 %v471
  %623 = vmatprep.subr.bf16.mxu0 0
  %624 = vmatpush1.bf16.msra.mxu0 %v472
  %625 = vmatprep.subr.bf16.mxu0 0
  %626 = vmatpush1.bf16.msra.mxu0 %v473
  %627 = vmatprep.subr.bf16.mxu0 0
  %628 = vmatpush1.bf16.msra.mxu0 %v474
  %629 = vmatprep.subr.bf16.mxu0 0
  %630 = vmatpush1.bf16.msra.mxu0 %v475
  %631 = vmatprep.subr.bf16.mxu0 0
  %632 = vmatpush1.bf16.msra.mxu0 %v476
  %633 = vmatprep.subr.bf16.mxu0 0
  %634 = vmatpush1.bf16.msra.mxu0 %v477
  %635 = vmatprep.subr.bf16.mxu0 0
  %636 = vmatpush1.bf16.msra.mxu0 %v478
  %637 = vmatprep.subr.bf16.mxu0 0
  %638 = vmatpush1.bf16.msra.mxu0 %v479
  %639 = vmatprep.subr.bf16.mxu0 0
  %640 = vmatpush1.bf16.msra.mxu0 %v480
  %641 = vmatprep.subr.bf16.mxu0 0
  %642 = vmatpush1.bf16.msra.mxu0 %v481
  %643 = vmatprep.mubr.bf16.mxu0 %v233
  %644 = vmatmul.mubr.bf16.gmra.mrb[0].mxu0 %v232
  %v645 = vpop.f32.mrb[0].mxu0
  %v646 = vadd.f32 %v565, %v645
  %v647 = vpop.f32.mrb[0].mxu0
  %v648 = vpop.f32.mrb[0].mxu0
  %v649 = vadd.f32 %v568, %v648
  %v650 = vpop.f32.mrb[0].mxu0
  %651 = vmatprep.mubr.bf16.mxu0 %v238
  %652 = vmatmul.mubr.bf16.gmra.mrb[0].mxu0 %v237
  %v653 = vpop.f32.mrb[0].mxu0
  %v654 = vadd.f32 %v573, %v653
  %v655 = vpop.f32.mrb[0].mxu0
  %v656 = vpop.f32.mrb[0].mxu0
  %v657 = vadd.f32 %v576, %v656
  %v658 = vpop.f32.mrb[0].mxu0
  %659 = vmatprep.mubr.bf16.mxu0 %v243
  %660 = vmatmul.mubr.bf16.gmra.mrb[0].mxu0 %v242
  %v661 = vpop.f32.mrb[0].mxu0
  %v662 = vadd.f32 %v581, %v661
  %v663 = vpop.f32.mrb[0].mxu0
  %v664 = vpop.f32.mrb[0].mxu0
  %v665 = vadd.f32 %v584, %v664
  %v666 = vpop.f32.mrb[0].mxu0
  %667 = vmatprep.mubr.bf16.mxu0 %v248
  %668 = vmatmul.mubr.bf16.gmra.mrb[0].mxu0 %v247
  %v669 = vpop.f32.mrb[0].mxu0
  %v670 = vadd.f32 %v589, %v669
  %v671 = vpop.f32.mrb[0].mxu0
  %v672 = vpop.f32.mrb[0].mxu0
  %v673 = vadd.f32 %v592, %v672
  %v674 = vpop.f32.mrb[0].mxu0
  %675 = vmatprep.mubr.bf16.mxu0 %v253
  %676 = vmatmul.mubr.bf16.gmra.mrb[0].mxu0 %v252
  %v677 = vpop.f32.mrb[0].mxu0
  %v678 = vadd.f32 %v597, %v677
  %v679 = vpop.f32.mrb[0].mxu0
  %v680 = vpop.f32.mrb[0].mxu0
  %v681 = vadd.f32 %v600, %v680
  %v682 = vpop.f32.mrb[0].mxu0
  %683 = vmatprep.mubr.bf16.mxu0 %v258
  %684 = vmatmul.mubr.bf16.gmra.mrb[0].mxu0 %v257
  %v685 = vpop.f32.mrb[0].mxu0
  %v686 = vadd.f32 %v605, %v685
  %v687 = vpop.f32.mrb[0].mxu0
  %v688 = vpop.f32.mrb[0].mxu0
  %v689 = vadd.f32 %v608, %v688
  %v690 = vpop.f32.mrb[0].mxu0
  %691 = vdwg.mxu0
  %692 = vmatprep.subr.bf16.mxu0 0
  %693 = vmatpush1.bf16.msra.mxu0 %v482
  %694 = vmatprep.subr.bf16.mxu0 0
  %695 = vmatpush1.bf16.msra.mxu0 %v483
  %696 = vmatprep.subr.bf16.mxu0 0
  %697 = vmatpush1.bf16.msra.mxu0 %v484
  %698 = vmatprep.subr.bf16.mxu0 0
  %699 = vmatpush1.bf16.msra.mxu0 %v485
  %700 = vmatprep.subr.bf16.mxu0 0
  %701 = vmatpush1.bf16.msra.mxu0 %v486
  %702 = vmatprep.subr.bf16.mxu0 0
  %703 = vmatpush1.bf16.msra.mxu0 %v487
  %704 = vmatprep.subr.bf16.mxu0 0
  %705 = vmatpush1.bf16.msra.mxu0 %v488
  %706 = vmatprep.subr.bf16.mxu0 0
  %707 = vmatpush1.bf16.msra.mxu0 %v489
  %708 = vmatprep.subr.bf16.mxu0 0
  %709 = vmatpush1.bf16.msra.mxu0 0
  %710 = vmatprep.subr.bf16.mxu0 0
  %711 = vmatpush1.bf16.msra.mxu0 0
  %712 = vmatprep.subr.bf16.mxu0 0
  %713 = vmatpush1.bf16.msra.mxu0 0
  %714 = vmatprep.subr.bf16.mxu0 0
  %715 = vmatpush1.bf16.msra.mxu0 0
  %716 = vmatprep.subr.bf16.mxu0 0
  %717 = vmatpush1.bf16.msra.mxu0 0
  %718 = vmatprep.subr.bf16.mxu0 0
  %719 = vmatpush1.bf16.msra.mxu0 0
  %720 = vmatprep.subr.bf16.mxu0 0
  %721 = vmatpush1.bf16.msra.mxu0 0
  %722 = vmatprep.subr.bf16.mxu0 0
  %723 = vmatpush1.bf16.msra.mxu0 0
  %724 = vmatprep.mubr.bf16.mxu0 0
  %725 = vmatmul.mubr.bf16.gmra.mrb[0].mxu0 %v234
  %v726 = vpop.f32.mrb[0].mxu0
  %v727 = vadd.f32 %v646, %v726
  %v728 = vpop.f32.mrb[0].mxu0
  %v729 = vpop.f32.mrb[0].mxu0
  %v730 = vadd.f32 %v649, %v729
  %v731 = vpop.f32.mrb[0].mxu0
  %732 = vmatprep.mubr.bf16.mxu0 0
  %733 = vmatmul.mubr.bf16.gmra.mrb[0].mxu0 %v239
  %v734 = vpop.f32.mrb[0].mxu0
  %v735 = vadd.f32 %v654, %v734
  %v736 = vpop.f32.mrb[0].mxu0
  %v737 = vpop.f32.mrb[0].mxu0
  %v738 = vadd.f32 %v657, %v737
  %v739 = vpop.f32.mrb[0].mxu0
  %740 = vmatprep.mubr.bf16.mxu0 0
  %741 = vmatmul.mubr.bf16.gmra.mrb[0].mxu0 %v244
  %v742 = vpop.f32.mrb[0].mxu0
  %v743 = vadd.f32 %v662, %v742
  %v744 = vpop.f32.mrb[0].mxu0
  %v745 = vpop.f32.mrb[0].mxu0
  %v746 = vadd.f32 %v665, %v745
  %v747 = vpop.f32.mrb[0].mxu0
  %748 = vmatprep.mubr.bf16.mxu0 0
  %749 = vmatmul.mubr.bf16.gmra.mrb[0].mxu0 %v249
  %v750 = vpop.f32.mrb[0].mxu0
  %v751 = vadd.f32 %v670, %v750
  %v752 = vpop.f32.mrb[0].mxu0
  %v753 = vpop.f32.mrb[0].mxu0
  %v754 = vadd.f32 %v673, %v753
  %v755 = vpop.f32.mrb[0].mxu0
  %756 = vmatprep.mubr.bf16.mxu0 0
  %757 = vmatmul.mubr.bf16.gmra.mrb[0].mxu0 %v254
  %v758 = vpop.f32.mrb[0].mxu0
  %v759 = vadd.f32 %v678, %v758
  %v760 = vpop.f32.mrb[0].mxu0
  %v761 = vpop.f32.mrb[0].mxu0
  %v762 = vadd.f32 %v681, %v761
  %v763 = vpop.f32.mrb[0].mxu0
  %764 = vmatprep.mubr.bf16.mxu0 0
  %765 = vmatmul.mubr.bf16.gmra.mrb[0].mxu0 %v259
  %v766 = vpop.f32.mrb[0].mxu0
  %v767 = vadd.f32 %v686, %v766
  %v768 = vpop.f32.mrb[0].mxu0
  %v769 = vpop.f32.mrb[0].mxu0
  %v770 = vadd.f32 %v689, %v769
  %v771 = vpop.f32.mrb[0].mxu0
  %772 = vdwg.mxu0
  %v773 = vadd.f32 %v727, %v730
  %v774 = vadd.f32 %v773, %v735
  %v775 = vadd.f32 %v774, %v738
  %v776 = vadd.f32 %v775, %v743
  %v777 = vadd.f32 %v776, %v746
  %v778 = vadd.f32 %v777, %v751
  %v779 = vadd.f32 %v778, %v754
  %v780 = vadd.f32 %v779, %v759
  %v781 = vadd.f32 %v780, %v762
  %v782 = vadd.f32 %v781, %v767
  %v783 = vadd.f32 %v782, %v770
  %v784 = vrot.slane %v783, 4
  %v785 = vadd.f32 %v783, %v784
  %v786 = vrot.slane %v785, 2
  %v787 = vadd.f32 %v785, %v786
  %v788 = vrot.slane %v787, 1
  %v789 = vadd.f32 %v787, %v788
  %v790 = vmul.f32 %v789, 0.010416667
  %v791 = vsub.f32 %v727, %v790
  %v792 = vsub.f32 %v730, %v790
  %v793 = vsub.f32 %v735, %v790
  %v794 = vsub.f32 %v738, %v790
  %v795 = vsub.f32 %v743, %v790
  %v796 = vsub.f32 %v746, %v790
  %v797 = vsub.f32 %v751, %v790
  %v798 = vsub.f32 %v754, %v790
  %v799 = vsub.f32 %v759, %v790
  %v800 = vsub.f32 %v762, %v790
  %v801 = vsub.f32 %v767, %v790
  %v802 = vsub.f32 %v770, %v790
  %v803 = vmul.f32 %v791, %v791
  %v804 = vmul.f32 %v792, %v792
  %v805 = vmul.f32 %v793, %v793
  %v806 = vmul.f32 %v794, %v794
  %v807 = vmul.f32 %v795, %v795
  %v808 = vmul.f32 %v796, %v796
  %v809 = vmul.f32 %v797, %v797
  %v810 = vmul.f32 %v798, %v798
  %v811 = vmul.f32 %v799, %v799
  %v812 = vmul.f32 %v800, %v800
  %v813 = vmul.f32 %v801, %v801
  %v814 = vmul.f32 %v802, %v802
  %v815 = vadd.f32 %v803, %v804
  %v816 = vadd.f32 %v815, %v805
  %v817 = vadd.f32 %v816, %v806
  %v818 = vadd.f32 %v817, %v807
  %v819 = vadd.f32 %v818, %v808
  %v820 = vadd.f32 %v819, %v809
  %v821 = vadd.f32 %v820, %v810
  %v822 = vadd.f32 %v821, %v811
  %v823 = vadd.f32 %v822, %v812
  %v824 = vadd.f32 %v823, %v813
  %v825 = vadd.f32 %v824, %v814
  %v826 = vrot.slane %v825, 4
  %v827 = vadd.f32 %v825, %v826
  %v828 = vrot.slane %v827, 2
  %v829 = vadd.f32 %v827, %v828
  %v830 = vrot.slane %v829, 1
  %v831 = vadd.f32 %v829, %v830
  %v832 = vmul.f32 %v831, 0.010416667
  %v833 = vmax.f32 %v832, 0.0
  %v834 = vld [vmem:[%s2] sm:$0x1]
  %v835 = vadd.f32 %v833, 1e-05
  %v836 = vrsqrt.pop %v835
  %v837 = vmul.f32 %v834, %v836
  %v839 = vlaneseq
  %v840 = vshrl.u32 %v839, 7
  %v841 = vsub.s32 0, %v840
  %v842 = vrot.slane %v837, %v841
  %v844 = vmul.f32 %v791, %v842
  %v845 = vmul.f32 %v792, %v842
  %v846 = vmul.f32 %v793, %v842
  %v847 = vmul.f32 %v794, %v842
  %v848 = vmul.f32 %v795, %v842
  %v849 = vmul.f32 %v796, %v842
  %v850 = vmul.f32 %v797, %v842
  %v851 = vmul.f32 %v798, %v842
  %v852 = vmul.f32 %v799, %v842
  %v853 = vmul.f32 %v800, %v842
  %v854 = vmul.f32 %v801, %v842
  %v855 = vmul.f32 %v802, %v842
  %v856 = vld [vmem:[%s3] sm:$0x1]
  %v858 = vlaneseq
  %v859 = vshrl.u32 %v858, 7
  %v860 = vsub.s32 0, %v859
  %v861 = vrot.slane %v856, %v860
  %v863 = vadd.f32 %v844, %v861
  %v864 = vadd.f32 %v845, %v861
  %v865 = vadd.f32 %v846, %v861
  %v866 = vadd.f32 %v847, %v861
  %v867 = vadd.f32 %v848, %v861
  %v868 = vadd.f32 %v849, %v861
  %v869 = vadd.f32 %v850, %v861
  %v870 = vadd.f32 %v851, %v861
  %v871 = vadd.f32 %v852, %v861
  %v872 = vadd.f32 %v853, %v861
  %v873 = vadd.f32 %v854, %v861
  %v874 = vadd.f32 %v855, %v861
  %v875 = vmax.f32 %v863, %v866
  %v876 = vmax.f32 %v864, %v867
  %v877 = vmax.f32 %v865, %v868
  %v878 = vmax.f32 %v869, %v872
  %v879 = vmax.f32 %v870, %v873
  %v880 = vmax.f32 %v871, %v874
  %v881 = vmax.f32 %v875, %v878
  %v882 = vmax.f32 %v876, %v879
  %v883 = vmax.f32 %v877, %v880
  %v884 = vmax.f32 %v881, 0.0
  %v885 = vmax.f32 %v882, 0.0
  %v886 = vmax.f32 %v883, 0.0
  %v887 = vpack.c.bf16 %v885, %v884
  %v888 = vpack.c.bf16 %v886, %v886
  %v891 = vunpack.c.l.b16 %v887
  %v892 = vunpack.c.h.b16 %v887
  %v893 = vunpack.c.l.b16 %v888
  %v894 = vpack.c.b16 %v891, %v891
  %v895 = vpack.c.b16 %v892, %v892
  %v896 = vpack.c.b16 %v893, %v893
  %900 = vst [vmem:[%s4] sm:$0xf] %v894
  %901 = vst [vmem:[%s4 + $0x4] sm:$0xf] %v895
  %902 = vst [vmem:[%s4 + $0x8] sm:$0xf] %v896
  // Predicated region
  $region18: #{protomaml_forward.15} parent=0 // pred_check
    _
  $region19: #{protomaml_forward.15} parent=0 // pred_check_branch
    %904 = sbr.rel (0) target = $region21
  $region20: #{protomaml_forward.15} parent=0 // pred_region
    _
  $region21: #{protomaml_forward.15} parent=0 // pred_fallthru
    _
  // Predicated region
  $region22: #{protomaml_forward.15} parent=0 // pred_check
    _
  $region23: #{protomaml_forward.15} parent=0 // pred_check_branch
    %906 = sbr.rel (0) target = $region25
  $region24: #{protomaml_forward.15} parent=0 // pred_region
    _
  $region25: #{protomaml_forward.15} parent=0 // pred_fallthru
    _

// kernel: protomaml_forward.16
$region0: #{protomaml_forward.16}
  #allocation0 [shape = 'u32[]', space=smem, size = 0x4, offset = 0x4, fixed_abs, tag = 'smem constant byte address 0x4 - core index']
  #allocation1 [shape = 'u32[144,128]{1,0:T(1,128)}', space=vmem, size = 0x12000, scoped, tag = 'internal scratch']
  %s0 = inlined_call_operand.vmem [shape: bf16[32,640], index: 0, kind: input, shape index: {}]
  %s1 = inlined_call_operand.vmem [shape: bf16[640,128], index: 1, kind: input, shape index: {}]
  %s2 = inlined_call_operand.vmem [shape: f32[1,128], index: 2, kind: input, shape index: {}]
  %s3 = inlined_call_operand.vmem [shape: f32[1,128], index: 3, kind: input, shape index: {}]
  %s4 = inlined_call_operand.vmem [shape: f32[8,128], index: 4, kind: output, shape index: {}]
  %s5 = sld [smem:[#allocation0]]
  $region26: #{protomaml_forward.16} parent=0
    _
  %s7 = ssub.s32 1, %s5
  %s8 = scalar_select 0, %s7, %s5
  // Predicated region
  $region2: #{protomaml_forward.16} parent=0 // pred_check
    _
  $region3: #{protomaml_forward.16} parent=0 // pred_check_branch
    %10 = sbr.rel (0) target = $region5
  $region4: #{protomaml_forward.16} parent=0 // pred_region
    _
  $region5: #{protomaml_forward.16} parent=0 // pred_fallthru
    _
  // Predicated region
  $region6: #{protomaml_forward.16} parent=0 // pred_check
    _
  $region7: #{protomaml_forward.16} parent=0 // pred_check_branch
    %12 = sbr.rel (0) target = $region9
  $region8: #{protomaml_forward.16} parent=0 // pred_region
    _
  $region9: #{protomaml_forward.16} parent=0 // pred_fallthru
    _
  // Predicated region
  $region10: #{protomaml_forward.16} parent=0 // pred_check
    _
  $region11: #{protomaml_forward.16} parent=0 // pred_check_branch
    %14 = sbr.rel (0) target = $region13
  $region12: #{protomaml_forward.16} parent=0 // pred_region
    _
  $region13: #{protomaml_forward.16} parent=0 // pred_fallthru
    _
  // Predicated region
  $region14: #{protomaml_forward.16} parent=0 // pred_check
    _
  $region15: #{protomaml_forward.16} parent=0 // pred_check_branch
    %16 = sbr.rel (0) target = $region17
  $region16: #{protomaml_forward.16} parent=0 // pred_region
    _
  $region17: #{protomaml_forward.16} parent=0 // pred_fallthru
    _
  %v18 = vld [vmem:[%s0] sm:$0xff]
  %v19 = vld [vmem:[%s0 + $0x8] sm:$0xff]
  %v20 = vld [vmem:[%s0 + $0x10] sm:$0xf]
  %v21 = vld [vmem:[%s0 + $0x14] sm:$0xff]
  %v22 = vld [vmem:[%s0 + $0x1c] sm:$0xff]
  %v23 = vld [vmem:[%s0 + $0x24] sm:$0xf]
  %v24 = vld [vmem:[%s0 + $0x28] sm:$0xff]
  %v25 = vld [vmem:[%s0 + $0x30] sm:$0xff]
  %v26 = vld [vmem:[%s0 + $0x38] sm:$0xf]
  %v27 = vld [vmem:[%s0 + $0x3c] sm:$0xff]
  %v28 = vld [vmem:[%s0 + $0x44] sm:$0xff]
  %v29 = vld [vmem:[%s0 + $0x4c] sm:$0xf]
  %v30 = vld [vmem:[%s1] sm:$0xf]
  %v31 = vld [vmem:[%s1 + $0x4] sm:$0xf]
  %v32 = vld [vmem:[%s1 + $0x8] sm:$0xf]
  %v33 = vld [vmem:[%s1 + $0xc] sm:$0xf]
  %v34 = vld [vmem:[%s1 + $0x10] sm:$0xf]
  %v35 = vld [vmem:[%s1 + $0x14] sm:$0xf]
  %v36 = vld [vmem:[%s1 + $0x18] sm:$0xf]
  %v37 = vld [vmem:[%s1 + $0x1c] sm:$0xf]
  %v38 = vld [vmem:[%s1 + $0x20] sm:$0xf]
  %v39 = vld [vmem:[%s1 + $0x24] sm:$0xf]
  %v40 = vld [vmem:[%s1 + $0x28] sm:$0xf]
  %v41 = vld [vmem:[%s1 + $0x2c] sm:$0xf]
  %v42 = vld [vmem:[%s1 + $0x30] sm:$0xf]
  %v43 = vld [vmem:[%s1 + $0x34] sm:$0xf]
  %v44 = vld [vmem:[%s1 + $0x38] sm:$0xf]
  %v45 = vld [vmem:[%s1 + $0x3c] sm:$0xf]
  %v46 = vld [vmem:[%s1 + $0x40] sm:$0xf]
  %v47 = vld [vmem:[%s1 + $0x44] sm:$0xf]
  %v48 = vld [vmem:[%s1 + $0x48] sm:$0xf]
  %v49 = vld [vmem:[%s1 + $0x4c] sm:$0xf]
  %v50 = vld [vmem:[%s1 + $0x50] sm:$0xf]
  %v51 = vld [vmem:[%s1 + $0x54] sm:$0xf]
  %v52 = vld [vmem:[%s1 + $0x58] sm:$0xf]
  %v53 = vld [vmem:[%s1 + $0x5c] sm:$0xf]
  %v54 = vld [vmem:[%s1 + $0x60] sm:$0xf]
  %v55 = vld [vmem:[%s1 + $0x64] sm:$0xf]
  %v56 = vld [vmem:[%s1 + $0x68] sm:$0xf]
  %v57 = vld [vmem:[%s1 + $0x6c] sm:$0xf]
  %v58 = vld [vmem:[%s1 + $0x70] sm:$0xf]
  %v59 = vld [vmem:[%s1 + $0x74] sm:$0xf]
  %v60 = vld [vmem:[%s1 + $0x78] sm:$0xf]
  %v61 = vld [vmem:[%s1 + $0x7c] sm:$0xf]
  %v62 = vld [vmem:[%s1 + $0x80] sm:$0xf]
  %v63 = vld [vmem:[%s1 + $0x84] sm:$0xf]
  %v64 = vld [vmem:[%s1 + $0x88] sm:$0xf]
  %v65 = vld [vmem:[%s1 + $0x8c] sm:$0xf]
  %v66 = vld [vmem:[%s1 + $0x90] sm:$0xf]
  %v67 = vld [vmem:[%s1 + $0x94] sm:$0xf]
  %v68 = vld [vmem:[%s1 + $0x98] sm:$0xf]
  %v69 = vld [vmem:[%s1 + $0x9c] sm:$0xf]
  %v70 = vld [vmem:[%s1 + $0xa0] sm:$0xf]
  %v71 = vld [vmem:[%s1 + $0xa4] sm:$0xf]
  %v72 = vld [vmem:[%s1 + $0xa8] sm:$0xf]
  %v73 = vld [vmem:[%s1 + $0xac] sm:$0xf]
  %v74 = vld [vmem:[%s1 + $0xb0] sm:$0xf]
  %v75 = vld [vmem:[%s1 + $0xb4] sm:$0xf]
  %v76 = vld [vmem:[%s1 + $0xb8] sm:$0xf]
  %v77 = vld [vmem:[%s1 + $0xbc] sm:$0xf]
  %v78 = vld [vmem:[%s1 + $0xc0] sm:$0xf]
  %v79 = vld [vmem:[%s1 + $0xc4] sm:$0xf]
  %v80 = vld [vmem:[%s1 + $0xc8] sm:$0xf]
  %v81 = vld [vmem:[%s1 + $0xcc] sm:$0xf]
  %v82 = vld [vmem:[%s1 + $0xd0] sm:$0xf]
  %v83 = vld [vmem:[%s1 + $0xd4] sm:$0xf]
  %v84 = vld [vmem:[%s1 + $0xd8] sm:$0xf]
  %v85 = vld [vmem:[%s1 + $0xdc] sm:$0xf]
  %v86 = vld [vmem:[%s1 + $0xe0] sm:$0xf]
  %v87 = vld [vmem:[%s1 + $0xe4] sm:$0xf]
  %v88 = vld [vmem:[%s1 + $0xe8] sm:$0xf]
  %v89 = vld [vmem:[%s1 + $0xec] sm:$0xf]
  %v90 = vld [vmem:[%s1 + $0xf0] sm:$0xf]
  %v91 = vld [vmem:[%s1 + $0xf4] sm:$0xf]
  %v92 = vld [vmem:[%s1 + $0xf8] sm:$0xf]
  %v93 = vld [vmem:[%s1 + $0xfc] sm:$0xf]
  %v94 = vld [vmem:[%s1 + $0x100] sm:$0xf]
  %v95 = vld [vmem:[%s1 + $0x104] sm:$0xf]
  %v96 = vld [vmem:[%s1 + $0x108] sm:$0xf]
  %v97 = vld [vmem:[%s1 + $0x10c] sm:$0xf]
  %v98 = vld [vmem:[%s1 + $0x110] sm:$0xf]
  %v99 = vld [vmem:[%s1 + $0x114] sm:$0xf]
  %v100 = vld [vmem:[%s1 + $0x118] sm:$0xf]
  %v101 = vld [vmem:[%s1 + $0x11c] sm:$0xf]
  %v102 = vld [vmem:[%s1 + $0x120] sm:$0xf]
  %v103 = vld [vmem:[%s1 + $0x124] sm:$0xf]
  %v104 = vld [vmem:[%s1 + $0x128] sm:$0xf]
  %v105 = vld [vmem:[%s1 + $0x12c] sm:$0xf]
  %v106 = vld [vmem:[%s1 + $0x130] sm:$0xf]
  %v107 = vld [vmem:[%s1 + $0x134] sm:$0xf]
  %v108 = vld [vmem:[%s1 + $0x138] sm:$0xf]
  %v109 = vld [vmem:[%s1 + $0x13c] sm:$0xf]
  %v122 = vunpack.c.l.b16 %v18
  %v123 = vunpack.c.h.b16 %v18
  %v124 = vunpack.c.l.b16 %v19
  %v125 = vunpack.c.h.b16 %v19
  %v126 = vunpack.c.l.b16 %v20
  %v127 = vunpack.c.l.b16 %v21
  %v128 = vunpack.c.h.b16 %v21
  %v129 = vunpack.c.l.b16 %v22
  %v130 = vunpack.c.h.b16 %v22
  %v131 = vunpack.c.l.b16 %v23
  %v132 = vunpack.c.l.b16 %v24
  %v133 = vunpack.c.h.b16 %v24
  %v134 = vunpack.c.l.b16 %v25
  %v135 = vunpack.c.h.b16 %v25
  %v136 = vunpack.c.l.b16 %v26
  %v137 = vunpack.c.l.b16 %v27
  %v138 = vunpack.c.h.b16 %v27
  %v139 = vunpack.c.l.b16 %v28
  %v140 = vunpack.c.h.b16 %v28
  %v141 = vunpack.c.l.b16 %v29
  %v142 = vpack.c.b16 %v127, %v122
  %v143 = vpack.c.b16 %v128, %v123
  %v144 = vpack.c.b16 %v129, %v124
  %v145 = vpack.c.b16 %v130, %v125
  %v146 = vpack.c.b16 %v131, %v126
  %v147 = vpack.c.b16 %v137, %v132
  %v148 = vpack.c.b16 %v138, %v133
  %v149 = vpack.c.b16 %v139, %v134
  %v150 = vpack.c.b16 %v140, %v135
  %v151 = vpack.c.b16 %v141, %v136
  %v242 = vunpack.c.l.b16 %v30
  %v243 = vunpack.c.l.b16 %v31
  %v244 = vunpack.c.l.b16 %v32
  %v245 = vunpack.c.l.b16 %v33
  %v246 = vunpack.c.l.b16 %v34
  %v247 = vunpack.c.l.b16 %v35
  %v248 = vunpack.c.l.b16 %v36
  %v249 = vunpack.c.l.b16 %v37
  %v250 = vunpack.c.l.b16 %v38
  %v251 = vunpack.c.l.b16 %v39
  %v252 = vunpack.c.l.b16 %v40
  %v253 = vunpack.c.l.b16 %v41
  %v254 = vunpack.c.l.b16 %v42
  %v255 = vunpack.c.l.b16 %v43
  %v256 = vunpack.c.l.b16 %v44
  %v257 = vunpack.c.l.b16 %v45
  %v258 = vunpack.c.l.b16 %v46
  %v259 = vunpack.c.l.b16 %v47
  %v260 = vunpack.c.l.b16 %v48
  %v261 = vunpack.c.l.b16 %v49
  %v262 = vunpack.c.l.b16 %v50
  %v263 = vunpack.c.l.b16 %v51
  %v264 = vunpack.c.l.b16 %v52
  %v265 = vunpack.c.l.b16 %v53
  %v266 = vunpack.c.l.b16 %v54
  %v267 = vunpack.c.l.b16 %v55
  %v268 = vunpack.c.l.b16 %v56
  %v269 = vunpack.c.l.b16 %v57
  %v270 = vunpack.c.l.b16 %v58
  %v271 = vunpack.c.l.b16 %v59
  %v272 = vunpack.c.l.b16 %v60
  %v273 = vunpack.c.l.b16 %v61
  %v274 = vunpack.c.l.b16 %v62
  %v275 = vunpack.c.l.b16 %v63
  %v276 = vunpack.c.l.b16 %v64
  %v277 = vunpack.c.l.b16 %v65
  %v278 = vunpack.c.l.b16 %v66
  %v279 = vunpack.c.l.b16 %v67
  %v280 = vunpack.c.l.b16 %v68
  %v281 = vunpack.c.l.b16 %v69
  %v282 = vunpack.c.l.b16 %v70
  %v283 = vunpack.c.l.b16 %v71
  %v284 = vunpack.c.l.b16 %v72
  %v285 = vunpack.c.l.b16 %v73
  %v286 = vunpack.c.l.b16 %v74
  %v287 = vunpack.c.l.b16 %v75
  %v288 = vunpack.c.l.b16 %v76
  %v289 = vunpack.c.l.b16 %v77
  %v290 = vunpack.c.l.b16 %v78
  %v291 = vunpack.c.l.b16 %v79
  %v292 = vunpack.c.l.b16 %v80
  %v293 = vunpack.c.l.b16 %v81
  %v294 = vunpack.c.l.b16 %v82
  %v295 = vunpack.c.l.b16 %v83
  %v296 = vunpack.c.l.b16 %v84
  %v297 = vunpack.c.l.b16 %v85
  %v298 = vunpack.c.l.b16 %v86
  %v299 = vunpack.c.l.b16 %v87
  %v300 = vunpack.c.l.b16 %v88
  %v301 = vunpack.c.l.b16 %v89
  %v302 = vunpack.c.l.b16 %v90
  %v303 = vunpack.c.l.b16 %v91
  %v304 = vunpack.c.l.b16 %v92
  %v305 = vunpack.c.l.b16 %v93
  %v306 = vunpack.c.l.b16 %v94
  %v307 = vunpack.c.l.b16 %v95
  %v308 = vunpack.c.l.b16 %v96
  %v309 = vunpack.c.l.b16 %v97
  %v310 = vunpack.c.l.b16 %v98
  %v311 = vunpack.c.l.b16 %v99
  %v312 = vunpack.c.l.b16 %v100
  %v313 = vunpack.c.l.b16 %v101
  %v314 = vunpack.c.l.b16 %v102
  %v315 = vunpack.c.l.b16 %v103
  %v316 = vunpack.c.l.b16 %v104
  %v317 = vunpack.c.l.b16 %v105
  %v318 = vunpack.c.l.b16 %v106
  %v319 = vunpack.c.l.b16 %v107
  %v320 = vunpack.c.l.b16 %v108
  %v321 = vunpack.c.l.b16 %v109
  %v322 = vpack.c.b16 %v243, %v242
  %v323 = vpack.c.b16 %v245, %v244
  %v324 = vpack.c.b16 %v247, %v246
  %v325 = vpack.c.b16 %v249, %v248
  %v326 = vpack.c.b16 %v251, %v250
  %v327 = vpack.c.b16 %v253, %v252
  %v328 = vpack.c.b16 %v255, %v254
  %v329 = vpack.c.b16 %v257, %v256
  %v330 = vpack.c.b16 %v259, %v258
  %v331 = vpack.c.b16 %v261, %v260
  %v332 = vpack.c.b16 %v263, %v262
  %v333 = vpack.c.b16 %v265, %v264
  %v334 = vpack.c.b16 %v267, %v266
  %v335 = vpack.c.b16 %v269, %v268
  %v336 = vpack.c.b16 %v271, %v270
  %v337 = vpack.c.b16 %v273, %v272
  %v338 = vpack.c.b16 %v275, %v274
  %v339 = vpack.c.b16 %v277, %v276
  %v340 = vpack.c.b16 %v279, %v278
  %v341 = vpack.c.b16 %v281, %v280
  %v342 = vpack.c.b16 %v283, %v282
  %v343 = vpack.c.b16 %v285, %v284
  %v344 = vpack.c.b16 %v287, %v286
  %v345 = vpack.c.b16 %v289, %v288
  %v346 = vpack.c.b16 %v291, %v290
  %v347 = vpack.c.b16 %v293, %v292
  %v348 = vpack.c.b16 %v295, %v294
  %v349 = vpack.c.b16 %v297, %v296
  %v350 = vpack.c.b16 %v299, %v298
  %v351 = vpack.c.b16 %v301, %v300
  %v352 = vpack.c.b16 %v303, %v302
  %v353 = vpack.c.b16 %v305, %v304
  %v354 = vpack.c.b16 %v307, %v306
  %v355 = vpack.c.b16 %v309, %v308
  %v356 = vpack.c.b16 %v311, %v310
  %v357 = vpack.c.b16 %v313, %v312
  %v358 = vpack.c.b16 %v315, %v314
  %v359 = vpack.c.b16 %v317, %v316
  %v360 = vpack.c.b16 %v319, %v318
  %v361 = vpack.c.b16 %v321, %v320
  %402 = vmatprep.subr.bf16.mxu0 0
  %403 = vmatpush1.bf16.msra.mxu0 %v322
  %404 = vmatprep.subr.bf16.mxu0 0
  %405 = vmatpush1.bf16.msra.mxu0 %v323
  %406 = vmatprep.subr.bf16.mxu0 0
  %407 = vmatpush1.bf16.msra.mxu0 %v324
  %408 = vmatprep.subr.bf16.mxu0 0
  %409 = vmatpush1.bf16.msra.mxu0 %v325
  %410 = vmatprep.subr.bf16.mxu0 0
  %411 = vmatpush1.bf16.msra.mxu0 %v326
  %412 = vmatprep.subr.bf16.mxu0 0
  %413 = vmatpush1.bf16.msra.mxu0 %v327
  %414 = vmatprep.subr.bf16.mxu0 0
  %415 = vmatpush1.bf16.msra.mxu0 %v328
  %416 = vmatprep.subr.bf16.mxu0 0
  %417 = vmatpush1.bf16.msra.mxu0 %v329
  %418 = vmatprep.subr.bf16.mxu0 0
  %419 = vmatpush1.bf16.msra.mxu0 %v330
  %420 = vmatprep.subr.bf16.mxu0 0
  %421 = vmatpush1.bf16.msra.mxu0 %v331
  %422 = vmatprep.subr.bf16.mxu0 0
  %423 = vmatpush1.bf16.msra.mxu0 %v332
  %424 = vmatprep.subr.bf16.mxu0 0
  %425 = vmatpush1.bf16.msra.mxu0 %v333
  %426 = vmatprep.subr.bf16.mxu0 0
  %427 = vmatpush1.bf16.msra.mxu0 %v334
  %428 = vmatprep.subr.bf16.mxu0 0
  %429 = vmatpush1.bf16.msra.mxu0 %v335
  %430 = vmatprep.subr.bf16.mxu0 0
  %431 = vmatpush1.bf16.msra.mxu0 %v336
  %432 = vmatprep.subr.bf16.mxu0 0
  %433 = vmatpush1.bf16.msra.mxu0 %v337
  %434 = vmatprep.mubr.bf16.mxu0 %v143
  %435 = vmatmul.mubr.bf16.gmra.mrb[0].mxu0 %v142
  %v436 = vpop.f32.mrb[0].mxu0
  %v437 = vadd.f32 0.0, %v436
  %v438 = vpop.f32.mrb[0].mxu0
  %v439 = vpop.f32.mrb[0].mxu0
  %v440 = vadd.f32 0.0, %v439
  %v441 = vpop.f32.mrb[0].mxu0
  %442 = vmatprep.mubr.bf16.mxu0 %v148
  %443 = vmatmul.mubr.bf16.gmra.mrb[0].mxu0 %v147
  %v444 = vpop.f32.mrb[0].mxu0
  %v445 = vadd.f32 0.0, %v444
  %v446 = vpop.f32.mrb[0].mxu0
  %v447 = vpop.f32.mrb[0].mxu0
  %v448 = vadd.f32 0.0, %v447
  %v449 = vpop.f32.mrb[0].mxu0
  %450 = vdwg.mxu0
  %451 = vmatprep.subr.bf16.mxu0 0
  %452 = vmatpush1.bf16.msra.mxu0 %v338
  %453 = vmatprep.subr.bf16.mxu0 0
  %454 = vmatpush1.bf16.msra.mxu0 %v339
  %455 = vmatprep.subr.bf16.mxu0 0
  %456 = vmatpush1.bf16.msra.mxu0 %v340
  %457 = vmatprep.subr.bf16.mxu0 0
  %458 = vmatpush1.bf16.msra.mxu0 %v341
  %459 = vmatprep.subr.bf16.mxu0 0
  %460 = vmatpush1.bf16.msra.mxu0 %v342
  %461 = vmatprep.subr.bf16.mxu0 0
  %462 = vmatpush1.bf16.msra.mxu0 %v343
  %463 = vmatprep.subr.bf16.mxu0 0
  %464 = vmatpush1.bf16.msra.mxu0 %v344
  %465 = vmatprep.subr.bf16.mxu0 0
  %466 = vmatpush1.bf16.msra.mxu0 %v345
  %467 = vmatprep.subr.bf16.mxu0 0
  %468 = vmatpush1.bf16.msra.mxu0 %v346
  %469 = vmatprep.subr.bf16.mxu0 0
  %470 = vmatpush1.bf16.msra.mxu0 %v347
  %471 = vmatprep.subr.bf16.mxu0 0
  %472 = vmatpush1.bf16.msra.mxu0 %v348
  %473 = vmatprep.subr.bf16.mxu0 0
  %474 = vmatpush1.bf16.msra.mxu0 %v349
  %475 = vmatprep.subr.bf16.mxu0 0
  %476 = vmatpush1.bf16.msra.mxu0 %v350
  %477 = vmatprep.subr.bf16.mxu0 0
  %478 = vmatpush1.bf16.msra.mxu0 %v351
  %479 = vmatprep.subr.bf16.mxu0 0
  %480 = vmatpush1.bf16.msra.mxu0 %v352
  %481 = vmatprep.subr.bf16.mxu0 0
  %482 = vmatpush1.bf16.msra.mxu0 %v353
  %483 = vmatprep.mubr.bf16.mxu0 %v145
  %484 = vmatmul.mubr.bf16.gmra.mrb[0].mxu0 %v144
  %v485 = vpop.f32.mrb[0].mxu0
  %v486 = vadd.f32 %v437, %v485
  %v487 = vpop.f32.mrb[0].mxu0
  %v488 = vpop.f32.mrb[0].mxu0
  %v489 = vadd.f32 %v440, %v488
  %v490 = vpop.f32.mrb[0].mxu0
  %491 = vmatprep.mubr.bf16.mxu0 %v150
  %492 = vmatmul.mubr.bf16.gmra.mrb[0].mxu0 %v149
  %v493 = vpop.f32.mrb[0].mxu0
  %v494 = vadd.f32 %v445, %v493
  %v495 = vpop.f32.mrb[0].mxu0
  %v496 = vpop.f32.mrb[0].mxu0
  %v497 = vadd.f32 %v448, %v496
  %v498 = vpop.f32.mrb[0].mxu0
  %499 = vdwg.mxu0
  %500 = vmatprep.subr.bf16.mxu0 0
  %501 = vmatpush1.bf16.msra.mxu0 %v354
  %502 = vmatprep.subr.bf16.mxu0 0
  %503 = vmatpush1.bf16.msra.mxu0 %v355
  %504 = vmatprep.subr.bf16.mxu0 0
  %505 = vmatpush1.bf16.msra.mxu0 %v356
  %506 = vmatprep.subr.bf16.mxu0 0
  %507 = vmatpush1.bf16.msra.mxu0 %v357
  %508 = vmatprep.subr.bf16.mxu0 0
  %509 = vmatpush1.bf16.msra.mxu0 %v358
  %510 = vmatprep.subr.bf16.mxu0 0
  %511 = vmatpush1.bf16.msra.mxu0 %v359
  %512 = vmatprep.subr.bf16.mxu0 0
  %513 = vmatpush1.bf16.msra.mxu0 %v360
  %514 = vmatprep.subr.bf16.mxu0 0
  %515 = vmatpush1.bf16.msra.mxu0 %v361
  %516 = vmatprep.subr.bf16.mxu0 0
  %517 = vmatpush1.bf16.msra.mxu0 0
  %518 = vmatprep.subr.bf16.mxu0 0
  %519 = vmatpush1.bf16.msra.mxu0 0
  %520 = vmatprep.subr.bf16.mxu0 0
  %521 = vmatpush1.bf16.msra.mxu0 0
  %522 = vmatprep.subr.bf16.mxu0 0
  %523 = vmatpush1.bf16.msra.mxu0 0
  %524 = vmatprep.subr.bf16.mxu0 0
  %525 = vmatpush1.bf16.msra.mxu0 0
  %526 = vmatprep.subr.bf16.mxu0 0
  %527 = vmatpush1.bf16.msra.mxu0 0
  %528 = vmatprep.subr.bf16.mxu0 0
  %529 = vmatpush1.bf16.msra.mxu0 0
  %530 = vmatprep.subr.bf16.mxu0 0
  %531 = vmatpush1.bf16.msra.mxu0 0
  %532 = vmatprep.mubr.bf16.mxu0 0
  %533 = vmatmul.mubr.bf16.gmra.mrb[0].mxu0 %v146
  %v534 = vpop.f32.mrb[0].mxu0
  %v535 = vadd.f32 %v486, %v534
  %v536 = vpop.f32.mrb[0].mxu0
  %v537 = vpop.f32.mrb[0].mxu0
  %v538 = vadd.f32 %v489, %v537
  %v539 = vpop.f32.mrb[0].mxu0
  %540 = vmatprep.mubr.bf16.mxu0 0
  %541 = vmatmul.mubr.bf16.gmra.mrb[0].mxu0 %v151
  %v542 = vpop.f32.mrb[0].mxu0
  %v543 = vadd.f32 %v494, %v542
  %v544 = vpop.f32.mrb[0].mxu0
  %v545 = vpop.f32.mrb[0].mxu0
  %v546 = vadd.f32 %v497, %v545
  %v547 = vpop.f32.mrb[0].mxu0
  %548 = vdwg.mxu0
  %v549 = vadd.f32 %v535, %v538
  %v550 = vadd.f32 %v549, %v543
  %v551 = vadd.f32 %v550, %v546
  %v552 = vrot.slane %v551, 4
  %v553 = vadd.f32 %v551, %v552
  %v554 = vrot.slane %v553, 2
  %v555 = vadd.f32 %v553, %v554
  %v556 = vrot.slane %v555, 1
  %v557 = vadd.f32 %v555, %v556
  %v558 = vmul.f32 %v557, 0.041666668
  %v559 = vsub.f32 %v535, %v558
  %v560 = vsub.f32 %v538, %v558
  %v561 = vsub.f32 %v543, %v558
  %v562 = vsub.f32 %v546, %v558
  %v563 = vmul.f32 %v559, %v559
  %v564 = vmul.f32 %v560, %v560
  %v565 = vmul.f32 %v561, %v561
  %v566 = vmul.f32 %v562, %v562
  %v567 = vadd.f32 %v563, %v564
  %v568 = vadd.f32 %v567, %v565
  %v569 = vadd.f32 %v568, %v566
  %v570 = vrot.slane %v569, 4
  %v571 = vadd.f32 %v569, %v570
  %v572 = vrot.slane %v571, 2
  %v573 = vadd.f32 %v571, %v572
  %v574 = vrot.slane %v573, 1
  %v575 = vadd.f32 %v573, %v574
  %v576 = vmul.f32 %v558, %v558
  %v577 = vmul.f32 %v576, 8.0
  %v578 = vsub.f32 %v575, %v577
  %v579 = vmul.f32 %v578, 0.041666668
  %v580 = vmax.f32 %v579, 0.0
  %v581 = vld [vmem:[%s2] sm:$0x1]
  %v582 = vadd.f32 %v580, 1e-05
  %v583 = vrsqrt.pop %v582
  %v584 = vmul.f32 %v581, %v583
  %v586 = vlaneseq
  %v587 = vshrl.u32 %v586, 7
  %v588 = vsub.s32 0, %v587
  %v589 = vrot.slane %v584, %v588
  %v591 = vmul.f32 %v559, %v589
  %v592 = vmul.f32 %v560, %v589
  %v593 = vmul.f32 %v561, %v589
  %v594 = vmul.f32 %v562, %v589
  %v595 = vld [vmem:[%s3] sm:$0x1]
  %v597 = vlaneseq
  %v598 = vshrl.u32 %v597, 7
  %v599 = vsub.s32 0, %v598
  %v600 = vrot.slane %v595, %v599
  %v602 = vadd.f32 %v591, %v600
  %v603 = vadd.f32 %v592, %v600
  %v604 = vadd.f32 %v593, %v600
  %v605 = vadd.f32 %v594, %v600
  %v606 = vmax.f32 %v602, %v603
  %v607 = vmax.f32 %v604, %v605
  %v608 = vmax.f32 %v606, %v607
  %v609 = vmax.f32 %v608, 0.0
  %610 = vst [vmem:[%s4] sm:$0xff] %v609
  // Predicated region
  $region18: #{protomaml_forward.16} parent=0 // pred_check
    _
  $region19: #{protomaml_forward.16} parent=0 // pred_check_branch
    %612 = sbr.rel (0) target = $region21
  $region20: #{protomaml_forward.16} parent=0 // pred_region
    _
  $region21: #{protomaml_forward.16} parent=0 // pred_fallthru
    _
  // Predicated region
  $region22: #{protomaml_forward.16} parent=0 // pred_check
    _
  $region23: #{protomaml_forward.16} parent=0 // pred_check_branch
    %614 = sbr.rel (0) target = $region25
  $region24: #{protomaml_forward.16} parent=0 // pred_region
    _
  $region25: #{protomaml_forward.16} parent=0 // pred_fallthru
    _

// kernel: protomaml_forward.17
$region0: #{protomaml_forward.17}
  #allocation0 [shape = 'u32[]', space=smem, size = 0x4, offset = 0x4, fixed_abs, tag = 'smem constant byte address 0x4 - core index']
  #allocation1 [shape = 'u32[144,128]{1,0:T(1,128)}', space=vmem, size = 0x12000, scoped, tag = 'internal scratch']
  %s0 = inlined_call_operand.vmem [shape: f32[2,3,128], index: 0, kind: input, shape index: {}]
  %s1 = inlined_call_operand.vmem [shape: f32[6,128], index: 1, kind: input, shape index: {}]
  %s2 = inlined_call_operand.vmem [shape: f32[6,3], index: 2, kind: output, shape index: {}]
  %s3 = sld [smem:[#allocation0]]
  $region18: #{protomaml_forward.17} parent=0
    _
  %s5 = ssub.s32 1, %s3
  %s6 = scalar_select 0, %s5, %s3
  // Predicated region
  $region2: #{protomaml_forward.17} parent=0 // pred_check
    _
  $region3: #{protomaml_forward.17} parent=0 // pred_check_branch
    %8 = sbr.rel (0) target = $region5
  $region4: #{protomaml_forward.17} parent=0 // pred_region
    _
  $region5: #{protomaml_forward.17} parent=0 // pred_fallthru
    _
  // Predicated region
  $region6: #{protomaml_forward.17} parent=0 // pred_check
    _
  $region7: #{protomaml_forward.17} parent=0 // pred_check_branch
    %10 = sbr.rel (0) target = $region9
  $region8: #{protomaml_forward.17} parent=0 // pred_region
    _
  $region9: #{protomaml_forward.17} parent=0 // pred_fallthru
    _
  %v11 = vld [vmem:[%s0] sm:$0x7]
  %v12 = vld [vmem:[%s0 + $0x4] sm:$0x7]
  %vm13 = vcmask 1042432
  %v14 = vsel %vm13, %v11, 0.0
  %v15 = vsel %vm13, %v12, 0.0
  %v16 = vadd.f32 %v14, %v15
  %v17 = vrcp.pop 2.0
  %v18 = vmul.f32 %v16, %v17
  %v19 = vld [vmem:[%s1] sm:$0x3f]
  %20 = vmatprep.subr.mxu0 0.0
  %21 = vmatpush1.xpose.msra.mxu0 %v18
  %22 = vmatprep.subr.mxu0 0.0
  %23 = vmatpush1.xpose.msra.mxu0 0.0
  %24 = vmatprep.subr.mxu0 0.0
  %25 = vmatpush1.xpose.msra.mxu0 0.0
  %26 = vmatprep.subr.mxu0 0.0
  %27 = vmatpush1.xpose.msra.mxu0 0.0
  %28 = vmatprep.subr.mxu0 0.0
  %29 = vmatpush1.xpose.msra.mxu0 0.0
  %30 = vmatprep.subr.mxu0 0.0
  %31 = vmatpush1.xpose.msra.mxu0 0.0
  %32 = vmatprep.subr.mxu0 0.0
  %33 = vmatpush1.xpose.msra.mxu0 0.0
  %34 = vmatprep.subr.mxu0 0.0
  %35 = vmatpush1.xpose.msra.mxu0 0.0
  %36 = vmatprep.subr.mxu0 0.0
  %37 = vmatpush1.xpose.msra.mxu0 0.0
  %38 = vmatprep.subr.mxu0 0.0
  %39 = vmatpush1.xpose.msra.mxu0 0.0
  %40 = vmatprep.subr.mxu0 0.0
  %41 = vmatpush1.xpose.msra.mxu0 0.0
  %42 = vmatprep.subr.mxu0 0.0
  %43 = vmatpush1.xpose.msra.mxu0 0.0
  %44 = vmatprep.subr.mxu0 0.0
  %45 = vmatpush1.xpose.msra.mxu0 0.0
  %46 = vmatprep.subr.mxu0 0.0
  %47 = vmatpush1.xpose.msra.mxu0 0.0
  %48 = vmatprep.subr.mxu0 0.0
  %49 = vmatpush1.xpose.msra.mxu0 0.0
  %50 = vmatprep.subr.mxu0 0.0
  %51 = vmatpush1.xpose.msra.mxu0 0.0
  %52 = vmatprep.subr.mxu0 0.0
  %53 = vmatpush1.xpose.msra.mxu0 0.0
  %54 = vmatprep.subr.mxu0 0.0
  %55 = vmatpush1.xpose.msra.mxu0 0.0
  %56 = vmatprep.subr.mxu0 0.0
  %57 = vmatpush1.xpose.msra.mxu0 0.0
  %58 = vmatprep.subr.mxu0 0.0
  %59 = vmatpush1.xpose.msra.mxu0 0.0
  %60 = vmatprep.subr.mxu0 0.0
  %61 = vmatpush1.xpose.msra.mxu0 0.0
  %62 = vmatprep.subr.mxu0 0.0
  %63 = vmatpush1.xpose.msra.mxu0 0.0
  %64 = vmatprep.subr.mxu0 0.0
  %65 = vmatpush1.xpose.msra.mxu0 0.0
  %66 = vmatprep.subr.mxu0 0.0
  %67 = vmatpush1.xpose.msra.mxu0 0.0
  %68 = vmatprep.subr.mxu0 0.0
  %69 = vmatpush1.xpose.msra.mxu0 0.0
  %70 = vmatprep.subr.mxu0 0.0
  %71 = vmatpush1.xpose.msra.mxu0 0.0
  %72 = vmatprep.subr.mxu0 0.0
  %73 = vmatpush1.xpose.msra.mxu0 0.0
  %74 = vmatprep.subr.mxu0 0.0
  %75 = vmatpush1.xpose.msra.mxu0 0.0
  %76 = vmatprep.subr.mxu0 0.0
  %77 = vmatpush1.xpose.msra.mxu0 0.0
  %78 = vmatprep.subr.mxu0 0.0
  %79 = vmatpush1.xpose.msra.mxu0 0.0
  %80 = vmatprep.subr.mxu0 0.0
  %81 = vmatpush1.xpose.msra.mxu0 0.0
  %82 = vmatprep.subr.mxu0 0.0
  %83 = vmatpush1.xpose.msra.mxu0 0.0
  %84 = vmatprep.mubr.f32.mxu0 0.0
  %85 = vmatmul.mubr.f32.gmra.mrb[0].mxu0 %v19
  %v86 = vpop.f32.mrb[0].mxu0
  %v87 = vadd.f32 0.0, %v86
  %v88 = vpop.f32.mrb[0].mxu0
  %89 = vdwg.mxu0
  %v90 = vmul.f32 %v19, %v19
  %vm91 = vcmask 1045504
  %v92 = vsel %vm91, %v90, 0.0
  %93 = vadd.xlane.f32.xlu0 %v92
  %v94 = vpop.xlane.xlu0 %93
  %v95 = vmul.f32 %v18, %v18
  %v96 = vsel %vm13, %v95, 0.0
  %97 = vadd.xlane.f32.xlu0 %v96
  %v98 = vpop.xlane.xlu0 %97
  %v99 = vmul.f32 %v87, 2.0
  %v100 = vsub.f32 %v99, %v94
  %v102 = vlaneseq
  %v103 = vand.u32 %v102, 127
  %v104 = vlaneseq
  %v105 = vshrl.u32 %v104, 7
  %v106 = vsub.s32 %v103, %v105
  %v107 = vrot.slane %v98, %v106
  %vm108 = vcmask 1042434
  %v109 = vsel %vm108, %v107, %v107
  %vm110 = vcmask 1043459
  %v111 = vsel %vm110, %v107, %v109
  %vm112 = vcmask 1044484
  %v113 = vsel %vm112, %v107, %v111
  %vm114 = vcmask 1045509
  %v115 = vsel %vm114, %v107, %v113
  %v117 = vsub.f32 %v100, %v115
  %vm118 = vcmask 21504
  %119 = vst.msk [vmem:[%s2] sm:$0x3f] %vm118, %v117
  // Predicated region
  $region10: #{protomaml_forward.17} parent=0 // pred_check
    _
  $region11: #{protomaml_forward.17} parent=0 // pred_check_branch
    %121 = sbr.rel (0) target = $region13
  $region12: #{protomaml_forward.17} parent=0 // pred_region
    _
  $region13: #{protomaml_forward.17} parent=0 // pred_fallthru
    _
  // Predicated region
  $region14: #{protomaml_forward.17} parent=0 // pred_check
    _
  $region15: #{protomaml_forward.17} parent=0 // pred_check_branch
    %123 = sbr.rel (0) target = $region17
  $region16: #{protomaml_forward.17} parent=0 // pred_region
    _
  $region17: #{protomaml_forward.17} parent=0 // pred_fallthru
    _

</llo_original>
